<compile_context>
chip_gen: v7x
topology: tpu7x:2x2x1
jax: 0.10.0
libtpu: 0.0.40
codegen_flags: <defaults>
</compile_context>

<pallas_src>
import functools
import math

import jax
import jax.numpy as jnp
from jax.experimental import pallas as pl
from jax.experimental.pallas import tpu as pltpu

LEAKY_SLOPE = 0.01
BN_EPS = 1e-5
MATMUL_DTYPE = jnp.float32   # flip to jnp.bfloat16 on v6e/v7x for MXU; VPU math stays f32


# ---------------------------------------------------------------------------
# Fully fused forward kernel
# ---------------------------------------------------------------------------
def fused_net_kernel(x_ref, *refs, batch, n_classes, planes, par_kernels, n_blocks):
    """One kernel = whole Net.forward (eval mode).

    Activation layout: (L, B*planes) f32 — time on sublanes, batch*channels on lanes.
    Every conv layer is one matmul: im2col is built by lane-concatenating the K shifted
    window reads of the zero-padded VMEM scratch; weights are tap-stacked + block-diagonal
    over the batch (packed once in pack_params).
    """
    nk = len(par_kernels)
    pw_refs = refs[0:nk]                 # parallel conv weights, each (K_i*B*Cin, B*P)
    c1w_ref = refs[nk]                   # (3*B*P, B*P)
    bw_ref = refs[nk + 1]                # (2*n_blocks, 3*B*P, B*P)
    bns_ref = refs[nk + 2]               # (n_bn, 1, B*P)   folded BN scale
    bnb_ref = refs[nk + 3]               # (n_bn, 1, B*P)   folded BN shift
    wm_ref = refs[nk + 4]                # (B*P, B*NC)      block-diag fc weight
    bm_ref = refs[nk + 5]                # (1, B*NC)
    wa_ref = refs[nk + 6]                # (B*P, B)         block-diag fc_target1 weight
    ba_ref = refs[nk + 7]                # (1, B)
    yoh_ref = refs[nk + 8]               # (1, B*NC)        one-hot main targets
    y1v_ref = refs[nk + 9]               # (1, B)           aux targets
    logits_ref = refs[nk + 10]           # (1, B*NC) out
    loss_ref = refs[nk + 11]             # (1, 1)    out
    seq_ref = refs[nk + 12]              # VMEM scratch (seq_rows, B*P)  padded activations
    id_ref = refs[nk + 13]               # VMEM scratch (id_rows,  B*P)  residual branch
    pool_ref = refs[nk + 14]             # VMEM scratch (id_rows,  B*P)  conv2-out for maxpool

    BC = batch * planes
    mm = MATMUL_DTYPE

    def leaky(v):
        return jnp.where(v >= 0.0, v, LEAKY_SLOPE * v)

    def bn(v, idx):
        return v * bns_ref[idx] + bnb_ref[idx]

    def conv_mm(cols, w2d):
        # single MXU op covering all taps and the whole batch
        return jnp.dot(cols.astype(mm), w2d, preferred_element_type=jnp.float32)

    L_in = x_ref.shape[0]
    pad1 = 2

    # ---- Stage 1: parallel convs -> concat(time) -> bn1 -> LeakyReLU,
    #      written into seq_ref with conv1's pad=2 halo already in place.
    seq_ref[0:pad1, :] = jnp.zeros((pad1, BC), jnp.float32)
    off = pad1
    for i, K in enumerate(par_kernels):
        Lo = L_in - K + 1
        cols = jnp.concatenate([x_ref[k:k + Lo, :] for k in range(K)], axis=1)
        acc = conv_mm(cols, pw_refs[i][...])           # one matmul for all K taps
        seq_ref[off:off + Lo, :] = leaky(bn(acc, 0))
        off += Lo
    L1 = off - pad1
    seq_ref[off:off + pad1, :] = jnp.zeros((pad1, BC), jnp.float32)

    # ---- Stage 2: conv1 (k=3, stride=2, pad=2): strided im2col, one matmul.
    L2 = (L1 + 2 * pad1 - 3) // 2 + 1
    cols = jnp.concatenate([seq_ref[pl.ds(k, L2, stride=2), :] for k in range(3)], axis=1)
    cur = conv_mm(cols, c1w_ref[...])
    Lc = L2
    id_ref[0:Lc, :] = cur                              # residual source for block 0

    # ---- Stage 3: n_blocks ResNet_1D_Blocks (dropout = identity in eval mode).
    # seq_ref row 0 is already zero (stage-1 left pad) and is never overwritten below;
    # it serves as the left pad row for every block conv.
    zero1 = jnp.zeros((1, BC), jnp.float32)
    for i in range(n_blocks):
        Lo = Lc // 2

        # conv1: bn1 + LeakyReLU, pad=1, ONE fused matmul
        h = leaky(bn(cur, 1 + 2 * i))
        seq_ref[1:1 + Lc, :] = h
        seq_ref[1 + Lc:2 + Lc, :] = zero1              # right pad row for this block size
        cols = jnp.concatenate([seq_ref[k:k + Lc, :] for k in range(3)], axis=1)
        h1 = conv_mm(cols, bw_ref[2 * i])

        # conv2: bn2 + LeakyReLU, pad=1, ONE fused matmul over the full length
        h2 = leaky(bn(h1, 2 + 2 * i))
        seq_ref[1:1 + Lc, :] = h2                      # right pad row (1+Lc) still zero
        cols = jnp.concatenate([seq_ref[k:k + Lc, :] for k in range(3)], axis=1)
        c2 = conv_mm(cols, bw_ref[2 * i + 1])          # (Lc, BC)

        # MaxPool(2,2) of conv2 output and of the identity branch via strided decimation
        pool_ref[0:Lc, :] = c2
        pooled = jnp.maximum(pool_ref[pl.ds(0, Lo, stride=2), :],
                             pool_ref[pl.ds(1, Lo, stride=2), :])
        idp = jnp.maximum(id_ref[pl.ds(0, Lo, stride=2), :],
                          id_ref[pl.ds(1, Lo, stride=2), :])
        cur = pooled + idp
        Lc = Lo
        id_ref[0:Lc, :] = cur                          # residual source for the next block

    # ---- Stage 4: final bn2 + LeakyReLU
    cur = leaky(bn(cur, 1 + 2 * n_blocks))             # (Lc, BC), Lc == 2

    # ---- Stage 5: AvgPool1d(6,6,pad=2) -> fc / fc_target1 -> 0.9*CE + 0.1*BCE
    feat = jnp.sum(cur, axis=0, keepdims=True) * (1.0 / 6.0)          # (1, B*P)
    main_all = jnp.dot(feat, wm_ref[...],
                       preferred_element_type=jnp.float32) + bm_ref[...]   # (1, B*NC)
    aux_all = jnp.dot(feat, wa_ref[...],
                      preferred_element_type=jnp.float32) + ba_ref[...]    # (1, B)
    logits_ref[...] = main_all.astype(logits_ref.dtype)

    # CE: picked logits via one-hot (vectorized); per-sample logsumexp in a tiny static loop
    picked = jnp.sum(yoh_ref[...] * main_all, axis=1, keepdims=True)       # (1, 1)
    col = jax.lax.broadcasted_iota(jnp.int32, (1, batch * n_classes), 1)
    ce_sum = -picked
    for b in range(batch):   # B is tiny & static here; reshape to (B,NC) if B is scaled up
        mask = jnp.logical_and(col >= b * n_classes, col < (b + 1) * n_classes)
        m_b = jnp.max(jnp.where(mask, main_all, -1e30), axis=1, keepdims=True)
        s_b = jnp.sum(jnp.where(mask, jnp.exp(main_all - m_b), 0.0),
                      axis=1, keepdims=True)
        ce_sum = ce_sum + m_b + jnp.log(s_b)

    # BCE with logits, fully vectorized over the batch lanes
    a = aux_all
    t = y1v_ref[...]
    bce = jnp.maximum(a, 0.0) - a * t + jnp.log(1.0 + jnp.exp(-jnp.abs(a)))
    bce_sum = jnp.sum(bce, axis=1, keepdims=True)

    inv_b = 1.0 / batch
    loss_ref[...] = (0.9 * ce_sum * inv_b + 0.1 * bce_sum * inv_b).astype(loss_ref.dtype)


# ---------------------------------------------------------------------------
# One-time parameter packing (OFF the per-step path — call once, reuse every step)
# ---------------------------------------------------------------------------
def pack_params(params, batch):
    """Tap-stack + batch-block-diagonalize conv weights, fold BN, tile biases."""
    B = batch
    eye = jnp.eye(B, dtype=jnp.float32)

    def pack_conv(w):                    # (O, C, K) -> (K*B*C, B*O), tap-stacked block-diag
        wt = jnp.transpose(w, (2, 1, 0)).astype(jnp.float32)        # (K, C, O)
        blocks = [jnp.kron(eye, wt[k]) for k in range(w.shape[2])]  # each (B*C, B*O)
        return jnp.concatenate(blocks, axis=0).astype(MATMUL_DTYPE)

    def bn_fold(g, b, rm, rv):
        inv = g / jnp.sqrt(rv + BN_EPS)
        scale = jnp.tile(inv, B)[None, :].astype(jnp.float32)
        shift = jnp.tile(b - rm * inv, B)[None, :].astype(jnp.float32)
        return scale, shift

    bn_list = ([params['bn1']]
               + [bn for blk in params['blocks'] for bn in (blk['bn1'], blk['bn2'])]
               + [params['bn2']])
    folded = [bn_fold(*b) for b in bn_list]

    return {
        'pw': [pack_conv(w) for w in params['parallel_w']],
        'c1w': pack_conv(params['conv1_w']),
        'bw': jnp.stack([pack_conv(w) for blk in params['blocks']
                         for w in (blk['conv1_w'], blk['conv2_w'])]),
        'bns': jnp.stack([s for s, _ in folded]),
        'bnb': jnp.stack([t for _, t in folded]),
        'wm': jnp.kron(eye, params['fc_w'].T).astype(jnp.float32),
        'bm': jnp.tile(params['fc_b'], B)[None, :].astype(jnp.float32),
        'wa': jnp.kron(eye, params['fc1_w'].T).astype(jnp.float32),
        'ba': jnp.tile(params['fc1_b'], B)[None, :].astype(jnp.float32),
    }


# ---------------------------------------------------------------------------
# Per-step forward: single pallas_call on pre-packed weights
# ---------------------------------------------------------------------------
@jax.jit
def net_forward(packed, x, y, y1):
    B, Cin, L = x.shape
    P = packed['c1w'].shape[1] // B
    NC = packed['wm'].shape[1] // B
    Ks = [int(w.shape[0]) // (B * Cin) for w in packed['pw']]
    n_blocks = packed['bw'].shape[0] // 2

    # static shape bookkeeping
    L1 = sum(L - k + 1 for k in Ks)
    L2 = (L1 + 2 * 2 - 3) // 2 + 1
    Lcur = L2
    for _ in range(n_blocks):
        Lcur //= 2
    L_pool = (Lcur + 2 * 2 - 6) // 6 + 1
    assert L_pool == 1, "fc expects planes*1 features -> avgpool output length must be 1"

    # per-step data prep (tiny): time-major input with batch folded into lanes,
    # one-hot main targets, aux targets as a lane vector.
    xT = jnp.transpose(x, (2, 0, 1)).reshape(L, B * Cin).astype(jnp.float32)
    yoh = jax.nn.one_hot(y.astype(jnp.int32), NC, dtype=jnp.float32).reshape(1, B * NC)
    y1v = y1.astype(jnp.float32).reshape(1, B)

    def r8(n):
        return ((n + 7) // 8) * 8

    seq_rows = r8(L1 + 4)
    id_rows = r8(max(L2, 8))

    vmem_spec = pl.BlockSpec(memory_space=pltpu.MemorySpace.VMEM)
    n_inputs = 1 + len(Ks) + 10

    kernel = functools.partial(
        fused_net_kernel,
        batch=B, n_classes=NC, planes=P,
        par_kernels=tuple(Ks), n_blocks=n_blocks)

    logits_flat, loss = pl.pallas_call(
        kernel,
        out_shape=(jax.ShapeDtypeStruct((1, B * NC), jnp.float32),
                   jax.ShapeDtypeStruct((1, 1), jnp.float32)),
        in_specs=[vmem_spec] * n_inputs,
        out_specs=(vmem_spec, vmem_spec),
        scratch_shapes=[pltpu.VMEM((seq_rows, B * P), jnp.float32),
                        pltpu.VMEM((id_rows, B * P), jnp.float32),
                        pltpu.VMEM((id_rows, B * P), jnp.float32)],
    )(xT, *packed['pw'], packed['c1w'], packed['bw'], packed['bns'], packed['bnb'],
      packed['wm'], packed['bm'], packed['wa'], packed['ba'], yoh, y1v)

    # TODO(synk): on v7x (2 TensorCores) split the batch over a leading "parallel" grid
    # axis (per-core partial CE/BCE sums) — the single gridless call here uses one core.
    return {'loss': loss[0, 0], 'logits': logits_flat.reshape(B, NC)}


# ---------------------------------------------------------------------------
# Pure-JAX reference (for validation of the Pallas path)
# ---------------------------------------------------------------------------
def forward_ref(params, batch):
    x, y, y1 = batch['input'], batch['target'], batch['target1']

    def conv(x, w, stride=1, pad=0):
        return jax.lax.conv_general_dilated(
            x, w, window_strides=(stride,), padding=[(pad, pad)],
            dimension_numbers=('NCH', 'OIH', 'NCH'),
            precision=jax.lax.Precision.HIGHEST)

    def bn_relu(x, g, b, rm, rv):
        s = (g / jnp.sqrt(rv + BN_EPS))[None, :, None]
        yv = (x - rm[None, :, None]) * s + b[None, :, None]
        return jnp.where(yv >= 0, yv, LEAKY_SLOPE * yv)

    def maxpool(x):
        Lo = x.shape[2] // 2
        return jnp.maximum(x[:, :, 0:2 * Lo:2], x[:, :, 1:2 * Lo:2])

    out = jnp.concatenate([conv(x, w) for w in params['parallel_w']], axis=2)
    out = bn_relu(out, *params['bn1'])
    out = conv(out, params['conv1_w'], stride=2, pad=2)
    for blk in params['blocks']:
        idn = out
        h = bn_relu(out, *blk['bn1'])
        h = conv(h, blk['conv1_w'], pad=1)
        h = bn_relu(h, *blk['bn2'])
        h = conv(h, blk['conv2_w'], pad=1)
        out = maxpool(h) + maxpool(idn)
    out = bn_relu(out, *params['bn2'])
    xp = jnp.pad(out, ((0, 0), (0, 0), (2, 2)))[:, :, :6]
    feat = jnp.sum(xp, axis=2) / 6.0
    main = feat @ params['fc_w'].T + params['fc_b']
    aux = (feat @ params['fc1_w'].T + params['fc1_b'])[:, 0]
    m = jnp.max(main, axis=1)
    lse = m + jnp.log(jnp.sum(jnp.exp(main - m[:, None]), axis=1))
    ce = lse - jnp.take_along_axis(main, y[:, None], axis=1)[:, 0]
    loss_main = jnp.mean(ce)
    bce = jnp.maximum(aux, 0) - aux * y1 + jnp.log(1 + jnp.exp(-jnp.abs(aux)))
    loss_aux = jnp.mean(bce)
    return {'loss': 0.9 * loss_main + 0.1 * loss_aux, 'logits': main}


# ---------------------------------------------------------------------------
# Deterministic parameter init
# ---------------------------------------------------------------------------
def init_params(key, in_ch, planes, kernels, n_classes, n_blocks=6):
    keys = iter(jax.random.split(key, 128))

    def conv_w(o, c, k):
        return (jax.random.normal(next(keys), (o, c, k), jnp.float32)
                / math.sqrt(c * k))

    def bn(c):
        g = jax.random.uniform(next(keys), (c,), jnp.float32, 0.5, 1.5)
        b = 0.1 * jax.random.normal(next(keys), (c,), jnp.float32)
        rm = 0.1 * jax.random.normal(next(keys), (c,), jnp.float32)
        rv = jax.random.uniform(next(keys), (c,), jnp.float32, 0.5, 1.5)
        return (g, b, rm, rv)

    params = {}
    params['parallel_w'] = [conv_w(planes, in_ch, k) for k in kernels]
    params['bn1'] = bn(planes)
    params['conv1_w'] = conv_w(planes, planes, 3)
    params['blocks'] = [{'bn1': bn(planes),
                         'conv1_w': conv_w(planes, planes, 3),
                         'bn2': bn(planes),
                         'conv2_w': conv_w(planes, planes, 3)}
                        for _ in range(n_blocks)]
    params['bn2'] = bn(planes)
    params['fc_w'] = jax.random.normal(next(keys), (n_classes, planes), jnp.float32) / math.sqrt(planes)
    params['fc_b'] = 0.01 * jax.random.normal(next(keys), (n_classes,), jnp.float32)
    params['fc1_w'] = jax.random.normal(next(keys), (1, planes), jnp.float32) / math.sqrt(planes)
    params['fc1_b'] = 0.01 * jax.random.normal(next(keys), (1,), jnp.float32)
    return params


if __name__ == "__main__":
    # config: FEATURES -> 4 input channels, KERNELS=(3,5,7), PLANES=8, N_CLASSES=6,
    #         DROPOUT_RATE irrelevant (eval), TRAINING=False.
    B, IN_CH, L = 2, 4, 128
    PLANES, KERNELS, N_CLASSES = 8, (3, 5, 7), 6

    key = jax.random.PRNGKey(0)
    kp, kx, ky, ky1 = jax.random.split(key, 4)
    params = init_params(kp, IN_CH, PLANES, KERNELS, N_CLASSES)

    x = jax.random.normal(kx, (B, IN_CH, L), jnp.float32)
    y = jax.random.randint(ky, (B,), 0, N_CLASSES, jnp.int32)
    y1 = jax.random.uniform(ky1, (B,), jnp.float32)
    batch = {'input': x, 'target': y, 'target1': y1}

    packed = pack_params(params, B)          # packed ONCE, reused by every forward step
    out = net_forward(packed, x, y, y1)
    jax.block_until_ready(out)

    ref = forward_ref(params, batch)
    ok = bool(jnp.allclose(out['logits'], ref['logits'], rtol=1e-2, atol=1e-3)) and \
         bool(jnp.allclose(out['loss'], ref['loss'], rtol=1e-2, atol=1e-3))
    if not ok:
        raise SystemExit(f"MISMATCH: pallas={out}, ref={ref}")
    print("KERNEL_OK")
</pallas_src>

<mosaic_0001>
module attributes {stable_mosaic.version = 11 : i64} {
  func.func @fused_net_kernel(%arg0: memref<128x8xf32, #tpu.memory_space<vmem>>, %arg1: memref<24x16xf32, #tpu.memory_space<vmem>>, %arg2: memref<40x16xf32, #tpu.memory_space<vmem>>, %arg3: memref<56x16xf32, #tpu.memory_space<vmem>>, %arg4: memref<48x16xf32, #tpu.memory_space<vmem>>, %arg5: memref<12x48x16xf32, #tpu.memory_space<vmem>>, %arg6: memref<14x1x16xf32, #tpu.memory_space<vmem>>, %arg7: memref<14x1x16xf32, #tpu.memory_space<vmem>>, %arg8: memref<16x12xf32, #tpu.memory_space<vmem>>, %arg9: memref<1x12xf32, #tpu.memory_space<vmem>>, %arg10: memref<16x2xf32, #tpu.memory_space<vmem>>, %arg11: memref<1x2xf32, #tpu.memory_space<vmem>>, %arg12: memref<1x12xf32, #tpu.memory_space<vmem>>, %arg13: memref<1x2xf32, #tpu.memory_space<vmem>>, %arg14: memref<1x12xf32, #tpu.memory_space<vmem>>, %arg15: memref<1x1xf32, #tpu.memory_space<vmem>>, %arg16: memref<376x16xf32, #tpu.memory_space<vmem>>, %arg17: memref<192x16xf32, #tpu.memory_space<vmem>>, %arg18: memref<192x16xf32, #tpu.memory_space<vmem>>) attributes {dimension_semantics = [], scalar_prefetch = 0 : i64, scratch_operands = 3 : i64, tpu.core_type = #tpu.core_type<tc>} {
    %cst = arith.constant 0.000000e+00 : f32
    %0 = vector.broadcast %cst : f32 to vector<2x16xf32>
    %c0 = arith.constant 0 : index
    %c0_0 = arith.constant 0 : index
    %1 = vector.load %arg16[%c0, %c0_0] : memref<376x16xf32, #tpu.memory_space<vmem>>, vector<2x16xf32>
    tpu.vector_store %arg16[%c0, %c0_0], %0 {strides = array<i32>} : memref<376x16xf32, #tpu.memory_space<vmem>>, vector<2x16xf32>,
    %c0_1 = arith.constant 0 : index
    %c0_2 = arith.constant 0 : index
    %2 = vector.load %arg0[%c0_1, %c0_2] : memref<128x8xf32, #tpu.memory_space<vmem>>, vector<126x8xf32>
    %c1 = arith.constant 1 : index
    %c0_3 = arith.constant 0 : index
    %3 = vector.load %arg0[%c1, %c0_3] : memref<128x8xf32, #tpu.memory_space<vmem>>, vector<126x8xf32>
    %c2 = arith.constant 2 : index
    %c0_4 = arith.constant 0 : index
    %4 = vector.load %arg0[%c2, %c0_4] : memref<128x8xf32, #tpu.memory_space<vmem>>, vector<126x8xf32>
    %5 = tpu.concatenate %2, %3, %4 in 1 : vector<126x8xf32>, vector<126x8xf32>, vector<126x8xf32> -> vector<126x24xf32>
    %c0_5 = arith.constant 0 : index
    %c0_6 = arith.constant 0 : index
    %6 = vector.load %arg1[%c0_5, %c0_6] : memref<24x16xf32, #tpu.memory_space<vmem>>, vector<24x16xf32>
    %cst_7 = arith.constant dense<0.000000e+00> : vector<126x16xf32>
    %7 = tpu.matmul %5, %6, %cst_7 {dimension_numbers = #tpu.dot_dimension_numbers<[1], [0], [0], [1], [0, 0, 1, 1], [], []>} : vector<126x24xf32>, vector<24x16xf32>, vector<126x16xf32> -> vector<126x16xf32>
    %c0_8 = arith.constant 0 : index
    %c0_9 = arith.constant 0 : index
    %c0_10 = arith.constant 0 : index
    %8 = vector.load %arg6[%c0_8, %c0_9, %c0_10] : memref<14x1x16xf32, #tpu.memory_space<vmem>>, vector<1x1x16xf32>
    %9 = vector.shape_cast %8 : vector<1x1x16xf32> to vector<1x16xf32>
    %10 = vector.broadcast %9 : vector<1x16xf32> to vector<126x16xf32>
    %11 = arith.mulf %7, %10 : vector<126x16xf32>
    %c0_11 = arith.constant 0 : index
    %c0_12 = arith.constant 0 : index
    %c0_13 = arith.constant 0 : index
    %12 = vector.load %arg7[%c0_11, %c0_12, %c0_13] : memref<14x1x16xf32, #tpu.memory_space<vmem>>, vector<1x1x16xf32>
    %13 = vector.shape_cast %12 : vector<1x1x16xf32> to vector<1x16xf32>
    %14 = vector.broadcast %13 : vector<1x16xf32> to vector<126x16xf32>
    %15 = arith.addf %11, %14 : vector<126x16xf32>
    %cst_14 = arith.constant 0.000000e+00 : f32
    %16 = vector.broadcast %cst_14 : f32 to vector<126x16xf32>
    %17 = arith.cmpf oge, %15, %16 : vector<126x16xf32>
    %cst_15 = arith.constant 0.00999999977 : f32
    %18 = vector.broadcast %cst_15 : f32 to vector<126x16xf32>
    %19 = arith.mulf %18, %15 : vector<126x16xf32>
    %20 = arith.select %17, %15, %19 : vector<126x16xi1>, vector<126x16xf32>
    %c2_16 = arith.constant 2 : index
    %c0_17 = arith.constant 0 : index
    %21 = vector.load %arg16[%c2_16, %c0_17] : memref<376x16xf32, #tpu.memory_space<vmem>>, vector<126x16xf32>
    tpu.vector_store %arg16[%c2_16, %c0_17], %20 {strides = array<i32>} : memref<376x16xf32, #tpu.memory_space<vmem>>, vector<126x16xf32>,
    %c0_18 = arith.constant 0 : index
    %c0_19 = arith.constant 0 : index
    %22 = vector.load %arg0[%c0_18, %c0_19] : memref<128x8xf32, #tpu.memory_space<vmem>>, vector<124x8xf32>
    %c1_20 = arith.constant 1 : index
    %c0_21 = arith.constant 0 : index
    %23 = vector.load %arg0[%c1_20, %c0_21] : memref<128x8xf32, #tpu.memory_space<vmem>>, vector<124x8xf32>
    %c2_22 = arith.constant 2 : index
    %c0_23 = arith.constant 0 : index
    %24 = vector.load %arg0[%c2_22, %c0_23] : memref<128x8xf32, #tpu.memory_space<vmem>>, vector<124x8xf32>
    %c3 = arith.constant 3 : index
    %c0_24 = arith.constant 0 : index
    %25 = vector.load %arg0[%c3, %c0_24] : memref<128x8xf32, #tpu.memory_space<vmem>>, vector<124x8xf32>
    %c4 = arith.constant 4 : index
    %c0_25 = arith.constant 0 : index
    %26 = vector.load %arg0[%c4, %c0_25] : memref<128x8xf32, #tpu.memory_space<vmem>>, vector<124x8xf32>
    %27 = tpu.concatenate %22, %23, %24, %25, %26 in 1 : vector<124x8xf32>, vector<124x8xf32>, vector<124x8xf32>, vector<124x8xf32>, vector<124x8xf32> -> vector<124x40xf32>
    %c0_26 = arith.constant 0 : index
    %c0_27 = arith.constant 0 : index
    %28 = vector.load %arg2[%c0_26, %c0_27] : memref<40x16xf32, #tpu.memory_space<vmem>>, vector<40x16xf32>
    %cst_28 = arith.constant dense<0.000000e+00> : vector<124x16xf32>
    %29 = tpu.matmul %27, %28, %cst_28 {dimension_numbers = #tpu.dot_dimension_numbers<[1], [0], [0], [1], [0, 0, 1, 1], [], []>} : vector<124x40xf32>, vector<40x16xf32>, vector<124x16xf32> -> vector<124x16xf32>
    %c0_29 = arith.constant 0 : index
    %c0_30 = arith.constant 0 : index
    %c0_31 = arith.constant 0 : index
    %30 = vector.load %arg6[%c0_29, %c0_30, %c0_31] : memref<14x1x16xf32, #tpu.memory_space<vmem>>, vector<1x1x16xf32>
    %31 = vector.shape_cast %30 : vector<1x1x16xf32> to vector<1x16xf32>
    %32 = vector.broadcast %31 : vector<1x16xf32> to vector<124x16xf32>
    %33 = arith.mulf %29, %32 : vector<124x16xf32>
    %c0_32 = arith.constant 0 : index
    %c0_33 = arith.constant 0 : index
    %c0_34 = arith.constant 0 : index
    %34 = vector.load %arg7[%c0_32, %c0_33, %c0_34] : memref<14x1x16xf32, #tpu.memory_space<vmem>>, vector<1x1x16xf32>
    %35 = vector.shape_cast %34 : vector<1x1x16xf32> to vector<1x16xf32>
    %36 = vector.broadcast %35 : vector<1x16xf32> to vector<124x16xf32>
    %37 = arith.addf %33, %36 : vector<124x16xf32>
    %cst_35 = arith.constant 0.000000e+00 : f32
    %38 = vector.broadcast %cst_35 : f32 to vector<124x16xf32>
    %39 = arith.cmpf oge, %37, %38 : vector<124x16xf32>
    %cst_36 = arith.constant 0.00999999977 : f32
    %40 = vector.broadcast %cst_36 : f32 to vector<124x16xf32>
    %41 = arith.mulf %40, %37 : vector<124x16xf32>
    %42 = arith.select %39, %37, %41 : vector<124x16xi1>, vector<124x16xf32>
    %c128 = arith.constant 128 : index
    %c0_37 = arith.constant 0 : index
    %43 = vector.load %arg16[%c128, %c0_37] : memref<376x16xf32, #tpu.memory_space<vmem>>, vector<124x16xf32>
    tpu.vector_store %arg16[%c128, %c0_37], %42 {strides = array<i32>} : memref<376x16xf32, #tpu.memory_space<vmem>>, vector<124x16xf32>,
    %c0_38 = arith.constant 0 : index
    %c0_39 = arith.constant 0 : index
    %44 = vector.load %arg0[%c0_38, %c0_39] : memref<128x8xf32, #tpu.memory_space<vmem>>, vector<122x8xf32>
    %c1_40 = arith.constant 1 : index
    %c0_41 = arith.constant 0 : index
    %45 = vector.load %arg0[%c1_40, %c0_41] : memref<128x8xf32, #tpu.memory_space<vmem>>, vector<122x8xf32>
    %c2_42 = arith.constant 2 : index
    %c0_43 = arith.constant 0 : index
    %46 = vector.load %arg0[%c2_42, %c0_43] : memref<128x8xf32, #tpu.memory_space<vmem>>, vector<122x8xf32>
    %c3_44 = arith.constant 3 : index
    %c0_45 = arith.constant 0 : index
    %47 = vector.load %arg0[%c3_44, %c0_45] : memref<128x8xf32, #tpu.memory_space<vmem>>, vector<122x8xf32>
    %c4_46 = arith.constant 4 : index
    %c0_47 = arith.constant 0 : index
    %48 = vector.load %arg0[%c4_46, %c0_47] : memref<128x8xf32, #tpu.memory_space<vmem>>, vector<122x8xf32>
    %c5 = arith.constant 5 : index
    %c0_48 = arith.constant 0 : index
    %49 = vector.load %arg0[%c5, %c0_48] : memref<128x8xf32, #tpu.memory_space<vmem>>, vector<122x8xf32>
    %c6 = arith.constant 6 : index
    %c0_49 = arith.constant 0 : index
    %50 = vector.load %arg0[%c6, %c0_49] : memref<128x8xf32, #tpu.memory_space<vmem>>, vector<122x8xf32>
    %51 = tpu.concatenate %44, %45, %46, %47, %48, %49, %50 in 1 : vector<122x8xf32>, vector<122x8xf32>, vector<122x8xf32>, vector<122x8xf32>, vector<122x8xf32>, vector<122x8xf32>, vector<122x8xf32> -> vector<122x56xf32>
    %c0_50 = arith.constant 0 : index
    %c0_51 = arith.constant 0 : index
    %52 = vector.load %arg3[%c0_50, %c0_51] : memref<56x16xf32, #tpu.memory_space<vmem>>, vector<56x16xf32>
    %cst_52 = arith.constant dense<0.000000e+00> : vector<122x16xf32>
    %53 = tpu.matmul %51, %52, %cst_52 {dimension_numbers = #tpu.dot_dimension_numbers<[1], [0], [0], [1], [0, 0, 1, 1], [], []>} : vector<122x56xf32>, vector<56x16xf32>, vector<122x16xf32> -> vector<122x16xf32>
    %c0_53 = arith.constant 0 : index
    %c0_54 = arith.constant 0 : index
    %c0_55 = arith.constant 0 : index
    %54 = vector.load %arg6[%c0_53, %c0_54, %c0_55] : memref<14x1x16xf32, #tpu.memory_space<vmem>>, vector<1x1x16xf32>
    %55 = vector.shape_cast %54 : vector<1x1x16xf32> to vector<1x16xf32>
    %56 = vector.broadcast %55 : vector<1x16xf32> to vector<122x16xf32>
    %57 = arith.mulf %53, %56 : vector<122x16xf32>
    %c0_56 = arith.constant 0 : index
    %c0_57 = arith.constant 0 : index
    %c0_58 = arith.constant 0 : index
    %58 = vector.load %arg7[%c0_56, %c0_57, %c0_58] : memref<14x1x16xf32, #tpu.memory_space<vmem>>, vector<1x1x16xf32>
    %59 = vector.shape_cast %58 : vector<1x1x16xf32> to vector<1x16xf32>
    %60 = vector.broadcast %59 : vector<1x16xf32> to vector<122x16xf32>
    %61 = arith.addf %57, %60 : vector<122x16xf32>
    %cst_59 = arith.constant 0.000000e+00 : f32
    %62 = vector.broadcast %cst_59 : f32 to vector<122x16xf32>
    %63 = arith.cmpf oge, %61, %62 : vector<122x16xf32>
    %cst_60 = arith.constant 0.00999999977 : f32
    %64 = vector.broadcast %cst_60 : f32 to vector<122x16xf32>
    %65 = arith.mulf %64, %61 : vector<122x16xf32>
    %66 = arith.select %63, %61, %65 : vector<122x16xi1>, vector<122x16xf32>
    %c252 = arith.constant 252 : index
    %c0_61 = arith.constant 0 : index
    %67 = vector.load %arg16[%c252, %c0_61] : memref<376x16xf32, #tpu.memory_space<vmem>>, vector<122x16xf32>
    tpu.vector_store %arg16[%c252, %c0_61], %66 {strides = array<i32>} : memref<376x16xf32, #tpu.memory_space<vmem>>, vector<122x16xf32>,
    %cst_62 = arith.constant 0.000000e+00 : f32
    %68 = vector.broadcast %cst_62 : f32 to vector<2x16xf32>
    %c374 = arith.constant 374 : index
    %c0_63 = arith.constant 0 : index
    %69 = vector.load %arg16[%c374, %c0_63] : memref<376x16xf32, #tpu.memory_space<vmem>>, vector<2x16xf32>
    tpu.vector_store %arg16[%c374, %c0_63], %68 {strides = array<i32>} : memref<376x16xf32, #tpu.memory_space<vmem>>, vector<2x16xf32>,
    %c0_64 = arith.constant 0 : index
    %c0_65 = arith.constant 0 : index
    %70 = tpu.strided_load %arg16[%c0_64, %c0_65] {strides = array<i32: 2, 1>} : memref<376x16xf32, #tpu.memory_space<vmem>>, vector<187x16xf32>
    %c1_66 = arith.constant 1 : index
    %c0_67 = arith.constant 0 : index
    %71 = tpu.strided_load %arg16[%c1_66, %c0_67] {strides = array<i32: 2, 1>} : memref<376x16xf32, #tpu.memory_space<vmem>>, vector<187x16xf32>
    %c2_68 = arith.constant 2 : index
    %c0_69 = arith.constant 0 : index
    %72 = tpu.strided_load %arg16[%c2_68, %c0_69] {strides = array<i32: 2, 1>} : memref<376x16xf32, #tpu.memory_space<vmem>>, vector<187x16xf32>
    %73 = tpu.concatenate %70, %71, %72 in 1 : vector<187x16xf32>, vector<187x16xf32>, vector<187x16xf32> -> vector<187x48xf32>
    %c0_70 = arith.constant 0 : index
    %c0_71 = arith.constant 0 : index
    %74 = vector.load %arg4[%c0_70, %c0_71] : memref<48x16xf32, #tpu.memory_space<vmem>>, vector<48x16xf32>
    %cst_72 = arith.constant dense<0.000000e+00> : vector<187x16xf32>
    %75 = tpu.matmul %73, %74, %cst_72 {dimension_numbers = #tpu.dot_dimension_numbers<[1], [0], [0], [1], [0, 0, 1, 1], [], []>} : vector<187x48xf32>, vector<48x16xf32>, vector<187x16xf32> -> vector<187x16xf32>
    %c0_73 = arith.constant 0 : index
    %c0_74 = arith.constant 0 : index
    %76 = vector.load %arg17[%c0_73, %c0_74] : memref<192x16xf32, #tpu.memory_space<vmem>>, vector<187x16xf32>
    tpu.vector_store %arg17[%c0_73, %c0_74], %75 {strides = array<i32>} : memref<192x16xf32, #tpu.memory_space<vmem>>, vector<187x16xf32>,
    %cst_75 = arith.constant 0.000000e+00 : f32
    %77 = vector.broadcast %cst_75 : f32 to vector<1x16xf32>
    %c1_76 = arith.constant 1 : index
    %c0_77 = arith.constant 0 : index
    %c0_78 = arith.constant 0 : index
    %78 = vector.load %arg6[%c1_76, %c0_77, %c0_78] : memref<14x1x16xf32, #tpu.memory_space<vmem>>, vector<1x1x16xf32>
    %79 = vector.shape_cast %78 : vector<1x1x16xf32> to vector<1x16xf32>
    %80 = vector.broadcast %79 : vector<1x16xf32> to vector<187x16xf32>
    %81 = arith.mulf %75, %80 : vector<187x16xf32>
    %c1_79 = arith.constant 1 : index
    %c0_80 = arith.constant 0 : index
    %c0_81 = arith.constant 0 : index
    %82 = vector.load %arg7[%c1_79, %c0_80, %c0_81] : memref<14x1x16xf32, #tpu.memory_space<vmem>>, vector<1x1x16xf32>
    %83 = vector.shape_cast %82 : vector<1x1x16xf32> to vector<1x16xf32>
    %84 = vector.broadcast %83 : vector<1x16xf32> to vector<187x16xf32>
    %85 = arith.addf %81, %84 : vector<187x16xf32>
    %cst_82 = arith.constant 0.000000e+00 : f32
    %86 = vector.broadcast %cst_82 : f32 to vector<187x16xf32>
    %87 = arith.cmpf oge, %85, %86 : vector<187x16xf32>
    %cst_83 = arith.constant 0.00999999977 : f32
    %88 = vector.broadcast %cst_83 : f32 to vector<187x16xf32>
    %89 = arith.mulf %88, %85 : vector<187x16xf32>
    %90 = arith.select %87, %85, %89 : vector<187x16xi1>, vector<187x16xf32>
    %c1_84 = arith.constant 1 : index
    %c0_85 = arith.constant 0 : index
    %91 = vector.load %arg16[%c1_84, %c0_85] : memref<376x16xf32, #tpu.memory_space<vmem>>, vector<187x16xf32>
    tpu.vector_store %arg16[%c1_84, %c0_85], %90 {strides = array<i32>} : memref<376x16xf32, #tpu.memory_space<vmem>>, vector<187x16xf32>,
    %c188 = arith.constant 188 : index
    %c0_86 = arith.constant 0 : index
    %92 = vector.load %arg16[%c188, %c0_86] : memref<376x16xf32, #tpu.memory_space<vmem>>, vector<1x16xf32>
    tpu.vector_store %arg16[%c188, %c0_86], %77 {strides = array<i32>} : memref<376x16xf32, #tpu.memory_space<vmem>>, vector<1x16xf32>,
    %c0_87 = arith.constant 0 : index
    %c0_88 = arith.constant 0 : index
    %93 = vector.load %arg16[%c0_87, %c0_88] : memref<376x16xf32, #tpu.memory_space<vmem>>, vector<187x16xf32>
    %c1_89 = arith.constant 1 : index
    %c0_90 = arith.constant 0 : index
    %94 = vector.load %arg16[%c1_89, %c0_90] : memref<376x16xf32, #tpu.memory_space<vmem>>, vector<187x16xf32>
    %c2_91 = arith.constant 2 : index
    %c0_92 = arith.constant 0 : index
    %95 = vector.load %arg16[%c2_91, %c0_92] : memref<376x16xf32, #tpu.memory_space<vmem>>, vector<187x16xf32>
    %96 = tpu.concatenate %93, %94, %95 in 1 : vector<187x16xf32>, vector<187x16xf32>, vector<187x16xf32> -> vector<187x48xf32>
    %c0_93 = arith.constant 0 : index
    %c0_94 = arith.constant 0 : index
    %c0_95 = arith.constant 0 : index
    %97 = vector.load %arg5[%c0_93, %c0_94, %c0_95] : memref<12x48x16xf32, #tpu.memory_space<vmem>>, vector<1x48x16xf32>
    %98 = vector.shape_cast %97 : vector<1x48x16xf32> to vector<48x16xf32>
    %cst_96 = arith.constant dense<0.000000e+00> : vector<187x16xf32>
    %99 = tpu.matmul %96, %98, %cst_96 {dimension_numbers = #tpu.dot_dimension_numbers<[1], [0], [0], [1], [0, 0, 1, 1], [], []>} : vector<187x48xf32>, vector<48x16xf32>, vector<187x16xf32> -> vector<187x16xf32>
    %c2_97 = arith.constant 2 : index
    %c0_98 = arith.constant 0 : index
    %c0_99 = arith.constant 0 : index
    %100 = vector.load %arg6[%c2_97, %c0_98, %c0_99] : memref<14x1x16xf32, #tpu.memory_space<vmem>>, vector<1x1x16xf32>
    %101 = vector.shape_cast %100 : vector<1x1x16xf32> to vector<1x16xf32>
    %102 = vector.broadcast %101 : vector<1x16xf32> to vector<187x16xf32>
    %103 = arith.mulf %99, %102 : vector<187x16xf32>
    %c2_100 = arith.constant 2 : index
    %c0_101 = arith.constant 0 : index
    %c0_102 = arith.constant 0 : index
    %104 = vector.load %arg7[%c2_100, %c0_101, %c0_102] : memref<14x1x16xf32, #tpu.memory_space<vmem>>, vector<1x1x16xf32>
    %105 = vector.shape_cast %104 : vector<1x1x16xf32> to vector<1x16xf32>
    %106 = vector.broadcast %105 : vector<1x16xf32> to vector<187x16xf32>
    %107 = arith.addf %103, %106 : vector<187x16xf32>
    %cst_103 = arith.constant 0.000000e+00 : f32
    %108 = vector.broadcast %cst_103 : f32 to vector<187x16xf32>
    %109 = arith.cmpf oge, %107, %108 : vector<187x16xf32>
    %cst_104 = arith.constant 0.00999999977 : f32
    %110 = vector.broadcast %cst_104 : f32 to vector<187x16xf32>
    %111 = arith.mulf %110, %107 : vector<187x16xf32>
    %112 = arith.select %109, %107, %111 : vector<187x16xi1>, vector<187x16xf32>
    %c1_105 = arith.constant 1 : index
    %c0_106 = arith.constant 0 : index
    %113 = vector.load %arg16[%c1_105, %c0_106] : memref<376x16xf32, #tpu.memory_space<vmem>>, vector<187x16xf32>
    tpu.vector_store %arg16[%c1_105, %c0_106], %112 {strides = array<i32>} : memref<376x16xf32, #tpu.memory_space<vmem>>, vector<187x16xf32>,
    %c0_107 = arith.constant 0 : index
    %c0_108 = arith.constant 0 : index
    %114 = vector.load %arg16[%c0_107, %c0_108] : memref<376x16xf32, #tpu.memory_space<vmem>>, vector<187x16xf32>
    %c1_109 = arith.constant 1 : index
    %c0_110 = arith.constant 0 : index
    %115 = vector.load %arg16[%c1_109, %c0_110] : memref<376x16xf32, #tpu.memory_space<vmem>>, vector<187x16xf32>
    %c2_111 = arith.constant 2 : index
    %c0_112 = arith.constant 0 : index
    %116 = vector.load %arg16[%c2_111, %c0_112] : memref<376x16xf32, #tpu.memory_space<vmem>>, vector<187x16xf32>
    %117 = tpu.concatenate %114, %115, %116 in 1 : vector<187x16xf32>, vector<187x16xf32>, vector<187x16xf32> -> vector<187x48xf32>
    %c1_113 = arith.constant 1 : index
    %c0_114 = arith.constant 0 : index
    %c0_115 = arith.constant 0 : index
    %118 = vector.load %arg5[%c1_113, %c0_114, %c0_115] : memref<12x48x16xf32, #tpu.memory_space<vmem>>, vector<1x48x16xf32>
    %119 = vector.shape_cast %118 : vector<1x48x16xf32> to vector<48x16xf32>
    %cst_116 = arith.constant dense<0.000000e+00> : vector<187x16xf32>
    %120 = tpu.matmul %117, %119, %cst_116 {dimension_numbers = #tpu.dot_dimension_numbers<[1], [0], [0], [1], [0, 0, 1, 1], [], []>} : vector<187x48xf32>, vector<48x16xf32>, vector<187x16xf32> -> vector<187x16xf32>
    %c0_117 = arith.constant 0 : index
    %c0_118 = arith.constant 0 : index
    %121 = vector.load %arg18[%c0_117, %c0_118] : memref<192x16xf32, #tpu.memory_space<vmem>>, vector<187x16xf32>
    tpu.vector_store %arg18[%c0_117, %c0_118], %120 {strides = array<i32>} : memref<192x16xf32, #tpu.memory_space<vmem>>, vector<187x16xf32>,
    %c0_119 = arith.constant 0 : index
    %c0_120 = arith.constant 0 : index
    %122 = tpu.strided_load %arg18[%c0_119, %c0_120] {strides = array<i32: 2, 1>} : memref<192x16xf32, #tpu.memory_space<vmem>>, vector<93x16xf32>
    %c1_121 = arith.constant 1 : index
    %c0_122 = arith.constant 0 : index
    %123 = tpu.strided_load %arg18[%c1_121, %c0_122] {strides = array<i32: 2, 1>} : memref<192x16xf32, #tpu.memory_space<vmem>>, vector<93x16xf32>
    %124 = arith.maximumf %122, %123 : vector<93x16xf32>
    %c0_123 = arith.constant 0 : index
    %c0_124 = arith.constant 0 : index
    %125 = tpu.strided_load %arg17[%c0_123, %c0_124] {strides = array<i32: 2, 1>} : memref<192x16xf32, #tpu.memory_space<vmem>>, vector<93x16xf32>
    %c1_125 = arith.constant 1 : index
    %c0_126 = arith.constant 0 : index
    %126 = tpu.strided_load %arg17[%c1_125, %c0_126] {strides = array<i32: 2, 1>} : memref<192x16xf32, #tpu.memory_space<vmem>>, vector<93x16xf32>
    %127 = arith.maximumf %125, %126 : vector<93x16xf32>
    %128 = arith.addf %124, %127 : vector<93x16xf32>
    %c0_127 = arith.constant 0 : index
    %c0_128 = arith.constant 0 : index
    %129 = vector.load %arg17[%c0_127, %c0_128] : memref<192x16xf32, #tpu.memory_space<vmem>>, vector<93x16xf32>
    tpu.vector_store %arg17[%c0_127, %c0_128], %128 {strides = array<i32>} : memref<192x16xf32, #tpu.memory_space<vmem>>, vector<93x16xf32>,
    %c3_129 = arith.constant 3 : index
    %c0_130 = arith.constant 0 : index
    %c0_131 = arith.constant 0 : index
    %130 = vector.load %arg6[%c3_129, %c0_130, %c0_131] : memref<14x1x16xf32, #tpu.memory_space<vmem>>, vector<1x1x16xf32>
    %131 = vector.shape_cast %130 : vector<1x1x16xf32> to vector<1x16xf32>
    %132 = vector.broadcast %131 : vector<1x16xf32> to vector<93x16xf32>
    %133 = arith.mulf %128, %132 : vector<93x16xf32>
    %c3_132 = arith.constant 3 : index
    %c0_133 = arith.constant 0 : index
    %c0_134 = arith.constant 0 : index
    %134 = vector.load %arg7[%c3_132, %c0_133, %c0_134] : memref<14x1x16xf32, #tpu.memory_space<vmem>>, vector<1x1x16xf32>
    %135 = vector.shape_cast %134 : vector<1x1x16xf32> to vector<1x16xf32>
    %136 = vector.broadcast %135 : vector<1x16xf32> to vector<93x16xf32>
    %137 = arith.addf %133, %136 : vector<93x16xf32>
    %cst_135 = arith.constant 0.000000e+00 : f32
    %138 = vector.broadcast %cst_135 : f32 to vector<93x16xf32>
    %139 = arith.cmpf oge, %137, %138 : vector<93x16xf32>
    %cst_136 = arith.constant 0.00999999977 : f32
    %140 = vector.broadcast %cst_136 : f32 to vector<93x16xf32>
    %141 = arith.mulf %140, %137 : vector<93x16xf32>
    %142 = arith.select %139, %137, %141 : vector<93x16xi1>, vector<93x16xf32>
    %c1_137 = arith.constant 1 : index
    %c0_138 = arith.constant 0 : index
    %143 = vector.load %arg16[%c1_137, %c0_138] : memref<376x16xf32, #tpu.memory_space<vmem>>, vector<93x16xf32>
    tpu.vector_store %arg16[%c1_137, %c0_138], %142 {strides = array<i32>} : memref<376x16xf32, #tpu.memory_space<vmem>>, vector<93x16xf32>,
    %c94 = arith.constant 94 : index
    %c0_139 = arith.constant 0 : index
    %144 = vector.load %arg16[%c94, %c0_139] : memref<376x16xf32, #tpu.memory_space<vmem>>, vector<1x16xf32>
    tpu.vector_store %arg16[%c94, %c0_139], %77 {strides = array<i32>} : memref<376x16xf32, #tpu.memory_space<vmem>>, vector<1x16xf32>,
    %c0_140 = arith.constant 0 : index
    %c0_141 = arith.constant 0 : index
    %145 = vector.load %arg16[%c0_140, %c0_141] : memref<376x16xf32, #tpu.memory_space<vmem>>, vector<93x16xf32>
    %c1_142 = arith.constant 1 : index
    %c0_143 = arith.constant 0 : index
    %146 = vector.load %arg16[%c1_142, %c0_143] : memref<376x16xf32, #tpu.memory_space<vmem>>, vector<93x16xf32>
    %c2_144 = arith.constant 2 : index
    %c0_145 = arith.constant 0 : index
    %147 = vector.load %arg16[%c2_144, %c0_145] : memref<376x16xf32, #tpu.memory_space<vmem>>, vector<93x16xf32>
    %148 = tpu.concatenate %145, %146, %147 in 1 : vector<93x16xf32>, vector<93x16xf32>, vector<93x16xf32> -> vector<93x48xf32>
    %c2_146 = arith.constant 2 : index
    %c0_147 = arith.constant 0 : index
    %c0_148 = arith.constant 0 : index
    %149 = vector.load %arg5[%c2_146, %c0_147, %c0_148] : memref<12x48x16xf32, #tpu.memory_space<vmem>>, vector<1x48x16xf32>
    %150 = vector.shape_cast %149 : vector<1x48x16xf32> to vector<48x16xf32>
    %cst_149 = arith.constant dense<0.000000e+00> : vector<93x16xf32>
    %151 = tpu.matmul %148, %150, %cst_149 {dimension_numbers = #tpu.dot_dimension_numbers<[1], [0], [0], [1], [0, 0, 1, 1], [], []>} : vector<93x48xf32>, vector<48x16xf32>, vector<93x16xf32> -> vector<93x16xf32>
    %c4_150 = arith.constant 4 : index
    %c0_151 = arith.constant 0 : index
    %c0_152 = arith.constant 0 : index
    %152 = vector.load %arg6[%c4_150, %c0_151, %c0_152] : memref<14x1x16xf32, #tpu.memory_space<vmem>>, vector<1x1x16xf32>
    %153 = vector.shape_cast %152 : vector<1x1x16xf32> to vector<1x16xf32>
    %154 = vector.broadcast %153 : vector<1x16xf32> to vector<93x16xf32>
    %155 = arith.mulf %151, %154 : vector<93x16xf32>
    %c4_153 = arith.constant 4 : index
    %c0_154 = arith.constant 0 : index
    %c0_155 = arith.constant 0 : index
    %156 = vector.load %arg7[%c4_153, %c0_154, %c0_155] : memref<14x1x16xf32, #tpu.memory_space<vmem>>, vector<1x1x16xf32>
    %157 = vector.shape_cast %156 : vector<1x1x16xf32> to vector<1x16xf32>
    %158 = vector.broadcast %157 : vector<1x16xf32> to vector<93x16xf32>
    %159 = arith.addf %155, %158 : vector<93x16xf32>
    %cst_156 = arith.constant 0.000000e+00 : f32
    %160 = vector.broadcast %cst_156 : f32 to vector<93x16xf32>
    %161 = arith.cmpf oge, %159, %160 : vector<93x16xf32>
    %cst_157 = arith.constant 0.00999999977 : f32
    %162 = vector.broadcast %cst_157 : f32 to vector<93x16xf32>
    %163 = arith.mulf %162, %159 : vector<93x16xf32>
    %164 = arith.select %161, %159, %163 : vector<93x16xi1>, vector<93x16xf32>
    %c1_158 = arith.constant 1 : index
    %c0_159 = arith.constant 0 : index
    %165 = vector.load %arg16[%c1_158, %c0_159] : memref<376x16xf32, #tpu.memory_space<vmem>>, vector<93x16xf32>
    tpu.vector_store %arg16[%c1_158, %c0_159], %164 {strides = array<i32>} : memref<376x16xf32, #tpu.memory_space<vmem>>, vector<93x16xf32>,
    %c0_160 = arith.constant 0 : index
    %c0_161 = arith.constant 0 : index
    %166 = vector.load %arg16[%c0_160, %c0_161] : memref<376x16xf32, #tpu.memory_space<vmem>>, vector<93x16xf32>
    %c1_162 = arith.constant 1 : index
    %c0_163 = arith.constant 0 : index
    %167 = vector.load %arg16[%c1_162, %c0_163] : memref<376x16xf32, #tpu.memory_space<vmem>>, vector<93x16xf32>
    %c2_164 = arith.constant 2 : index
    %c0_165 = arith.constant 0 : index
    %168 = vector.load %arg16[%c2_164, %c0_165] : memref<376x16xf32, #tpu.memory_space<vmem>>, vector<93x16xf32>
    %169 = tpu.concatenate %166, %167, %168 in 1 : vector<93x16xf32>, vector<93x16xf32>, vector<93x16xf32> -> vector<93x48xf32>
    %c3_166 = arith.constant 3 : index
    %c0_167 = arith.constant 0 : index
    %c0_168 = arith.constant 0 : index
    %170 = vector.load %arg5[%c3_166, %c0_167, %c0_168] : memref<12x48x16xf32, #tpu.memory_space<vmem>>, vector<1x48x16xf32>
    %171 = vector.shape_cast %170 : vector<1x48x16xf32> to vector<48x16xf32>
    %cst_169 = arith.constant dense<0.000000e+00> : vector<93x16xf32>
    %172 = tpu.matmul %169, %171, %cst_169 {dimension_numbers = #tpu.dot_dimension_numbers<[1], [0], [0], [1], [0, 0, 1, 1], [], []>} : vector<93x48xf32>, vector<48x16xf32>, vector<93x16xf32> -> vector<93x16xf32>
    %c0_170 = arith.constant 0 : index
    %c0_171 = arith.constant 0 : index
    %173 = vector.load %arg18[%c0_170, %c0_171] : memref<192x16xf32, #tpu.memory_space<vmem>>, vector<93x16xf32>
    tpu.vector_store %arg18[%c0_170, %c0_171], %172 {strides = array<i32>} : memref<192x16xf32, #tpu.memory_space<vmem>>, vector<93x16xf32>,
    %c0_172 = arith.constant 0 : index
    %c0_173 = arith.constant 0 : index
    %174 = tpu.strided_load %arg18[%c0_172, %c0_173] {strides = array<i32: 2, 1>} : memref<192x16xf32, #tpu.memory_space<vmem>>, vector<46x16xf32>
    %c1_174 = arith.constant 1 : index
    %c0_175 = arith.constant 0 : index
    %175 = tpu.strided_load %arg18[%c1_174, %c0_175] {strides = array<i32: 2, 1>} : memref<192x16xf32, #tpu.memory_space<vmem>>, vector<46x16xf32>
    %176 = arith.maximumf %174, %175 : vector<46x16xf32>
    %c0_176 = arith.constant 0 : index
    %c0_177 = arith.constant 0 : index
    %177 = tpu.strided_load %arg17[%c0_176, %c0_177] {strides = array<i32: 2, 1>} : memref<192x16xf32, #tpu.memory_space<vmem>>, vector<46x16xf32>
    %c1_178 = arith.constant 1 : index
    %c0_179 = arith.constant 0 : index
    %178 = tpu.strided_load %arg17[%c1_178, %c0_179] {strides = array<i32: 2, 1>} : memref<192x16xf32, #tpu.memory_space<vmem>>, vector<46x16xf32>
    %179 = arith.maximumf %177, %178 : vector<46x16xf32>
    %180 = arith.addf %176, %179 : vector<46x16xf32>
    %c0_180 = arith.constant 0 : index
    %c0_181 = arith.constant 0 : index
    %181 = vector.load %arg17[%c0_180, %c0_181] : memref<192x16xf32, #tpu.memory_space<vmem>>, vector<46x16xf32>
    tpu.vector_store %arg17[%c0_180, %c0_181], %180 {strides = array<i32>} : memref<192x16xf32, #tpu.memory_space<vmem>>, vector<46x16xf32>,
    %c5_182 = arith.constant 5 : index
    %c0_183 = arith.constant 0 : index
    %c0_184 = arith.constant 0 : index
    %182 = vector.load %arg6[%c5_182, %c0_183, %c0_184] : memref<14x1x16xf32, #tpu.memory_space<vmem>>, vector<1x1x16xf32>
    %183 = vector.shape_cast %182 : vector<1x1x16xf32> to vector<1x16xf32>
    %184 = vector.broadcast %183 : vector<1x16xf32> to vector<46x16xf32>
    %185 = arith.mulf %180, %184 : vector<46x16xf32>
    %c5_185 = arith.constant 5 : index
    %c0_186 = arith.constant 0 : index
    %c0_187 = arith.constant 0 : index
    %186 = vector.load %arg7[%c5_185, %c0_186, %c0_187] : memref<14x1x16xf32, #tpu.memory_space<vmem>>, vector<1x1x16xf32>
    %187 = vector.shape_cast %186 : vector<1x1x16xf32> to vector<1x16xf32>
    %188 = vector.broadcast %187 : vector<1x16xf32> to vector<46x16xf32>
    %189 = arith.addf %185, %188 : vector<46x16xf32>
    %cst_188 = arith.constant 0.000000e+00 : f32
    %190 = vector.broadcast %cst_188 : f32 to vector<46x16xf32>
    %191 = arith.cmpf oge, %189, %190 : vector<46x16xf32>
    %cst_189 = arith.constant 0.00999999977 : f32
    %192 = vector.broadcast %cst_189 : f32 to vector<46x16xf32>
    %193 = arith.mulf %192, %189 : vector<46x16xf32>
    %194 = arith.select %191, %189, %193 : vector<46x16xi1>, vector<46x16xf32>
    %c1_190 = arith.constant 1 : index
    %c0_191 = arith.constant 0 : index
    %195 = vector.load %arg16[%c1_190, %c0_191] : memref<376x16xf32, #tpu.memory_space<vmem>>, vector<46x16xf32>
    tpu.vector_store %arg16[%c1_190, %c0_191], %194 {strides = array<i32>} : memref<376x16xf32, #tpu.memory_space<vmem>>, vector<46x16xf32>,
    %c47 = arith.constant 47 : index
    %c0_192 = arith.constant 0 : index
    %196 = vector.load %arg16[%c47, %c0_192] : memref<376x16xf32, #tpu.memory_space<vmem>>, vector<1x16xf32>
    tpu.vector_store %arg16[%c47, %c0_192], %77 {strides = array<i32>} : memref<376x16xf32, #tpu.memory_space<vmem>>, vector<1x16xf32>,
    %c0_193 = arith.constant 0 : index
    %c0_194 = arith.constant 0 : index
    %197 = vector.load %arg16[%c0_193, %c0_194] : memref<376x16xf32, #tpu.memory_space<vmem>>, vector<46x16xf32>
    %c1_195 = arith.constant 1 : index
    %c0_196 = arith.constant 0 : index
    %198 = vector.load %arg16[%c1_195, %c0_196] : memref<376x16xf32, #tpu.memory_space<vmem>>, vector<46x16xf32>
    %c2_197 = arith.constant 2 : index
    %c0_198 = arith.constant 0 : index
    %199 = vector.load %arg16[%c2_197, %c0_198] : memref<376x16xf32, #tpu.memory_space<vmem>>, vector<46x16xf32>
    %200 = tpu.concatenate %197, %198, %199 in 1 : vector<46x16xf32>, vector<46x16xf32>, vector<46x16xf32> -> vector<46x48xf32>
    %c4_199 = arith.constant 4 : index
    %c0_200 = arith.constant 0 : index
    %c0_201 = arith.constant 0 : index
    %201 = vector.load %arg5[%c4_199, %c0_200, %c0_201] : memref<12x48x16xf32, #tpu.memory_space<vmem>>, vector<1x48x16xf32>
    %202 = vector.shape_cast %201 : vector<1x48x16xf32> to vector<48x16xf32>
    %cst_202 = arith.constant dense<0.000000e+00> : vector<46x16xf32>
    %203 = tpu.matmul %200, %202, %cst_202 {dimension_numbers = #tpu.dot_dimension_numbers<[1], [0], [0], [1], [0, 0, 1, 1], [], []>} : vector<46x48xf32>, vector<48x16xf32>, vector<46x16xf32> -> vector<46x16xf32>
    %c6_203 = arith.constant 6 : index
    %c0_204 = arith.constant 0 : index
    %c0_205 = arith.constant 0 : index
    %204 = vector.load %arg6[%c6_203, %c0_204, %c0_205] : memref<14x1x16xf32, #tpu.memory_space<vmem>>, vector<1x1x16xf32>
    %205 = vector.shape_cast %204 : vector<1x1x16xf32> to vector<1x16xf32>
    %206 = vector.broadcast %205 : vector<1x16xf32> to vector<46x16xf32>
    %207 = arith.mulf %203, %206 : vector<46x16xf32>
    %c6_206 = arith.constant 6 : index
    %c0_207 = arith.constant 0 : index
    %c0_208 = arith.constant 0 : index
    %208 = vector.load %arg7[%c6_206, %c0_207, %c0_208] : memref<14x1x16xf32, #tpu.memory_space<vmem>>, vector<1x1x16xf32>
    %209 = vector.shape_cast %208 : vector<1x1x16xf32> to vector<1x16xf32>
    %210 = vector.broadcast %209 : vector<1x16xf32> to vector<46x16xf32>
    %211 = arith.addf %207, %210 : vector<46x16xf32>
    %cst_209 = arith.constant 0.000000e+00 : f32
    %212 = vector.broadcast %cst_209 : f32 to vector<46x16xf32>
    %213 = arith.cmpf oge, %211, %212 : vector<46x16xf32>
    %cst_210 = arith.constant 0.00999999977 : f32
    %214 = vector.broadcast %cst_210 : f32 to vector<46x16xf32>
    %215 = arith.mulf %214, %211 : vector<46x16xf32>
    %216 = arith.select %213, %211, %215 : vector<46x16xi1>, vector<46x16xf32>
    %c1_211 = arith.constant 1 : index
    %c0_212 = arith.constant 0 : index
    %217 = vector.load %arg16[%c1_211, %c0_212] : memref<376x16xf32, #tpu.memory_space<vmem>>, vector<46x16xf32>
    tpu.vector_store %arg16[%c1_211, %c0_212], %216 {strides = array<i32>} : memref<376x16xf32, #tpu.memory_space<vmem>>, vector<46x16xf32>,
    %c0_213 = arith.constant 0 : index
    %c0_214 = arith.constant 0 : index
    %218 = vector.load %arg16[%c0_213, %c0_214] : memref<376x16xf32, #tpu.memory_space<vmem>>, vector<46x16xf32>
    %c1_215 = arith.constant 1 : index
    %c0_216 = arith.constant 0 : index
    %219 = vector.load %arg16[%c1_215, %c0_216] : memref<376x16xf32, #tpu.memory_space<vmem>>, vector<46x16xf32>
    %c2_217 = arith.constant 2 : index
    %c0_218 = arith.constant 0 : index
    %220 = vector.load %arg16[%c2_217, %c0_218] : memref<376x16xf32, #tpu.memory_space<vmem>>, vector<46x16xf32>
    %221 = tpu.concatenate %218, %219, %220 in 1 : vector<46x16xf32>, vector<46x16xf32>, vector<46x16xf32> -> vector<46x48xf32>
    %c5_219 = arith.constant 5 : index
    %c0_220 = arith.constant 0 : index
    %c0_221 = arith.constant 0 : index
    %222 = vector.load %arg5[%c5_219, %c0_220, %c0_221] : memref<12x48x16xf32, #tpu.memory_space<vmem>>, vector<1x48x16xf32>
    %223 = vector.shape_cast %222 : vector<1x48x16xf32> to vector<48x16xf32>
    %cst_222 = arith.constant dense<0.000000e+00> : vector<46x16xf32>
    %224 = tpu.matmul %221, %223, %cst_222 {dimension_numbers = #tpu.dot_dimension_numbers<[1], [0], [0], [1], [0, 0, 1, 1], [], []>} : vector<46x48xf32>, vector<48x16xf32>, vector<46x16xf32> -> vector<46x16xf32>
    %c0_223 = arith.constant 0 : index
    %c0_224 = arith.constant 0 : index
    %225 = vector.load %arg18[%c0_223, %c0_224] : memref<192x16xf32, #tpu.memory_space<vmem>>, vector<46x16xf32>
    tpu.vector_store %arg18[%c0_223, %c0_224], %224 {strides = array<i32>} : memref<192x16xf32, #tpu.memory_space<vmem>>, vector<46x16xf32>,
    %c0_225 = arith.constant 0 : index
    %c0_226 = arith.constant 0 : index
    %226 = tpu.strided_load %arg18[%c0_225, %c0_226] {strides = array<i32: 2, 1>} : memref<192x16xf32, #tpu.memory_space<vmem>>, vector<23x16xf32>
    %c1_227 = arith.constant 1 : index
    %c0_228 = arith.constant 0 : index
    %227 = tpu.strided_load %arg18[%c1_227, %c0_228] {strides = array<i32: 2, 1>} : memref<192x16xf32, #tpu.memory_space<vmem>>, vector<23x16xf32>
    %228 = arith.maximumf %226, %227 : vector<23x16xf32>
    %c0_229 = arith.constant 0 : index
    %c0_230 = arith.constant 0 : index
    %229 = tpu.strided_load %arg17[%c0_229, %c0_230] {strides = array<i32: 2, 1>} : memref<192x16xf32, #tpu.memory_space<vmem>>, vector<23x16xf32>
    %c1_231 = arith.constant 1 : index
    %c0_232 = arith.constant 0 : index
    %230 = tpu.strided_load %arg17[%c1_231, %c0_232] {strides = array<i32: 2, 1>} : memref<192x16xf32, #tpu.memory_space<vmem>>, vector<23x16xf32>
    %231 = arith.maximumf %229, %230 : vector<23x16xf32>
    %232 = arith.addf %228, %231 : vector<23x16xf32>
    %c0_233 = arith.constant 0 : index
    %c0_234 = arith.constant 0 : index
    %233 = vector.load %arg17[%c0_233, %c0_234] : memref<192x16xf32, #tpu.memory_space<vmem>>, vector<23x16xf32>
    tpu.vector_store %arg17[%c0_233, %c0_234], %232 {strides = array<i32>} : memref<192x16xf32, #tpu.memory_space<vmem>>, vector<23x16xf32>,
    %c7 = arith.constant 7 : index
    %c0_235 = arith.constant 0 : index
    %c0_236 = arith.constant 0 : index
    %234 = vector.load %arg6[%c7, %c0_235, %c0_236] : memref<14x1x16xf32, #tpu.memory_space<vmem>>, vector<1x1x16xf32>
    %235 = vector.shape_cast %234 : vector<1x1x16xf32> to vector<1x16xf32>
    %236 = vector.broadcast %235 : vector<1x16xf32> to vector<23x16xf32>
    %237 = arith.mulf %232, %236 : vector<23x16xf32>
    %c7_237 = arith.constant 7 : index
    %c0_238 = arith.constant 0 : index
    %c0_239 = arith.constant 0 : index
    %238 = vector.load %arg7[%c7_237, %c0_238, %c0_239] : memref<14x1x16xf32, #tpu.memory_space<vmem>>, vector<1x1x16xf32>
    %239 = vector.shape_cast %238 : vector<1x1x16xf32> to vector<1x16xf32>
    %240 = vector.broadcast %239 : vector<1x16xf32> to vector<23x16xf32>
    %241 = arith.addf %237, %240 : vector<23x16xf32>
    %cst_240 = arith.constant 0.000000e+00 : f32
    %242 = vector.broadcast %cst_240 : f32 to vector<23x16xf32>
    %243 = arith.cmpf oge, %241, %242 : vector<23x16xf32>
    %cst_241 = arith.constant 0.00999999977 : f32
    %244 = vector.broadcast %cst_241 : f32 to vector<23x16xf32>
    %245 = arith.mulf %244, %241 : vector<23x16xf32>
    %246 = arith.select %243, %241, %245 : vector<23x16xi1>, vector<23x16xf32>
    %c1_242 = arith.constant 1 : index
    %c0_243 = arith.constant 0 : index
    %247 = vector.load %arg16[%c1_242, %c0_243] : memref<376x16xf32, #tpu.memory_space<vmem>>, vector<23x16xf32>
    tpu.vector_store %arg16[%c1_242, %c0_243], %246 {strides = array<i32>} : memref<376x16xf32, #tpu.memory_space<vmem>>, vector<23x16xf32>,
    %c24 = arith.constant 24 : index
    %c0_244 = arith.constant 0 : index
    %248 = vector.load %arg16[%c24, %c0_244] : memref<376x16xf32, #tpu.memory_space<vmem>>, vector<1x16xf32>
    tpu.vector_store %arg16[%c24, %c0_244], %77 {strides = array<i32>} : memref<376x16xf32, #tpu.memory_space<vmem>>, vector<1x16xf32>,
    %c0_245 = arith.constant 0 : index
    %c0_246 = arith.constant 0 : index
    %249 = vector.load %arg16[%c0_245, %c0_246] : memref<376x16xf32, #tpu.memory_space<vmem>>, vector<23x16xf32>
    %c1_247 = arith.constant 1 : index
    %c0_248 = arith.constant 0 : index
    %250 = vector.load %arg16[%c1_247, %c0_248] : memref<376x16xf32, #tpu.memory_space<vmem>>, vector<23x16xf32>
    %c2_249 = arith.constant 2 : index
    %c0_250 = arith.constant 0 : index
    %251 = vector.load %arg16[%c2_249, %c0_250] : memref<376x16xf32, #tpu.memory_space<vmem>>, vector<23x16xf32>
    %252 = tpu.concatenate %249, %250, %251 in 1 : vector<23x16xf32>, vector<23x16xf32>, vector<23x16xf32> -> vector<23x48xf32>
    %c6_251 = arith.constant 6 : index
    %c0_252 = arith.constant 0 : index
    %c0_253 = arith.constant 0 : index
    %253 = vector.load %arg5[%c6_251, %c0_252, %c0_253] : memref<12x48x16xf32, #tpu.memory_space<vmem>>, vector<1x48x16xf32>
    %254 = vector.shape_cast %253 : vector<1x48x16xf32> to vector<48x16xf32>
    %cst_254 = arith.constant dense<0.000000e+00> : vector<23x16xf32>
    %255 = tpu.matmul %252, %254, %cst_254 {dimension_numbers = #tpu.dot_dimension_numbers<[1], [0], [0], [1], [0, 0, 1, 1], [], []>} : vector<23x48xf32>, vector<48x16xf32>, vector<23x16xf32> -> vector<23x16xf32>
    %c8 = arith.constant 8 : index
    %c0_255 = arith.constant 0 : index
    %c0_256 = arith.constant 0 : index
    %256 = vector.load %arg6[%c8, %c0_255, %c0_256] : memref<14x1x16xf32, #tpu.memory_space<vmem>>, vector<1x1x16xf32>
    %257 = vector.shape_cast %256 : vector<1x1x16xf32> to vector<1x16xf32>
    %258 = vector.broadcast %257 : vector<1x16xf32> to vector<23x16xf32>
    %259 = arith.mulf %255, %258 : vector<23x16xf32>
    %c8_257 = arith.constant 8 : index
    %c0_258 = arith.constant 0 : index
    %c0_259 = arith.constant 0 : index
    %260 = vector.load %arg7[%c8_257, %c0_258, %c0_259] : memref<14x1x16xf32, #tpu.memory_space<vmem>>, vector<1x1x16xf32>
    %261 = vector.shape_cast %260 : vector<1x1x16xf32> to vector<1x16xf32>
    %262 = vector.broadcast %261 : vector<1x16xf32> to vector<23x16xf32>
    %263 = arith.addf %259, %262 : vector<23x16xf32>
    %cst_260 = arith.constant 0.000000e+00 : f32
    %264 = vector.broadcast %cst_260 : f32 to vector<23x16xf32>
    %265 = arith.cmpf oge, %263, %264 : vector<23x16xf32>
    %cst_261 = arith.constant 0.00999999977 : f32
    %266 = vector.broadcast %cst_261 : f32 to vector<23x16xf32>
    %267 = arith.mulf %266, %263 : vector<23x16xf32>
    %268 = arith.select %265, %263, %267 : vector<23x16xi1>, vector<23x16xf32>
    %c1_262 = arith.constant 1 : index
    %c0_263 = arith.constant 0 : index
    %269 = vector.load %arg16[%c1_262, %c0_263] : memref<376x16xf32, #tpu.memory_space<vmem>>, vector<23x16xf32>
    tpu.vector_store %arg16[%c1_262, %c0_263], %268 {strides = array<i32>} : memref<376x16xf32, #tpu.memory_space<vmem>>, vector<23x16xf32>,
    %c0_264 = arith.constant 0 : index
    %c0_265 = arith.constant 0 : index
    %270 = vector.load %arg16[%c0_264, %c0_265] : memref<376x16xf32, #tpu.memory_space<vmem>>, vector<23x16xf32>
    %c1_266 = arith.constant 1 : index
    %c0_267 = arith.constant 0 : index
    %271 = vector.load %arg16[%c1_266, %c0_267] : memref<376x16xf32, #tpu.memory_space<vmem>>, vector<23x16xf32>
    %c2_268 = arith.constant 2 : index
    %c0_269 = arith.constant 0 : index
    %272 = vector.load %arg16[%c2_268, %c0_269] : memref<376x16xf32, #tpu.memory_space<vmem>>, vector<23x16xf32>
    %273 = tpu.concatenate %270, %271, %272 in 1 : vector<23x16xf32>, vector<23x16xf32>, vector<23x16xf32> -> vector<23x48xf32>
    %c7_270 = arith.constant 7 : index
    %c0_271 = arith.constant 0 : index
    %c0_272 = arith.constant 0 : index
    %274 = vector.load %arg5[%c7_270, %c0_271, %c0_272] : memref<12x48x16xf32, #tpu.memory_space<vmem>>, vector<1x48x16xf32>
    %275 = vector.shape_cast %274 : vector<1x48x16xf32> to vector<48x16xf32>
    %cst_273 = arith.constant dense<0.000000e+00> : vector<23x16xf32>
    %276 = tpu.matmul %273, %275, %cst_273 {dimension_numbers = #tpu.dot_dimension_numbers<[1], [0], [0], [1], [0, 0, 1, 1], [], []>} : vector<23x48xf32>, vector<48x16xf32>, vector<23x16xf32> -> vector<23x16xf32>
    %c0_274 = arith.constant 0 : index
    %c0_275 = arith.constant 0 : index
    %277 = vector.load %arg18[%c0_274, %c0_275] : memref<192x16xf32, #tpu.memory_space<vmem>>, vector<23x16xf32>
    tpu.vector_store %arg18[%c0_274, %c0_275], %276 {strides = array<i32>} : memref<192x16xf32, #tpu.memory_space<vmem>>, vector<23x16xf32>,
    %c0_276 = arith.constant 0 : index
    %c0_277 = arith.constant 0 : index
    %278 = tpu.strided_load %arg18[%c0_276, %c0_277] {strides = array<i32: 2, 1>} : memref<192x16xf32, #tpu.memory_space<vmem>>, vector<11x16xf32>
    %c1_278 = arith.constant 1 : index
    %c0_279 = arith.constant 0 : index
    %279 = tpu.strided_load %arg18[%c1_278, %c0_279] {strides = array<i32: 2, 1>} : memref<192x16xf32, #tpu.memory_space<vmem>>, vector<11x16xf32>
    %280 = arith.maximumf %278, %279 : vector<11x16xf32>
    %c0_280 = arith.constant 0 : index
    %c0_281 = arith.constant 0 : index
    %281 = tpu.strided_load %arg17[%c0_280, %c0_281] {strides = array<i32: 2, 1>} : memref<192x16xf32, #tpu.memory_space<vmem>>, vector<11x16xf32>
    %c1_282 = arith.constant 1 : index
    %c0_283 = arith.constant 0 : index
    %282 = tpu.strided_load %arg17[%c1_282, %c0_283] {strides = array<i32: 2, 1>} : memref<192x16xf32, #tpu.memory_space<vmem>>, vector<11x16xf32>
    %283 = arith.maximumf %281, %282 : vector<11x16xf32>
    %284 = arith.addf %280, %283 : vector<11x16xf32>
    %c0_284 = arith.constant 0 : index
    %c0_285 = arith.constant 0 : index
    %285 = vector.load %arg17[%c0_284, %c0_285] : memref<192x16xf32, #tpu.memory_space<vmem>>, vector<11x16xf32>
    tpu.vector_store %arg17[%c0_284, %c0_285], %284 {strides = array<i32>} : memref<192x16xf32, #tpu.memory_space<vmem>>, vector<11x16xf32>,
    %c9 = arith.constant 9 : index
    %c0_286 = arith.constant 0 : index
    %c0_287 = arith.constant 0 : index
    %286 = vector.load %arg6[%c9, %c0_286, %c0_287] : memref<14x1x16xf32, #tpu.memory_space<vmem>>, vector<1x1x16xf32>
    %287 = vector.shape_cast %286 : vector<1x1x16xf32> to vector<1x16xf32>
    %288 = vector.broadcast %287 : vector<1x16xf32> to vector<11x16xf32>
    %289 = arith.mulf %284, %288 : vector<11x16xf32>
    %c9_288 = arith.constant 9 : index
    %c0_289 = arith.constant 0 : index
    %c0_290 = arith.constant 0 : index
    %290 = vector.load %arg7[%c9_288, %c0_289, %c0_290] : memref<14x1x16xf32, #tpu.memory_space<vmem>>, vector<1x1x16xf32>
    %291 = vector.shape_cast %290 : vector<1x1x16xf32> to vector<1x16xf32>
    %292 = vector.broadcast %291 : vector<1x16xf32> to vector<11x16xf32>
    %293 = arith.addf %289, %292 : vector<11x16xf32>
    %cst_291 = arith.constant 0.000000e+00 : f32
    %294 = vector.broadcast %cst_291 : f32 to vector<11x16xf32>
    %295 = arith.cmpf oge, %293, %294 : vector<11x16xf32>
    %cst_292 = arith.constant 0.00999999977 : f32
    %296 = vector.broadcast %cst_292 : f32 to vector<11x16xf32>
    %297 = arith.mulf %296, %293 : vector<11x16xf32>
    %298 = arith.select %295, %293, %297 : vector<11x16xi1>, vector<11x16xf32>
    %c1_293 = arith.constant 1 : index
    %c0_294 = arith.constant 0 : index
    %299 = vector.load %arg16[%c1_293, %c0_294] : memref<376x16xf32, #tpu.memory_space<vmem>>, vector<11x16xf32>
    tpu.vector_store %arg16[%c1_293, %c0_294], %298 {strides = array<i32>} : memref<376x16xf32, #tpu.memory_space<vmem>>, vector<11x16xf32>,
    %c12 = arith.constant 12 : index
    %c0_295 = arith.constant 0 : index
    %300 = vector.load %arg16[%c12, %c0_295] : memref<376x16xf32, #tpu.memory_space<vmem>>, vector<1x16xf32>
    tpu.vector_store %arg16[%c12, %c0_295], %77 {strides = array<i32>} : memref<376x16xf32, #tpu.memory_space<vmem>>, vector<1x16xf32>,
    %c0_296 = arith.constant 0 : index
    %c0_297 = arith.constant 0 : index
    %301 = vector.load %arg16[%c0_296, %c0_297] : memref<376x16xf32, #tpu.memory_space<vmem>>, vector<11x16xf32>
    %c1_298 = arith.constant 1 : index
    %c0_299 = arith.constant 0 : index
    %302 = vector.load %arg16[%c1_298, %c0_299] : memref<376x16xf32, #tpu.memory_space<vmem>>, vector<11x16xf32>
    %c2_300 = arith.constant 2 : index
    %c0_301 = arith.constant 0 : index
    %303 = vector.load %arg16[%c2_300, %c0_301] : memref<376x16xf32, #tpu.memory_space<vmem>>, vector<11x16xf32>
    %304 = tpu.concatenate %301, %302, %303 in 1 : vector<11x16xf32>, vector<11x16xf32>, vector<11x16xf32> -> vector<11x48xf32>
    %c8_302 = arith.constant 8 : index
    %c0_303 = arith.constant 0 : index
    %c0_304 = arith.constant 0 : index
    %305 = vector.load %arg5[%c8_302, %c0_303, %c0_304] : memref<12x48x16xf32, #tpu.memory_space<vmem>>, vector<1x48x16xf32>
    %306 = vector.shape_cast %305 : vector<1x48x16xf32> to vector<48x16xf32>
    %cst_305 = arith.constant dense<0.000000e+00> : vector<11x16xf32>
    %307 = tpu.matmul %304, %306, %cst_305 {dimension_numbers = #tpu.dot_dimension_numbers<[1], [0], [0], [1], [0, 0, 1, 1], [], []>} : vector<11x48xf32>, vector<48x16xf32>, vector<11x16xf32> -> vector<11x16xf32>
    %c10 = arith.constant 10 : index
    %c0_306 = arith.constant 0 : index
    %c0_307 = arith.constant 0 : index
    %308 = vector.load %arg6[%c10, %c0_306, %c0_307] : memref<14x1x16xf32, #tpu.memory_space<vmem>>, vector<1x1x16xf32>
    %309 = vector.shape_cast %308 : vector<1x1x16xf32> to vector<1x16xf32>
    %310 = vector.broadcast %309 : vector<1x16xf32> to vector<11x16xf32>
    %311 = arith.mulf %307, %310 : vector<11x16xf32>
    %c10_308 = arith.constant 10 : index
    %c0_309 = arith.constant 0 : index
    %c0_310 = arith.constant 0 : index
    %312 = vector.load %arg7[%c10_308, %c0_309, %c0_310] : memref<14x1x16xf32, #tpu.memory_space<vmem>>, vector<1x1x16xf32>
    %313 = vector.shape_cast %312 : vector<1x1x16xf32> to vector<1x16xf32>
    %314 = vector.broadcast %313 : vector<1x16xf32> to vector<11x16xf32>
    %315 = arith.addf %311, %314 : vector<11x16xf32>
    %cst_311 = arith.constant 0.000000e+00 : f32
    %316 = vector.broadcast %cst_311 : f32 to vector<11x16xf32>
    %317 = arith.cmpf oge, %315, %316 : vector<11x16xf32>
    %cst_312 = arith.constant 0.00999999977 : f32
    %318 = vector.broadcast %cst_312 : f32 to vector<11x16xf32>
    %319 = arith.mulf %318, %315 : vector<11x16xf32>
    %320 = arith.select %317, %315, %319 : vector<11x16xi1>, vector<11x16xf32>
    %c1_313 = arith.constant 1 : index
    %c0_314 = arith.constant 0 : index
    %321 = vector.load %arg16[%c1_313, %c0_314] : memref<376x16xf32, #tpu.memory_space<vmem>>, vector<11x16xf32>
    tpu.vector_store %arg16[%c1_313, %c0_314], %320 {strides = array<i32>} : memref<376x16xf32, #tpu.memory_space<vmem>>, vector<11x16xf32>,
    %c0_315 = arith.constant 0 : index
    %c0_316 = arith.constant 0 : index
    %322 = vector.load %arg16[%c0_315, %c0_316] : memref<376x16xf32, #tpu.memory_space<vmem>>, vector<11x16xf32>
    %c1_317 = arith.constant 1 : index
    %c0_318 = arith.constant 0 : index
    %323 = vector.load %arg16[%c1_317, %c0_318] : memref<376x16xf32, #tpu.memory_space<vmem>>, vector<11x16xf32>
    %c2_319 = arith.constant 2 : index
    %c0_320 = arith.constant 0 : index
    %324 = vector.load %arg16[%c2_319, %c0_320] : memref<376x16xf32, #tpu.memory_space<vmem>>, vector<11x16xf32>
    %325 = tpu.concatenate %322, %323, %324 in 1 : vector<11x16xf32>, vector<11x16xf32>, vector<11x16xf32> -> vector<11x48xf32>
    %c9_321 = arith.constant 9 : index
    %c0_322 = arith.constant 0 : index
    %c0_323 = arith.constant 0 : index
    %326 = vector.load %arg5[%c9_321, %c0_322, %c0_323] : memref<12x48x16xf32, #tpu.memory_space<vmem>>, vector<1x48x16xf32>
    %327 = vector.shape_cast %326 : vector<1x48x16xf32> to vector<48x16xf32>
    %cst_324 = arith.constant dense<0.000000e+00> : vector<11x16xf32>
    %328 = tpu.matmul %325, %327, %cst_324 {dimension_numbers = #tpu.dot_dimension_numbers<[1], [0], [0], [1], [0, 0, 1, 1], [], []>} : vector<11x48xf32>, vector<48x16xf32>, vector<11x16xf32> -> vector<11x16xf32>
    %c0_325 = arith.constant 0 : index
    %c0_326 = arith.constant 0 : index
    %329 = vector.load %arg18[%c0_325, %c0_326] : memref<192x16xf32, #tpu.memory_space<vmem>>, vector<11x16xf32>
    tpu.vector_store %arg18[%c0_325, %c0_326], %328 {strides = array<i32>} : memref<192x16xf32, #tpu.memory_space<vmem>>, vector<11x16xf32>,
    %c0_327 = arith.constant 0 : index
    %c0_328 = arith.constant 0 : index
    %330 = tpu.strided_load %arg18[%c0_327, %c0_328] {strides = array<i32: 2, 1>} : memref<192x16xf32, #tpu.memory_space<vmem>>, vector<5x16xf32>
    %c1_329 = arith.constant 1 : index
    %c0_330 = arith.constant 0 : index
    %331 = tpu.strided_load %arg18[%c1_329, %c0_330] {strides = array<i32: 2, 1>} : memref<192x16xf32, #tpu.memory_space<vmem>>, vector<5x16xf32>
    %332 = arith.maximumf %330, %331 : vector<5x16xf32>
    %c0_331 = arith.constant 0 : index
    %c0_332 = arith.constant 0 : index
    %333 = tpu.strided_load %arg17[%c0_331, %c0_332] {strides = array<i32: 2, 1>} : memref<192x16xf32, #tpu.memory_space<vmem>>, vector<5x16xf32>
    %c1_333 = arith.constant 1 : index
    %c0_334 = arith.constant 0 : index
    %334 = tpu.strided_load %arg17[%c1_333, %c0_334] {strides = array<i32: 2, 1>} : memref<192x16xf32, #tpu.memory_space<vmem>>, vector<5x16xf32>
    %335 = arith.maximumf %333, %334 : vector<5x16xf32>
    %336 = arith.addf %332, %335 : vector<5x16xf32>
    %c0_335 = arith.constant 0 : index
    %c0_336 = arith.constant 0 : index
    %337 = vector.load %arg17[%c0_335, %c0_336] : memref<192x16xf32, #tpu.memory_space<vmem>>, vector<5x16xf32>
    tpu.vector_store %arg17[%c0_335, %c0_336], %336 {strides = array<i32>} : memref<192x16xf32, #tpu.memory_space<vmem>>, vector<5x16xf32>,
    %c11 = arith.constant 11 : index
    %c0_337 = arith.constant 0 : index
    %c0_338 = arith.constant 0 : index
    %338 = vector.load %arg6[%c11, %c0_337, %c0_338] : memref<14x1x16xf32, #tpu.memory_space<vmem>>, vector<1x1x16xf32>
    %339 = vector.shape_cast %338 : vector<1x1x16xf32> to vector<1x16xf32>
    %340 = vector.broadcast %339 : vector<1x16xf32> to vector<5x16xf32>
    %341 = arith.mulf %336, %340 : vector<5x16xf32>
    %c11_339 = arith.constant 11 : index
    %c0_340 = arith.constant 0 : index
    %c0_341 = arith.constant 0 : index
    %342 = vector.load %arg7[%c11_339, %c0_340, %c0_341] : memref<14x1x16xf32, #tpu.memory_space<vmem>>, vector<1x1x16xf32>
    %343 = vector.shape_cast %342 : vector<1x1x16xf32> to vector<1x16xf32>
    %344 = vector.broadcast %343 : vector<1x16xf32> to vector<5x16xf32>
    %345 = arith.addf %341, %344 : vector<5x16xf32>
    %cst_342 = arith.constant 0.000000e+00 : f32
    %346 = vector.broadcast %cst_342 : f32 to vector<5x16xf32>
    %347 = arith.cmpf oge, %345, %346 : vector<5x16xf32>
    %cst_343 = arith.constant 0.00999999977 : f32
    %348 = vector.broadcast %cst_343 : f32 to vector<5x16xf32>
    %349 = arith.mulf %348, %345 : vector<5x16xf32>
    %350 = arith.select %347, %345, %349 : vector<5x16xi1>, vector<5x16xf32>
    %c1_344 = arith.constant 1 : index
    %c0_345 = arith.constant 0 : index
    %351 = vector.load %arg16[%c1_344, %c0_345] : memref<376x16xf32, #tpu.memory_space<vmem>>, vector<5x16xf32>
    tpu.vector_store %arg16[%c1_344, %c0_345], %350 {strides = array<i32>} : memref<376x16xf32, #tpu.memory_space<vmem>>, vector<5x16xf32>,
    %c6_346 = arith.constant 6 : index
    %c0_347 = arith.constant 0 : index
    %352 = vector.load %arg16[%c6_346, %c0_347] : memref<376x16xf32, #tpu.memory_space<vmem>>, vector<1x16xf32>
    tpu.vector_store %arg16[%c6_346, %c0_347], %77 {strides = array<i32>} : memref<376x16xf32, #tpu.memory_space<vmem>>, vector<1x16xf32>,
    %c0_348 = arith.constant 0 : index
    %c0_349 = arith.constant 0 : index
    %353 = vector.load %arg16[%c0_348, %c0_349] : memref<376x16xf32, #tpu.memory_space<vmem>>, vector<5x16xf32>
    %c1_350 = arith.constant 1 : index
    %c0_351 = arith.constant 0 : index
    %354 = vector.load %arg16[%c1_350, %c0_351] : memref<376x16xf32, #tpu.memory_space<vmem>>, vector<5x16xf32>
    %c2_352 = arith.constant 2 : index
    %c0_353 = arith.constant 0 : index
    %355 = vector.load %arg16[%c2_352, %c0_353] : memref<376x16xf32, #tpu.memory_space<vmem>>, vector<5x16xf32>
    %356 = tpu.concatenate %353, %354, %355 in 1 : vector<5x16xf32>, vector<5x16xf32>, vector<5x16xf32> -> vector<5x48xf32>
    %c10_354 = arith.constant 10 : index
    %c0_355 = arith.constant 0 : index
    %c0_356 = arith.constant 0 : index
    %357 = vector.load %arg5[%c10_354, %c0_355, %c0_356] : memref<12x48x16xf32, #tpu.memory_space<vmem>>, vector<1x48x16xf32>
    %358 = vector.shape_cast %357 : vector<1x48x16xf32> to vector<48x16xf32>
    %cst_357 = arith.constant dense<0.000000e+00> : vector<5x16xf32>
    %359 = tpu.matmul %356, %358, %cst_357 {dimension_numbers = #tpu.dot_dimension_numbers<[1], [0], [0], [1], [0, 0, 1, 1], [], []>} : vector<5x48xf32>, vector<48x16xf32>, vector<5x16xf32> -> vector<5x16xf32>
    %c12_358 = arith.constant 12 : index
    %c0_359 = arith.constant 0 : index
    %c0_360 = arith.constant 0 : index
    %360 = vector.load %arg6[%c12_358, %c0_359, %c0_360] : memref<14x1x16xf32, #tpu.memory_space<vmem>>, vector<1x1x16xf32>
    %361 = vector.shape_cast %360 : vector<1x1x16xf32> to vector<1x16xf32>
    %362 = vector.broadcast %361 : vector<1x16xf32> to vector<5x16xf32>
    %363 = arith.mulf %359, %362 : vector<5x16xf32>
    %c12_361 = arith.constant 12 : index
    %c0_362 = arith.constant 0 : index
    %c0_363 = arith.constant 0 : index
    %364 = vector.load %arg7[%c12_361, %c0_362, %c0_363] : memref<14x1x16xf32, #tpu.memory_space<vmem>>, vector<1x1x16xf32>
    %365 = vector.shape_cast %364 : vector<1x1x16xf32> to vector<1x16xf32>
    %366 = vector.broadcast %365 : vector<1x16xf32> to vector<5x16xf32>
    %367 = arith.addf %363, %366 : vector<5x16xf32>
    %cst_364 = arith.constant 0.000000e+00 : f32
    %368 = vector.broadcast %cst_364 : f32 to vector<5x16xf32>
    %369 = arith.cmpf oge, %367, %368 : vector<5x16xf32>
    %cst_365 = arith.constant 0.00999999977 : f32
    %370 = vector.broadcast %cst_365 : f32 to vector<5x16xf32>
    %371 = arith.mulf %370, %367 : vector<5x16xf32>
    %372 = arith.select %369, %367, %371 : vector<5x16xi1>, vector<5x16xf32>
    %c1_366 = arith.constant 1 : index
    %c0_367 = arith.constant 0 : index
    %373 = vector.load %arg16[%c1_366, %c0_367] : memref<376x16xf32, #tpu.memory_space<vmem>>, vector<5x16xf32>
    tpu.vector_store %arg16[%c1_366, %c0_367], %372 {strides = array<i32>} : memref<376x16xf32, #tpu.memory_space<vmem>>, vector<5x16xf32>,
    %c0_368 = arith.constant 0 : index
    %c0_369 = arith.constant 0 : index
    %374 = vector.load %arg16[%c0_368, %c0_369] : memref<376x16xf32, #tpu.memory_space<vmem>>, vector<5x16xf32>
    %c1_370 = arith.constant 1 : index
    %c0_371 = arith.constant 0 : index
    %375 = vector.load %arg16[%c1_370, %c0_371] : memref<376x16xf32, #tpu.memory_space<vmem>>, vector<5x16xf32>
    %c2_372 = arith.constant 2 : index
    %c0_373 = arith.constant 0 : index
    %376 = vector.load %arg16[%c2_372, %c0_373] : memref<376x16xf32, #tpu.memory_space<vmem>>, vector<5x16xf32>
    %377 = tpu.concatenate %374, %375, %376 in 1 : vector<5x16xf32>, vector<5x16xf32>, vector<5x16xf32> -> vector<5x48xf32>
    %c11_374 = arith.constant 11 : index
    %c0_375 = arith.constant 0 : index
    %c0_376 = arith.constant 0 : index
    %378 = vector.load %arg5[%c11_374, %c0_375, %c0_376] : memref<12x48x16xf32, #tpu.memory_space<vmem>>, vector<1x48x16xf32>
    %379 = vector.shape_cast %378 : vector<1x48x16xf32> to vector<48x16xf32>
    %cst_377 = arith.constant dense<0.000000e+00> : vector<5x16xf32>
    %380 = tpu.matmul %377, %379, %cst_377 {dimension_numbers = #tpu.dot_dimension_numbers<[1], [0], [0], [1], [0, 0, 1, 1], [], []>} : vector<5x48xf32>, vector<48x16xf32>, vector<5x16xf32> -> vector<5x16xf32>
    %c0_378 = arith.constant 0 : index
    %c0_379 = arith.constant 0 : index
    %381 = vector.load %arg18[%c0_378, %c0_379] : memref<192x16xf32, #tpu.memory_space<vmem>>, vector<5x16xf32>
    tpu.vector_store %arg18[%c0_378, %c0_379], %380 {strides = array<i32>} : memref<192x16xf32, #tpu.memory_space<vmem>>, vector<5x16xf32>,
    %c0_380 = arith.constant 0 : index
    %c0_381 = arith.constant 0 : index
    %382 = tpu.strided_load %arg18[%c0_380, %c0_381] {strides = array<i32: 2, 1>} : memref<192x16xf32, #tpu.memory_space<vmem>>, vector<2x16xf32>
    %c1_382 = arith.constant 1 : index
    %c0_383 = arith.constant 0 : index
    %383 = tpu.strided_load %arg18[%c1_382, %c0_383] {strides = array<i32: 2, 1>} : memref<192x16xf32, #tpu.memory_space<vmem>>, vector<2x16xf32>
    %384 = arith.maximumf %382, %383 : vector<2x16xf32>
    %c0_384 = arith.constant 0 : index
    %c0_385 = arith.constant 0 : index
    %385 = tpu.strided_load %arg17[%c0_384, %c0_385] {strides = array<i32: 2, 1>} : memref<192x16xf32, #tpu.memory_space<vmem>>, vector<2x16xf32>
    %c1_386 = arith.constant 1 : index
    %c0_387 = arith.constant 0 : index
    %386 = tpu.strided_load %arg17[%c1_386, %c0_387] {strides = array<i32: 2, 1>} : memref<192x16xf32, #tpu.memory_space<vmem>>, vector<2x16xf32>
    %387 = arith.maximumf %385, %386 : vector<2x16xf32>
    %388 = arith.addf %384, %387 : vector<2x16xf32>
    %c0_388 = arith.constant 0 : index
    %c0_389 = arith.constant 0 : index
    %389 = vector.load %arg17[%c0_388, %c0_389] : memref<192x16xf32, #tpu.memory_space<vmem>>, vector<2x16xf32>
    tpu.vector_store %arg17[%c0_388, %c0_389], %388 {strides = array<i32>} : memref<192x16xf32, #tpu.memory_space<vmem>>, vector<2x16xf32>,
    %c13 = arith.constant 13 : index
    %c0_390 = arith.constant 0 : index
    %c0_391 = arith.constant 0 : index
    %390 = vector.load %arg6[%c13, %c0_390, %c0_391] : memref<14x1x16xf32, #tpu.memory_space<vmem>>, vector<1x1x16xf32>
    %391 = vector.shape_cast %390 : vector<1x1x16xf32> to vector<1x16xf32>
    %392 = vector.broadcast %391 : vector<1x16xf32> to vector<2x16xf32>
    %393 = arith.mulf %388, %392 : vector<2x16xf32>
    %c13_392 = arith.constant 13 : index
    %c0_393 = arith.constant 0 : index
    %c0_394 = arith.constant 0 : index
    %394 = vector.load %arg7[%c13_392, %c0_393, %c0_394] : memref<14x1x16xf32, #tpu.memory_space<vmem>>, vector<1x1x16xf32>
    %395 = vector.shape_cast %394 : vector<1x1x16xf32> to vector<1x16xf32>
    %396 = vector.broadcast %395 : vector<1x16xf32> to vector<2x16xf32>
    %397 = arith.addf %393, %396 : vector<2x16xf32>
    %cst_395 = arith.constant 0.000000e+00 : f32
    %398 = vector.broadcast %cst_395 : f32 to vector<2x16xf32>
    %399 = arith.cmpf oge, %397, %398 : vector<2x16xf32>
    %cst_396 = arith.constant 0.00999999977 : f32
    %400 = vector.broadcast %cst_396 : f32 to vector<2x16xf32>
    %401 = arith.mulf %400, %397 : vector<2x16xf32>
    %402 = arith.select %399, %397, %401 : vector<2x16xi1>, vector<2x16xf32>
    %cst_397 = arith.constant dense<0.000000e+00> : vector<16xf32>
    %403 = vector.multi_reduction <add>, %402, %cst_397 [0] : vector<2x16xf32> to vector<16xf32>
    %404 = vector.shape_cast %403 : vector<16xf32> to vector<1x16xf32>
    %cst_398 = arith.constant 0.166666672 : f32
    %405 = vector.broadcast %cst_398 : f32 to vector<1x16xf32>
    %406 = arith.mulf %404, %405 : vector<1x16xf32>
    %c0_399 = arith.constant 0 : index
    %c0_400 = arith.constant 0 : index
    %407 = vector.load %arg8[%c0_399, %c0_400] : memref<16x12xf32, #tpu.memory_space<vmem>>, vector<16x12xf32>
    %cst_401 = arith.constant dense<0.000000e+00> : vector<1x12xf32>
    %408 = tpu.matmul %406, %407, %cst_401 {dimension_numbers = #tpu.dot_dimension_numbers<[1], [0], [0], [1], [0, 0, 1, 1], [], []>} : vector<1x16xf32>, vector<16x12xf32>, vector<1x12xf32> -> vector<1x12xf32>
    %c0_402 = arith.constant 0 : index
    %c0_403 = arith.constant 0 : index
    %409 = vector.load %arg9[%c0_402, %c0_403] : memref<1x12xf32, #tpu.memory_space<vmem>>, vector<1x12xf32>
    %410 = arith.addf %408, %409 : vector<1x12xf32>
    %c0_404 = arith.constant 0 : index
    %c0_405 = arith.constant 0 : index
    %411 = vector.load %arg10[%c0_404, %c0_405] : memref<16x2xf32, #tpu.memory_space<vmem>>, vector<16x2xf32>
    %cst_406 = arith.constant dense<0.000000e+00> : vector<1x2xf32>
    %412 = tpu.matmul %406, %411, %cst_406 {dimension_numbers = #tpu.dot_dimension_numbers<[1], [0], [0], [1], [0, 0, 1, 1], [], []>} : vector<1x16xf32>, vector<16x2xf32>, vector<1x2xf32> -> vector<1x2xf32>
    %c0_407 = arith.constant 0 : index
    %c0_408 = arith.constant 0 : index
    %413 = vector.load %arg11[%c0_407, %c0_408] : memref<1x2xf32, #tpu.memory_space<vmem>>, vector<1x2xf32>
    %414 = arith.addf %412, %413 : vector<1x2xf32>
    %c0_409 = arith.constant 0 : index
    %c0_410 = arith.constant 0 : index
    %415 = vector.load %arg14[%c0_409, %c0_410] : memref<1x12xf32, #tpu.memory_space<vmem>>, vector<1x12xf32>
    tpu.vector_store %arg14[%c0_409, %c0_410], %410 {strides = array<i32>} : memref<1x12xf32, #tpu.memory_space<vmem>>, vector<1x12xf32>,
    %c0_411 = arith.constant 0 : index
    %c0_412 = arith.constant 0 : index
    %416 = vector.load %arg12[%c0_411, %c0_412] : memref<1x12xf32, #tpu.memory_space<vmem>>, vector<1x12xf32>
    %417 = arith.mulf %416, %410 : vector<1x12xf32>
    %cst_413 = arith.constant dense<0.000000e+00> : vector<1xf32>
    %418 = vector.multi_reduction <add>, %417, %cst_413 [1] : vector<1x12xf32> to vector<1xf32>
    %419 = vector.shape_cast %418 : vector<1xf32> to vector<1x1xf32>
    %420 = tpu.iota {dimensions = array<i32: 1>} : vector<1x12xi32>
    %cst_414 = arith.constant 0.000000e+00 : f32
    %421 = vector.broadcast %cst_414 : f32 to vector<1x1xf32>
    %422 = arith.subf %421, %419 : vector<1x1xf32>
    %c0_i32 = arith.constant 0 : i32
    %423 = vector.broadcast %c0_i32 : i32 to vector<1x12xi32>
    %424 = arith.cmpi sge, %420, %423 : vector<1x12xi32>
    %c6_i32 = arith.constant 6 : i32
    %425 = vector.broadcast %c6_i32 : i32 to vector<1x12xi32>
    %426 = arith.cmpi slt, %420, %425 : vector<1x12xi32>
    %427 = arith.andi %424, %426 : vector<1x12xi1>
    %cst_415 = arith.constant -1.000000e+30 : f32
    %428 = vector.broadcast %cst_415 : f32 to vector<1x12xf32>
    %429 = arith.select %427, %410, %428 : vector<1x12xi1>, vector<1x12xf32>
    %cst_416 = arith.constant dense<0xFF800000> : vector<1xf32>
    %430 = vector.multi_reduction <maximumf>, %429, %cst_416 [1] : vector<1x12xf32> to vector<1xf32>
    %431 = vector.shape_cast %430 : vector<1xf32> to vector<1x1xf32>
    %432 = vector.broadcast %431 : vector<1x1xf32> to vector<1x12xf32>
    %433 = arith.subf %410, %432 : vector<1x12xf32>
    %434 = math.exp %433 : vector<1x12xf32>
    %cst_417 = arith.constant 0.000000e+00 : f32
    %435 = vector.broadcast %cst_417 : f32 to vector<1x12xf32>
    %436 = arith.select %427, %434, %435 : vector<1x12xi1>, vector<1x12xf32>
    %cst_418 = arith.constant dense<0.000000e+00> : vector<1xf32>
    %437 = vector.multi_reduction <add>, %436, %cst_418 [1] : vector<1x12xf32> to vector<1xf32>
    %438 = vector.shape_cast %437 : vector<1xf32> to vector<1x1xf32>
    %439 = arith.addf %422, %431 : vector<1x1xf32>
    %440 = math.log %438 : vector<1x1xf32>
    %441 = arith.addf %439, %440 : vector<1x1xf32>
    %c6_i32_419 = arith.constant 6 : i32
    %442 = vector.broadcast %c6_i32_419 : i32 to vector<1x12xi32>
    %443 = arith.cmpi sge, %420, %442 : vector<1x12xi32>
    %c12_i32 = arith.constant 12 : i32
    %444 = vector.broadcast %c12_i32 : i32 to vector<1x12xi32>
    %445 = arith.cmpi slt, %420, %444 : vector<1x12xi32>
    %446 = arith.andi %443, %445 : vector<1x12xi1>
    %cst_420 = arith.constant -1.000000e+30 : f32
    %447 = vector.broadcast %cst_420 : f32 to vector<1x12xf32>
    %448 = arith.select %446, %410, %447 : vector<1x12xi1>, vector<1x12xf32>
    %cst_421 = arith.constant dense<0xFF800000> : vector<1xf32>
    %449 = vector.multi_reduction <maximumf>, %448, %cst_421 [1] : vector<1x12xf32> to vector<1xf32>
    %450 = vector.shape_cast %449 : vector<1xf32> to vector<1x1xf32>
    %451 = vector.broadcast %450 : vector<1x1xf32> to vector<1x12xf32>
    %452 = arith.subf %410, %451 : vector<1x12xf32>
    %453 = math.exp %452 : vector<1x12xf32>
    %cst_422 = arith.constant 0.000000e+00 : f32
    %454 = vector.broadcast %cst_422 : f32 to vector<1x12xf32>
    %455 = arith.select %446, %453, %454 : vector<1x12xi1>, vector<1x12xf32>
    %cst_423 = arith.constant dense<0.000000e+00> : vector<1xf32>
    %456 = vector.multi_reduction <add>, %455, %cst_423 [1] : vector<1x12xf32> to vector<1xf32>
    %457 = vector.shape_cast %456 : vector<1xf32> to vector<1x1xf32>
    %458 = arith.addf %441, %450 : vector<1x1xf32>
    %459 = math.log %457 : vector<1x1xf32>
    %460 = arith.addf %458, %459 : vector<1x1xf32>
    %c0_424 = arith.constant 0 : index
    %c0_425 = arith.constant 0 : index
    %461 = vector.load %arg13[%c0_424, %c0_425] : memref<1x2xf32, #tpu.memory_space<vmem>>, vector<1x2xf32>
    %cst_426 = arith.constant 0.000000e+00 : f32
    %462 = vector.broadcast %cst_426 : f32 to vector<1x2xf32>
    %463 = arith.maximumf %414, %462 : vector<1x2xf32>
    %464 = arith.mulf %414, %461 : vector<1x2xf32>
    %465 = arith.subf %463, %464 : vector<1x2xf32>
    %466 = math.absf %414 : vector<1x2xf32>
    %cst_427 = arith.constant 0.000000e+00 : f32
    %467 = vector.broadcast %cst_427 : f32 to vector<1x2xf32>
    %468 = arith.subf %467, %466 : vector<1x2xf32>
    %469 = math.exp %468 : vector<1x2xf32>
    %cst_428 = arith.constant 1.000000e+00 : f32
    %470 = vector.broadcast %cst_428 : f32 to vector<1x2xf32>
    %471 = arith.addf %470, %469 : vector<1x2xf32>
    %472 = math.log %471 : vector<1x2xf32>
    %473 = arith.addf %465, %472 : vector<1x2xf32>
    %cst_429 = arith.constant dense<0.000000e+00> : vector<1xf32>
    %474 = vector.multi_reduction <add>, %473, %cst_429 [1] : vector<1x2xf32> to vector<1xf32>
    %475 = vector.shape_cast %474 : vector<1xf32> to vector<1x1xf32>
    %cst_430 = arith.constant 0.899999976 : f32
    %476 = vector.broadcast %cst_430 : f32 to vector<1x1xf32>
    %477 = arith.mulf %476, %460 : vector<1x1xf32>
    %cst_431 = arith.constant 5.000000e-01 : f32
    %478 = vector.broadcast %cst_431 : f32 to vector<1x1xf32>
    %479 = arith.mulf %477, %478 : vector<1x1xf32>
    %cst_432 = arith.constant 1.000000e-01 : f32
    %480 = vector.broadcast %cst_432 : f32 to vector<1x1xf32>
    %481 = arith.mulf %480, %475 : vector<1x1xf32>
    %cst_433 = arith.constant 5.000000e-01 : f32
    %482 = vector.broadcast %cst_433 : f32 to vector<1x1xf32>
    %483 = arith.mulf %481, %482 : vector<1x1xf32>
    %484 = arith.addf %479, %483 : vector<1x1xf32>
    %c0_434 = arith.constant 0 : index
    %c0_435 = arith.constant 0 : index
    %485 = vector.load %arg15[%c0_434, %c0_435] : memref<1x1xf32, #tpu.memory_space<vmem>>, vector<1x1xf32>
    tpu.vector_store %arg15[%c0_434, %c0_435], %484 {strides = array<i32>} : memref<1x1xf32, #tpu.memory_space<vmem>>, vector<1x1xf32>,
    return
  }
}

</mosaic_0001>

<llo_original>
// kernel: net_forward.1
$region0: #{net_forward.1}
  #allocation0 [shape = 'u32[]', space=smem, size = 0x4, offset = 0x4, fixed_abs, tag = 'smem constant byte address 0x4 - core index']
  #allocation1 [shape = 'u32[144,128]{1,0:T(1,128)}', space=vmem, size = 0x12000, scoped, tag = 'internal scratch']
  #allocation2 [shape = 'f32[376,16]{1,0:T(8,128)}', space=vmem, size = 0x2f000, scoped, tag = 'scratch operand']
  #allocation3 [shape = 'f32[192,16]{1,0:T(8,128)}', space=vmem, size = 0x18000, scoped, tag = 'scratch operand']
  #allocation4 [shape = 'f32[192,16]{1,0:T(8,128)}', space=vmem, size = 0x18000, scoped, tag = 'scratch operand']
  %s0 = inlined_call_operand.vmem [shape: f32[128,8], index: 0, kind: input, shape index: {}]
  %s1 = inlined_call_operand.vmem [shape: f32[24,16], index: 1, kind: input, shape index: {}]
  %s2 = inlined_call_operand.vmem [shape: f32[40,16], index: 2, kind: input, shape index: {}]
  %s3 = inlined_call_operand.vmem [shape: f32[56,16], index: 3, kind: input, shape index: {}]
  %s4 = inlined_call_operand.vmem [shape: f32[48,16], index: 4, kind: input, shape index: {}]
  %s5 = inlined_call_operand.vmem [shape: f32[12,48,16], index: 5, kind: input, shape index: {}]
  %s6 = inlined_call_operand.vmem [shape: f32[14,1,16], index: 6, kind: input, shape index: {}]
  %s7 = inlined_call_operand.vmem [shape: f32[14,1,16], index: 7, kind: input, shape index: {}]
  %s8 = inlined_call_operand.vmem [shape: f32[16,12], index: 8, kind: input, shape index: {}]
  %s9 = inlined_call_operand.vmem [shape: f32[1,12], index: 9, kind: input, shape index: {}]
  %s10 = inlined_call_operand.vmem [shape: f32[16,2], index: 10, kind: input, shape index: {}]
  %s11 = inlined_call_operand.vmem [shape: f32[1,2], index: 11, kind: input, shape index: {}]
  %s12 = inlined_call_operand.vmem [shape: f32[1,12], index: 12, kind: input, shape index: {}]
  %s13 = inlined_call_operand.vmem [shape: f32[1,2], index: 13, kind: input, shape index: {}]
  %s14 = inlined_call_operand.vmem [shape: f32[1,12], index: 14, kind: output, shape index: {0}]
  %s15 = inlined_call_operand.hbm [shape: f32[1,1], index: 15, kind: output, shape index: {1}]
  %16 = xla_tuple %s14, %s15
  %s17 = sld [smem:[#allocation0]]
  $region74: #{net_forward.1} parent=0
    _
  %s19 = ssub.s32 1, %s17
  %s20 = scalar_select 0, %s19, %s17
  $region1: #{net_forward.1} parent=0
    #allocation5 [shape = 'u8[512]{0}', space=vmem, size = 0x400, scoped, tag = 'output window, operand 1, single buffered']
    #allocation6 [shape = 's32[1]{0}', space=sflag, size = 0x4, scoped, tag = 'scoped memory for net_forward.1']
    %21 = vsyncpa [#allocation6], 0
    // Predicated region
    $region2: #{net_forward.1} parent=1 // pred_check
      _
    $region3: #{net_forward.1} parent=1 // pred_check_branch
      %23 = sbr.rel (0) target = $region5
    $region4: #{net_forward.1} parent=1 // pred_region
      _
    $region5: #{net_forward.1} parent=1 // pred_fallthru
      _
    // Predicated region
    $region6: #{net_forward.1} parent=1 // pred_check
      _
    $region7: #{net_forward.1} parent=1 // pred_check_branch
      %25 = sbr.rel (0) target = $region9
    $region8: #{net_forward.1} parent=1 // pred_region
      _
    $region9: #{net_forward.1} parent=1 // pred_fallthru
      _
    // Predicated region
    $region10: #{net_forward.1} parent=1 // pred_check
      _
    $region11: #{net_forward.1} parent=1 // pred_check_branch
      %27 = sbr.rel (0) target = $region13
    $region12: #{net_forward.1} parent=1 // pred_region
      _
    $region13: #{net_forward.1} parent=1 // pred_fallthru
      _
    // Predicated region
    $region14: #{net_forward.1} parent=1 // pred_check
      _
    $region15: #{net_forward.1} parent=1 // pred_check_branch
      %29 = sbr.rel (0) target = $region17
    $region16: #{net_forward.1} parent=1 // pred_region
      _
    $region17: #{net_forward.1} parent=1 // pred_fallthru
      _
    // Predicated region
    $region18: #{net_forward.1} parent=1 // pred_check
      _
    $region19: #{net_forward.1} parent=1 // pred_check_branch
      %31 = sbr.rel (0) target = $region21
    $region20: #{net_forward.1} parent=1 // pred_region
      _
    $region21: #{net_forward.1} parent=1 // pred_fallthru
      _
    // Predicated region
    $region22: #{net_forward.1} parent=1 // pred_check
      _
    $region23: #{net_forward.1} parent=1 // pred_check_branch
      %33 = sbr.rel (0) target = $region25
    $region24: #{net_forward.1} parent=1 // pred_region
      _
    $region25: #{net_forward.1} parent=1 // pred_fallthru
      _
    // Predicated region
    $region26: #{net_forward.1} parent=1 // pred_check
      _
    $region27: #{net_forward.1} parent=1 // pred_check_branch
      %35 = sbr.rel (0) target = $region29
    $region28: #{net_forward.1} parent=1 // pred_region
      _
    $region29: #{net_forward.1} parent=1 // pred_fallthru
      _
    // Predicated region
    $region30: #{net_forward.1} parent=1 // pred_check
      _
    $region31: #{net_forward.1} parent=1 // pred_check_branch
      %37 = sbr.rel (0) target = $region33
    $region32: #{net_forward.1} parent=1 // pred_region
      _
    $region33: #{net_forward.1} parent=1 // pred_fallthru
      _
    // Predicated region
    $region34: #{net_forward.1} parent=1 // pred_check
      _
    $region35: #{net_forward.1} parent=1 // pred_check_branch
      %39 = sbr.rel (0) target = $region37
    $region36: #{net_forward.1} parent=1 // pred_region
      _
    $region37: #{net_forward.1} parent=1 // pred_fallthru
      _
    // Predicated region
    $region38: #{net_forward.1} parent=1 // pred_check
      _
    $region39: #{net_forward.1} parent=1 // pred_check_branch
      %41 = sbr.rel (0) target = $region41
    $region40: #{net_forward.1} parent=1 // pred_region
      _
    $region41: #{net_forward.1} parent=1 // pred_fallthru
      _
    // Predicated region
    $region42: #{net_forward.1} parent=1 // pred_check
      _
    $region43: #{net_forward.1} parent=1 // pred_check_branch
      %43 = sbr.rel (0) target = $region45
    $region44: #{net_forward.1} parent=1 // pred_region
      _
    $region45: #{net_forward.1} parent=1 // pred_fallthru
      _
    // Predicated region
    $region46: #{net_forward.1} parent=1 // pred_check
      _
    $region47: #{net_forward.1} parent=1 // pred_check_branch
      %45 = sbr.rel (0) target = $region49
    $region48: #{net_forward.1} parent=1 // pred_region
      _
    $region49: #{net_forward.1} parent=1 // pred_fallthru
      _
    // Predicated region
    $region50: #{net_forward.1} parent=1 // pred_check
      _
    $region51: #{net_forward.1} parent=1 // pred_check_branch
      %47 = sbr.rel (0) target = $region53
    $region52: #{net_forward.1} parent=1 // pred_region
      _
    $region53: #{net_forward.1} parent=1 // pred_fallthru
      _
    // Predicated region
    $region54: #{net_forward.1} parent=1 // pred_check
      _
    $region55: #{net_forward.1} parent=1 // pred_check_branch
      %49 = sbr.rel (0) target = $region57
    $region56: #{net_forward.1} parent=1 // pred_region
      _
    $region57: #{net_forward.1} parent=1 // pred_fallthru
      _
    %vm50 = vcmask 123904
    %51 = vst.msk [vmem:[#allocation2] sm:$0x3] %vm50, 0.0
    %v52 = vld [vmem:[%s0] sm:$0xff]
    %v53 = vld [vmem:[%s0 + $0x8] sm:$0xff]
    %v54 = vld [vmem:[%s0 + $0x10] sm:$0xff]
    %v55 = vld [vmem:[%s0 + $0x18] sm:$0xff]
    %v56 = vld [vmem:[%s0 + $0x20] sm:$0xff]
    %v57 = vld [vmem:[%s0 + $0x28] sm:$0xff]
    %v58 = vld [vmem:[%s0 + $0x30] sm:$0xff]
    %v59 = vld [vmem:[%s0 + $0x38] sm:$0xff]
    %v60 = vld [vmem:[%s0 + $0x40] sm:$0xff]
    %v61 = vld [vmem:[%s0 + $0x48] sm:$0xff]
    %v62 = vld [vmem:[%s0 + $0x50] sm:$0xff]
    %v63 = vld [vmem:[%s0 + $0x58] sm:$0xff]
    %v64 = vld [vmem:[%s0 + $0x60] sm:$0xff]
    %v65 = vld [vmem:[%s0 + $0x68] sm:$0xff]
    %v66 = vld [vmem:[%s0 + $0x70] sm:$0xff]
    %v67 = vld [vmem:[%s0 + $0x78] sm:$0x3f]
    %v68 = vld [vmem:[%s0 + $0x1] sm:$0xff]
    %v69 = vld [vmem:[%s0 + $0x9] sm:$0xff]
    %v70 = vld [vmem:[%s0 + $0x11] sm:$0xff]
    %v71 = vld [vmem:[%s0 + $0x19] sm:$0xff]
    %v72 = vld [vmem:[%s0 + $0x21] sm:$0xff]
    %v73 = vld [vmem:[%s0 + $0x29] sm:$0xff]
    %v74 = vld [vmem:[%s0 + $0x31] sm:$0xff]
    %v75 = vld [vmem:[%s0 + $0x39] sm:$0xff]
    %v76 = vld [vmem:[%s0 + $0x41] sm:$0xff]
    %v77 = vld [vmem:[%s0 + $0x49] sm:$0xff]
    %v78 = vld [vmem:[%s0 + $0x51] sm:$0xff]
    %v79 = vld [vmem:[%s0 + $0x59] sm:$0xff]
    %v80 = vld [vmem:[%s0 + $0x61] sm:$0xff]
    %v81 = vld [vmem:[%s0 + $0x69] sm:$0xff]
    %v82 = vld [vmem:[%s0 + $0x71] sm:$0xff]
    %v83 = vld [vmem:[%s0 + $0x79] sm:$0x3f]
    %v84 = vld [vmem:[%s0 + $0x2] sm:$0xff]
    %v85 = vld [vmem:[%s0 + $0xa] sm:$0xff]
    %v86 = vld [vmem:[%s0 + $0x12] sm:$0xff]
    %v87 = vld [vmem:[%s0 + $0x1a] sm:$0xff]
    %v88 = vld [vmem:[%s0 + $0x22] sm:$0xff]
    %v89 = vld [vmem:[%s0 + $0x2a] sm:$0xff]
    %v90 = vld [vmem:[%s0 + $0x32] sm:$0xff]
    %v91 = vld [vmem:[%s0 + $0x3a] sm:$0xff]
    %v92 = vld [vmem:[%s0 + $0x42] sm:$0xff]
    %v93 = vld [vmem:[%s0 + $0x4a] sm:$0xff]
    %v94 = vld [vmem:[%s0 + $0x52] sm:$0xff]
    %v95 = vld [vmem:[%s0 + $0x5a] sm:$0xff]
    %v96 = vld [vmem:[%s0 + $0x62] sm:$0xff]
    %v97 = vld [vmem:[%s0 + $0x6a] sm:$0xff]
    %v98 = vld [vmem:[%s0 + $0x72] sm:$0xff]
    %v99 = vld [vmem:[%s0 + $0x7a] sm:$0x3f]
    %116 = vrot.lane.b32.xlu0 %v68, 8
    %v117 = vpop.permute.xlu0 %116
    %118 = vrot.lane.b32.xlu0 %v69, 8
    %v119 = vpop.permute.xlu0 %118
    %120 = vrot.lane.b32.xlu0 %v70, 8
    %v121 = vpop.permute.xlu0 %120
    %122 = vrot.lane.b32.xlu0 %v71, 8
    %v123 = vpop.permute.xlu0 %122
    %124 = vrot.lane.b32.xlu0 %v72, 8
    %v125 = vpop.permute.xlu0 %124
    %126 = vrot.lane.b32.xlu0 %v73, 8
    %v127 = vpop.permute.xlu0 %126
    %128 = vrot.lane.b32.xlu0 %v74, 8
    %v129 = vpop.permute.xlu0 %128
    %130 = vrot.lane.b32.xlu0 %v75, 8
    %v131 = vpop.permute.xlu0 %130
    %132 = vrot.lane.b32.xlu0 %v76, 8
    %v133 = vpop.permute.xlu0 %132
    %134 = vrot.lane.b32.xlu0 %v77, 8
    %v135 = vpop.permute.xlu0 %134
    %136 = vrot.lane.b32.xlu0 %v78, 8
    %v137 = vpop.permute.xlu0 %136
    %138 = vrot.lane.b32.xlu0 %v79, 8
    %v139 = vpop.permute.xlu0 %138
    %140 = vrot.lane.b32.xlu0 %v80, 8
    %v141 = vpop.permute.xlu0 %140
    %142 = vrot.lane.b32.xlu0 %v81, 8
    %v143 = vpop.permute.xlu0 %142
    %144 = vrot.lane.b32.xlu0 %v82, 8
    %v145 = vpop.permute.xlu0 %144
    %146 = vrot.lane.b32.xlu0 %v83, 8
    %v147 = vpop.permute.xlu0 %146
    %180 = vrot.lane.b32.xlu0 %v84, 16
    %v181 = vpop.permute.xlu0 %180
    %182 = vrot.lane.b32.xlu0 %v85, 16
    %v183 = vpop.permute.xlu0 %182
    %184 = vrot.lane.b32.xlu0 %v86, 16
    %v185 = vpop.permute.xlu0 %184
    %186 = vrot.lane.b32.xlu0 %v87, 16
    %v187 = vpop.permute.xlu0 %186
    %188 = vrot.lane.b32.xlu0 %v88, 16
    %v189 = vpop.permute.xlu0 %188
    %190 = vrot.lane.b32.xlu0 %v89, 16
    %v191 = vpop.permute.xlu0 %190
    %192 = vrot.lane.b32.xlu0 %v90, 16
    %v193 = vpop.permute.xlu0 %192
    %194 = vrot.lane.b32.xlu0 %v91, 16
    %v195 = vpop.permute.xlu0 %194
    %196 = vrot.lane.b32.xlu0 %v92, 16
    %v197 = vpop.permute.xlu0 %196
    %198 = vrot.lane.b32.xlu0 %v93, 16
    %v199 = vpop.permute.xlu0 %198
    %200 = vrot.lane.b32.xlu0 %v94, 16
    %v201 = vpop.permute.xlu0 %200
    %202 = vrot.lane.b32.xlu0 %v95, 16
    %v203 = vpop.permute.xlu0 %202
    %204 = vrot.lane.b32.xlu0 %v96, 16
    %v205 = vpop.permute.xlu0 %204
    %206 = vrot.lane.b32.xlu0 %v97, 16
    %v207 = vpop.permute.xlu0 %206
    %208 = vrot.lane.b32.xlu0 %v98, 16
    %v209 = vpop.permute.xlu0 %208
    %210 = vrot.lane.b32.xlu0 %v99, 16
    %v211 = vpop.permute.xlu0 %210
    %vm228 = vcmask 64512
    %v229 = vsel %vm228, %v52, %v117
    %v230 = vsel %vm228, %v53, %v119
    %v231 = vsel %vm228, %v54, %v121
    %v232 = vsel %vm228, %v55, %v123
    %v233 = vsel %vm228, %v56, %v125
    %v234 = vsel %vm228, %v57, %v127
    %v235 = vsel %vm228, %v58, %v129
    %v236 = vsel %vm228, %v59, %v131
    %v237 = vsel %vm228, %v60, %v133
    %v238 = vsel %vm228, %v61, %v135
    %v239 = vsel %vm228, %v62, %v137
    %v240 = vsel %vm228, %v63, %v139
    %v241 = vsel %vm228, %v64, %v141
    %v242 = vsel %vm228, %v65, %v143
    %v243 = vsel %vm228, %v66, %v145
    %v244 = vsel %vm228, %v67, %v147
    %vm245 = vcmask 130048
    %v246 = vsel %vm245, %v229, %v181
    %v247 = vsel %vm245, %v230, %v183
    %v248 = vsel %vm245, %v231, %v185
    %v249 = vsel %vm245, %v232, %v187
    %v250 = vsel %vm245, %v233, %v189
    %v251 = vsel %vm245, %v234, %v191
    %v252 = vsel %vm245, %v235, %v193
    %v253 = vsel %vm245, %v236, %v195
    %v254 = vsel %vm245, %v237, %v197
    %v255 = vsel %vm245, %v238, %v199
    %v256 = vsel %vm245, %v239, %v201
    %v257 = vsel %vm245, %v240, %v203
    %v258 = vsel %vm245, %v241, %v205
    %v259 = vsel %vm245, %v242, %v207
    %v260 = vsel %vm245, %v243, %v209
    %v261 = vsel %vm245, %v244, %v211
    %v262 = vld [vmem:[%s1] sm:$0xff]
    %v263 = vld [vmem:[%s1 + $0x8] sm:$0xff]
    %v264 = vld [vmem:[%s1 + $0x10] sm:$0xff]
    %vm265 = vcmask 195584
    %v267 = vsel %vm265, %v246, 0
    %v270 = vsel %vm265, %v247, 0
    %v273 = vsel %vm265, %v248, 0
    %v276 = vsel %vm265, %v249, 0
    %v279 = vsel %vm265, %v250, 0
    %v282 = vsel %vm265, %v251, 0
    %v285 = vsel %vm265, %v252, 0
    %v288 = vsel %vm265, %v253, 0
    %v291 = vsel %vm265, %v254, 0
    %v294 = vsel %vm265, %v255, 0
    %v297 = vsel %vm265, %v256, 0
    %v300 = vsel %vm265, %v257, 0
    %v303 = vsel %vm265, %v258, 0
    %v306 = vsel %vm265, %v259, 0
    %v309 = vsel %vm265, %v260, 0
    %v312 = vsel %vm265, %v261, 0
    %314 = vmatprep.subr.mxu0 0.0
    %315 = vmatpush1.msra.mxu0 %v262
    %316 = vmatprep.subr.mxu0 0.0
    %317 = vmatpush1.msra.mxu0 %v263
    %318 = vmatprep.subr.mxu0 0.0
    %319 = vmatpush1.msra.mxu0 %v264
    %320 = vmatprep.subr.mxu0 0.0
    %321 = vmatpush1.msra.mxu0 0.0
    %322 = vmatprep.subr.mxu0 0.0
    %323 = vmatpush1.msra.mxu0 0.0
    %324 = vmatprep.subr.mxu0 0.0
    %325 = vmatpush1.msra.mxu0 0.0
    %326 = vmatprep.subr.mxu0 0.0
    %327 = vmatpush1.msra.mxu0 0.0
    %328 = vmatprep.subr.mxu0 0.0
    %329 = vmatpush1.msra.mxu0 0.0
    %330 = vmatprep.subr.mxu0 0.0
    %331 = vmatpush1.msra.mxu0 0.0
    %332 = vmatprep.subr.mxu0 0.0
    %333 = vmatpush1.msra.mxu0 0.0
    %334 = vmatprep.subr.mxu0 0.0
    %335 = vmatpush1.msra.mxu0 0.0
    %336 = vmatprep.subr.mxu0 0.0
    %337 = vmatpush1.msra.mxu0 0.0
    %338 = vmatprep.subr.mxu0 0.0
    %339 = vmatpush1.msra.mxu0 0.0
    %340 = vmatprep.subr.mxu0 0.0
    %341 = vmatpush1.msra.mxu0 0.0
    %342 = vmatprep.subr.mxu0 0.0
    %343 = vmatpush1.msra.mxu0 0.0
    %344 = vmatprep.subr.mxu0 0.0
    %345 = vmatpush1.msra.mxu0 0.0
    %346 = vmatprep.subr.mxu0 0.0
    %347 = vmatpush1.msra.mxu0 0.0
    %348 = vmatprep.subr.mxu0 0.0
    %349 = vmatpush1.msra.mxu0 0.0
    %350 = vmatprep.subr.mxu0 0.0
    %351 = vmatpush1.msra.mxu0 0.0
    %352 = vmatprep.subr.mxu0 0.0
    %353 = vmatpush1.msra.mxu0 0.0
    %354 = vmatprep.subr.mxu0 0.0
    %355 = vmatpush1.msra.mxu0 0.0
    %356 = vmatprep.subr.mxu0 0.0
    %357 = vmatpush1.msra.mxu0 0.0
    %358 = vmatprep.subr.mxu0 0.0
    %359 = vmatpush1.msra.mxu0 0.0
    %360 = vmatprep.subr.mxu0 0.0
    %361 = vmatpush1.msra.mxu0 0.0
    %362 = vmatprep.subr.mxu0 0.0
    %363 = vmatpush1.msra.mxu0 0.0
    %364 = vmatprep.subr.mxu0 0.0
    %365 = vmatpush1.msra.mxu0 0.0
    %366 = vmatprep.subr.mxu0 0.0
    %367 = vmatpush1.msra.mxu0 0.0
    %368 = vmatprep.subr.mxu0 0.0
    %369 = vmatpush1.msra.mxu0 0.0
    %370 = vmatprep.subr.mxu0 0.0
    %371 = vmatpush1.msra.mxu0 0.0
    %372 = vmatprep.subr.mxu0 0.0
    %373 = vmatpush1.msra.mxu0 0.0
    %374 = vmatprep.subr.mxu0 0.0
    %375 = vmatpush1.msra.mxu0 0.0
    %376 = vmatprep.subr.mxu0 0.0
    %377 = vmatpush1.msra.mxu0 0.0
    %378 = vmatprep.mubr.f32.mxu0 0.0
    %379 = vmatmul.mubr.f32.gmra.mrb[0].mxu0 %v267
    %v380 = vpop.f32.mrb[0].mxu0
    %v381 = vadd.f32 0.0, %v380
    %v382 = vpop.f32.mrb[0].mxu0
    %383 = vmatprep.mubr.f32.mxu0 0.0
    %384 = vmatmul.mubr.f32.gmra.mrb[0].mxu0 %v270
    %v385 = vpop.f32.mrb[0].mxu0
    %v386 = vadd.f32 0.0, %v385
    %v387 = vpop.f32.mrb[0].mxu0
    %388 = vmatprep.mubr.f32.mxu0 0.0
    %389 = vmatmul.mubr.f32.gmra.mrb[0].mxu0 %v273
    %v390 = vpop.f32.mrb[0].mxu0
    %v391 = vadd.f32 0.0, %v390
    %v392 = vpop.f32.mrb[0].mxu0
    %393 = vmatprep.mubr.f32.mxu0 0.0
    %394 = vmatmul.mubr.f32.gmra.mrb[0].mxu0 %v276
    %v395 = vpop.f32.mrb[0].mxu0
    %v396 = vadd.f32 0.0, %v395
    %v397 = vpop.f32.mrb[0].mxu0
    %398 = vmatprep.mubr.f32.mxu0 0.0
    %399 = vmatmul.mubr.f32.gmra.mrb[0].mxu0 %v279
    %v400 = vpop.f32.mrb[0].mxu0
    %v401 = vadd.f32 0.0, %v400
    %v402 = vpop.f32.mrb[0].mxu0
    %403 = vmatprep.mubr.f32.mxu0 0.0
    %404 = vmatmul.mubr.f32.gmra.mrb[0].mxu0 %v282
    %v405 = vpop.f32.mrb[0].mxu0
    %v406 = vadd.f32 0.0, %v405
    %v407 = vpop.f32.mrb[0].mxu0
    %408 = vmatprep.mubr.f32.mxu0 0.0
    %409 = vmatmul.mubr.f32.gmra.mrb[0].mxu0 %v285
    %v410 = vpop.f32.mrb[0].mxu0
    %v411 = vadd.f32 0.0, %v410
    %v412 = vpop.f32.mrb[0].mxu0
    %413 = vmatprep.mubr.f32.mxu0 0.0
    %414 = vmatmul.mubr.f32.gmra.mrb[0].mxu0 %v288
    %v415 = vpop.f32.mrb[0].mxu0
    %v416 = vadd.f32 0.0, %v415
    %v417 = vpop.f32.mrb[0].mxu0
    %418 = vmatprep.mubr.f32.mxu0 0.0
    %419 = vmatmul.mubr.f32.gmra.mrb[0].mxu0 %v291
    %v420 = vpop.f32.mrb[0].mxu0
    %v421 = vadd.f32 0.0, %v420
    %v422 = vpop.f32.mrb[0].mxu0
    %423 = vmatprep.mubr.f32.mxu0 0.0
    %424 = vmatmul.mubr.f32.gmra.mrb[0].mxu0 %v294
    %v425 = vpop.f32.mrb[0].mxu0
    %v426 = vadd.f32 0.0, %v425
    %v427 = vpop.f32.mrb[0].mxu0
    %428 = vmatprep.mubr.f32.mxu0 0.0
    %429 = vmatmul.mubr.f32.gmra.mrb[0].mxu0 %v297
    %v430 = vpop.f32.mrb[0].mxu0
    %v431 = vadd.f32 0.0, %v430
    %v432 = vpop.f32.mrb[0].mxu0
    %433 = vmatprep.mubr.f32.mxu0 0.0
    %434 = vmatmul.mubr.f32.gmra.mrb[0].mxu0 %v300
    %v435 = vpop.f32.mrb[0].mxu0
    %v436 = vadd.f32 0.0, %v435
    %v437 = vpop.f32.mrb[0].mxu0
    %438 = vmatprep.mubr.f32.mxu0 0.0
    %439 = vmatmul.mubr.f32.gmra.mrb[0].mxu0 %v303
    %v440 = vpop.f32.mrb[0].mxu0
    %v441 = vadd.f32 0.0, %v440
    %v442 = vpop.f32.mrb[0].mxu0
    %443 = vmatprep.mubr.f32.mxu0 0.0
    %444 = vmatmul.mubr.f32.gmra.mrb[0].mxu0 %v306
    %v445 = vpop.f32.mrb[0].mxu0
    %v446 = vadd.f32 0.0, %v445
    %v447 = vpop.f32.mrb[0].mxu0
    %448 = vmatprep.mubr.f32.mxu0 0.0
    %449 = vmatmul.mubr.f32.gmra.mrb[0].mxu0 %v309
    %v450 = vpop.f32.mrb[0].mxu0
    %v451 = vadd.f32 0.0, %v450
    %v452 = vpop.f32.mrb[0].mxu0
    %453 = vmatprep.mubr.f32.mxu0 0.0
    %454 = vmatmul.mubr.f32.gmra.mrb[0].mxu0 %v312
    %v455 = vpop.f32.mrb[0].mxu0
    %v456 = vadd.f32 0.0, %v455
    %v457 = vpop.f32.mrb[0].mxu0
    %458 = vdwg.mxu0
    %v459 = vld [vmem:[%s6] sm:$0x1]
    %v461 = vlaneseq
    %v462 = vshrl.u32 %v461, 7
    %v463 = vsub.s32 0, %v462
    %v464 = vrot.slane %v459, %v463
    %v466 = vmul.f32 %v381, %v464
    %v467 = vmul.f32 %v386, %v464
    %v468 = vmul.f32 %v391, %v464
    %v469 = vmul.f32 %v396, %v464
    %v470 = vmul.f32 %v401, %v464
    %v471 = vmul.f32 %v406, %v464
    %v472 = vmul.f32 %v411, %v464
    %v473 = vmul.f32 %v416, %v464
    %v474 = vmul.f32 %v421, %v464
    %v475 = vmul.f32 %v426, %v464
    %v476 = vmul.f32 %v431, %v464
    %v477 = vmul.f32 %v436, %v464
    %v478 = vmul.f32 %v441, %v464
    %v479 = vmul.f32 %v446, %v464
    %v480 = vmul.f32 %v451, %v464
    %v481 = vmul.f32 %v456, %v464
    %v482 = vld [vmem:[%s7] sm:$0x1]
    %v484 = vlaneseq
    %v485 = vshrl.u32 %v484, 7
    %v486 = vsub.s32 0, %v485
    %v487 = vrot.slane %v482, %v486
    %v489 = vadd.f32 %v466, %v487
    %v490 = vadd.f32 %v467, %v487
    %v491 = vadd.f32 %v468, %v487
    %v492 = vadd.f32 %v469, %v487
    %v493 = vadd.f32 %v470, %v487
    %v494 = vadd.f32 %v471, %v487
    %v495 = vadd.f32 %v472, %v487
    %v496 = vadd.f32 %v473, %v487
    %v497 = vadd.f32 %v474, %v487
    %v498 = vadd.f32 %v475, %v487
    %v499 = vadd.f32 %v476, %v487
    %v500 = vadd.f32 %v477, %v487
    %v501 = vadd.f32 %v478, %v487
    %v502 = vadd.f32 %v479, %v487
    %v503 = vadd.f32 %v480, %v487
    %v504 = vadd.f32 %v481, %v487
    %vm505 = vcmp.ge.f32.partialorder %v489, 0.0
    %vm506 = vcmp.ge.f32.partialorder %v490, 0.0
    %vm507 = vcmp.ge.f32.partialorder %v491, 0.0
    %vm508 = vcmp.ge.f32.partialorder %v492, 0.0
    %vm509 = vcmp.ge.f32.partialorder %v493, 0.0
    %vm510 = vcmp.ge.f32.partialorder %v494, 0.0
    %vm511 = vcmp.ge.f32.partialorder %v495, 0.0
    %vm512 = vcmp.ge.f32.partialorder %v496, 0.0
    %vm513 = vcmp.ge.f32.partialorder %v497, 0.0
    %vm514 = vcmp.ge.f32.partialorder %v498, 0.0
    %vm515 = vcmp.ge.f32.partialorder %v499, 0.0
    %vm516 = vcmp.ge.f32.partialorder %v500, 0.0
    %vm517 = vcmp.ge.f32.partialorder %v501, 0.0
    %vm518 = vcmp.ge.f32.partialorder %v502, 0.0
    %vm519 = vcmp.ge.f32.partialorder %v503, 0.0
    %vm520 = vcmp.ge.f32.partialorder %v504, 0.0
    %v521 = vmul.f32 %v489, 0.01
    %v522 = vmul.f32 %v490, 0.01
    %v523 = vmul.f32 %v491, 0.01
    %v524 = vmul.f32 %v492, 0.01
    %v525 = vmul.f32 %v493, 0.01
    %v526 = vmul.f32 %v494, 0.01
    %v527 = vmul.f32 %v495, 0.01
    %v528 = vmul.f32 %v496, 0.01
    %v529 = vmul.f32 %v497, 0.01
    %v530 = vmul.f32 %v498, 0.01
    %v531 = vmul.f32 %v499, 0.01
    %v532 = vmul.f32 %v500, 0.01
    %v533 = vmul.f32 %v501, 0.01
    %v534 = vmul.f32 %v502, 0.01
    %v535 = vmul.f32 %v503, 0.01
    %v536 = vmul.f32 %v504, 0.01
    %v537 = vsel %vm505, %v489, %v521
    %v538 = vsel %vm506, %v490, %v522
    %v539 = vsel %vm507, %v491, %v523
    %v540 = vsel %vm508, %v492, %v524
    %v541 = vsel %vm509, %v493, %v525
    %v542 = vsel %vm510, %v494, %v526
    %v543 = vsel %vm511, %v495, %v527
    %v544 = vsel %vm512, %v496, %v528
    %v545 = vsel %vm513, %v497, %v529
    %v546 = vsel %vm514, %v498, %v530
    %v547 = vsel %vm515, %v499, %v531
    %v548 = vsel %vm516, %v500, %v532
    %v549 = vsel %vm517, %v501, %v533
    %v550 = vsel %vm518, %v502, %v534
    %v551 = vsel %vm519, %v503, %v535
    %v552 = vsel %vm520, %v504, %v536
    %553 = vst.msk [vmem:[#allocation2 + $0x2] sm:$0xff] %vm245, %v537
    %554 = vst.msk [vmem:[#allocation2 + $0xa] sm:$0xff] %vm245, %v538
    %555 = vst.msk [vmem:[#allocation2 + $0x12] sm:$0xff] %vm245, %v539
    %556 = vst.msk [vmem:[#allocation2 + $0x1a] sm:$0xff] %vm245, %v540
    %557 = vst.msk [vmem:[#allocation2 + $0x22] sm:$0xff] %vm245, %v541
    %558 = vst.msk [vmem:[#allocation2 + $0x2a] sm:$0xff] %vm245, %v542
    %559 = vst.msk [vmem:[#allocation2 + $0x32] sm:$0xff] %vm245, %v543
    %560 = vst.msk [vmem:[#allocation2 + $0x3a] sm:$0xff] %vm245, %v544
    %561 = vst.msk [vmem:[#allocation2 + $0x42] sm:$0xff] %vm245, %v545
    %562 = vst.msk [vmem:[#allocation2 + $0x4a] sm:$0xff] %vm245, %v546
    %563 = vst.msk [vmem:[#allocation2 + $0x52] sm:$0xff] %vm245, %v547
    %564 = vst.msk [vmem:[#allocation2 + $0x5a] sm:$0xff] %vm245, %v548
    %565 = vst.msk [vmem:[#allocation2 + $0x62] sm:$0xff] %vm245, %v549
    %566 = vst.msk [vmem:[#allocation2 + $0x6a] sm:$0xff] %vm245, %v550
    %567 = vst.msk [vmem:[#allocation2 + $0x72] sm:$0xff] %vm245, %v551
    %vm568 = vcmask 128000
    %569 = vst.msk [vmem:[#allocation2 + $0x7a] sm:$0x3f] %vm568, %v552
    %v570 = vld [vmem:[%s0] sm:$0xff]
    %v571 = vld [vmem:[%s0 + $0x8] sm:$0xff]
    %v572 = vld [vmem:[%s0 + $0x10] sm:$0xff]
    %v573 = vld [vmem:[%s0 + $0x18] sm:$0xff]
    %v574 = vld [vmem:[%s0 + $0x20] sm:$0xff]
    %v575 = vld [vmem:[%s0 + $0x28] sm:$0xff]
    %v576 = vld [vmem:[%s0 + $0x30] sm:$0xff]
    %v577 = vld [vmem:[%s0 + $0x38] sm:$0xff]
    %v578 = vld [vmem:[%s0 + $0x40] sm:$0xff]
    %v579 = vld [vmem:[%s0 + $0x48] sm:$0xff]
    %v580 = vld [vmem:[%s0 + $0x50] sm:$0xff]
    %v581 = vld [vmem:[%s0 + $0x58] sm:$0xff]
    %v582 = vld [vmem:[%s0 + $0x60] sm:$0xff]
    %v583 = vld [vmem:[%s0 + $0x68] sm:$0xff]
    %v584 = vld [vmem:[%s0 + $0x70] sm:$0xff]
    %v585 = vld [vmem:[%s0 + $0x78] sm:$0xf]
    %v586 = vld [vmem:[%s0 + $0x1] sm:$0xff]
    %v587 = vld [vmem:[%s0 + $0x9] sm:$0xff]
    %v588 = vld [vmem:[%s0 + $0x11] sm:$0xff]
    %v589 = vld [vmem:[%s0 + $0x19] sm:$0xff]
    %v590 = vld [vmem:[%s0 + $0x21] sm:$0xff]
    %v591 = vld [vmem:[%s0 + $0x29] sm:$0xff]
    %v592 = vld [vmem:[%s0 + $0x31] sm:$0xff]
    %v593 = vld [vmem:[%s0 + $0x39] sm:$0xff]
    %v594 = vld [vmem:[%s0 + $0x41] sm:$0xff]
    %v595 = vld [vmem:[%s0 + $0x49] sm:$0xff]
    %v596 = vld [vmem:[%s0 + $0x51] sm:$0xff]
    %v597 = vld [vmem:[%s0 + $0x59] sm:$0xff]
    %v598 = vld [vmem:[%s0 + $0x61] sm:$0xff]
    %v599 = vld [vmem:[%s0 + $0x69] sm:$0xff]
    %v600 = vld [vmem:[%s0 + $0x71] sm:$0xff]
    %v601 = vld [vmem:[%s0 + $0x79] sm:$0xf]
    %v602 = vld [vmem:[%s0 + $0x2] sm:$0xff]
    %v603 = vld [vmem:[%s0 + $0xa] sm:$0xff]
    %v604 = vld [vmem:[%s0 + $0x12] sm:$0xff]
    %v605 = vld [vmem:[%s0 + $0x1a] sm:$0xff]
    %v606 = vld [vmem:[%s0 + $0x22] sm:$0xff]
    %v607 = vld [vmem:[%s0 + $0x2a] sm:$0xff]
    %v608 = vld [vmem:[%s0 + $0x32] sm:$0xff]
    %v609 = vld [vmem:[%s0 + $0x3a] sm:$0xff]
    %v610 = vld [vmem:[%s0 + $0x42] sm:$0xff]
    %v611 = vld [vmem:[%s0 + $0x4a] sm:$0xff]
    %v612 = vld [vmem:[%s0 + $0x52] sm:$0xff]
    %v613 = vld [vmem:[%s0 + $0x5a] sm:$0xff]
    %v614 = vld [vmem:[%s0 + $0x62] sm:$0xff]
    %v615 = vld [vmem:[%s0 + $0x6a] sm:$0xff]
    %v616 = vld [vmem:[%s0 + $0x72] sm:$0xff]
    %v617 = vld [vmem:[%s0 + $0x7a] sm:$0xf]
    %v618 = vld [vmem:[%s0 + $0x3] sm:$0xff]
    %v619 = vld [vmem:[%s0 + $0xb] sm:$0xff]
    %v620 = vld [vmem:[%s0 + $0x13] sm:$0xff]
    %v621 = vld [vmem:[%s0 + $0x1b] sm:$0xff]
    %v622 = vld [vmem:[%s0 + $0x23] sm:$0xff]
    %v623 = vld [vmem:[%s0 + $0x2b] sm:$0xff]
    %v624 = vld [vmem:[%s0 + $0x33] sm:$0xff]
    %v625 = vld [vmem:[%s0 + $0x3b] sm:$0xff]
    %v626 = vld [vmem:[%s0 + $0x43] sm:$0xff]
    %v627 = vld [vmem:[%s0 + $0x4b] sm:$0xff]
    %v628 = vld [vmem:[%s0 + $0x53] sm:$0xff]
    %v629 = vld [vmem:[%s0 + $0x5b] sm:$0xff]
    %v630 = vld [vmem:[%s0 + $0x63] sm:$0xff]
    %v631 = vld [vmem:[%s0 + $0x6b] sm:$0xff]
    %v632 = vld [vmem:[%s0 + $0x73] sm:$0xff]
    %v633 = vld [vmem:[%s0 + $0x7b] sm:$0xf]
    %v634 = vld [vmem:[%s0 + $0x4] sm:$0xff]
    %v635 = vld [vmem:[%s0 + $0xc] sm:$0xff]
    %v636 = vld [vmem:[%s0 + $0x14] sm:$0xff]
    %v637 = vld [vmem:[%s0 + $0x1c] sm:$0xff]
    %v638 = vld [vmem:[%s0 + $0x24] sm:$0xff]
    %v639 = vld [vmem:[%s0 + $0x2c] sm:$0xff]
    %v640 = vld [vmem:[%s0 + $0x34] sm:$0xff]
    %v641 = vld [vmem:[%s0 + $0x3c] sm:$0xff]
    %v642 = vld [vmem:[%s0 + $0x44] sm:$0xff]
    %v643 = vld [vmem:[%s0 + $0x4c] sm:$0xff]
    %v644 = vld [vmem:[%s0 + $0x54] sm:$0xff]
    %v645 = vld [vmem:[%s0 + $0x5c] sm:$0xff]
    %v646 = vld [vmem:[%s0 + $0x64] sm:$0xff]
    %v647 = vld [vmem:[%s0 + $0x6c] sm:$0xff]
    %v648 = vld [vmem:[%s0 + $0x74] sm:$0xff]
    %v649 = vld [vmem:[%s0 + $0x7c] sm:$0xf]
    %666 = vrot.lane.b32.xlu0 %v586, 8
    %v667 = vpop.permute.xlu0 %666
    %668 = vrot.lane.b32.xlu0 %v587, 8
    %v669 = vpop.permute.xlu0 %668
    %670 = vrot.lane.b32.xlu0 %v588, 8
    %v671 = vpop.permute.xlu0 %670
    %672 = vrot.lane.b32.xlu0 %v589, 8
    %v673 = vpop.permute.xlu0 %672
    %674 = vrot.lane.b32.xlu0 %v590, 8
    %v675 = vpop.permute.xlu0 %674
    %676 = vrot.lane.b32.xlu0 %v591, 8
    %v677 = vpop.permute.xlu0 %676
    %678 = vrot.lane.b32.xlu0 %v592, 8
    %v679 = vpop.permute.xlu0 %678
    %680 = vrot.lane.b32.xlu0 %v593, 8
    %v681 = vpop.permute.xlu0 %680
    %682 = vrot.lane.b32.xlu0 %v594, 8
    %v683 = vpop.permute.xlu0 %682
    %684 = vrot.lane.b32.xlu0 %v595, 8
    %v685 = vpop.permute.xlu0 %684
    %686 = vrot.lane.b32.xlu0 %v596, 8
    %v687 = vpop.permute.xlu0 %686
    %688 = vrot.lane.b32.xlu0 %v597, 8
    %v689 = vpop.permute.xlu0 %688
    %690 = vrot.lane.b32.xlu0 %v598, 8
    %v691 = vpop.permute.xlu0 %690
    %692 = vrot.lane.b32.xlu0 %v599, 8
    %v693 = vpop.permute.xlu0 %692
    %694 = vrot.lane.b32.xlu0 %v600, 8
    %v695 = vpop.permute.xlu0 %694
    %696 = vrot.lane.b32.xlu0 %v601, 8
    %v697 = vpop.permute.xlu0 %696
    %730 = vrot.lane.b32.xlu0 %v602, 16
    %v731 = vpop.permute.xlu0 %730
    %732 = vrot.lane.b32.xlu0 %v603, 16
    %v733 = vpop.permute.xlu0 %732
    %734 = vrot.lane.b32.xlu0 %v604, 16
    %v735 = vpop.permute.xlu0 %734
    %736 = vrot.lane.b32.xlu0 %v605, 16
    %v737 = vpop.permute.xlu0 %736
    %738 = vrot.lane.b32.xlu0 %v606, 16
    %v739 = vpop.permute.xlu0 %738
    %740 = vrot.lane.b32.xlu0 %v607, 16
    %v741 = vpop.permute.xlu0 %740
    %742 = vrot.lane.b32.xlu0 %v608, 16
    %v743 = vpop.permute.xlu0 %742
    %744 = vrot.lane.b32.xlu0 %v609, 16
    %v745 = vpop.permute.xlu0 %744
    %746 = vrot.lane.b32.xlu0 %v610, 16
    %v747 = vpop.permute.xlu0 %746
    %748 = vrot.lane.b32.xlu0 %v611, 16
    %v749 = vpop.permute.xlu0 %748
    %750 = vrot.lane.b32.xlu0 %v612, 16
    %v751 = vpop.permute.xlu0 %750
    %752 = vrot.lane.b32.xlu0 %v613, 16
    %v753 = vpop.permute.xlu0 %752
    %754 = vrot.lane.b32.xlu0 %v614, 16
    %v755 = vpop.permute.xlu0 %754
    %756 = vrot.lane.b32.xlu0 %v615, 16
    %v757 = vpop.permute.xlu0 %756
    %758 = vrot.lane.b32.xlu0 %v616, 16
    %v759 = vpop.permute.xlu0 %758
    %760 = vrot.lane.b32.xlu0 %v617, 16
    %v761 = vpop.permute.xlu0 %760
    %794 = vrot.lane.b32.xlu0 %v618, 24
    %v795 = vpop.permute.xlu0 %794
    %796 = vrot.lane.b32.xlu0 %v619, 24
    %v797 = vpop.permute.xlu0 %796
    %798 = vrot.lane.b32.xlu0 %v620, 24
    %v799 = vpop.permute.xlu0 %798
    %800 = vrot.lane.b32.xlu0 %v621, 24
    %v801 = vpop.permute.xlu0 %800
    %802 = vrot.lane.b32.xlu0 %v622, 24
    %v803 = vpop.permute.xlu0 %802
    %804 = vrot.lane.b32.xlu0 %v623, 24
    %v805 = vpop.permute.xlu0 %804
    %806 = vrot.lane.b32.xlu0 %v624, 24
    %v807 = vpop.permute.xlu0 %806
    %808 = vrot.lane.b32.xlu0 %v625, 24
    %v809 = vpop.permute.xlu0 %808
    %810 = vrot.lane.b32.xlu0 %v626, 24
    %v811 = vpop.permute.xlu0 %810
    %812 = vrot.lane.b32.xlu0 %v627, 24
    %v813 = vpop.permute.xlu0 %812
    %814 = vrot.lane.b32.xlu0 %v628, 24
    %v815 = vpop.permute.xlu0 %814
    %816 = vrot.lane.b32.xlu0 %v629, 24
    %v817 = vpop.permute.xlu0 %816
    %818 = vrot.lane.b32.xlu0 %v630, 24
    %v819 = vpop.permute.xlu0 %818
    %820 = vrot.lane.b32.xlu0 %v631, 24
    %v821 = vpop.permute.xlu0 %820
    %822 = vrot.lane.b32.xlu0 %v632, 24
    %v823 = vpop.permute.xlu0 %822
    %824 = vrot.lane.b32.xlu0 %v633, 24
    %v825 = vpop.permute.xlu0 %824
    %858 = vrot.lane.b32.xlu0 %v634, 32
    %v859 = vpop.permute.xlu0 %858
    %860 = vrot.lane.b32.xlu0 %v635, 32
    %v861 = vpop.permute.xlu0 %860
    %862 = vrot.lane.b32.xlu0 %v636, 32
    %v863 = vpop.permute.xlu0 %862
    %864 = vrot.lane.b32.xlu0 %v637, 32
    %v865 = vpop.permute.xlu0 %864
    %866 = vrot.lane.b32.xlu0 %v638, 32
    %v867 = vpop.permute.xlu0 %866
    %868 = vrot.lane.b32.xlu0 %v639, 32
    %v869 = vpop.permute.xlu0 %868
    %870 = vrot.lane.b32.xlu0 %v640, 32
    %v871 = vpop.permute.xlu0 %870
    %872 = vrot.lane.b32.xlu0 %v641, 32
    %v873 = vpop.permute.xlu0 %872
    %874 = vrot.lane.b32.xlu0 %v642, 32
    %v875 = vpop.permute.xlu0 %874
    %876 = vrot.lane.b32.xlu0 %v643, 32
    %v877 = vpop.permute.xlu0 %876
    %878 = vrot.lane.b32.xlu0 %v644, 32
    %v879 = vpop.permute.xlu0 %878
    %880 = vrot.lane.b32.xlu0 %v645, 32
    %v881 = vpop.permute.xlu0 %880
    %882 = vrot.lane.b32.xlu0 %v646, 32
    %v883 = vpop.permute.xlu0 %882
    %884 = vrot.lane.b32.xlu0 %v647, 32
    %v885 = vpop.permute.xlu0 %884
    %886 = vrot.lane.b32.xlu0 %v648, 32
    %v887 = vpop.permute.xlu0 %886
    %888 = vrot.lane.b32.xlu0 %v649, 32
    %v889 = vpop.permute.xlu0 %888
    %v906 = vsel %vm228, %v570, %v667
    %v907 = vsel %vm228, %v571, %v669
    %v908 = vsel %vm228, %v572, %v671
    %v909 = vsel %vm228, %v573, %v673
    %v910 = vsel %vm228, %v574, %v675
    %v911 = vsel %vm228, %v575, %v677
    %v912 = vsel %vm228, %v576, %v679
    %v913 = vsel %vm228, %v577, %v681
    %v914 = vsel %vm228, %v578, %v683
    %v915 = vsel %vm228, %v579, %v685
    %v916 = vsel %vm228, %v580, %v687
    %v917 = vsel %vm228, %v581, %v689
    %v918 = vsel %vm228, %v582, %v691
    %v919 = vsel %vm228, %v583, %v693
    %v920 = vsel %vm228, %v584, %v695
    %v921 = vsel %vm228, %v585, %v697
    %v922 = vsel %vm245, %v906, %v731
    %v923 = vsel %vm245, %v907, %v733
    %v924 = vsel %vm245, %v908, %v735
    %v925 = vsel %vm245, %v909, %v737
    %v926 = vsel %vm245, %v910, %v739
    %v927 = vsel %vm245, %v911, %v741
    %v928 = vsel %vm245, %v912, %v743
    %v929 = vsel %vm245, %v913, %v745
    %v930 = vsel %vm245, %v914, %v747
    %v931 = vsel %vm245, %v915, %v749
    %v932 = vsel %vm245, %v916, %v751
    %v933 = vsel %vm245, %v917, %v753
    %v934 = vsel %vm245, %v918, %v755
    %v935 = vsel %vm245, %v919, %v757
    %v936 = vsel %vm245, %v920, %v759
    %v937 = vsel %vm245, %v921, %v761
    %v938 = vsel %vm265, %v922, %v795
    %v939 = vsel %vm265, %v923, %v797
    %v940 = vsel %vm265, %v924, %v799
    %v941 = vsel %vm265, %v925, %v801
    %v942 = vsel %vm265, %v926, %v803
    %v943 = vsel %vm265, %v927, %v805
    %v944 = vsel %vm265, %v928, %v807
    %v945 = vsel %vm265, %v929, %v809
    %v946 = vsel %vm265, %v930, %v811
    %v947 = vsel %vm265, %v931, %v813
    %v948 = vsel %vm265, %v932, %v815
    %v949 = vsel %vm265, %v933, %v817
    %v950 = vsel %vm265, %v934, %v819
    %v951 = vsel %vm265, %v935, %v821
    %v952 = vsel %vm265, %v936, %v823
    %v953 = vsel %vm265, %v937, %v825
    %vm954 = vcmask 261120
    %v955 = vsel %vm954, %v938, %v859
    %v956 = vsel %vm954, %v939, %v861
    %v957 = vsel %vm954, %v940, %v863
    %v958 = vsel %vm954, %v941, %v865
    %v959 = vsel %vm954, %v942, %v867
    %v960 = vsel %vm954, %v943, %v869
    %v961 = vsel %vm954, %v944, %v871
    %v962 = vsel %vm954, %v945, %v873
    %v963 = vsel %vm954, %v946, %v875
    %v964 = vsel %vm954, %v947, %v877
    %v965 = vsel %vm954, %v948, %v879
    %v966 = vsel %vm954, %v949, %v881
    %v967 = vsel %vm954, %v950, %v883
    %v968 = vsel %vm954, %v951, %v885
    %v969 = vsel %vm954, %v952, %v887
    %v970 = vsel %vm954, %v953, %v889
    %v971 = vld [vmem:[%s2] sm:$0xff]
    %v972 = vld [vmem:[%s2 + $0x8] sm:$0xff]
    %v973 = vld [vmem:[%s2 + $0x10] sm:$0xff]
    %v974 = vld [vmem:[%s2 + $0x18] sm:$0xff]
    %v975 = vld [vmem:[%s2 + $0x20] sm:$0xff]
    %vm976 = vcmask 326656
    %v978 = vsel %vm976, %v955, 0
    %v981 = vsel %vm976, %v956, 0
    %v984 = vsel %vm976, %v957, 0
    %v987 = vsel %vm976, %v958, 0
    %v990 = vsel %vm976, %v959, 0
    %v993 = vsel %vm976, %v960, 0
    %v996 = vsel %vm976, %v961, 0
    %v999 = vsel %vm976, %v962, 0
    %v1002 = vsel %vm976, %v963, 0
    %v1005 = vsel %vm976, %v964, 0
    %v1008 = vsel %vm976, %v965, 0
    %v1011 = vsel %vm976, %v966, 0
    %v1014 = vsel %vm976, %v967, 0
    %v1017 = vsel %vm976, %v968, 0
    %v1020 = vsel %vm976, %v969, 0
    %v1023 = vsel %vm976, %v970, 0
    %1025 = vmatprep.subr.mxu0 0.0
    %1026 = vmatpush1.msra.mxu0 %v971
    %1027 = vmatprep.subr.mxu0 0.0
    %1028 = vmatpush1.msra.mxu0 %v972
    %1029 = vmatprep.subr.mxu0 0.0
    %1030 = vmatpush1.msra.mxu0 %v973
    %1031 = vmatprep.subr.mxu0 0.0
    %1032 = vmatpush1.msra.mxu0 %v974
    %1033 = vmatprep.subr.mxu0 0.0
    %1034 = vmatpush1.msra.mxu0 %v975
    %1035 = vmatprep.subr.mxu0 0.0
    %1036 = vmatpush1.msra.mxu0 0.0
    %1037 = vmatprep.subr.mxu0 0.0
    %1038 = vmatpush1.msra.mxu0 0.0
    %1039 = vmatprep.subr.mxu0 0.0
    %1040 = vmatpush1.msra.mxu0 0.0
    %1041 = vmatprep.subr.mxu0 0.0
    %1042 = vmatpush1.msra.mxu0 0.0
    %1043 = vmatprep.subr.mxu0 0.0
    %1044 = vmatpush1.msra.mxu0 0.0
    %1045 = vmatprep.subr.mxu0 0.0
    %1046 = vmatpush1.msra.mxu0 0.0
    %1047 = vmatprep.subr.mxu0 0.0
    %1048 = vmatpush1.msra.mxu0 0.0
    %1049 = vmatprep.subr.mxu0 0.0
    %1050 = vmatpush1.msra.mxu0 0.0
    %1051 = vmatprep.subr.mxu0 0.0
    %1052 = vmatpush1.msra.mxu0 0.0
    %1053 = vmatprep.subr.mxu0 0.0
    %1054 = vmatpush1.msra.mxu0 0.0
    %1055 = vmatprep.subr.mxu0 0.0
    %1056 = vmatpush1.msra.mxu0 0.0
    %1057 = vmatprep.subr.mxu0 0.0
    %1058 = vmatpush1.msra.mxu0 0.0
    %1059 = vmatprep.subr.mxu0 0.0
    %1060 = vmatpush1.msra.mxu0 0.0
    %1061 = vmatprep.subr.mxu0 0.0
    %1062 = vmatpush1.msra.mxu0 0.0
    %1063 = vmatprep.subr.mxu0 0.0
    %1064 = vmatpush1.msra.mxu0 0.0
    %1065 = vmatprep.subr.mxu0 0.0
    %1066 = vmatpush1.msra.mxu0 0.0
    %1067 = vmatprep.subr.mxu0 0.0
    %1068 = vmatpush1.msra.mxu0 0.0
    %1069 = vmatprep.subr.mxu0 0.0
    %1070 = vmatpush1.msra.mxu0 0.0
    %1071 = vmatprep.subr.mxu0 0.0
    %1072 = vmatpush1.msra.mxu0 0.0
    %1073 = vmatprep.subr.mxu0 0.0
    %1074 = vmatpush1.msra.mxu0 0.0
    %1075 = vmatprep.subr.mxu0 0.0
    %1076 = vmatpush1.msra.mxu0 0.0
    %1077 = vmatprep.subr.mxu0 0.0
    %1078 = vmatpush1.msra.mxu0 0.0
    %1079 = vmatprep.subr.mxu0 0.0
    %1080 = vmatpush1.msra.mxu0 0.0
    %1081 = vmatprep.subr.mxu0 0.0
    %1082 = vmatpush1.msra.mxu0 0.0
    %1083 = vmatprep.subr.mxu0 0.0
    %1084 = vmatpush1.msra.mxu0 0.0
    %1085 = vmatprep.subr.mxu0 0.0
    %1086 = vmatpush1.msra.mxu0 0.0
    %1087 = vmatprep.subr.mxu0 0.0
    %1088 = vmatpush1.msra.mxu0 0.0
    %1089 = vmatprep.mubr.f32.mxu0 0.0
    %1090 = vmatmul.mubr.f32.gmra.mrb[0].mxu0 %v978
    %v1091 = vpop.f32.mrb[0].mxu0
    %v1092 = vadd.f32 0.0, %v1091
    %v1093 = vpop.f32.mrb[0].mxu0
    %1094 = vmatprep.mubr.f32.mxu0 0.0
    %1095 = vmatmul.mubr.f32.gmra.mrb[0].mxu0 %v981
    %v1096 = vpop.f32.mrb[0].mxu0
    %v1097 = vadd.f32 0.0, %v1096
    %v1098 = vpop.f32.mrb[0].mxu0
    %1099 = vmatprep.mubr.f32.mxu0 0.0
    %1100 = vmatmul.mubr.f32.gmra.mrb[0].mxu0 %v984
    %v1101 = vpop.f32.mrb[0].mxu0
    %v1102 = vadd.f32 0.0, %v1101
    %v1103 = vpop.f32.mrb[0].mxu0
    %1104 = vmatprep.mubr.f32.mxu0 0.0
    %1105 = vmatmul.mubr.f32.gmra.mrb[0].mxu0 %v987
    %v1106 = vpop.f32.mrb[0].mxu0
    %v1107 = vadd.f32 0.0, %v1106
    %v1108 = vpop.f32.mrb[0].mxu0
    %1109 = vmatprep.mubr.f32.mxu0 0.0
    %1110 = vmatmul.mubr.f32.gmra.mrb[0].mxu0 %v990
    %v1111 = vpop.f32.mrb[0].mxu0
    %v1112 = vadd.f32 0.0, %v1111
    %v1113 = vpop.f32.mrb[0].mxu0
    %1114 = vmatprep.mubr.f32.mxu0 0.0
    %1115 = vmatmul.mubr.f32.gmra.mrb[0].mxu0 %v993
    %v1116 = vpop.f32.mrb[0].mxu0
    %v1117 = vadd.f32 0.0, %v1116
    %v1118 = vpop.f32.mrb[0].mxu0
    %1119 = vmatprep.mubr.f32.mxu0 0.0
    %1120 = vmatmul.mubr.f32.gmra.mrb[0].mxu0 %v996
    %v1121 = vpop.f32.mrb[0].mxu0
    %v1122 = vadd.f32 0.0, %v1121
    %v1123 = vpop.f32.mrb[0].mxu0
    %1124 = vmatprep.mubr.f32.mxu0 0.0
    %1125 = vmatmul.mubr.f32.gmra.mrb[0].mxu0 %v999
    %v1126 = vpop.f32.mrb[0].mxu0
    %v1127 = vadd.f32 0.0, %v1126
    %v1128 = vpop.f32.mrb[0].mxu0
    %1129 = vmatprep.mubr.f32.mxu0 0.0
    %1130 = vmatmul.mubr.f32.gmra.mrb[0].mxu0 %v1002
    %v1131 = vpop.f32.mrb[0].mxu0
    %v1132 = vadd.f32 0.0, %v1131
    %v1133 = vpop.f32.mrb[0].mxu0
    %1134 = vmatprep.mubr.f32.mxu0 0.0
    %1135 = vmatmul.mubr.f32.gmra.mrb[0].mxu0 %v1005
    %v1136 = vpop.f32.mrb[0].mxu0
    %v1137 = vadd.f32 0.0, %v1136
    %v1138 = vpop.f32.mrb[0].mxu0
    %1139 = vmatprep.mubr.f32.mxu0 0.0
    %1140 = vmatmul.mubr.f32.gmra.mrb[0].mxu0 %v1008
    %v1141 = vpop.f32.mrb[0].mxu0
    %v1142 = vadd.f32 0.0, %v1141
    %v1143 = vpop.f32.mrb[0].mxu0
    %1144 = vmatprep.mubr.f32.mxu0 0.0
    %1145 = vmatmul.mubr.f32.gmra.mrb[0].mxu0 %v1011
    %v1146 = vpop.f32.mrb[0].mxu0
    %v1147 = vadd.f32 0.0, %v1146
    %v1148 = vpop.f32.mrb[0].mxu0
    %1149 = vmatprep.mubr.f32.mxu0 0.0
    %1150 = vmatmul.mubr.f32.gmra.mrb[0].mxu0 %v1014
    %v1151 = vpop.f32.mrb[0].mxu0
    %v1152 = vadd.f32 0.0, %v1151
    %v1153 = vpop.f32.mrb[0].mxu0
    %1154 = vmatprep.mubr.f32.mxu0 0.0
    %1155 = vmatmul.mubr.f32.gmra.mrb[0].mxu0 %v1017
    %v1156 = vpop.f32.mrb[0].mxu0
    %v1157 = vadd.f32 0.0, %v1156
    %v1158 = vpop.f32.mrb[0].mxu0
    %1159 = vmatprep.mubr.f32.mxu0 0.0
    %1160 = vmatmul.mubr.f32.gmra.mrb[0].mxu0 %v1020
    %v1161 = vpop.f32.mrb[0].mxu0
    %v1162 = vadd.f32 0.0, %v1161
    %v1163 = vpop.f32.mrb[0].mxu0
    %1164 = vmatprep.mubr.f32.mxu0 0.0
    %1165 = vmatmul.mubr.f32.gmra.mrb[0].mxu0 %v1023
    %v1166 = vpop.f32.mrb[0].mxu0
    %v1167 = vadd.f32 0.0, %v1166
    %v1168 = vpop.f32.mrb[0].mxu0
    %1169 = vdwg.mxu0
    %v1170 = vld [vmem:[%s6] sm:$0x1]
    %v1172 = vlaneseq
    %v1173 = vshrl.u32 %v1172, 7
    %v1174 = vsub.s32 0, %v1173
    %v1175 = vrot.slane %v1170, %v1174
    %v1177 = vmul.f32 %v1092, %v1175
    %v1178 = vmul.f32 %v1097, %v1175
    %v1179 = vmul.f32 %v1102, %v1175
    %v1180 = vmul.f32 %v1107, %v1175
    %v1181 = vmul.f32 %v1112, %v1175
    %v1182 = vmul.f32 %v1117, %v1175
    %v1183 = vmul.f32 %v1122, %v1175
    %v1184 = vmul.f32 %v1127, %v1175
    %v1185 = vmul.f32 %v1132, %v1175
    %v1186 = vmul.f32 %v1137, %v1175
    %v1187 = vmul.f32 %v1142, %v1175
    %v1188 = vmul.f32 %v1147, %v1175
    %v1189 = vmul.f32 %v1152, %v1175
    %v1190 = vmul.f32 %v1157, %v1175
    %v1191 = vmul.f32 %v1162, %v1175
    %v1192 = vmul.f32 %v1167, %v1175
    %v1193 = vld [vmem:[%s7] sm:$0x1]
    %v1195 = vlaneseq
    %v1196 = vshrl.u32 %v1195, 7
    %v1197 = vsub.s32 0, %v1196
    %v1198 = vrot.slane %v1193, %v1197
    %v1200 = vadd.f32 %v1177, %v1198
    %v1201 = vadd.f32 %v1178, %v1198
    %v1202 = vadd.f32 %v1179, %v1198
    %v1203 = vadd.f32 %v1180, %v1198
    %v1204 = vadd.f32 %v1181, %v1198
    %v1205 = vadd.f32 %v1182, %v1198
    %v1206 = vadd.f32 %v1183, %v1198
    %v1207 = vadd.f32 %v1184, %v1198
    %v1208 = vadd.f32 %v1185, %v1198
    %v1209 = vadd.f32 %v1186, %v1198
    %v1210 = vadd.f32 %v1187, %v1198
    %v1211 = vadd.f32 %v1188, %v1198
    %v1212 = vadd.f32 %v1189, %v1198
    %v1213 = vadd.f32 %v1190, %v1198
    %v1214 = vadd.f32 %v1191, %v1198
    %v1215 = vadd.f32 %v1192, %v1198
    %vm1216 = vcmp.ge.f32.partialorder %v1200, 0.0
    %vm1217 = vcmp.ge.f32.partialorder %v1201, 0.0
    %vm1218 = vcmp.ge.f32.partialorder %v1202, 0.0
    %vm1219 = vcmp.ge.f32.partialorder %v1203, 0.0
    %vm1220 = vcmp.ge.f32.partialorder %v1204, 0.0
    %vm1221 = vcmp.ge.f32.partialorder %v1205, 0.0
    %vm1222 = vcmp.ge.f32.partialorder %v1206, 0.0
    %vm1223 = vcmp.ge.f32.partialorder %v1207, 0.0
    %vm1224 = vcmp.ge.f32.partialorder %v1208, 0.0
    %vm1225 = vcmp.ge.f32.partialorder %v1209, 0.0
    %vm1226 = vcmp.ge.f32.partialorder %v1210, 0.0
    %vm1227 = vcmp.ge.f32.partialorder %v1211, 0.0
    %vm1228 = vcmp.ge.f32.partialorder %v1212, 0.0
    %vm1229 = vcmp.ge.f32.partialorder %v1213, 0.0
    %vm1230 = vcmp.ge.f32.partialorder %v1214, 0.0
    %vm1231 = vcmp.ge.f32.partialorder %v1215, 0.0
    %v1232 = vmul.f32 %v1200, 0.01
    %v1233 = vmul.f32 %v1201, 0.01
    %v1234 = vmul.f32 %v1202, 0.01
    %v1235 = vmul.f32 %v1203, 0.01
    %v1236 = vmul.f32 %v1204, 0.01
    %v1237 = vmul.f32 %v1205, 0.01
    %v1238 = vmul.f32 %v1206, 0.01
    %v1239 = vmul.f32 %v1207, 0.01
    %v1240 = vmul.f32 %v1208, 0.01
    %v1241 = vmul.f32 %v1209, 0.01
    %v1242 = vmul.f32 %v1210, 0.01
    %v1243 = vmul.f32 %v1211, 0.01
    %v1244 = vmul.f32 %v1212, 0.01
    %v1245 = vmul.f32 %v1213, 0.01
    %v1246 = vmul.f32 %v1214, 0.01
    %v1247 = vmul.f32 %v1215, 0.01
    %v1248 = vsel %vm1216, %v1200, %v1232
    %v1249 = vsel %vm1217, %v1201, %v1233
    %v1250 = vsel %vm1218, %v1202, %v1234
    %v1251 = vsel %vm1219, %v1203, %v1235
    %v1252 = vsel %vm1220, %v1204, %v1236
    %v1253 = vsel %vm1221, %v1205, %v1237
    %v1254 = vsel %vm1222, %v1206, %v1238
    %v1255 = vsel %vm1223, %v1207, %v1239
    %v1256 = vsel %vm1224, %v1208, %v1240
    %v1257 = vsel %vm1225, %v1209, %v1241
    %v1258 = vsel %vm1226, %v1210, %v1242
    %v1259 = vsel %vm1227, %v1211, %v1243
    %v1260 = vsel %vm1228, %v1212, %v1244
    %v1261 = vsel %vm1229, %v1213, %v1245
    %v1262 = vsel %vm1230, %v1214, %v1246
    %v1263 = vsel %vm1231, %v1215, %v1247
    %1264 = vst.msk [vmem:[#allocation2 + $0x80] sm:$0xff] %vm245, %v1248
    %1265 = vst.msk [vmem:[#allocation2 + $0x88] sm:$0xff] %vm245, %v1249
    %1266 = vst.msk [vmem:[#allocation2 + $0x90] sm:$0xff] %vm245, %v1250
    %1267 = vst.msk [vmem:[#allocation2 + $0x98] sm:$0xff] %vm245, %v1251
    %1268 = vst.msk [vmem:[#allocation2 + $0xa0] sm:$0xff] %vm245, %v1252
    %1269 = vst.msk [vmem:[#allocation2 + $0xa8] sm:$0xff] %vm245, %v1253
    %1270 = vst.msk [vmem:[#allocation2 + $0xb0] sm:$0xff] %vm245, %v1254
    %1271 = vst.msk [vmem:[#allocation2 + $0xb8] sm:$0xff] %vm245, %v1255
    %1272 = vst.msk [vmem:[#allocation2 + $0xc0] sm:$0xff] %vm245, %v1256
    %1273 = vst.msk [vmem:[#allocation2 + $0xc8] sm:$0xff] %vm245, %v1257
    %1274 = vst.msk [vmem:[#allocation2 + $0xd0] sm:$0xff] %vm245, %v1258
    %1275 = vst.msk [vmem:[#allocation2 + $0xd8] sm:$0xff] %vm245, %v1259
    %1276 = vst.msk [vmem:[#allocation2 + $0xe0] sm:$0xff] %vm245, %v1260
    %1277 = vst.msk [vmem:[#allocation2 + $0xe8] sm:$0xff] %vm245, %v1261
    %1278 = vst.msk [vmem:[#allocation2 + $0xf0] sm:$0xff] %vm245, %v1262
    %vm1279 = vcmask 125952
    %1280 = vst.msk [vmem:[#allocation2 + $0xf8] sm:$0xf] %vm1279, %v1263
    %v1281 = vld [vmem:[%s0] sm:$0xff]
    %v1282 = vld [vmem:[%s0 + $0x8] sm:$0xff]
    %v1283 = vld [vmem:[%s0 + $0x10] sm:$0xff]
    %v1284 = vld [vmem:[%s0 + $0x18] sm:$0xff]
    %v1285 = vld [vmem:[%s0 + $0x20] sm:$0xff]
    %v1286 = vld [vmem:[%s0 + $0x28] sm:$0xff]
    %v1287 = vld [vmem:[%s0 + $0x30] sm:$0xff]
    %v1288 = vld [vmem:[%s0 + $0x38] sm:$0xff]
    %v1289 = vld [vmem:[%s0 + $0x40] sm:$0xff]
    %v1290 = vld [vmem:[%s0 + $0x48] sm:$0xff]
    %v1291 = vld [vmem:[%s0 + $0x50] sm:$0xff]
    %v1292 = vld [vmem:[%s0 + $0x58] sm:$0xff]
    %v1293 = vld [vmem:[%s0 + $0x60] sm:$0xff]
    %v1294 = vld [vmem:[%s0 + $0x68] sm:$0xff]
    %v1295 = vld [vmem:[%s0 + $0x70] sm:$0xff]
    %v1296 = vld [vmem:[%s0 + $0x78] sm:$0x3]
    %v1297 = vld [vmem:[%s0 + $0x1] sm:$0xff]
    %v1298 = vld [vmem:[%s0 + $0x9] sm:$0xff]
    %v1299 = vld [vmem:[%s0 + $0x11] sm:$0xff]
    %v1300 = vld [vmem:[%s0 + $0x19] sm:$0xff]
    %v1301 = vld [vmem:[%s0 + $0x21] sm:$0xff]
    %v1302 = vld [vmem:[%s0 + $0x29] sm:$0xff]
    %v1303 = vld [vmem:[%s0 + $0x31] sm:$0xff]
    %v1304 = vld [vmem:[%s0 + $0x39] sm:$0xff]
    %v1305 = vld [vmem:[%s0 + $0x41] sm:$0xff]
    %v1306 = vld [vmem:[%s0 + $0x49] sm:$0xff]
    %v1307 = vld [vmem:[%s0 + $0x51] sm:$0xff]
    %v1308 = vld [vmem:[%s0 + $0x59] sm:$0xff]
    %v1309 = vld [vmem:[%s0 + $0x61] sm:$0xff]
    %v1310 = vld [vmem:[%s0 + $0x69] sm:$0xff]
    %v1311 = vld [vmem:[%s0 + $0x71] sm:$0xff]
    %v1312 = vld [vmem:[%s0 + $0x79] sm:$0x3]
    %v1313 = vld [vmem:[%s0 + $0x2] sm:$0xff]
    %v1314 = vld [vmem:[%s0 + $0xa] sm:$0xff]
    %v1315 = vld [vmem:[%s0 + $0x12] sm:$0xff]
    %v1316 = vld [vmem:[%s0 + $0x1a] sm:$0xff]
    %v1317 = vld [vmem:[%s0 + $0x22] sm:$0xff]
    %v1318 = vld [vmem:[%s0 + $0x2a] sm:$0xff]
    %v1319 = vld [vmem:[%s0 + $0x32] sm:$0xff]
    %v1320 = vld [vmem:[%s0 + $0x3a] sm:$0xff]
    %v1321 = vld [vmem:[%s0 + $0x42] sm:$0xff]
    %v1322 = vld [vmem:[%s0 + $0x4a] sm:$0xff]
    %v1323 = vld [vmem:[%s0 + $0x52] sm:$0xff]
    %v1324 = vld [vmem:[%s0 + $0x5a] sm:$0xff]
    %v1325 = vld [vmem:[%s0 + $0x62] sm:$0xff]
    %v1326 = vld [vmem:[%s0 + $0x6a] sm:$0xff]
    %v1327 = vld [vmem:[%s0 + $0x72] sm:$0xff]
    %v1328 = vld [vmem:[%s0 + $0x7a] sm:$0x3]
    %v1329 = vld [vmem:[%s0 + $0x3] sm:$0xff]
    %v1330 = vld [vmem:[%s0 + $0xb] sm:$0xff]
    %v1331 = vld [vmem:[%s0 + $0x13] sm:$0xff]
    %v1332 = vld [vmem:[%s0 + $0x1b] sm:$0xff]
    %v1333 = vld [vmem:[%s0 + $0x23] sm:$0xff]
    %v1334 = vld [vmem:[%s0 + $0x2b] sm:$0xff]
    %v1335 = vld [vmem:[%s0 + $0x33] sm:$0xff]
    %v1336 = vld [vmem:[%s0 + $0x3b] sm:$0xff]
    %v1337 = vld [vmem:[%s0 + $0x43] sm:$0xff]
    %v1338 = vld [vmem:[%s0 + $0x4b] sm:$0xff]
    %v1339 = vld [vmem:[%s0 + $0x53] sm:$0xff]
    %v1340 = vld [vmem:[%s0 + $0x5b] sm:$0xff]
    %v1341 = vld [vmem:[%s0 + $0x63] sm:$0xff]
    %v1342 = vld [vmem:[%s0 + $0x6b] sm:$0xff]
    %v1343 = vld [vmem:[%s0 + $0x73] sm:$0xff]
    %v1344 = vld [vmem:[%s0 + $0x7b] sm:$0x3]
    %v1345 = vld [vmem:[%s0 + $0x4] sm:$0xff]
    %v1346 = vld [vmem:[%s0 + $0xc] sm:$0xff]
    %v1347 = vld [vmem:[%s0 + $0x14] sm:$0xff]
    %v1348 = vld [vmem:[%s0 + $0x1c] sm:$0xff]
    %v1349 = vld [vmem:[%s0 + $0x24] sm:$0xff]
    %v1350 = vld [vmem:[%s0 + $0x2c] sm:$0xff]
    %v1351 = vld [vmem:[%s0 + $0x34] sm:$0xff]
    %v1352 = vld [vmem:[%s0 + $0x3c] sm:$0xff]
    %v1353 = vld [vmem:[%s0 + $0x44] sm:$0xff]
    %v1354 = vld [vmem:[%s0 + $0x4c] sm:$0xff]
    %v1355 = vld [vmem:[%s0 + $0x54] sm:$0xff]
    %v1356 = vld [vmem:[%s0 + $0x5c] sm:$0xff]
    %v1357 = vld [vmem:[%s0 + $0x64] sm:$0xff]
    %v1358 = vld [vmem:[%s0 + $0x6c] sm:$0xff]
    %v1359 = vld [vmem:[%s0 + $0x74] sm:$0xff]
    %v1360 = vld [vmem:[%s0 + $0x7c] sm:$0x3]
    %v1361 = vld [vmem:[%s0 + $0x5] sm:$0xff]
    %v1362 = vld [vmem:[%s0 + $0xd] sm:$0xff]
    %v1363 = vld [vmem:[%s0 + $0x15] sm:$0xff]
    %v1364 = vld [vmem:[%s0 + $0x1d] sm:$0xff]
    %v1365 = vld [vmem:[%s0 + $0x25] sm:$0xff]
    %v1366 = vld [vmem:[%s0 + $0x2d] sm:$0xff]
    %v1367 = vld [vmem:[%s0 + $0x35] sm:$0xff]
    %v1368 = vld [vmem:[%s0 + $0x3d] sm:$0xff]
    %v1369 = vld [vmem:[%s0 + $0x45] sm:$0xff]
    %v1370 = vld [vmem:[%s0 + $0x4d] sm:$0xff]
    %v1371 = vld [vmem:[%s0 + $0x55] sm:$0xff]
    %v1372 = vld [vmem:[%s0 + $0x5d] sm:$0xff]
    %v1373 = vld [vmem:[%s0 + $0x65] sm:$0xff]
    %v1374 = vld [vmem:[%s0 + $0x6d] sm:$0xff]
    %v1375 = vld [vmem:[%s0 + $0x75] sm:$0xff]
    %v1376 = vld [vmem:[%s0 + $0x7d] sm:$0x3]
    %v1377 = vld [vmem:[%s0 + $0x6] sm:$0xff]
    %v1378 = vld [vmem:[%s0 + $0xe] sm:$0xff]
    %v1379 = vld [vmem:[%s0 + $0x16] sm:$0xff]
    %v1380 = vld [vmem:[%s0 + $0x1e] sm:$0xff]
    %v1381 = vld [vmem:[%s0 + $0x26] sm:$0xff]
    %v1382 = vld [vmem:[%s0 + $0x2e] sm:$0xff]
    %v1383 = vld [vmem:[%s0 + $0x36] sm:$0xff]
    %v1384 = vld [vmem:[%s0 + $0x3e] sm:$0xff]
    %v1385 = vld [vmem:[%s0 + $0x46] sm:$0xff]
    %v1386 = vld [vmem:[%s0 + $0x4e] sm:$0xff]
    %v1387 = vld [vmem:[%s0 + $0x56] sm:$0xff]
    %v1388 = vld [vmem:[%s0 + $0x5e] sm:$0xff]
    %v1389 = vld [vmem:[%s0 + $0x66] sm:$0xff]
    %v1390 = vld [vmem:[%s0 + $0x6e] sm:$0xff]
    %v1391 = vld [vmem:[%s0 + $0x76] sm:$0xff]
    %v1392 = vld [vmem:[%s0 + $0x7e] sm:$0x3]
    %1409 = vrot.lane.b32.xlu0 %v1297, 8
    %v1410 = vpop.permute.xlu0 %1409
    %1411 = vrot.lane.b32.xlu0 %v1298, 8
    %v1412 = vpop.permute.xlu0 %1411
    %1413 = vrot.lane.b32.xlu0 %v1299, 8
    %v1414 = vpop.permute.xlu0 %1413
    %1415 = vrot.lane.b32.xlu0 %v1300, 8
    %v1416 = vpop.permute.xlu0 %1415
    %1417 = vrot.lane.b32.xlu0 %v1301, 8
    %v1418 = vpop.permute.xlu0 %1417
    %1419 = vrot.lane.b32.xlu0 %v1302, 8
    %v1420 = vpop.permute.xlu0 %1419
    %1421 = vrot.lane.b32.xlu0 %v1303, 8
    %v1422 = vpop.permute.xlu0 %1421
    %1423 = vrot.lane.b32.xlu0 %v1304, 8
    %v1424 = vpop.permute.xlu0 %1423
    %1425 = vrot.lane.b32.xlu0 %v1305, 8
    %v1426 = vpop.permute.xlu0 %1425
    %1427 = vrot.lane.b32.xlu0 %v1306, 8
    %v1428 = vpop.permute.xlu0 %1427
    %1429 = vrot.lane.b32.xlu0 %v1307, 8
    %v1430 = vpop.permute.xlu0 %1429
    %1431 = vrot.lane.b32.xlu0 %v1308, 8
    %v1432 = vpop.permute.xlu0 %1431
    %1433 = vrot.lane.b32.xlu0 %v1309, 8
    %v1434 = vpop.permute.xlu0 %1433
    %1435 = vrot.lane.b32.xlu0 %v1310, 8
    %v1436 = vpop.permute.xlu0 %1435
    %1437 = vrot.lane.b32.xlu0 %v1311, 8
    %v1438 = vpop.permute.xlu0 %1437
    %1439 = vrot.lane.b32.xlu0 %v1312, 8
    %v1440 = vpop.permute.xlu0 %1439
    %1473 = vrot.lane.b32.xlu0 %v1313, 16
    %v1474 = vpop.permute.xlu0 %1473
    %1475 = vrot.lane.b32.xlu0 %v1314, 16
    %v1476 = vpop.permute.xlu0 %1475
    %1477 = vrot.lane.b32.xlu0 %v1315, 16
    %v1478 = vpop.permute.xlu0 %1477
    %1479 = vrot.lane.b32.xlu0 %v1316, 16
    %v1480 = vpop.permute.xlu0 %1479
    %1481 = vrot.lane.b32.xlu0 %v1317, 16
    %v1482 = vpop.permute.xlu0 %1481
    %1483 = vrot.lane.b32.xlu0 %v1318, 16
    %v1484 = vpop.permute.xlu0 %1483
    %1485 = vrot.lane.b32.xlu0 %v1319, 16
    %v1486 = vpop.permute.xlu0 %1485
    %1487 = vrot.lane.b32.xlu0 %v1320, 16
    %v1488 = vpop.permute.xlu0 %1487
    %1489 = vrot.lane.b32.xlu0 %v1321, 16
    %v1490 = vpop.permute.xlu0 %1489
    %1491 = vrot.lane.b32.xlu0 %v1322, 16
    %v1492 = vpop.permute.xlu0 %1491
    %1493 = vrot.lane.b32.xlu0 %v1323, 16
    %v1494 = vpop.permute.xlu0 %1493
    %1495 = vrot.lane.b32.xlu0 %v1324, 16
    %v1496 = vpop.permute.xlu0 %1495
    %1497 = vrot.lane.b32.xlu0 %v1325, 16
    %v1498 = vpop.permute.xlu0 %1497
    %1499 = vrot.lane.b32.xlu0 %v1326, 16
    %v1500 = vpop.permute.xlu0 %1499
    %1501 = vrot.lane.b32.xlu0 %v1327, 16
    %v1502 = vpop.permute.xlu0 %1501
    %1503 = vrot.lane.b32.xlu0 %v1328, 16
    %v1504 = vpop.permute.xlu0 %1503
    %1537 = vrot.lane.b32.xlu0 %v1329, 24
    %v1538 = vpop.permute.xlu0 %1537
    %1539 = vrot.lane.b32.xlu0 %v1330, 24
    %v1540 = vpop.permute.xlu0 %1539
    %1541 = vrot.lane.b32.xlu0 %v1331, 24
    %v1542 = vpop.permute.xlu0 %1541
    %1543 = vrot.lane.b32.xlu0 %v1332, 24
    %v1544 = vpop.permute.xlu0 %1543
    %1545 = vrot.lane.b32.xlu0 %v1333, 24
    %v1546 = vpop.permute.xlu0 %1545
    %1547 = vrot.lane.b32.xlu0 %v1334, 24
    %v1548 = vpop.permute.xlu0 %1547
    %1549 = vrot.lane.b32.xlu0 %v1335, 24
    %v1550 = vpop.permute.xlu0 %1549
    %1551 = vrot.lane.b32.xlu0 %v1336, 24
    %v1552 = vpop.permute.xlu0 %1551
    %1553 = vrot.lane.b32.xlu0 %v1337, 24
    %v1554 = vpop.permute.xlu0 %1553
    %1555 = vrot.lane.b32.xlu0 %v1338, 24
    %v1556 = vpop.permute.xlu0 %1555
    %1557 = vrot.lane.b32.xlu0 %v1339, 24
    %v1558 = vpop.permute.xlu0 %1557
    %1559 = vrot.lane.b32.xlu0 %v1340, 24
    %v1560 = vpop.permute.xlu0 %1559
    %1561 = vrot.lane.b32.xlu0 %v1341, 24
    %v1562 = vpop.permute.xlu0 %1561
    %1563 = vrot.lane.b32.xlu0 %v1342, 24
    %v1564 = vpop.permute.xlu0 %1563
    %1565 = vrot.lane.b32.xlu0 %v1343, 24
    %v1566 = vpop.permute.xlu0 %1565
    %1567 = vrot.lane.b32.xlu0 %v1344, 24
    %v1568 = vpop.permute.xlu0 %1567
    %1601 = vrot.lane.b32.xlu0 %v1345, 32
    %v1602 = vpop.permute.xlu0 %1601
    %1603 = vrot.lane.b32.xlu0 %v1346, 32
    %v1604 = vpop.permute.xlu0 %1603
    %1605 = vrot.lane.b32.xlu0 %v1347, 32
    %v1606 = vpop.permute.xlu0 %1605
    %1607 = vrot.lane.b32.xlu0 %v1348, 32
    %v1608 = vpop.permute.xlu0 %1607
    %1609 = vrot.lane.b32.xlu0 %v1349, 32
    %v1610 = vpop.permute.xlu0 %1609
    %1611 = vrot.lane.b32.xlu0 %v1350, 32
    %v1612 = vpop.permute.xlu0 %1611
    %1613 = vrot.lane.b32.xlu0 %v1351, 32
    %v1614 = vpop.permute.xlu0 %1613
    %1615 = vrot.lane.b32.xlu0 %v1352, 32
    %v1616 = vpop.permute.xlu0 %1615
    %1617 = vrot.lane.b32.xlu0 %v1353, 32
    %v1618 = vpop.permute.xlu0 %1617
    %1619 = vrot.lane.b32.xlu0 %v1354, 32
    %v1620 = vpop.permute.xlu0 %1619
    %1621 = vrot.lane.b32.xlu0 %v1355, 32
    %v1622 = vpop.permute.xlu0 %1621
    %1623 = vrot.lane.b32.xlu0 %v1356, 32
    %v1624 = vpop.permute.xlu0 %1623
    %1625 = vrot.lane.b32.xlu0 %v1357, 32
    %v1626 = vpop.permute.xlu0 %1625
    %1627 = vrot.lane.b32.xlu0 %v1358, 32
    %v1628 = vpop.permute.xlu0 %1627
    %1629 = vrot.lane.b32.xlu0 %v1359, 32
    %v1630 = vpop.permute.xlu0 %1629
    %1631 = vrot.lane.b32.xlu0 %v1360, 32
    %v1632 = vpop.permute.xlu0 %1631
    %1665 = vrot.lane.b32.xlu0 %v1361, 40
    %v1666 = vpop.permute.xlu0 %1665
    %1667 = vrot.lane.b32.xlu0 %v1362, 40
    %v1668 = vpop.permute.xlu0 %1667
    %1669 = vrot.lane.b32.xlu0 %v1363, 40
    %v1670 = vpop.permute.xlu0 %1669
    %1671 = vrot.lane.b32.xlu0 %v1364, 40
    %v1672 = vpop.permute.xlu0 %1671
    %1673 = vrot.lane.b32.xlu0 %v1365, 40
    %v1674 = vpop.permute.xlu0 %1673
    %1675 = vrot.lane.b32.xlu0 %v1366, 40
    %v1676 = vpop.permute.xlu0 %1675
    %1677 = vrot.lane.b32.xlu0 %v1367, 40
    %v1678 = vpop.permute.xlu0 %1677
    %1679 = vrot.lane.b32.xlu0 %v1368, 40
    %v1680 = vpop.permute.xlu0 %1679
    %1681 = vrot.lane.b32.xlu0 %v1369, 40
    %v1682 = vpop.permute.xlu0 %1681
    %1683 = vrot.lane.b32.xlu0 %v1370, 40
    %v1684 = vpop.permute.xlu0 %1683
    %1685 = vrot.lane.b32.xlu0 %v1371, 40
    %v1686 = vpop.permute.xlu0 %1685
    %1687 = vrot.lane.b32.xlu0 %v1372, 40
    %v1688 = vpop.permute.xlu0 %1687
    %1689 = vrot.lane.b32.xlu0 %v1373, 40
    %v1690 = vpop.permute.xlu0 %1689
    %1691 = vrot.lane.b32.xlu0 %v1374, 40
    %v1692 = vpop.permute.xlu0 %1691
    %1693 = vrot.lane.b32.xlu0 %v1375, 40
    %v1694 = vpop.permute.xlu0 %1693
    %1695 = vrot.lane.b32.xlu0 %v1376, 40
    %v1696 = vpop.permute.xlu0 %1695
    %1729 = vrot.lane.b32.xlu0 %v1377, 48
    %v1730 = vpop.permute.xlu0 %1729
    %1731 = vrot.lane.b32.xlu0 %v1378, 48
    %v1732 = vpop.permute.xlu0 %1731
    %1733 = vrot.lane.b32.xlu0 %v1379, 48
    %v1734 = vpop.permute.xlu0 %1733
    %1735 = vrot.lane.b32.xlu0 %v1380, 48
    %v1736 = vpop.permute.xlu0 %1735
    %1737 = vrot.lane.b32.xlu0 %v1381, 48
    %v1738 = vpop.permute.xlu0 %1737
    %1739 = vrot.lane.b32.xlu0 %v1382, 48
    %v1740 = vpop.permute.xlu0 %1739
    %1741 = vrot.lane.b32.xlu0 %v1383, 48
    %v1742 = vpop.permute.xlu0 %1741
    %1743 = vrot.lane.b32.xlu0 %v1384, 48
    %v1744 = vpop.permute.xlu0 %1743
    %1745 = vrot.lane.b32.xlu0 %v1385, 48
    %v1746 = vpop.permute.xlu0 %1745
    %1747 = vrot.lane.b32.xlu0 %v1386, 48
    %v1748 = vpop.permute.xlu0 %1747
    %1749 = vrot.lane.b32.xlu0 %v1387, 48
    %v1750 = vpop.permute.xlu0 %1749
    %1751 = vrot.lane.b32.xlu0 %v1388, 48
    %v1752 = vpop.permute.xlu0 %1751
    %1753 = vrot.lane.b32.xlu0 %v1389, 48
    %v1754 = vpop.permute.xlu0 %1753
    %1755 = vrot.lane.b32.xlu0 %v1390, 48
    %v1756 = vpop.permute.xlu0 %1755
    %1757 = vrot.lane.b32.xlu0 %v1391, 48
    %v1758 = vpop.permute.xlu0 %1757
    %1759 = vrot.lane.b32.xlu0 %v1392, 48
    %v1760 = vpop.permute.xlu0 %1759
    %v1777 = vsel %vm228, %v1281, %v1410
    %v1778 = vsel %vm228, %v1282, %v1412
    %v1779 = vsel %vm228, %v1283, %v1414
    %v1780 = vsel %vm228, %v1284, %v1416
    %v1781 = vsel %vm228, %v1285, %v1418
    %v1782 = vsel %vm228, %v1286, %v1420
    %v1783 = vsel %vm228, %v1287, %v1422
    %v1784 = vsel %vm228, %v1288, %v1424
    %v1785 = vsel %vm228, %v1289, %v1426
    %v1786 = vsel %vm228, %v1290, %v1428
    %v1787 = vsel %vm228, %v1291, %v1430
    %v1788 = vsel %vm228, %v1292, %v1432
    %v1789 = vsel %vm228, %v1293, %v1434
    %v1790 = vsel %vm228, %v1294, %v1436
    %v1791 = vsel %vm228, %v1295, %v1438
    %v1792 = vsel %vm228, %v1296, %v1440
    %v1793 = vsel %vm245, %v1777, %v1474
    %v1794 = vsel %vm245, %v1778, %v1476
    %v1795 = vsel %vm245, %v1779, %v1478
    %v1796 = vsel %vm245, %v1780, %v1480
    %v1797 = vsel %vm245, %v1781, %v1482
    %v1798 = vsel %vm245, %v1782, %v1484
    %v1799 = vsel %vm245, %v1783, %v1486
    %v1800 = vsel %vm245, %v1784, %v1488
    %v1801 = vsel %vm245, %v1785, %v1490
    %v1802 = vsel %vm245, %v1786, %v1492
    %v1803 = vsel %vm245, %v1787, %v1494
    %v1804 = vsel %vm245, %v1788, %v1496
    %v1805 = vsel %vm245, %v1789, %v1498
    %v1806 = vsel %vm245, %v1790, %v1500
    %v1807 = vsel %vm245, %v1791, %v1502
    %v1808 = vsel %vm245, %v1792, %v1504
    %v1809 = vsel %vm265, %v1793, %v1538
    %v1810 = vsel %vm265, %v1794, %v1540
    %v1811 = vsel %vm265, %v1795, %v1542
    %v1812 = vsel %vm265, %v1796, %v1544
    %v1813 = vsel %vm265, %v1797, %v1546
    %v1814 = vsel %vm265, %v1798, %v1548
    %v1815 = vsel %vm265, %v1799, %v1550
    %v1816 = vsel %vm265, %v1800, %v1552
    %v1817 = vsel %vm265, %v1801, %v1554
    %v1818 = vsel %vm265, %v1802, %v1556
    %v1819 = vsel %vm265, %v1803, %v1558
    %v1820 = vsel %vm265, %v1804, %v1560
    %v1821 = vsel %vm265, %v1805, %v1562
    %v1822 = vsel %vm265, %v1806, %v1564
    %v1823 = vsel %vm265, %v1807, %v1566
    %v1824 = vsel %vm265, %v1808, %v1568
    %v1825 = vsel %vm954, %v1809, %v1602
    %v1826 = vsel %vm954, %v1810, %v1604
    %v1827 = vsel %vm954, %v1811, %v1606
    %v1828 = vsel %vm954, %v1812, %v1608
    %v1829 = vsel %vm954, %v1813, %v1610
    %v1830 = vsel %vm954, %v1814, %v1612
    %v1831 = vsel %vm954, %v1815, %v1614
    %v1832 = vsel %vm954, %v1816, %v1616
    %v1833 = vsel %vm954, %v1817, %v1618
    %v1834 = vsel %vm954, %v1818, %v1620
    %v1835 = vsel %vm954, %v1819, %v1622
    %v1836 = vsel %vm954, %v1820, %v1624
    %v1837 = vsel %vm954, %v1821, %v1626
    %v1838 = vsel %vm954, %v1822, %v1628
    %v1839 = vsel %vm954, %v1823, %v1630
    %v1840 = vsel %vm954, %v1824, %v1632
    %v1841 = vsel %vm976, %v1825, %v1666
    %v1842 = vsel %vm976, %v1826, %v1668
    %v1843 = vsel %vm976, %v1827, %v1670
    %v1844 = vsel %vm976, %v1828, %v1672
    %v1845 = vsel %vm976, %v1829, %v1674
    %v1846 = vsel %vm976, %v1830, %v1676
    %v1847 = vsel %vm976, %v1831, %v1678
    %v1848 = vsel %vm976, %v1832, %v1680
    %v1849 = vsel %vm976, %v1833, %v1682
    %v1850 = vsel %vm976, %v1834, %v1684
    %v1851 = vsel %vm976, %v1835, %v1686
    %v1852 = vsel %vm976, %v1836, %v1688
    %v1853 = vsel %vm976, %v1837, %v1690
    %v1854 = vsel %vm976, %v1838, %v1692
    %v1855 = vsel %vm976, %v1839, %v1694
    %v1856 = vsel %vm976, %v1840, %v1696
    %vm1857 = vcmask 392192
    %v1858 = vsel %vm1857, %v1841, %v1730
    %v1859 = vsel %vm1857, %v1842, %v1732
    %v1860 = vsel %vm1857, %v1843, %v1734
    %v1861 = vsel %vm1857, %v1844, %v1736
    %v1862 = vsel %vm1857, %v1845, %v1738
    %v1863 = vsel %vm1857, %v1846, %v1740
    %v1864 = vsel %vm1857, %v1847, %v1742
    %v1865 = vsel %vm1857, %v1848, %v1744
    %v1866 = vsel %vm1857, %v1849, %v1746
    %v1867 = vsel %vm1857, %v1850, %v1748
    %v1868 = vsel %vm1857, %v1851, %v1750
    %v1869 = vsel %vm1857, %v1852, %v1752
    %v1870 = vsel %vm1857, %v1853, %v1754
    %v1871 = vsel %vm1857, %v1854, %v1756
    %v1872 = vsel %vm1857, %v1855, %v1758
    %v1873 = vsel %vm1857, %v1856, %v1760
    %v1874 = vld [vmem:[%s3] sm:$0xff]
    %v1875 = vld [vmem:[%s3 + $0x8] sm:$0xff]
    %v1876 = vld [vmem:[%s3 + $0x10] sm:$0xff]
    %v1877 = vld [vmem:[%s3 + $0x18] sm:$0xff]
    %v1878 = vld [vmem:[%s3 + $0x20] sm:$0xff]
    %v1879 = vld [vmem:[%s3 + $0x28] sm:$0xff]
    %v1880 = vld [vmem:[%s3 + $0x30] sm:$0xff]
    %vm1881 = vcmask 457728
    %v1883 = vsel %vm1881, %v1858, 0
    %v1886 = vsel %vm1881, %v1859, 0
    %v1889 = vsel %vm1881, %v1860, 0
    %v1892 = vsel %vm1881, %v1861, 0
    %v1895 = vsel %vm1881, %v1862, 0
    %v1898 = vsel %vm1881, %v1863, 0
    %v1901 = vsel %vm1881, %v1864, 0
    %v1904 = vsel %vm1881, %v1865, 0
    %v1907 = vsel %vm1881, %v1866, 0
    %v1910 = vsel %vm1881, %v1867, 0
    %v1913 = vsel %vm1881, %v1868, 0
    %v1916 = vsel %vm1881, %v1869, 0
    %v1919 = vsel %vm1881, %v1870, 0
    %v1922 = vsel %vm1881, %v1871, 0
    %v1925 = vsel %vm1881, %v1872, 0
    %v1928 = vsel %vm1881, %v1873, 0
    %1930 = vmatprep.subr.mxu0 0.0
    %1931 = vmatpush1.msra.mxu0 %v1874
    %1932 = vmatprep.subr.mxu0 0.0
    %1933 = vmatpush1.msra.mxu0 %v1875
    %1934 = vmatprep.subr.mxu0 0.0
    %1935 = vmatpush1.msra.mxu0 %v1876
    %1936 = vmatprep.subr.mxu0 0.0
    %1937 = vmatpush1.msra.mxu0 %v1877
    %1938 = vmatprep.subr.mxu0 0.0
    %1939 = vmatpush1.msra.mxu0 %v1878
    %1940 = vmatprep.subr.mxu0 0.0
    %1941 = vmatpush1.msra.mxu0 %v1879
    %1942 = vmatprep.subr.mxu0 0.0
    %1943 = vmatpush1.msra.mxu0 %v1880
    %1944 = vmatprep.subr.mxu0 0.0
    %1945 = vmatpush1.msra.mxu0 0.0
    %1946 = vmatprep.subr.mxu0 0.0
    %1947 = vmatpush1.msra.mxu0 0.0
    %1948 = vmatprep.subr.mxu0 0.0
    %1949 = vmatpush1.msra.mxu0 0.0
    %1950 = vmatprep.subr.mxu0 0.0
    %1951 = vmatpush1.msra.mxu0 0.0
    %1952 = vmatprep.subr.mxu0 0.0
    %1953 = vmatpush1.msra.mxu0 0.0
    %1954 = vmatprep.subr.mxu0 0.0
    %1955 = vmatpush1.msra.mxu0 0.0
    %1956 = vmatprep.subr.mxu0 0.0
    %1957 = vmatpush1.msra.mxu0 0.0
    %1958 = vmatprep.subr.mxu0 0.0
    %1959 = vmatpush1.msra.mxu0 0.0
    %1960 = vmatprep.subr.mxu0 0.0
    %1961 = vmatpush1.msra.mxu0 0.0
    %1962 = vmatprep.subr.mxu0 0.0
    %1963 = vmatpush1.msra.mxu0 0.0
    %1964 = vmatprep.subr.mxu0 0.0
    %1965 = vmatpush1.msra.mxu0 0.0
    %1966 = vmatprep.subr.mxu0 0.0
    %1967 = vmatpush1.msra.mxu0 0.0
    %1968 = vmatprep.subr.mxu0 0.0
    %1969 = vmatpush1.msra.mxu0 0.0
    %1970 = vmatprep.subr.mxu0 0.0
    %1971 = vmatpush1.msra.mxu0 0.0
    %1972 = vmatprep.subr.mxu0 0.0
    %1973 = vmatpush1.msra.mxu0 0.0
    %1974 = vmatprep.subr.mxu0 0.0
    %1975 = vmatpush1.msra.mxu0 0.0
    %1976 = vmatprep.subr.mxu0 0.0
    %1977 = vmatpush1.msra.mxu0 0.0
    %1978 = vmatprep.subr.mxu0 0.0
    %1979 = vmatpush1.msra.mxu0 0.0
    %1980 = vmatprep.subr.mxu0 0.0
    %1981 = vmatpush1.msra.mxu0 0.0
    %1982 = vmatprep.subr.mxu0 0.0
    %1983 = vmatpush1.msra.mxu0 0.0
    %1984 = vmatprep.subr.mxu0 0.0
    %1985 = vmatpush1.msra.mxu0 0.0
    %1986 = vmatprep.subr.mxu0 0.0
    %1987 = vmatpush1.msra.mxu0 0.0
    %1988 = vmatprep.subr.mxu0 0.0
    %1989 = vmatpush1.msra.mxu0 0.0
    %1990 = vmatprep.subr.mxu0 0.0
    %1991 = vmatpush1.msra.mxu0 0.0
    %1992 = vmatprep.subr.mxu0 0.0
    %1993 = vmatpush1.msra.mxu0 0.0
    %1994 = vmatprep.mubr.f32.mxu0 0.0
    %1995 = vmatmul.mubr.f32.gmra.mrb[0].mxu0 %v1883
    %v1996 = vpop.f32.mrb[0].mxu0
    %v1997 = vadd.f32 0.0, %v1996
    %v1998 = vpop.f32.mrb[0].mxu0
    %1999 = vmatprep.mubr.f32.mxu0 0.0
    %2000 = vmatmul.mubr.f32.gmra.mrb[0].mxu0 %v1886
    %v2001 = vpop.f32.mrb[0].mxu0
    %v2002 = vadd.f32 0.0, %v2001
    %v2003 = vpop.f32.mrb[0].mxu0
    %2004 = vmatprep.mubr.f32.mxu0 0.0
    %2005 = vmatmul.mubr.f32.gmra.mrb[0].mxu0 %v1889
    %v2006 = vpop.f32.mrb[0].mxu0
    %v2007 = vadd.f32 0.0, %v2006
    %v2008 = vpop.f32.mrb[0].mxu0
    %2009 = vmatprep.mubr.f32.mxu0 0.0
    %2010 = vmatmul.mubr.f32.gmra.mrb[0].mxu0 %v1892
    %v2011 = vpop.f32.mrb[0].mxu0
    %v2012 = vadd.f32 0.0, %v2011
    %v2013 = vpop.f32.mrb[0].mxu0
    %2014 = vmatprep.mubr.f32.mxu0 0.0
    %2015 = vmatmul.mubr.f32.gmra.mrb[0].mxu0 %v1895
    %v2016 = vpop.f32.mrb[0].mxu0
    %v2017 = vadd.f32 0.0, %v2016
    %v2018 = vpop.f32.mrb[0].mxu0
    %2019 = vmatprep.mubr.f32.mxu0 0.0
    %2020 = vmatmul.mubr.f32.gmra.mrb[0].mxu0 %v1898
    %v2021 = vpop.f32.mrb[0].mxu0
    %v2022 = vadd.f32 0.0, %v2021
    %v2023 = vpop.f32.mrb[0].mxu0
    %2024 = vmatprep.mubr.f32.mxu0 0.0
    %2025 = vmatmul.mubr.f32.gmra.mrb[0].mxu0 %v1901
    %v2026 = vpop.f32.mrb[0].mxu0
    %v2027 = vadd.f32 0.0, %v2026
    %v2028 = vpop.f32.mrb[0].mxu0
    %2029 = vmatprep.mubr.f32.mxu0 0.0
    %2030 = vmatmul.mubr.f32.gmra.mrb[0].mxu0 %v1904
    %v2031 = vpop.f32.mrb[0].mxu0
    %v2032 = vadd.f32 0.0, %v2031
    %v2033 = vpop.f32.mrb[0].mxu0
    %2034 = vmatprep.mubr.f32.mxu0 0.0
    %2035 = vmatmul.mubr.f32.gmra.mrb[0].mxu0 %v1907
    %v2036 = vpop.f32.mrb[0].mxu0
    %v2037 = vadd.f32 0.0, %v2036
    %v2038 = vpop.f32.mrb[0].mxu0
    %2039 = vmatprep.mubr.f32.mxu0 0.0
    %2040 = vmatmul.mubr.f32.gmra.mrb[0].mxu0 %v1910
    %v2041 = vpop.f32.mrb[0].mxu0
    %v2042 = vadd.f32 0.0, %v2041
    %v2043 = vpop.f32.mrb[0].mxu0
    %2044 = vmatprep.mubr.f32.mxu0 0.0
    %2045 = vmatmul.mubr.f32.gmra.mrb[0].mxu0 %v1913
    %v2046 = vpop.f32.mrb[0].mxu0
    %v2047 = vadd.f32 0.0, %v2046
    %v2048 = vpop.f32.mrb[0].mxu0
    %2049 = vmatprep.mubr.f32.mxu0 0.0
    %2050 = vmatmul.mubr.f32.gmra.mrb[0].mxu0 %v1916
    %v2051 = vpop.f32.mrb[0].mxu0
    %v2052 = vadd.f32 0.0, %v2051
    %v2053 = vpop.f32.mrb[0].mxu0
    %2054 = vmatprep.mubr.f32.mxu0 0.0
    %2055 = vmatmul.mubr.f32.gmra.mrb[0].mxu0 %v1919
    %v2056 = vpop.f32.mrb[0].mxu0
    %v2057 = vadd.f32 0.0, %v2056
    %v2058 = vpop.f32.mrb[0].mxu0
    %2059 = vmatprep.mubr.f32.mxu0 0.0
    %2060 = vmatmul.mubr.f32.gmra.mrb[0].mxu0 %v1922
    %v2061 = vpop.f32.mrb[0].mxu0
    %v2062 = vadd.f32 0.0, %v2061
    %v2063 = vpop.f32.mrb[0].mxu0
    %2064 = vmatprep.mubr.f32.mxu0 0.0
    %2065 = vmatmul.mubr.f32.gmra.mrb[0].mxu0 %v1925
    %v2066 = vpop.f32.mrb[0].mxu0
    %v2067 = vadd.f32 0.0, %v2066
    %v2068 = vpop.f32.mrb[0].mxu0
    %2069 = vmatprep.mubr.f32.mxu0 0.0
    %2070 = vmatmul.mubr.f32.gmra.mrb[0].mxu0 %v1928
    %v2071 = vpop.f32.mrb[0].mxu0
    %v2072 = vadd.f32 0.0, %v2071
    %v2073 = vpop.f32.mrb[0].mxu0
    %2074 = vdwg.mxu0
    %v2075 = vld [vmem:[%s6] sm:$0x1]
    %v2077 = vlaneseq
    %v2078 = vshrl.u32 %v2077, 7
    %v2079 = vsub.s32 0, %v2078
    %v2080 = vrot.slane %v2075, %v2079
    %v2082 = vmul.f32 %v1997, %v2080
    %v2083 = vmul.f32 %v2002, %v2080
    %v2084 = vmul.f32 %v2007, %v2080
    %v2085 = vmul.f32 %v2012, %v2080
    %v2086 = vmul.f32 %v2017, %v2080
    %v2087 = vmul.f32 %v2022, %v2080
    %v2088 = vmul.f32 %v2027, %v2080
    %v2089 = vmul.f32 %v2032, %v2080
    %v2090 = vmul.f32 %v2037, %v2080
    %v2091 = vmul.f32 %v2042, %v2080
    %v2092 = vmul.f32 %v2047, %v2080
    %v2093 = vmul.f32 %v2052, %v2080
    %v2094 = vmul.f32 %v2057, %v2080
    %v2095 = vmul.f32 %v2062, %v2080
    %v2096 = vmul.f32 %v2067, %v2080
    %v2097 = vmul.f32 %v2072, %v2080
    %v2098 = vld [vmem:[%s7] sm:$0x1]
    %v2100 = vlaneseq
    %v2101 = vshrl.u32 %v2100, 7
    %v2102 = vsub.s32 0, %v2101
    %v2103 = vrot.slane %v2098, %v2102
    %v2105 = vadd.f32 %v2082, %v2103
    %v2106 = vadd.f32 %v2083, %v2103
    %v2107 = vadd.f32 %v2084, %v2103
    %v2108 = vadd.f32 %v2085, %v2103
    %v2109 = vadd.f32 %v2086, %v2103
    %v2110 = vadd.f32 %v2087, %v2103
    %v2111 = vadd.f32 %v2088, %v2103
    %v2112 = vadd.f32 %v2089, %v2103
    %v2113 = vadd.f32 %v2090, %v2103
    %v2114 = vadd.f32 %v2091, %v2103
    %v2115 = vadd.f32 %v2092, %v2103
    %v2116 = vadd.f32 %v2093, %v2103
    %v2117 = vadd.f32 %v2094, %v2103
    %v2118 = vadd.f32 %v2095, %v2103
    %v2119 = vadd.f32 %v2096, %v2103
    %v2120 = vadd.f32 %v2097, %v2103
    %vm2121 = vcmp.ge.f32.partialorder %v2105, 0.0
    %vm2122 = vcmp.ge.f32.partialorder %v2106, 0.0
    %vm2123 = vcmp.ge.f32.partialorder %v2107, 0.0
    %vm2124 = vcmp.ge.f32.partialorder %v2108, 0.0
    %vm2125 = vcmp.ge.f32.partialorder %v2109, 0.0
    %vm2126 = vcmp.ge.f32.partialorder %v2110, 0.0
    %vm2127 = vcmp.ge.f32.partialorder %v2111, 0.0
    %vm2128 = vcmp.ge.f32.partialorder %v2112, 0.0
    %vm2129 = vcmp.ge.f32.partialorder %v2113, 0.0
    %vm2130 = vcmp.ge.f32.partialorder %v2114, 0.0
    %vm2131 = vcmp.ge.f32.partialorder %v2115, 0.0
    %vm2132 = vcmp.ge.f32.partialorder %v2116, 0.0
    %vm2133 = vcmp.ge.f32.partialorder %v2117, 0.0
    %vm2134 = vcmp.ge.f32.partialorder %v2118, 0.0
    %vm2135 = vcmp.ge.f32.partialorder %v2119, 0.0
    %vm2136 = vcmp.ge.f32.partialorder %v2120, 0.0
    %v2137 = vmul.f32 %v2105, 0.01
    %v2138 = vmul.f32 %v2106, 0.01
    %v2139 = vmul.f32 %v2107, 0.01
    %v2140 = vmul.f32 %v2108, 0.01
    %v2141 = vmul.f32 %v2109, 0.01
    %v2142 = vmul.f32 %v2110, 0.01
    %v2143 = vmul.f32 %v2111, 0.01
    %v2144 = vmul.f32 %v2112, 0.01
    %v2145 = vmul.f32 %v2113, 0.01
    %v2146 = vmul.f32 %v2114, 0.01
    %v2147 = vmul.f32 %v2115, 0.01
    %v2148 = vmul.f32 %v2116, 0.01
    %v2149 = vmul.f32 %v2117, 0.01
    %v2150 = vmul.f32 %v2118, 0.01
    %v2151 = vmul.f32 %v2119, 0.01
    %v2152 = vmul.f32 %v2120, 0.01
    %v2153 = vsel %vm2121, %v2105, %v2137
    %v2154 = vsel %vm2122, %v2106, %v2138
    %v2155 = vsel %vm2123, %v2107, %v2139
    %v2156 = vsel %vm2124, %v2108, %v2140
    %v2157 = vsel %vm2125, %v2109, %v2141
    %v2158 = vsel %vm2126, %v2110, %v2142
    %v2159 = vsel %vm2127, %v2111, %v2143
    %v2160 = vsel %vm2128, %v2112, %v2144
    %v2161 = vsel %vm2129, %v2113, %v2145
    %v2162 = vsel %vm2130, %v2114, %v2146
    %v2163 = vsel %vm2131, %v2115, %v2147
    %v2164 = vsel %vm2132, %v2116, %v2148
    %v2165 = vsel %vm2133, %v2117, %v2149
    %v2166 = vsel %vm2134, %v2118, %v2150
    %v2167 = vsel %vm2135, %v2119, %v2151
    %v2168 = vsel %vm2136, %v2120, %v2152
    %2169 = vst.msk [vmem:[#allocation2 + $0xfc] sm:$0xff] %vm245, %v2153
    %2170 = vst.msk [vmem:[#allocation2 + $0x104] sm:$0xff] %vm245, %v2154
    %2171 = vst.msk [vmem:[#allocation2 + $0x10c] sm:$0xff] %vm245, %v2155
    %2172 = vst.msk [vmem:[#allocation2 + $0x114] sm:$0xff] %vm245, %v2156
    %2173 = vst.msk [vmem:[#allocation2 + $0x11c] sm:$0xff] %vm245, %v2157
    %2174 = vst.msk [vmem:[#allocation2 + $0x124] sm:$0xff] %vm245, %v2158
    %2175 = vst.msk [vmem:[#allocation2 + $0x12c] sm:$0xff] %vm245, %v2159
    %2176 = vst.msk [vmem:[#allocation2 + $0x134] sm:$0xff] %vm245, %v2160
    %2177 = vst.msk [vmem:[#allocation2 + $0x13c] sm:$0xff] %vm245, %v2161
    %2178 = vst.msk [vmem:[#allocation2 + $0x144] sm:$0xff] %vm245, %v2162
    %2179 = vst.msk [vmem:[#allocation2 + $0x14c] sm:$0xff] %vm245, %v2163
    %2180 = vst.msk [vmem:[#allocation2 + $0x154] sm:$0xff] %vm245, %v2164
    %2181 = vst.msk [vmem:[#allocation2 + $0x15c] sm:$0xff] %vm245, %v2165
    %2182 = vst.msk [vmem:[#allocation2 + $0x164] sm:$0xff] %vm245, %v2166
    %2183 = vst.msk [vmem:[#allocation2 + $0x16c] sm:$0xff] %vm245, %v2167
    %2184 = vst.msk [vmem:[#allocation2 + $0x174] sm:$0x3] %vm50, %v2168
    %2185 = vst.msk [vmem:[#allocation2 + $0x176] sm:$0x3] %vm50, 0.0
    %v2186 = vld [vmem:[#allocation2] ss:$2 sm:$0xff]
    %s2187 = scalar_lea.vmem [#allocation2], 16
    %v2188 = vld [vmem:[%s2187] ss:$2 sm:$0xff]
    %s2189 = scalar_lea.vmem [#allocation2], 32
    %v2190 = vld [vmem:[%s2189] ss:$2 sm:$0xff]
    %s2191 = scalar_lea.vmem [#allocation2], 48
    %v2192 = vld [vmem:[%s2191] ss:$2 sm:$0xff]
    %s2193 = scalar_lea.vmem [#allocation2], 64
    %v2194 = vld [vmem:[%s2193] ss:$2 sm:$0xff]
    %s2195 = scalar_lea.vmem [#allocation2], 80
    %v2196 = vld [vmem:[%s2195] ss:$2 sm:$0xff]
    %s2197 = scalar_lea.vmem [#allocation2], 96
    %v2198 = vld [vmem:[%s2197] ss:$2 sm:$0xff]
    %s2199 = scalar_lea.vmem [#allocation2], 112
    %v2200 = vld [vmem:[%s2199] ss:$2 sm:$0xff]
    %s2201 = scalar_lea.vmem [#allocation2], 128
    %v2202 = vld [vmem:[%s2201] ss:$2 sm:$0xff]
    %s2203 = scalar_lea.vmem [#allocation2], 144
    %v2204 = vld [vmem:[%s2203] ss:$2 sm:$0xff]
    %s2205 = scalar_lea.vmem [#allocation2], 160
    %v2206 = vld [vmem:[%s2205] ss:$2 sm:$0xff]
    %s2207 = scalar_lea.vmem [#allocation2], 176
    %v2208 = vld [vmem:[%s2207] ss:$2 sm:$0xff]
    %s2209 = scalar_lea.vmem [#allocation2], 192
    %v2210 = vld [vmem:[%s2209] ss:$2 sm:$0xff]
    %s2211 = scalar_lea.vmem [#allocation2], 208
    %v2212 = vld [vmem:[%s2211] ss:$2 sm:$0xff]
    %s2213 = scalar_lea.vmem [#allocation2], 224
    %v2214 = vld [vmem:[%s2213] ss:$2 sm:$0xff]
    %s2215 = scalar_lea.vmem [#allocation2], 240
    %v2216 = vld [vmem:[%s2215] ss:$2 sm:$0xff]
    %s2217 = scalar_lea.vmem [#allocation2], 256
    %v2218 = vld [vmem:[%s2217] ss:$2 sm:$0xff]
    %s2219 = scalar_lea.vmem [#allocation2], 272
    %v2220 = vld [vmem:[%s2219] ss:$2 sm:$0xff]
    %s2221 = scalar_lea.vmem [#allocation2], 288
    %v2222 = vld [vmem:[%s2221] ss:$2 sm:$0xff]
    %s2223 = scalar_lea.vmem [#allocation2], 304
    %v2224 = vld [vmem:[%s2223] ss:$2 sm:$0xff]
    %s2225 = scalar_lea.vmem [#allocation2], 320
    %v2226 = vld [vmem:[%s2225] ss:$2 sm:$0xff]
    %s2227 = scalar_lea.vmem [#allocation2], 336
    %v2228 = vld [vmem:[%s2227] ss:$2 sm:$0xff]
    %s2229 = scalar_lea.vmem [#allocation2], 352
    %v2230 = vld [vmem:[%s2229] ss:$2 sm:$0xff]
    %s2231 = scalar_lea.vmem [#allocation2], 368
    %v2232 = vld [vmem:[%s2231] ss:$2 sm:$0x7]
    %s2233 = scalar_lea.vmem [#allocation2], 1
    %v2234 = vld [vmem:[%s2233] ss:$2 sm:$0xff]
    %s2235 = scalar_lea.vmem [#allocation2], 17
    %v2236 = vld [vmem:[%s2235] ss:$2 sm:$0xff]
    %s2237 = scalar_lea.vmem [#allocation2], 33
    %v2238 = vld [vmem:[%s2237] ss:$2 sm:$0xff]
    %s2239 = scalar_lea.vmem [#allocation2], 49
    %v2240 = vld [vmem:[%s2239] ss:$2 sm:$0xff]
    %s2241 = scalar_lea.vmem [#allocation2], 65
    %v2242 = vld [vmem:[%s2241] ss:$2 sm:$0xff]
    %s2243 = scalar_lea.vmem [#allocation2], 81
    %v2244 = vld [vmem:[%s2243] ss:$2 sm:$0xff]
    %s2245 = scalar_lea.vmem [#allocation2], 97
    %v2246 = vld [vmem:[%s2245] ss:$2 sm:$0xff]
    %s2247 = scalar_lea.vmem [#allocation2], 113
    %v2248 = vld [vmem:[%s2247] ss:$2 sm:$0xff]
    %s2249 = scalar_lea.vmem [#allocation2], 129
    %v2250 = vld [vmem:[%s2249] ss:$2 sm:$0xff]
    %s2251 = scalar_lea.vmem [#allocation2], 145
    %v2252 = vld [vmem:[%s2251] ss:$2 sm:$0xff]
    %s2253 = scalar_lea.vmem [#allocation2], 161
    %v2254 = vld [vmem:[%s2253] ss:$2 sm:$0xff]
    %s2255 = scalar_lea.vmem [#allocation2], 177
    %v2256 = vld [vmem:[%s2255] ss:$2 sm:$0xff]
    %s2257 = scalar_lea.vmem [#allocation2], 193
    %v2258 = vld [vmem:[%s2257] ss:$2 sm:$0xff]
    %s2259 = scalar_lea.vmem [#allocation2], 209
    %v2260 = vld [vmem:[%s2259] ss:$2 sm:$0xff]
    %s2261 = scalar_lea.vmem [#allocation2], 225
    %v2262 = vld [vmem:[%s2261] ss:$2 sm:$0xff]
    %s2263 = scalar_lea.vmem [#allocation2], 241
    %v2264 = vld [vmem:[%s2263] ss:$2 sm:$0xff]
    %s2265 = scalar_lea.vmem [#allocation2], 257
    %v2266 = vld [vmem:[%s2265] ss:$2 sm:$0xff]
    %s2267 = scalar_lea.vmem [#allocation2], 273
    %v2268 = vld [vmem:[%s2267] ss:$2 sm:$0xff]
    %s2269 = scalar_lea.vmem [#allocation2], 289
    %v2270 = vld [vmem:[%s2269] ss:$2 sm:$0xff]
    %s2271 = scalar_lea.vmem [#allocation2], 305
    %v2272 = vld [vmem:[%s2271] ss:$2 sm:$0xff]
    %s2273 = scalar_lea.vmem [#allocation2], 321
    %v2274 = vld [vmem:[%s2273] ss:$2 sm:$0xff]
    %s2275 = scalar_lea.vmem [#allocation2], 337
    %v2276 = vld [vmem:[%s2275] ss:$2 sm:$0xff]
    %s2277 = scalar_lea.vmem [#allocation2], 353
    %v2278 = vld [vmem:[%s2277] ss:$2 sm:$0xff]
    %s2279 = scalar_lea.vmem [#allocation2], 369
    %v2280 = vld [vmem:[%s2279] ss:$2 sm:$0x7]
    %s2281 = scalar_lea.vmem [#allocation2], 2
    %v2282 = vld [vmem:[%s2281] ss:$2 sm:$0xff]
    %s2283 = scalar_lea.vmem [#allocation2], 18
    %v2284 = vld [vmem:[%s2283] ss:$2 sm:$0xff]
    %s2285 = scalar_lea.vmem [#allocation2], 34
    %v2286 = vld [vmem:[%s2285] ss:$2 sm:$0xff]
    %s2287 = scalar_lea.vmem [#allocation2], 50
    %v2288 = vld [vmem:[%s2287] ss:$2 sm:$0xff]
    %s2289 = scalar_lea.vmem [#allocation2], 66
    %v2290 = vld [vmem:[%s2289] ss:$2 sm:$0xff]
    %s2291 = scalar_lea.vmem [#allocation2], 82
    %v2292 = vld [vmem:[%s2291] ss:$2 sm:$0xff]
    %s2293 = scalar_lea.vmem [#allocation2], 98
    %v2294 = vld [vmem:[%s2293] ss:$2 sm:$0xff]
    %s2295 = scalar_lea.vmem [#allocation2], 114
    %v2296 = vld [vmem:[%s2295] ss:$2 sm:$0xff]
    %s2297 = scalar_lea.vmem [#allocation2], 130
    %v2298 = vld [vmem:[%s2297] ss:$2 sm:$0xff]
    %s2299 = scalar_lea.vmem [#allocation2], 146
    %v2300 = vld [vmem:[%s2299] ss:$2 sm:$0xff]
    %s2301 = scalar_lea.vmem [#allocation2], 162
    %v2302 = vld [vmem:[%s2301] ss:$2 sm:$0xff]
    %s2303 = scalar_lea.vmem [#allocation2], 178
    %v2304 = vld [vmem:[%s2303] ss:$2 sm:$0xff]
    %s2305 = scalar_lea.vmem [#allocation2], 194
    %v2306 = vld [vmem:[%s2305] ss:$2 sm:$0xff]
    %s2307 = scalar_lea.vmem [#allocation2], 210
    %v2308 = vld [vmem:[%s2307] ss:$2 sm:$0xff]
    %s2309 = scalar_lea.vmem [#allocation2], 226
    %v2310 = vld [vmem:[%s2309] ss:$2 sm:$0xff]
    %s2311 = scalar_lea.vmem [#allocation2], 242
    %v2312 = vld [vmem:[%s2311] ss:$2 sm:$0xff]
    %s2313 = scalar_lea.vmem [#allocation2], 258
    %v2314 = vld [vmem:[%s2313] ss:$2 sm:$0xff]
    %s2315 = scalar_lea.vmem [#allocation2], 274
    %v2316 = vld [vmem:[%s2315] ss:$2 sm:$0xff]
    %s2317 = scalar_lea.vmem [#allocation2], 290
    %v2318 = vld [vmem:[%s2317] ss:$2 sm:$0xff]
    %s2319 = scalar_lea.vmem [#allocation2], 306
    %v2320 = vld [vmem:[%s2319] ss:$2 sm:$0xff]
    %s2321 = scalar_lea.vmem [#allocation2], 322
    %v2322 = vld [vmem:[%s2321] ss:$2 sm:$0xff]
    %s2323 = scalar_lea.vmem [#allocation2], 338
    %v2324 = vld [vmem:[%s2323] ss:$2 sm:$0xff]
    %s2325 = scalar_lea.vmem [#allocation2], 354
    %v2326 = vld [vmem:[%s2325] ss:$2 sm:$0xff]
    %s2327 = scalar_lea.vmem [#allocation2], 370
    %v2328 = vld [vmem:[%s2327] ss:$2 sm:$0x7]
    %2353 = vrot.lane.b32.xlu0 %v2234, 16
    %v2354 = vpop.permute.xlu0 %2353
    %2355 = vrot.lane.b32.xlu0 %v2236, 16
    %v2356 = vpop.permute.xlu0 %2355
    %2357 = vrot.lane.b32.xlu0 %v2238, 16
    %v2358 = vpop.permute.xlu0 %2357
    %2359 = vrot.lane.b32.xlu0 %v2240, 16
    %v2360 = vpop.permute.xlu0 %2359
    %2361 = vrot.lane.b32.xlu0 %v2242, 16
    %v2362 = vpop.permute.xlu0 %2361
    %2363 = vrot.lane.b32.xlu0 %v2244, 16
    %v2364 = vpop.permute.xlu0 %2363
    %2365 = vrot.lane.b32.xlu0 %v2246, 16
    %v2366 = vpop.permute.xlu0 %2365
    %2367 = vrot.lane.b32.xlu0 %v2248, 16
    %v2368 = vpop.permute.xlu0 %2367
    %2369 = vrot.lane.b32.xlu0 %v2250, 16
    %v2370 = vpop.permute.xlu0 %2369
    %2371 = vrot.lane.b32.xlu0 %v2252, 16
    %v2372 = vpop.permute.xlu0 %2371
    %2373 = vrot.lane.b32.xlu0 %v2254, 16
    %v2374 = vpop.permute.xlu0 %2373
    %2375 = vrot.lane.b32.xlu0 %v2256, 16
    %v2376 = vpop.permute.xlu0 %2375
    %2377 = vrot.lane.b32.xlu0 %v2258, 16
    %v2378 = vpop.permute.xlu0 %2377
    %2379 = vrot.lane.b32.xlu0 %v2260, 16
    %v2380 = vpop.permute.xlu0 %2379
    %2381 = vrot.lane.b32.xlu0 %v2262, 16
    %v2382 = vpop.permute.xlu0 %2381
    %2383 = vrot.lane.b32.xlu0 %v2264, 16
    %v2384 = vpop.permute.xlu0 %2383
    %2385 = vrot.lane.b32.xlu0 %v2266, 16
    %v2386 = vpop.permute.xlu0 %2385
    %2387 = vrot.lane.b32.xlu0 %v2268, 16
    %v2388 = vpop.permute.xlu0 %2387
    %2389 = vrot.lane.b32.xlu0 %v2270, 16
    %v2390 = vpop.permute.xlu0 %2389
    %2391 = vrot.lane.b32.xlu0 %v2272, 16
    %v2392 = vpop.permute.xlu0 %2391
    %2393 = vrot.lane.b32.xlu0 %v2274, 16
    %v2394 = vpop.permute.xlu0 %2393
    %2395 = vrot.lane.b32.xlu0 %v2276, 16
    %v2396 = vpop.permute.xlu0 %2395
    %2397 = vrot.lane.b32.xlu0 %v2278, 16
    %v2398 = vpop.permute.xlu0 %2397
    %2399 = vrot.lane.b32.xlu0 %v2280, 16
    %v2400 = vpop.permute.xlu0 %2399
    %2449 = vrot.lane.b32.xlu0 %v2282, 32
    %v2450 = vpop.permute.xlu0 %2449
    %2451 = vrot.lane.b32.xlu0 %v2284, 32
    %v2452 = vpop.permute.xlu0 %2451
    %2453 = vrot.lane.b32.xlu0 %v2286, 32
    %v2454 = vpop.permute.xlu0 %2453
    %2455 = vrot.lane.b32.xlu0 %v2288, 32
    %v2456 = vpop.permute.xlu0 %2455
    %2457 = vrot.lane.b32.xlu0 %v2290, 32
    %v2458 = vpop.permute.xlu0 %2457
    %2459 = vrot.lane.b32.xlu0 %v2292, 32
    %v2460 = vpop.permute.xlu0 %2459
    %2461 = vrot.lane.b32.xlu0 %v2294, 32
    %v2462 = vpop.permute.xlu0 %2461
    %2463 = vrot.lane.b32.xlu0 %v2296, 32
    %v2464 = vpop.permute.xlu0 %2463
    %2465 = vrot.lane.b32.xlu0 %v2298, 32
    %v2466 = vpop.permute.xlu0 %2465
    %2467 = vrot.lane.b32.xlu0 %v2300, 32
    %v2468 = vpop.permute.xlu0 %2467
    %2469 = vrot.lane.b32.xlu0 %v2302, 32
    %v2470 = vpop.permute.xlu0 %2469
    %2471 = vrot.lane.b32.xlu0 %v2304, 32
    %v2472 = vpop.permute.xlu0 %2471
    %2473 = vrot.lane.b32.xlu0 %v2306, 32
    %v2474 = vpop.permute.xlu0 %2473
    %2475 = vrot.lane.b32.xlu0 %v2308, 32
    %v2476 = vpop.permute.xlu0 %2475
    %2477 = vrot.lane.b32.xlu0 %v2310, 32
    %v2478 = vpop.permute.xlu0 %2477
    %2479 = vrot.lane.b32.xlu0 %v2312, 32
    %v2480 = vpop.permute.xlu0 %2479
    %2481 = vrot.lane.b32.xlu0 %v2314, 32
    %v2482 = vpop.permute.xlu0 %2481
    %2483 = vrot.lane.b32.xlu0 %v2316, 32
    %v2484 = vpop.permute.xlu0 %2483
    %2485 = vrot.lane.b32.xlu0 %v2318, 32
    %v2486 = vpop.permute.xlu0 %2485
    %2487 = vrot.lane.b32.xlu0 %v2320, 32
    %v2488 = vpop.permute.xlu0 %2487
    %2489 = vrot.lane.b32.xlu0 %v2322, 32
    %v2490 = vpop.permute.xlu0 %2489
    %2491 = vrot.lane.b32.xlu0 %v2324, 32
    %v2492 = vpop.permute.xlu0 %2491
    %2493 = vrot.lane.b32.xlu0 %v2326, 32
    %v2494 = vpop.permute.xlu0 %2493
    %2495 = vrot.lane.b32.xlu0 %v2328, 32
    %v2496 = vpop.permute.xlu0 %2495
    %v2521 = vsel %vm245, %v2186, %v2354
    %v2522 = vsel %vm245, %v2188, %v2356
    %v2523 = vsel %vm245, %v2190, %v2358
    %v2524 = vsel %vm245, %v2192, %v2360
    %v2525 = vsel %vm245, %v2194, %v2362
    %v2526 = vsel %vm245, %v2196, %v2364
    %v2527 = vsel %vm245, %v2198, %v2366
    %v2528 = vsel %vm245, %v2200, %v2368
    %v2529 = vsel %vm245, %v2202, %v2370
    %v2530 = vsel %vm245, %v2204, %v2372
    %v2531 = vsel %vm245, %v2206, %v2374
    %v2532 = vsel %vm245, %v2208, %v2376
    %v2533 = vsel %vm245, %v2210, %v2378
    %v2534 = vsel %vm245, %v2212, %v2380
    %v2535 = vsel %vm245, %v2214, %v2382
    %v2536 = vsel %vm245, %v2216, %v2384
    %v2537 = vsel %vm245, %v2218, %v2386
    %v2538 = vsel %vm245, %v2220, %v2388
    %v2539 = vsel %vm245, %v2222, %v2390
    %v2540 = vsel %vm245, %v2224, %v2392
    %v2541 = vsel %vm245, %v2226, %v2394
    %v2542 = vsel %vm245, %v2228, %v2396
    %v2543 = vsel %vm245, %v2230, %v2398
    %v2544 = vsel %vm245, %v2232, %v2400
    %v2545 = vsel %vm954, %v2521, %v2450
    %v2546 = vsel %vm954, %v2522, %v2452
    %v2547 = vsel %vm954, %v2523, %v2454
    %v2548 = vsel %vm954, %v2524, %v2456
    %v2549 = vsel %vm954, %v2525, %v2458
    %v2550 = vsel %vm954, %v2526, %v2460
    %v2551 = vsel %vm954, %v2527, %v2462
    %v2552 = vsel %vm954, %v2528, %v2464
    %v2553 = vsel %vm954, %v2529, %v2466
    %v2554 = vsel %vm954, %v2530, %v2468
    %v2555 = vsel %vm954, %v2531, %v2470
    %v2556 = vsel %vm954, %v2532, %v2472
    %v2557 = vsel %vm954, %v2533, %v2474
    %v2558 = vsel %vm954, %v2534, %v2476
    %v2559 = vsel %vm954, %v2535, %v2478
    %v2560 = vsel %vm954, %v2536, %v2480
    %v2561 = vsel %vm954, %v2537, %v2482
    %v2562 = vsel %vm954, %v2538, %v2484
    %v2563 = vsel %vm954, %v2539, %v2486
    %v2564 = vsel %vm954, %v2540, %v2488
    %v2565 = vsel %vm954, %v2541, %v2490
    %v2566 = vsel %vm954, %v2542, %v2492
    %v2567 = vsel %vm954, %v2543, %v2494
    %v2568 = vsel %vm954, %v2544, %v2496
    %v2569 = vld [vmem:[%s4] sm:$0xff]
    %v2570 = vld [vmem:[%s4 + $0x8] sm:$0xff]
    %v2571 = vld [vmem:[%s4 + $0x10] sm:$0xff]
    %v2572 = vld [vmem:[%s4 + $0x18] sm:$0xff]
    %v2573 = vld [vmem:[%s4 + $0x20] sm:$0xff]
    %v2574 = vld [vmem:[%s4 + $0x28] sm:$0xff]
    %v2576 = vsel %vm1857, %v2545, 0
    %v2579 = vsel %vm1857, %v2546, 0
    %v2582 = vsel %vm1857, %v2547, 0
    %v2585 = vsel %vm1857, %v2548, 0
    %v2588 = vsel %vm1857, %v2549, 0
    %v2591 = vsel %vm1857, %v2550, 0
    %v2594 = vsel %vm1857, %v2551, 0
    %v2597 = vsel %vm1857, %v2552, 0
    %v2600 = vsel %vm1857, %v2553, 0
    %v2603 = vsel %vm1857, %v2554, 0
    %v2606 = vsel %vm1857, %v2555, 0
    %v2609 = vsel %vm1857, %v2556, 0
    %v2612 = vsel %vm1857, %v2557, 0
    %v2615 = vsel %vm1857, %v2558, 0
    %v2618 = vsel %vm1857, %v2559, 0
    %v2621 = vsel %vm1857, %v2560, 0
    %v2624 = vsel %vm1857, %v2561, 0
    %v2627 = vsel %vm1857, %v2562, 0
    %v2630 = vsel %vm1857, %v2563, 0
    %v2633 = vsel %vm1857, %v2564, 0
    %v2636 = vsel %vm1857, %v2565, 0
    %v2639 = vsel %vm1857, %v2566, 0
    %v2642 = vsel %vm1857, %v2567, 0
    %v2645 = vsel %vm1857, %v2568, 0
    %2647 = vmatprep.subr.mxu0 0.0
    %2648 = vmatpush1.msra.mxu0 %v2569
    %2649 = vmatprep.subr.mxu0 0.0
    %2650 = vmatpush1.msra.mxu0 %v2570
    %2651 = vmatprep.subr.mxu0 0.0
    %2652 = vmatpush1.msra.mxu0 %v2571
    %2653 = vmatprep.subr.mxu0 0.0
    %2654 = vmatpush1.msra.mxu0 %v2572
    %2655 = vmatprep.subr.mxu0 0.0
    %2656 = vmatpush1.msra.mxu0 %v2573
    %2657 = vmatprep.subr.mxu0 0.0
    %2658 = vmatpush1.msra.mxu0 %v2574
    %2659 = vmatprep.subr.mxu0 0.0
    %2660 = vmatpush1.msra.mxu0 0.0
    %2661 = vmatprep.subr.mxu0 0.0
    %2662 = vmatpush1.msra.mxu0 0.0
    %2663 = vmatprep.subr.mxu0 0.0
    %2664 = vmatpush1.msra.mxu0 0.0
    %2665 = vmatprep.subr.mxu0 0.0
    %2666 = vmatpush1.msra.mxu0 0.0
    %2667 = vmatprep.subr.mxu0 0.0
    %2668 = vmatpush1.msra.mxu0 0.0
    %2669 = vmatprep.subr.mxu0 0.0
    %2670 = vmatpush1.msra.mxu0 0.0
    %2671 = vmatprep.subr.mxu0 0.0
    %2672 = vmatpush1.msra.mxu0 0.0
    %2673 = vmatprep.subr.mxu0 0.0
    %2674 = vmatpush1.msra.mxu0 0.0
    %2675 = vmatprep.subr.mxu0 0.0
    %2676 = vmatpush1.msra.mxu0 0.0
    %2677 = vmatprep.subr.mxu0 0.0
    %2678 = vmatpush1.msra.mxu0 0.0
    %2679 = vmatprep.subr.mxu0 0.0
    %2680 = vmatpush1.msra.mxu0 0.0
    %2681 = vmatprep.subr.mxu0 0.0
    %2682 = vmatpush1.msra.mxu0 0.0
    %2683 = vmatprep.subr.mxu0 0.0
    %2684 = vmatpush1.msra.mxu0 0.0
    %2685 = vmatprep.subr.mxu0 0.0
    %2686 = vmatpush1.msra.mxu0 0.0
    %2687 = vmatprep.subr.mxu0 0.0
    %2688 = vmatpush1.msra.mxu0 0.0
    %2689 = vmatprep.subr.mxu0 0.0
    %2690 = vmatpush1.msra.mxu0 0.0
    %2691 = vmatprep.subr.mxu0 0.0
    %2692 = vmatpush1.msra.mxu0 0.0
    %2693 = vmatprep.subr.mxu0 0.0
    %2694 = vmatpush1.msra.mxu0 0.0
    %2695 = vmatprep.subr.mxu0 0.0
    %2696 = vmatpush1.msra.mxu0 0.0
    %2697 = vmatprep.subr.mxu0 0.0
    %2698 = vmatpush1.msra.mxu0 0.0
    %2699 = vmatprep.subr.mxu0 0.0
    %2700 = vmatpush1.msra.mxu0 0.0
    %2701 = vmatprep.subr.mxu0 0.0
    %2702 = vmatpush1.msra.mxu0 0.0
    %2703 = vmatprep.subr.mxu0 0.0
    %2704 = vmatpush1.msra.mxu0 0.0
    %2705 = vmatprep.subr.mxu0 0.0
    %2706 = vmatpush1.msra.mxu0 0.0
    %2707 = vmatprep.subr.mxu0 0.0
    %2708 = vmatpush1.msra.mxu0 0.0
    %2709 = vmatprep.subr.mxu0 0.0
    %2710 = vmatpush1.msra.mxu0 0.0
    %2711 = vmatprep.mubr.f32.mxu0 0.0
    %2712 = vmatmul.mubr.f32.gmra.mrb[0].mxu0 %v2576
    %v2713 = vpop.f32.mrb[0].mxu0
    %v2714 = vadd.f32 0.0, %v2713
    %v2715 = vpop.f32.mrb[0].mxu0
    %2716 = vmatprep.mubr.f32.mxu0 0.0
    %2717 = vmatmul.mubr.f32.gmra.mrb[0].mxu0 %v2579
    %v2718 = vpop.f32.mrb[0].mxu0
    %v2719 = vadd.f32 0.0, %v2718
    %v2720 = vpop.f32.mrb[0].mxu0
    %2721 = vmatprep.mubr.f32.mxu0 0.0
    %2722 = vmatmul.mubr.f32.gmra.mrb[0].mxu0 %v2582
    %v2723 = vpop.f32.mrb[0].mxu0
    %v2724 = vadd.f32 0.0, %v2723
    %v2725 = vpop.f32.mrb[0].mxu0
    %2726 = vmatprep.mubr.f32.mxu0 0.0
    %2727 = vmatmul.mubr.f32.gmra.mrb[0].mxu0 %v2585
    %v2728 = vpop.f32.mrb[0].mxu0
    %v2729 = vadd.f32 0.0, %v2728
    %v2730 = vpop.f32.mrb[0].mxu0
    %2731 = vmatprep.mubr.f32.mxu0 0.0
    %2732 = vmatmul.mubr.f32.gmra.mrb[0].mxu0 %v2588
    %v2733 = vpop.f32.mrb[0].mxu0
    %v2734 = vadd.f32 0.0, %v2733
    %v2735 = vpop.f32.mrb[0].mxu0
    %2736 = vmatprep.mubr.f32.mxu0 0.0
    %2737 = vmatmul.mubr.f32.gmra.mrb[0].mxu0 %v2591
    %v2738 = vpop.f32.mrb[0].mxu0
    %v2739 = vadd.f32 0.0, %v2738
    %v2740 = vpop.f32.mrb[0].mxu0
    %2741 = vmatprep.mubr.f32.mxu0 0.0
    %2742 = vmatmul.mubr.f32.gmra.mrb[0].mxu0 %v2594
    %v2743 = vpop.f32.mrb[0].mxu0
    %v2744 = vadd.f32 0.0, %v2743
    %v2745 = vpop.f32.mrb[0].mxu0
    %2746 = vmatprep.mubr.f32.mxu0 0.0
    %2747 = vmatmul.mubr.f32.gmra.mrb[0].mxu0 %v2597
    %v2748 = vpop.f32.mrb[0].mxu0
    %v2749 = vadd.f32 0.0, %v2748
    %v2750 = vpop.f32.mrb[0].mxu0
    %2751 = vmatprep.mubr.f32.mxu0 0.0
    %2752 = vmatmul.mubr.f32.gmra.mrb[0].mxu0 %v2600
    %v2753 = vpop.f32.mrb[0].mxu0
    %v2754 = vadd.f32 0.0, %v2753
    %v2755 = vpop.f32.mrb[0].mxu0
    %2756 = vmatprep.mubr.f32.mxu0 0.0
    %2757 = vmatmul.mubr.f32.gmra.mrb[0].mxu0 %v2603
    %v2758 = vpop.f32.mrb[0].mxu0
    %v2759 = vadd.f32 0.0, %v2758
    %v2760 = vpop.f32.mrb[0].mxu0
    %2761 = vmatprep.mubr.f32.mxu0 0.0
    %2762 = vmatmul.mubr.f32.gmra.mrb[0].mxu0 %v2606
    %v2763 = vpop.f32.mrb[0].mxu0
    %v2764 = vadd.f32 0.0, %v2763
    %v2765 = vpop.f32.mrb[0].mxu0
    %2766 = vmatprep.mubr.f32.mxu0 0.0
    %2767 = vmatmul.mubr.f32.gmra.mrb[0].mxu0 %v2609
    %v2768 = vpop.f32.mrb[0].mxu0
    %v2769 = vadd.f32 0.0, %v2768
    %v2770 = vpop.f32.mrb[0].mxu0
    %2771 = vmatprep.mubr.f32.mxu0 0.0
    %2772 = vmatmul.mubr.f32.gmra.mrb[0].mxu0 %v2612
    %v2773 = vpop.f32.mrb[0].mxu0
    %v2774 = vadd.f32 0.0, %v2773
    %v2775 = vpop.f32.mrb[0].mxu0
    %2776 = vmatprep.mubr.f32.mxu0 0.0
    %2777 = vmatmul.mubr.f32.gmra.mrb[0].mxu0 %v2615
    %v2778 = vpop.f32.mrb[0].mxu0
    %v2779 = vadd.f32 0.0, %v2778
    %v2780 = vpop.f32.mrb[0].mxu0
    %2781 = vmatprep.mubr.f32.mxu0 0.0
    %2782 = vmatmul.mubr.f32.gmra.mrb[0].mxu0 %v2618
    %v2783 = vpop.f32.mrb[0].mxu0
    %v2784 = vadd.f32 0.0, %v2783
    %v2785 = vpop.f32.mrb[0].mxu0
    %2786 = vmatprep.mubr.f32.mxu0 0.0
    %2787 = vmatmul.mubr.f32.gmra.mrb[0].mxu0 %v2621
    %v2788 = vpop.f32.mrb[0].mxu0
    %v2789 = vadd.f32 0.0, %v2788
    %v2790 = vpop.f32.mrb[0].mxu0
    %2791 = vmatprep.mubr.f32.mxu0 0.0
    %2792 = vmatmul.mubr.f32.gmra.mrb[0].mxu0 %v2624
    %v2793 = vpop.f32.mrb[0].mxu0
    %v2794 = vadd.f32 0.0, %v2793
    %v2795 = vpop.f32.mrb[0].mxu0
    %2796 = vmatprep.mubr.f32.mxu0 0.0
    %2797 = vmatmul.mubr.f32.gmra.mrb[0].mxu0 %v2627
    %v2798 = vpop.f32.mrb[0].mxu0
    %v2799 = vadd.f32 0.0, %v2798
    %v2800 = vpop.f32.mrb[0].mxu0
    %2801 = vmatprep.mubr.f32.mxu0 0.0
    %2802 = vmatmul.mubr.f32.gmra.mrb[0].mxu0 %v2630
    %v2803 = vpop.f32.mrb[0].mxu0
    %v2804 = vadd.f32 0.0, %v2803
    %v2805 = vpop.f32.mrb[0].mxu0
    %2806 = vmatprep.mubr.f32.mxu0 0.0
    %2807 = vmatmul.mubr.f32.gmra.mrb[0].mxu0 %v2633
    %v2808 = vpop.f32.mrb[0].mxu0
    %v2809 = vadd.f32 0.0, %v2808
    %v2810 = vpop.f32.mrb[0].mxu0
    %2811 = vmatprep.mubr.f32.mxu0 0.0
    %2812 = vmatmul.mubr.f32.gmra.mrb[0].mxu0 %v2636
    %v2813 = vpop.f32.mrb[0].mxu0
    %v2814 = vadd.f32 0.0, %v2813
    %v2815 = vpop.f32.mrb[0].mxu0
    %2816 = vmatprep.mubr.f32.mxu0 0.0
    %2817 = vmatmul.mubr.f32.gmra.mrb[0].mxu0 %v2639
    %v2818 = vpop.f32.mrb[0].mxu0
    %v2819 = vadd.f32 0.0, %v2818
    %v2820 = vpop.f32.mrb[0].mxu0
    %2821 = vmatprep.mubr.f32.mxu0 0.0
    %2822 = vmatmul.mubr.f32.gmra.mrb[0].mxu0 %v2642
    %v2823 = vpop.f32.mrb[0].mxu0
    %v2824 = vadd.f32 0.0, %v2823
    %v2825 = vpop.f32.mrb[0].mxu0
    %2826 = vmatprep.mubr.f32.mxu0 0.0
    %2827 = vmatmul.mubr.f32.gmra.mrb[0].mxu0 %v2645
    %v2828 = vpop.f32.mrb[0].mxu0
    %v2829 = vadd.f32 0.0, %v2828
    %v2830 = vpop.f32.mrb[0].mxu0
    %2831 = vdwg.mxu0
    %2832 = vst.msk [vmem:[#allocation3] sm:$0xff] %vm245, %v2714
    %2833 = vst.msk [vmem:[#allocation3 + $0x8] sm:$0xff] %vm245, %v2719
    %2834 = vst.msk [vmem:[#allocation3 + $0x10] sm:$0xff] %vm245, %v2724
    %2835 = vst.msk [vmem:[#allocation3 + $0x18] sm:$0xff] %vm245, %v2729
    %2836 = vst.msk [vmem:[#allocation3 + $0x20] sm:$0xff] %vm245, %v2734
    %2837 = vst.msk [vmem:[#allocation3 + $0x28] sm:$0xff] %vm245, %v2739
    %2838 = vst.msk [vmem:[#allocation3 + $0x30] sm:$0xff] %vm245, %v2744
    %2839 = vst.msk [vmem:[#allocation3 + $0x38] sm:$0xff] %vm245, %v2749
    %2840 = vst.msk [vmem:[#allocation3 + $0x40] sm:$0xff] %vm245, %v2754
    %2841 = vst.msk [vmem:[#allocation3 + $0x48] sm:$0xff] %vm245, %v2759
    %2842 = vst.msk [vmem:[#allocation3 + $0x50] sm:$0xff] %vm245, %v2764
    %2843 = vst.msk [vmem:[#allocation3 + $0x58] sm:$0xff] %vm245, %v2769
    %2844 = vst.msk [vmem:[#allocation3 + $0x60] sm:$0xff] %vm245, %v2774
    %2845 = vst.msk [vmem:[#allocation3 + $0x68] sm:$0xff] %vm245, %v2779
    %2846 = vst.msk [vmem:[#allocation3 + $0x70] sm:$0xff] %vm245, %v2784
    %2847 = vst.msk [vmem:[#allocation3 + $0x78] sm:$0xff] %vm245, %v2789
    %2848 = vst.msk [vmem:[#allocation3 + $0x80] sm:$0xff] %vm245, %v2794
    %2849 = vst.msk [vmem:[#allocation3 + $0x88] sm:$0xff] %vm245, %v2799
    %2850 = vst.msk [vmem:[#allocation3 + $0x90] sm:$0xff] %vm245, %v2804
    %2851 = vst.msk [vmem:[#allocation3 + $0x98] sm:$0xff] %vm245, %v2809
    %2852 = vst.msk [vmem:[#allocation3 + $0xa0] sm:$0xff] %vm245, %v2814
    %2853 = vst.msk [vmem:[#allocation3 + $0xa8] sm:$0xff] %vm245, %v2819
    %2854 = vst.msk [vmem:[#allocation3 + $0xb0] sm:$0xff] %vm245, %v2824
    %vm2855 = vcmask 124928
    %2856 = vst.msk [vmem:[#allocation3 + $0xb8] sm:$0x7] %vm2855, %v2829
    %s2857 = scalar_lea.vmem %s6, 1
    %v2858 = vld [vmem:[%s2857] sm:$0x1]
    %v2860 = vlaneseq
    %v2861 = vshrl.u32 %v2860, 7
    %v2862 = vsub.s32 0, %v2861
    %v2863 = vrot.slane %v2858, %v2862
    %v2865 = vmul.f32 %v2714, %v2863
    %v2866 = vmul.f32 %v2719, %v2863
    %v2867 = vmul.f32 %v2724, %v2863
    %v2868 = vmul.f32 %v2729, %v2863
    %v2869 = vmul.f32 %v2734, %v2863
    %v2870 = vmul.f32 %v2739, %v2863
    %v2871 = vmul.f32 %v2744, %v2863
    %v2872 = vmul.f32 %v2749, %v2863
    %v2873 = vmul.f32 %v2754, %v2863
    %v2874 = vmul.f32 %v2759, %v2863
    %v2875 = vmul.f32 %v2764, %v2863
    %v2876 = vmul.f32 %v2769, %v2863
    %v2877 = vmul.f32 %v2774, %v2863
    %v2878 = vmul.f32 %v2779, %v2863
    %v2879 = vmul.f32 %v2784, %v2863
    %v2880 = vmul.f32 %v2789, %v2863
    %v2881 = vmul.f32 %v2794, %v2863
    %v2882 = vmul.f32 %v2799, %v2863
    %v2883 = vmul.f32 %v2804, %v2863
    %v2884 = vmul.f32 %v2809, %v2863
    %v2885 = vmul.f32 %v2814, %v2863
    %v2886 = vmul.f32 %v2819, %v2863
    %v2887 = vmul.f32 %v2824, %v2863
    %v2888 = vmul.f32 %v2829, %v2863
    %s2889 = scalar_lea.vmem %s7, 1
    %v2890 = vld [vmem:[%s2889] sm:$0x1]
    %v2892 = vlaneseq
    %v2893 = vshrl.u32 %v2892, 7
    %v2894 = vsub.s32 0, %v2893
    %v2895 = vrot.slane %v2890, %v2894
    %v2897 = vadd.f32 %v2865, %v2895
    %v2898 = vadd.f32 %v2866, %v2895
    %v2899 = vadd.f32 %v2867, %v2895
    %v2900 = vadd.f32 %v2868, %v2895
    %v2901 = vadd.f32 %v2869, %v2895
    %v2902 = vadd.f32 %v2870, %v2895
    %v2903 = vadd.f32 %v2871, %v2895
    %v2904 = vadd.f32 %v2872, %v2895
    %v2905 = vadd.f32 %v2873, %v2895
    %v2906 = vadd.f32 %v2874, %v2895
    %v2907 = vadd.f32 %v2875, %v2895
    %v2908 = vadd.f32 %v2876, %v2895
    %v2909 = vadd.f32 %v2877, %v2895
    %v2910 = vadd.f32 %v2878, %v2895
    %v2911 = vadd.f32 %v2879, %v2895
    %v2912 = vadd.f32 %v2880, %v2895
    %v2913 = vadd.f32 %v2881, %v2895
    %v2914 = vadd.f32 %v2882, %v2895
    %v2915 = vadd.f32 %v2883, %v2895
    %v2916 = vadd.f32 %v2884, %v2895
    %v2917 = vadd.f32 %v2885, %v2895
    %v2918 = vadd.f32 %v2886, %v2895
    %v2919 = vadd.f32 %v2887, %v2895
    %v2920 = vadd.f32 %v2888, %v2895
    %vm2921 = vcmp.ge.f32.partialorder %v2897, 0.0
    %vm2922 = vcmp.ge.f32.partialorder %v2898, 0.0
    %vm2923 = vcmp.ge.f32.partialorder %v2899, 0.0
    %vm2924 = vcmp.ge.f32.partialorder %v2900, 0.0
    %vm2925 = vcmp.ge.f32.partialorder %v2901, 0.0
    %vm2926 = vcmp.ge.f32.partialorder %v2902, 0.0
    %vm2927 = vcmp.ge.f32.partialorder %v2903, 0.0
    %vm2928 = vcmp.ge.f32.partialorder %v2904, 0.0
    %vm2929 = vcmp.ge.f32.partialorder %v2905, 0.0
    %vm2930 = vcmp.ge.f32.partialorder %v2906, 0.0
    %vm2931 = vcmp.ge.f32.partialorder %v2907, 0.0
    %vm2932 = vcmp.ge.f32.partialorder %v2908, 0.0
    %vm2933 = vcmp.ge.f32.partialorder %v2909, 0.0
    %vm2934 = vcmp.ge.f32.partialorder %v2910, 0.0
    %vm2935 = vcmp.ge.f32.partialorder %v2911, 0.0
    %vm2936 = vcmp.ge.f32.partialorder %v2912, 0.0
    %vm2937 = vcmp.ge.f32.partialorder %v2913, 0.0
    %vm2938 = vcmp.ge.f32.partialorder %v2914, 0.0
    %vm2939 = vcmp.ge.f32.partialorder %v2915, 0.0
    %vm2940 = vcmp.ge.f32.partialorder %v2916, 0.0
    %vm2941 = vcmp.ge.f32.partialorder %v2917, 0.0
    %vm2942 = vcmp.ge.f32.partialorder %v2918, 0.0
    %vm2943 = vcmp.ge.f32.partialorder %v2919, 0.0
    %vm2944 = vcmp.ge.f32.partialorder %v2920, 0.0
    %v2945 = vmul.f32 %v2897, 0.01
    %v2946 = vmul.f32 %v2898, 0.01
    %v2947 = vmul.f32 %v2899, 0.01
    %v2948 = vmul.f32 %v2900, 0.01
    %v2949 = vmul.f32 %v2901, 0.01
    %v2950 = vmul.f32 %v2902, 0.01
    %v2951 = vmul.f32 %v2903, 0.01
    %v2952 = vmul.f32 %v2904, 0.01
    %v2953 = vmul.f32 %v2905, 0.01
    %v2954 = vmul.f32 %v2906, 0.01
    %v2955 = vmul.f32 %v2907, 0.01
    %v2956 = vmul.f32 %v2908, 0.01
    %v2957 = vmul.f32 %v2909, 0.01
    %v2958 = vmul.f32 %v2910, 0.01
    %v2959 = vmul.f32 %v2911, 0.01
    %v2960 = vmul.f32 %v2912, 0.01
    %v2961 = vmul.f32 %v2913, 0.01
    %v2962 = vmul.f32 %v2914, 0.01
    %v2963 = vmul.f32 %v2915, 0.01
    %v2964 = vmul.f32 %v2916, 0.01
    %v2965 = vmul.f32 %v2917, 0.01
    %v2966 = vmul.f32 %v2918, 0.01
    %v2967 = vmul.f32 %v2919, 0.01
    %v2968 = vmul.f32 %v2920, 0.01
    %v2969 = vsel %vm2921, %v2897, %v2945
    %v2970 = vsel %vm2922, %v2898, %v2946
    %v2971 = vsel %vm2923, %v2899, %v2947
    %v2972 = vsel %vm2924, %v2900, %v2948
    %v2973 = vsel %vm2925, %v2901, %v2949
    %v2974 = vsel %vm2926, %v2902, %v2950
    %v2975 = vsel %vm2927, %v2903, %v2951
    %v2976 = vsel %vm2928, %v2904, %v2952
    %v2977 = vsel %vm2929, %v2905, %v2953
    %v2978 = vsel %vm2930, %v2906, %v2954
    %v2979 = vsel %vm2931, %v2907, %v2955
    %v2980 = vsel %vm2932, %v2908, %v2956
    %v2981 = vsel %vm2933, %v2909, %v2957
    %v2982 = vsel %vm2934, %v2910, %v2958
    %v2983 = vsel %vm2935, %v2911, %v2959
    %v2984 = vsel %vm2936, %v2912, %v2960
    %v2985 = vsel %vm2937, %v2913, %v2961
    %v2986 = vsel %vm2938, %v2914, %v2962
    %v2987 = vsel %vm2939, %v2915, %v2963
    %v2988 = vsel %vm2940, %v2916, %v2964
    %v2989 = vsel %vm2941, %v2917, %v2965
    %v2990 = vsel %vm2942, %v2918, %v2966
    %v2991 = vsel %vm2943, %v2919, %v2967
    %v2992 = vsel %vm2944, %v2920, %v2968
    %2993 = vst.msk [vmem:[#allocation2 + $0x1] sm:$0xff] %vm245, %v2969
    %2994 = vst.msk [vmem:[#allocation2 + $0x9] sm:$0xff] %vm245, %v2970
    %2995 = vst.msk [vmem:[#allocation2 + $0x11] sm:$0xff] %vm245, %v2971
    %2996 = vst.msk [vmem:[#allocation2 + $0x19] sm:$0xff] %vm245, %v2972
    %2997 = vst.msk [vmem:[#allocation2 + $0x21] sm:$0xff] %vm245, %v2973
    %2998 = vst.msk [vmem:[#allocation2 + $0x29] sm:$0xff] %vm245, %v2974
    %2999 = vst.msk [vmem:[#allocation2 + $0x31] sm:$0xff] %vm245, %v2975
    %3000 = vst.msk [vmem:[#allocation2 + $0x39] sm:$0xff] %vm245, %v2976
    %3001 = vst.msk [vmem:[#allocation2 + $0x41] sm:$0xff] %vm245, %v2977
    %3002 = vst.msk [vmem:[#allocation2 + $0x49] sm:$0xff] %vm245, %v2978
    %3003 = vst.msk [vmem:[#allocation2 + $0x51] sm:$0xff] %vm245, %v2979
    %3004 = vst.msk [vmem:[#allocation2 + $0x59] sm:$0xff] %vm245, %v2980
    %3005 = vst.msk [vmem:[#allocation2 + $0x61] sm:$0xff] %vm245, %v2981
    %3006 = vst.msk [vmem:[#allocation2 + $0x69] sm:$0xff] %vm245, %v2982
    %3007 = vst.msk [vmem:[#allocation2 + $0x71] sm:$0xff] %vm245, %v2983
    %3008 = vst.msk [vmem:[#allocation2 + $0x79] sm:$0xff] %vm245, %v2984
    %3009 = vst.msk [vmem:[#allocation2 + $0x81] sm:$0xff] %vm245, %v2985
    %3010 = vst.msk [vmem:[#allocation2 + $0x89] sm:$0xff] %vm245, %v2986
    %3011 = vst.msk [vmem:[#allocation2 + $0x91] sm:$0xff] %vm245, %v2987
    %3012 = vst.msk [vmem:[#allocation2 + $0x99] sm:$0xff] %vm245, %v2988
    %3013 = vst.msk [vmem:[#allocation2 + $0xa1] sm:$0xff] %vm245, %v2989
    %3014 = vst.msk [vmem:[#allocation2 + $0xa9] sm:$0xff] %vm245, %v2990
    %3015 = vst.msk [vmem:[#allocation2 + $0xb1] sm:$0xff] %vm245, %v2991
    %3016 = vst.msk [vmem:[#allocation2 + $0xb9] sm:$0x7] %vm2855, %v2992
    %vm3017 = vcmask 122880
    %3018 = vst.msk [vmem:[#allocation2 + $0xbc] sm:$0x1] %vm3017, 0.0
    %v3019 = vld [vmem:[#allocation2] sm:$0xff]
    %v3020 = vld [vmem:[#allocation2 + $0x8] sm:$0xff]
    %v3021 = vld [vmem:[#allocation2 + $0x10] sm:$0xff]
    %v3022 = vld [vmem:[#allocation2 + $0x18] sm:$0xff]
    %v3023 = vld [vmem:[#allocation2 + $0x20] sm:$0xff]
    %v3024 = vld [vmem:[#allocation2 + $0x28] sm:$0xff]
    %v3025 = vld [vmem:[#allocation2 + $0x30] sm:$0xff]
    %v3026 = vld [vmem:[#allocation2 + $0x38] sm:$0xff]
    %v3027 = vld [vmem:[#allocation2 + $0x40] sm:$0xff]
    %v3028 = vld [vmem:[#allocation2 + $0x48] sm:$0xff]
    %v3029 = vld [vmem:[#allocation2 + $0x50] sm:$0xff]
    %v3030 = vld [vmem:[#allocation2 + $0x58] sm:$0xff]
    %v3031 = vld [vmem:[#allocation2 + $0x60] sm:$0xff]
    %v3032 = vld [vmem:[#allocation2 + $0x68] sm:$0xff]
    %v3033 = vld [vmem:[#allocation2 + $0x70] sm:$0xff]
    %v3034 = vld [vmem:[#allocation2 + $0x78] sm:$0xff]
    %v3035 = vld [vmem:[#allocation2 + $0x80] sm:$0xff]
    %v3036 = vld [vmem:[#allocation2 + $0x88] sm:$0xff]
    %v3037 = vld [vmem:[#allocation2 + $0x90] sm:$0xff]
    %v3038 = vld [vmem:[#allocation2 + $0x98] sm:$0xff]
    %v3039 = vld [vmem:[#allocation2 + $0xa0] sm:$0xff]
    %v3040 = vld [vmem:[#allocation2 + $0xa8] sm:$0xff]
    %v3041 = vld [vmem:[#allocation2 + $0xb0] sm:$0xff]
    %v3042 = vld [vmem:[#allocation2 + $0xb8] sm:$0x7]
    %v3043 = vld [vmem:[#allocation2 + $0x1] sm:$0xff]
    %v3044 = vld [vmem:[#allocation2 + $0x9] sm:$0xff]
    %v3045 = vld [vmem:[#allocation2 + $0x11] sm:$0xff]
    %v3046 = vld [vmem:[#allocation2 + $0x19] sm:$0xff]
    %v3047 = vld [vmem:[#allocation2 + $0x21] sm:$0xff]
    %v3048 = vld [vmem:[#allocation2 + $0x29] sm:$0xff]
    %v3049 = vld [vmem:[#allocation2 + $0x31] sm:$0xff]
    %v3050 = vld [vmem:[#allocation2 + $0x39] sm:$0xff]
    %v3051 = vld [vmem:[#allocation2 + $0x41] sm:$0xff]
    %v3052 = vld [vmem:[#allocation2 + $0x49] sm:$0xff]
    %v3053 = vld [vmem:[#allocation2 + $0x51] sm:$0xff]
    %v3054 = vld [vmem:[#allocation2 + $0x59] sm:$0xff]
    %v3055 = vld [vmem:[#allocation2 + $0x61] sm:$0xff]
    %v3056 = vld [vmem:[#allocation2 + $0x69] sm:$0xff]
    %v3057 = vld [vmem:[#allocation2 + $0x71] sm:$0xff]
    %v3058 = vld [vmem:[#allocation2 + $0x79] sm:$0xff]
    %v3059 = vld [vmem:[#allocation2 + $0x81] sm:$0xff]
    %v3060 = vld [vmem:[#allocation2 + $0x89] sm:$0xff]
    %v3061 = vld [vmem:[#allocation2 + $0x91] sm:$0xff]
    %v3062 = vld [vmem:[#allocation2 + $0x99] sm:$0xff]
    %v3063 = vld [vmem:[#allocation2 + $0xa1] sm:$0xff]
    %v3064 = vld [vmem:[#allocation2 + $0xa9] sm:$0xff]
    %v3065 = vld [vmem:[#allocation2 + $0xb1] sm:$0xff]
    %v3066 = vld [vmem:[#allocation2 + $0xb9] sm:$0x7]
    %v3067 = vld [vmem:[#allocation2 + $0x2] sm:$0xff]
    %v3068 = vld [vmem:[#allocation2 + $0xa] sm:$0xff]
    %v3069 = vld [vmem:[#allocation2 + $0x12] sm:$0xff]
    %v3070 = vld [vmem:[#allocation2 + $0x1a] sm:$0xff]
    %v3071 = vld [vmem:[#allocation2 + $0x22] sm:$0xff]
    %v3072 = vld [vmem:[#allocation2 + $0x2a] sm:$0xff]
    %v3073 = vld [vmem:[#allocation2 + $0x32] sm:$0xff]
    %v3074 = vld [vmem:[#allocation2 + $0x3a] sm:$0xff]
    %v3075 = vld [vmem:[#allocation2 + $0x42] sm:$0xff]
    %v3076 = vld [vmem:[#allocation2 + $0x4a] sm:$0xff]
    %v3077 = vld [vmem:[#allocation2 + $0x52] sm:$0xff]
    %v3078 = vld [vmem:[#allocation2 + $0x5a] sm:$0xff]
    %v3079 = vld [vmem:[#allocation2 + $0x62] sm:$0xff]
    %v3080 = vld [vmem:[#allocation2 + $0x6a] sm:$0xff]
    %v3081 = vld [vmem:[#allocation2 + $0x72] sm:$0xff]
    %v3082 = vld [vmem:[#allocation2 + $0x7a] sm:$0xff]
    %v3083 = vld [vmem:[#allocation2 + $0x82] sm:$0xff]
    %v3084 = vld [vmem:[#allocation2 + $0x8a] sm:$0xff]
    %v3085 = vld [vmem:[#allocation2 + $0x92] sm:$0xff]
    %v3086 = vld [vmem:[#allocation2 + $0x9a] sm:$0xff]
    %v3087 = vld [vmem:[#allocation2 + $0xa2] sm:$0xff]
    %v3088 = vld [vmem:[#allocation2 + $0xaa] sm:$0xff]
    %v3089 = vld [vmem:[#allocation2 + $0xb2] sm:$0xff]
    %v3090 = vld [vmem:[#allocation2 + $0xba] sm:$0x7]
    %3115 = vrot.lane.b32.xlu0 %v3043, 16
    %v3116 = vpop.permute.xlu0 %3115
    %3117 = vrot.lane.b32.xlu0 %v3044, 16
    %v3118 = vpop.permute.xlu0 %3117
    %3119 = vrot.lane.b32.xlu0 %v3045, 16
    %v3120 = vpop.permute.xlu0 %3119
    %3121 = vrot.lane.b32.xlu0 %v3046, 16
    %v3122 = vpop.permute.xlu0 %3121
    %3123 = vrot.lane.b32.xlu0 %v3047, 16
    %v3124 = vpop.permute.xlu0 %3123
    %3125 = vrot.lane.b32.xlu0 %v3048, 16
    %v3126 = vpop.permute.xlu0 %3125
    %3127 = vrot.lane.b32.xlu0 %v3049, 16
    %v3128 = vpop.permute.xlu0 %3127
    %3129 = vrot.lane.b32.xlu0 %v3050, 16
    %v3130 = vpop.permute.xlu0 %3129
    %3131 = vrot.lane.b32.xlu0 %v3051, 16
    %v3132 = vpop.permute.xlu0 %3131
    %3133 = vrot.lane.b32.xlu0 %v3052, 16
    %v3134 = vpop.permute.xlu0 %3133
    %3135 = vrot.lane.b32.xlu0 %v3053, 16
    %v3136 = vpop.permute.xlu0 %3135
    %3137 = vrot.lane.b32.xlu0 %v3054, 16
    %v3138 = vpop.permute.xlu0 %3137
    %3139 = vrot.lane.b32.xlu0 %v3055, 16
    %v3140 = vpop.permute.xlu0 %3139
    %3141 = vrot.lane.b32.xlu0 %v3056, 16
    %v3142 = vpop.permute.xlu0 %3141
    %3143 = vrot.lane.b32.xlu0 %v3057, 16
    %v3144 = vpop.permute.xlu0 %3143
    %3145 = vrot.lane.b32.xlu0 %v3058, 16
    %v3146 = vpop.permute.xlu0 %3145
    %3147 = vrot.lane.b32.xlu0 %v3059, 16
    %v3148 = vpop.permute.xlu0 %3147
    %3149 = vrot.lane.b32.xlu0 %v3060, 16
    %v3150 = vpop.permute.xlu0 %3149
    %3151 = vrot.lane.b32.xlu0 %v3061, 16
    %v3152 = vpop.permute.xlu0 %3151
    %3153 = vrot.lane.b32.xlu0 %v3062, 16
    %v3154 = vpop.permute.xlu0 %3153
    %3155 = vrot.lane.b32.xlu0 %v3063, 16
    %v3156 = vpop.permute.xlu0 %3155
    %3157 = vrot.lane.b32.xlu0 %v3064, 16
    %v3158 = vpop.permute.xlu0 %3157
    %3159 = vrot.lane.b32.xlu0 %v3065, 16
    %v3160 = vpop.permute.xlu0 %3159
    %3161 = vrot.lane.b32.xlu0 %v3066, 16
    %v3162 = vpop.permute.xlu0 %3161
    %3211 = vrot.lane.b32.xlu0 %v3067, 32
    %v3212 = vpop.permute.xlu0 %3211
    %3213 = vrot.lane.b32.xlu0 %v3068, 32
    %v3214 = vpop.permute.xlu0 %3213
    %3215 = vrot.lane.b32.xlu0 %v3069, 32
    %v3216 = vpop.permute.xlu0 %3215
    %3217 = vrot.lane.b32.xlu0 %v3070, 32
    %v3218 = vpop.permute.xlu0 %3217
    %3219 = vrot.lane.b32.xlu0 %v3071, 32
    %v3220 = vpop.permute.xlu0 %3219
    %3221 = vrot.lane.b32.xlu0 %v3072, 32
    %v3222 = vpop.permute.xlu0 %3221
    %3223 = vrot.lane.b32.xlu0 %v3073, 32
    %v3224 = vpop.permute.xlu0 %3223
    %3225 = vrot.lane.b32.xlu0 %v3074, 32
    %v3226 = vpop.permute.xlu0 %3225
    %3227 = vrot.lane.b32.xlu0 %v3075, 32
    %v3228 = vpop.permute.xlu0 %3227
    %3229 = vrot.lane.b32.xlu0 %v3076, 32
    %v3230 = vpop.permute.xlu0 %3229
    %3231 = vrot.lane.b32.xlu0 %v3077, 32
    %v3232 = vpop.permute.xlu0 %3231
    %3233 = vrot.lane.b32.xlu0 %v3078, 32
    %v3234 = vpop.permute.xlu0 %3233
    %3235 = vrot.lane.b32.xlu0 %v3079, 32
    %v3236 = vpop.permute.xlu0 %3235
    %3237 = vrot.lane.b32.xlu0 %v3080, 32
    %v3238 = vpop.permute.xlu0 %3237
    %3239 = vrot.lane.b32.xlu0 %v3081, 32
    %v3240 = vpop.permute.xlu0 %3239
    %3241 = vrot.lane.b32.xlu0 %v3082, 32
    %v3242 = vpop.permute.xlu0 %3241
    %3243 = vrot.lane.b32.xlu0 %v3083, 32
    %v3244 = vpop.permute.xlu0 %3243
    %3245 = vrot.lane.b32.xlu0 %v3084, 32
    %v3246 = vpop.permute.xlu0 %3245
    %3247 = vrot.lane.b32.xlu0 %v3085, 32
    %v3248 = vpop.permute.xlu0 %3247
    %3249 = vrot.lane.b32.xlu0 %v3086, 32
    %v3250 = vpop.permute.xlu0 %3249
    %3251 = vrot.lane.b32.xlu0 %v3087, 32
    %v3252 = vpop.permute.xlu0 %3251
    %3253 = vrot.lane.b32.xlu0 %v3088, 32
    %v3254 = vpop.permute.xlu0 %3253
    %3255 = vrot.lane.b32.xlu0 %v3089, 32
    %v3256 = vpop.permute.xlu0 %3255
    %3257 = vrot.lane.b32.xlu0 %v3090, 32
    %v3258 = vpop.permute.xlu0 %3257
    %v3283 = vsel %vm245, %v3019, %v3116
    %v3284 = vsel %vm245, %v3020, %v3118
    %v3285 = vsel %vm245, %v3021, %v3120
    %v3286 = vsel %vm245, %v3022, %v3122
    %v3287 = vsel %vm245, %v3023, %v3124
    %v3288 = vsel %vm245, %v3024, %v3126
    %v3289 = vsel %vm245, %v3025, %v3128
    %v3290 = vsel %vm245, %v3026, %v3130
    %v3291 = vsel %vm245, %v3027, %v3132
    %v3292 = vsel %vm245, %v3028, %v3134
    %v3293 = vsel %vm245, %v3029, %v3136
    %v3294 = vsel %vm245, %v3030, %v3138
    %v3295 = vsel %vm245, %v3031, %v3140
    %v3296 = vsel %vm245, %v3032, %v3142
    %v3297 = vsel %vm245, %v3033, %v3144
    %v3298 = vsel %vm245, %v3034, %v3146
    %v3299 = vsel %vm245, %v3035, %v3148
    %v3300 = vsel %vm245, %v3036, %v3150
    %v3301 = vsel %vm245, %v3037, %v3152
    %v3302 = vsel %vm245, %v3038, %v3154
    %v3303 = vsel %vm245, %v3039, %v3156
    %v3304 = vsel %vm245, %v3040, %v3158
    %v3305 = vsel %vm245, %v3041, %v3160
    %v3306 = vsel %vm245, %v3042, %v3162
    %v3307 = vsel %vm954, %v3283, %v3212
    %v3308 = vsel %vm954, %v3284, %v3214
    %v3309 = vsel %vm954, %v3285, %v3216
    %v3310 = vsel %vm954, %v3286, %v3218
    %v3311 = vsel %vm954, %v3287, %v3220
    %v3312 = vsel %vm954, %v3288, %v3222
    %v3313 = vsel %vm954, %v3289, %v3224
    %v3314 = vsel %vm954, %v3290, %v3226
    %v3315 = vsel %vm954, %v3291, %v3228
    %v3316 = vsel %vm954, %v3292, %v3230
    %v3317 = vsel %vm954, %v3293, %v3232
    %v3318 = vsel %vm954, %v3294, %v3234
    %v3319 = vsel %vm954, %v3295, %v3236
    %v3320 = vsel %vm954, %v3296, %v3238
    %v3321 = vsel %vm954, %v3297, %v3240
    %v3322 = vsel %vm954, %v3298, %v3242
    %v3323 = vsel %vm954, %v3299, %v3244
    %v3324 = vsel %vm954, %v3300, %v3246
    %v3325 = vsel %vm954, %v3301, %v3248
    %v3326 = vsel %vm954, %v3302, %v3250
    %v3327 = vsel %vm954, %v3303, %v3252
    %v3328 = vsel %vm954, %v3304, %v3254
    %v3329 = vsel %vm954, %v3305, %v3256
    %v3330 = vsel %vm954, %v3306, %v3258
    %v3331 = vld [vmem:[%s5] sm:$0xff]
    %v3332 = vld [vmem:[%s5 + $0x8] sm:$0xff]
    %v3333 = vld [vmem:[%s5 + $0x10] sm:$0xff]
    %v3334 = vld [vmem:[%s5 + $0x18] sm:$0xff]
    %v3335 = vld [vmem:[%s5 + $0x20] sm:$0xff]
    %v3336 = vld [vmem:[%s5 + $0x28] sm:$0xff]
    %v3338 = vsel %vm1857, %v3307, 0
    %v3341 = vsel %vm1857, %v3308, 0
    %v3344 = vsel %vm1857, %v3309, 0
    %v3347 = vsel %vm1857, %v3310, 0
    %v3350 = vsel %vm1857, %v3311, 0
    %v3353 = vsel %vm1857, %v3312, 0
    %v3356 = vsel %vm1857, %v3313, 0
    %v3359 = vsel %vm1857, %v3314, 0
    %v3362 = vsel %vm1857, %v3315, 0
    %v3365 = vsel %vm1857, %v3316, 0
    %v3368 = vsel %vm1857, %v3317, 0
    %v3371 = vsel %vm1857, %v3318, 0
    %v3374 = vsel %vm1857, %v3319, 0
    %v3377 = vsel %vm1857, %v3320, 0
    %v3380 = vsel %vm1857, %v3321, 0
    %v3383 = vsel %vm1857, %v3322, 0
    %v3386 = vsel %vm1857, %v3323, 0
    %v3389 = vsel %vm1857, %v3324, 0
    %v3392 = vsel %vm1857, %v3325, 0
    %v3395 = vsel %vm1857, %v3326, 0
    %v3398 = vsel %vm1857, %v3327, 0
    %v3401 = vsel %vm1857, %v3328, 0
    %v3404 = vsel %vm1857, %v3329, 0
    %v3407 = vsel %vm1857, %v3330, 0
    %3409 = vmatprep.subr.mxu0 0.0
    %3410 = vmatpush1.msra.mxu0 %v3331
    %3411 = vmatprep.subr.mxu0 0.0
    %3412 = vmatpush1.msra.mxu0 %v3332
    %3413 = vmatprep.subr.mxu0 0.0
    %3414 = vmatpush1.msra.mxu0 %v3333
    %3415 = vmatprep.subr.mxu0 0.0
    %3416 = vmatpush1.msra.mxu0 %v3334
    %3417 = vmatprep.subr.mxu0 0.0
    %3418 = vmatpush1.msra.mxu0 %v3335
    %3419 = vmatprep.subr.mxu0 0.0
    %3420 = vmatpush1.msra.mxu0 %v3336
    %3421 = vmatprep.subr.mxu0 0.0
    %3422 = vmatpush1.msra.mxu0 0.0
    %3423 = vmatprep.subr.mxu0 0.0
    %3424 = vmatpush1.msra.mxu0 0.0
    %3425 = vmatprep.subr.mxu0 0.0
    %3426 = vmatpush1.msra.mxu0 0.0
    %3427 = vmatprep.subr.mxu0 0.0
    %3428 = vmatpush1.msra.mxu0 0.0
    %3429 = vmatprep.subr.mxu0 0.0
    %3430 = vmatpush1.msra.mxu0 0.0
    %3431 = vmatprep.subr.mxu0 0.0
    %3432 = vmatpush1.msra.mxu0 0.0
    %3433 = vmatprep.subr.mxu0 0.0
    %3434 = vmatpush1.msra.mxu0 0.0
    %3435 = vmatprep.subr.mxu0 0.0
    %3436 = vmatpush1.msra.mxu0 0.0
    %3437 = vmatprep.subr.mxu0 0.0
    %3438 = vmatpush1.msra.mxu0 0.0
    %3439 = vmatprep.subr.mxu0 0.0
    %3440 = vmatpush1.msra.mxu0 0.0
    %3441 = vmatprep.subr.mxu0 0.0
    %3442 = vmatpush1.msra.mxu0 0.0
    %3443 = vmatprep.subr.mxu0 0.0
    %3444 = vmatpush1.msra.mxu0 0.0
    %3445 = vmatprep.subr.mxu0 0.0
    %3446 = vmatpush1.msra.mxu0 0.0
    %3447 = vmatprep.subr.mxu0 0.0
    %3448 = vmatpush1.msra.mxu0 0.0
    %3449 = vmatprep.subr.mxu0 0.0
    %3450 = vmatpush1.msra.mxu0 0.0
    %3451 = vmatprep.subr.mxu0 0.0
    %3452 = vmatpush1.msra.mxu0 0.0
    %3453 = vmatprep.subr.mxu0 0.0
    %3454 = vmatpush1.msra.mxu0 0.0
    %3455 = vmatprep.subr.mxu0 0.0
    %3456 = vmatpush1.msra.mxu0 0.0
    %3457 = vmatprep.subr.mxu0 0.0
    %3458 = vmatpush1.msra.mxu0 0.0
    %3459 = vmatprep.subr.mxu0 0.0
    %3460 = vmatpush1.msra.mxu0 0.0
    %3461 = vmatprep.subr.mxu0 0.0
    %3462 = vmatpush1.msra.mxu0 0.0
    %3463 = vmatprep.subr.mxu0 0.0
    %3464 = vmatpush1.msra.mxu0 0.0
    %3465 = vmatprep.subr.mxu0 0.0
    %3466 = vmatpush1.msra.mxu0 0.0
    %3467 = vmatprep.subr.mxu0 0.0
    %3468 = vmatpush1.msra.mxu0 0.0
    %3469 = vmatprep.subr.mxu0 0.0
    %3470 = vmatpush1.msra.mxu0 0.0
    %3471 = vmatprep.subr.mxu0 0.0
    %3472 = vmatpush1.msra.mxu0 0.0
    %3473 = vmatprep.mubr.f32.mxu0 0.0
    %3474 = vmatmul.mubr.f32.gmra.mrb[0].mxu0 %v3338
    %v3475 = vpop.f32.mrb[0].mxu0
    %v3476 = vadd.f32 0.0, %v3475
    %v3477 = vpop.f32.mrb[0].mxu0
    %3478 = vmatprep.mubr.f32.mxu0 0.0
    %3479 = vmatmul.mubr.f32.gmra.mrb[0].mxu0 %v3341
    %v3480 = vpop.f32.mrb[0].mxu0
    %v3481 = vadd.f32 0.0, %v3480
    %v3482 = vpop.f32.mrb[0].mxu0
    %3483 = vmatprep.mubr.f32.mxu0 0.0
    %3484 = vmatmul.mubr.f32.gmra.mrb[0].mxu0 %v3344
    %v3485 = vpop.f32.mrb[0].mxu0
    %v3486 = vadd.f32 0.0, %v3485
    %v3487 = vpop.f32.mrb[0].mxu0
    %3488 = vmatprep.mubr.f32.mxu0 0.0
    %3489 = vmatmul.mubr.f32.gmra.mrb[0].mxu0 %v3347
    %v3490 = vpop.f32.mrb[0].mxu0
    %v3491 = vadd.f32 0.0, %v3490
    %v3492 = vpop.f32.mrb[0].mxu0
    %3493 = vmatprep.mubr.f32.mxu0 0.0
    %3494 = vmatmul.mubr.f32.gmra.mrb[0].mxu0 %v3350
    %v3495 = vpop.f32.mrb[0].mxu0
    %v3496 = vadd.f32 0.0, %v3495
    %v3497 = vpop.f32.mrb[0].mxu0
    %3498 = vmatprep.mubr.f32.mxu0 0.0
    %3499 = vmatmul.mubr.f32.gmra.mrb[0].mxu0 %v3353
    %v3500 = vpop.f32.mrb[0].mxu0
    %v3501 = vadd.f32 0.0, %v3500
    %v3502 = vpop.f32.mrb[0].mxu0
    %3503 = vmatprep.mubr.f32.mxu0 0.0
    %3504 = vmatmul.mubr.f32.gmra.mrb[0].mxu0 %v3356
    %v3505 = vpop.f32.mrb[0].mxu0
    %v3506 = vadd.f32 0.0, %v3505
    %v3507 = vpop.f32.mrb[0].mxu0
    %3508 = vmatprep.mubr.f32.mxu0 0.0
    %3509 = vmatmul.mubr.f32.gmra.mrb[0].mxu0 %v3359
    %v3510 = vpop.f32.mrb[0].mxu0
    %v3511 = vadd.f32 0.0, %v3510
    %v3512 = vpop.f32.mrb[0].mxu0
    %3513 = vmatprep.mubr.f32.mxu0 0.0
    %3514 = vmatmul.mubr.f32.gmra.mrb[0].mxu0 %v3362
    %v3515 = vpop.f32.mrb[0].mxu0
    %v3516 = vadd.f32 0.0, %v3515
    %v3517 = vpop.f32.mrb[0].mxu0
    %3518 = vmatprep.mubr.f32.mxu0 0.0
    %3519 = vmatmul.mubr.f32.gmra.mrb[0].mxu0 %v3365
    %v3520 = vpop.f32.mrb[0].mxu0
    %v3521 = vadd.f32 0.0, %v3520
    %v3522 = vpop.f32.mrb[0].mxu0
    %3523 = vmatprep.mubr.f32.mxu0 0.0
    %3524 = vmatmul.mubr.f32.gmra.mrb[0].mxu0 %v3368
    %v3525 = vpop.f32.mrb[0].mxu0
    %v3526 = vadd.f32 0.0, %v3525
    %v3527 = vpop.f32.mrb[0].mxu0
    %3528 = vmatprep.mubr.f32.mxu0 0.0
    %3529 = vmatmul.mubr.f32.gmra.mrb[0].mxu0 %v3371
    %v3530 = vpop.f32.mrb[0].mxu0
    %v3531 = vadd.f32 0.0, %v3530
    %v3532 = vpop.f32.mrb[0].mxu0
    %3533 = vmatprep.mubr.f32.mxu0 0.0
    %3534 = vmatmul.mubr.f32.gmra.mrb[0].mxu0 %v3374
    %v3535 = vpop.f32.mrb[0].mxu0
    %v3536 = vadd.f32 0.0, %v3535
    %v3537 = vpop.f32.mrb[0].mxu0
    %3538 = vmatprep.mubr.f32.mxu0 0.0
    %3539 = vmatmul.mubr.f32.gmra.mrb[0].mxu0 %v3377
    %v3540 = vpop.f32.mrb[0].mxu0
    %v3541 = vadd.f32 0.0, %v3540
    %v3542 = vpop.f32.mrb[0].mxu0
    %3543 = vmatprep.mubr.f32.mxu0 0.0
    %3544 = vmatmul.mubr.f32.gmra.mrb[0].mxu0 %v3380
    %v3545 = vpop.f32.mrb[0].mxu0
    %v3546 = vadd.f32 0.0, %v3545
    %v3547 = vpop.f32.mrb[0].mxu0
    %3548 = vmatprep.mubr.f32.mxu0 0.0
    %3549 = vmatmul.mubr.f32.gmra.mrb[0].mxu0 %v3383
    %v3550 = vpop.f32.mrb[0].mxu0
    %v3551 = vadd.f32 0.0, %v3550
    %v3552 = vpop.f32.mrb[0].mxu0
    %3553 = vmatprep.mubr.f32.mxu0 0.0
    %3554 = vmatmul.mubr.f32.gmra.mrb[0].mxu0 %v3386
    %v3555 = vpop.f32.mrb[0].mxu0
    %v3556 = vadd.f32 0.0, %v3555
    %v3557 = vpop.f32.mrb[0].mxu0
    %3558 = vmatprep.mubr.f32.mxu0 0.0
    %3559 = vmatmul.mubr.f32.gmra.mrb[0].mxu0 %v3389
    %v3560 = vpop.f32.mrb[0].mxu0
    %v3561 = vadd.f32 0.0, %v3560
    %v3562 = vpop.f32.mrb[0].mxu0
    %3563 = vmatprep.mubr.f32.mxu0 0.0
    %3564 = vmatmul.mubr.f32.gmra.mrb[0].mxu0 %v3392
    %v3565 = vpop.f32.mrb[0].mxu0
    %v3566 = vadd.f32 0.0, %v3565
    %v3567 = vpop.f32.mrb[0].mxu0
    %3568 = vmatprep.mubr.f32.mxu0 0.0
    %3569 = vmatmul.mubr.f32.gmra.mrb[0].mxu0 %v3395
    %v3570 = vpop.f32.mrb[0].mxu0
    %v3571 = vadd.f32 0.0, %v3570
    %v3572 = vpop.f32.mrb[0].mxu0
    %3573 = vmatprep.mubr.f32.mxu0 0.0
    %3574 = vmatmul.mubr.f32.gmra.mrb[0].mxu0 %v3398
    %v3575 = vpop.f32.mrb[0].mxu0
    %v3576 = vadd.f32 0.0, %v3575
    %v3577 = vpop.f32.mrb[0].mxu0
    %3578 = vmatprep.mubr.f32.mxu0 0.0
    %3579 = vmatmul.mubr.f32.gmra.mrb[0].mxu0 %v3401
    %v3580 = vpop.f32.mrb[0].mxu0
    %v3581 = vadd.f32 0.0, %v3580
    %v3582 = vpop.f32.mrb[0].mxu0
    %3583 = vmatprep.mubr.f32.mxu0 0.0
    %3584 = vmatmul.mubr.f32.gmra.mrb[0].mxu0 %v3404
    %v3585 = vpop.f32.mrb[0].mxu0
    %v3586 = vadd.f32 0.0, %v3585
    %v3587 = vpop.f32.mrb[0].mxu0
    %3588 = vmatprep.mubr.f32.mxu0 0.0
    %3589 = vmatmul.mubr.f32.gmra.mrb[0].mxu0 %v3407
    %v3590 = vpop.f32.mrb[0].mxu0
    %v3591 = vadd.f32 0.0, %v3590
    %v3592 = vpop.f32.mrb[0].mxu0
    %3593 = vdwg.mxu0
    %s3594 = scalar_lea.vmem %s6, 2
    %v3595 = vld [vmem:[%s3594] sm:$0x1]
    %v3597 = vlaneseq
    %v3598 = vshrl.u32 %v3597, 7
    %v3599 = vsub.s32 0, %v3598
    %v3600 = vrot.slane %v3595, %v3599
    %v3602 = vmul.f32 %v3476, %v3600
    %v3603 = vmul.f32 %v3481, %v3600
    %v3604 = vmul.f32 %v3486, %v3600
    %v3605 = vmul.f32 %v3491, %v3600
    %v3606 = vmul.f32 %v3496, %v3600
    %v3607 = vmul.f32 %v3501, %v3600
    %v3608 = vmul.f32 %v3506, %v3600
    %v3609 = vmul.f32 %v3511, %v3600
    %v3610 = vmul.f32 %v3516, %v3600
    %v3611 = vmul.f32 %v3521, %v3600
    %v3612 = vmul.f32 %v3526, %v3600
    %v3613 = vmul.f32 %v3531, %v3600
    %v3614 = vmul.f32 %v3536, %v3600
    %v3615 = vmul.f32 %v3541, %v3600
    %v3616 = vmul.f32 %v3546, %v3600
    %v3617 = vmul.f32 %v3551, %v3600
    %v3618 = vmul.f32 %v3556, %v3600
    %v3619 = vmul.f32 %v3561, %v3600
    %v3620 = vmul.f32 %v3566, %v3600
    %v3621 = vmul.f32 %v3571, %v3600
    %v3622 = vmul.f32 %v3576, %v3600
    %v3623 = vmul.f32 %v3581, %v3600
    %v3624 = vmul.f32 %v3586, %v3600
    %v3625 = vmul.f32 %v3591, %v3600
    %s3626 = scalar_lea.vmem %s7, 2
    %v3627 = vld [vmem:[%s3626] sm:$0x1]
    %v3629 = vlaneseq
    %v3630 = vshrl.u32 %v3629, 7
    %v3631 = vsub.s32 0, %v3630
    %v3632 = vrot.slane %v3627, %v3631
    %v3634 = vadd.f32 %v3602, %v3632
    %v3635 = vadd.f32 %v3603, %v3632
    %v3636 = vadd.f32 %v3604, %v3632
    %v3637 = vadd.f32 %v3605, %v3632
    %v3638 = vadd.f32 %v3606, %v3632
    %v3639 = vadd.f32 %v3607, %v3632
    %v3640 = vadd.f32 %v3608, %v3632
    %v3641 = vadd.f32 %v3609, %v3632
    %v3642 = vadd.f32 %v3610, %v3632
    %v3643 = vadd.f32 %v3611, %v3632
    %v3644 = vadd.f32 %v3612, %v3632
    %v3645 = vadd.f32 %v3613, %v3632
    %v3646 = vadd.f32 %v3614, %v3632
    %v3647 = vadd.f32 %v3615, %v3632
    %v3648 = vadd.f32 %v3616, %v3632
    %v3649 = vadd.f32 %v3617, %v3632
    %v3650 = vadd.f32 %v3618, %v3632
    %v3651 = vadd.f32 %v3619, %v3632
    %v3652 = vadd.f32 %v3620, %v3632
    %v3653 = vadd.f32 %v3621, %v3632
    %v3654 = vadd.f32 %v3622, %v3632
    %v3655 = vadd.f32 %v3623, %v3632
    %v3656 = vadd.f32 %v3624, %v3632
    %v3657 = vadd.f32 %v3625, %v3632
    %vm3658 = vcmp.ge.f32.partialorder %v3634, 0.0
    %vm3659 = vcmp.ge.f32.partialorder %v3635, 0.0
    %vm3660 = vcmp.ge.f32.partialorder %v3636, 0.0
    %vm3661 = vcmp.ge.f32.partialorder %v3637, 0.0
    %vm3662 = vcmp.ge.f32.partialorder %v3638, 0.0
    %vm3663 = vcmp.ge.f32.partialorder %v3639, 0.0
    %vm3664 = vcmp.ge.f32.partialorder %v3640, 0.0
    %vm3665 = vcmp.ge.f32.partialorder %v3641, 0.0
    %vm3666 = vcmp.ge.f32.partialorder %v3642, 0.0
    %vm3667 = vcmp.ge.f32.partialorder %v3643, 0.0
    %vm3668 = vcmp.ge.f32.partialorder %v3644, 0.0
    %vm3669 = vcmp.ge.f32.partialorder %v3645, 0.0
    %vm3670 = vcmp.ge.f32.partialorder %v3646, 0.0
    %vm3671 = vcmp.ge.f32.partialorder %v3647, 0.0
    %vm3672 = vcmp.ge.f32.partialorder %v3648, 0.0
    %vm3673 = vcmp.ge.f32.partialorder %v3649, 0.0
    %vm3674 = vcmp.ge.f32.partialorder %v3650, 0.0
    %vm3675 = vcmp.ge.f32.partialorder %v3651, 0.0
    %vm3676 = vcmp.ge.f32.partialorder %v3652, 0.0
    %vm3677 = vcmp.ge.f32.partialorder %v3653, 0.0
    %vm3678 = vcmp.ge.f32.partialorder %v3654, 0.0
    %vm3679 = vcmp.ge.f32.partialorder %v3655, 0.0
    %vm3680 = vcmp.ge.f32.partialorder %v3656, 0.0
    %vm3681 = vcmp.ge.f32.partialorder %v3657, 0.0
    %v3682 = vmul.f32 %v3634, 0.01
    %v3683 = vmul.f32 %v3635, 0.01
    %v3684 = vmul.f32 %v3636, 0.01
    %v3685 = vmul.f32 %v3637, 0.01
    %v3686 = vmul.f32 %v3638, 0.01
    %v3687 = vmul.f32 %v3639, 0.01
    %v3688 = vmul.f32 %v3640, 0.01
    %v3689 = vmul.f32 %v3641, 0.01
    %v3690 = vmul.f32 %v3642, 0.01
    %v3691 = vmul.f32 %v3643, 0.01
    %v3692 = vmul.f32 %v3644, 0.01
    %v3693 = vmul.f32 %v3645, 0.01
    %v3694 = vmul.f32 %v3646, 0.01
    %v3695 = vmul.f32 %v3647, 0.01
    %v3696 = vmul.f32 %v3648, 0.01
    %v3697 = vmul.f32 %v3649, 0.01
    %v3698 = vmul.f32 %v3650, 0.01
    %v3699 = vmul.f32 %v3651, 0.01
    %v3700 = vmul.f32 %v3652, 0.01
    %v3701 = vmul.f32 %v3653, 0.01
    %v3702 = vmul.f32 %v3654, 0.01
    %v3703 = vmul.f32 %v3655, 0.01
    %v3704 = vmul.f32 %v3656, 0.01
    %v3705 = vmul.f32 %v3657, 0.01
    %v3706 = vsel %vm3658, %v3634, %v3682
    %v3707 = vsel %vm3659, %v3635, %v3683
    %v3708 = vsel %vm3660, %v3636, %v3684
    %v3709 = vsel %vm3661, %v3637, %v3685
    %v3710 = vsel %vm3662, %v3638, %v3686
    %v3711 = vsel %vm3663, %v3639, %v3687
    %v3712 = vsel %vm3664, %v3640, %v3688
    %v3713 = vsel %vm3665, %v3641, %v3689
    %v3714 = vsel %vm3666, %v3642, %v3690
    %v3715 = vsel %vm3667, %v3643, %v3691
    %v3716 = vsel %vm3668, %v3644, %v3692
    %v3717 = vsel %vm3669, %v3645, %v3693
    %v3718 = vsel %vm3670, %v3646, %v3694
    %v3719 = vsel %vm3671, %v3647, %v3695
    %v3720 = vsel %vm3672, %v3648, %v3696
    %v3721 = vsel %vm3673, %v3649, %v3697
    %v3722 = vsel %vm3674, %v3650, %v3698
    %v3723 = vsel %vm3675, %v3651, %v3699
    %v3724 = vsel %vm3676, %v3652, %v3700
    %v3725 = vsel %vm3677, %v3653, %v3701
    %v3726 = vsel %vm3678, %v3654, %v3702
    %v3727 = vsel %vm3679, %v3655, %v3703
    %v3728 = vsel %vm3680, %v3656, %v3704
    %v3729 = vsel %vm3681, %v3657, %v3705
    %3730 = vst.msk [vmem:[#allocation2 + $0x1] sm:$0xff] %vm245, %v3706
    %3731 = vst.msk [vmem:[#allocation2 + $0x9] sm:$0xff] %vm245, %v3707
    %3732 = vst.msk [vmem:[#allocation2 + $0x11] sm:$0xff] %vm245, %v3708
    %3733 = vst.msk [vmem:[#allocation2 + $0x19] sm:$0xff] %vm245, %v3709
    %3734 = vst.msk [vmem:[#allocation2 + $0x21] sm:$0xff] %vm245, %v3710
    %3735 = vst.msk [vmem:[#allocation2 + $0x29] sm:$0xff] %vm245, %v3711
    %3736 = vst.msk [vmem:[#allocation2 + $0x31] sm:$0xff] %vm245, %v3712
    %3737 = vst.msk [vmem:[#allocation2 + $0x39] sm:$0xff] %vm245, %v3713
    %3738 = vst.msk [vmem:[#allocation2 + $0x41] sm:$0xff] %vm245, %v3714
    %3739 = vst.msk [vmem:[#allocation2 + $0x49] sm:$0xff] %vm245, %v3715
    %3740 = vst.msk [vmem:[#allocation2 + $0x51] sm:$0xff] %vm245, %v3716
    %3741 = vst.msk [vmem:[#allocation2 + $0x59] sm:$0xff] %vm245, %v3717
    %3742 = vst.msk [vmem:[#allocation2 + $0x61] sm:$0xff] %vm245, %v3718
    %3743 = vst.msk [vmem:[#allocation2 + $0x69] sm:$0xff] %vm245, %v3719
    %3744 = vst.msk [vmem:[#allocation2 + $0x71] sm:$0xff] %vm245, %v3720
    %3745 = vst.msk [vmem:[#allocation2 + $0x79] sm:$0xff] %vm245, %v3721
    %3746 = vst.msk [vmem:[#allocation2 + $0x81] sm:$0xff] %vm245, %v3722
    %3747 = vst.msk [vmem:[#allocation2 + $0x89] sm:$0xff] %vm245, %v3723
    %3748 = vst.msk [vmem:[#allocation2 + $0x91] sm:$0xff] %vm245, %v3724
    %3749 = vst.msk [vmem:[#allocation2 + $0x99] sm:$0xff] %vm245, %v3725
    %3750 = vst.msk [vmem:[#allocation2 + $0xa1] sm:$0xff] %vm245, %v3726
    %3751 = vst.msk [vmem:[#allocation2 + $0xa9] sm:$0xff] %vm245, %v3727
    %3752 = vst.msk [vmem:[#allocation2 + $0xb1] sm:$0xff] %vm245, %v3728
    %3753 = vst.msk [vmem:[#allocation2 + $0xb9] sm:$0x7] %vm2855, %v3729
    %v3754 = vld [vmem:[#allocation2] sm:$0xff]
    %v3755 = vld [vmem:[#allocation2 + $0x8] sm:$0xff]
    %v3756 = vld [vmem:[#allocation2 + $0x10] sm:$0xff]
    %v3757 = vld [vmem:[#allocation2 + $0x18] sm:$0xff]
    %v3758 = vld [vmem:[#allocation2 + $0x20] sm:$0xff]
    %v3759 = vld [vmem:[#allocation2 + $0x28] sm:$0xff]
    %v3760 = vld [vmem:[#allocation2 + $0x30] sm:$0xff]
    %v3761 = vld [vmem:[#allocation2 + $0x38] sm:$0xff]
    %v3762 = vld [vmem:[#allocation2 + $0x40] sm:$0xff]
    %v3763 = vld [vmem:[#allocation2 + $0x48] sm:$0xff]
    %v3764 = vld [vmem:[#allocation2 + $0x50] sm:$0xff]
    %v3765 = vld [vmem:[#allocation2 + $0x58] sm:$0xff]
    %v3766 = vld [vmem:[#allocation2 + $0x60] sm:$0xff]
    %v3767 = vld [vmem:[#allocation2 + $0x68] sm:$0xff]
    %v3768 = vld [vmem:[#allocation2 + $0x70] sm:$0xff]
    %v3769 = vld [vmem:[#allocation2 + $0x78] sm:$0xff]
    %v3770 = vld [vmem:[#allocation2 + $0x80] sm:$0xff]
    %v3771 = vld [vmem:[#allocation2 + $0x88] sm:$0xff]
    %v3772 = vld [vmem:[#allocation2 + $0x90] sm:$0xff]
    %v3773 = vld [vmem:[#allocation2 + $0x98] sm:$0xff]
    %v3774 = vld [vmem:[#allocation2 + $0xa0] sm:$0xff]
    %v3775 = vld [vmem:[#allocation2 + $0xa8] sm:$0xff]
    %v3776 = vld [vmem:[#allocation2 + $0xb0] sm:$0xff]
    %v3777 = vld [vmem:[#allocation2 + $0xb8] sm:$0x7]
    %v3778 = vld [vmem:[#allocation2 + $0x1] sm:$0xff]
    %v3779 = vld [vmem:[#allocation2 + $0x9] sm:$0xff]
    %v3780 = vld [vmem:[#allocation2 + $0x11] sm:$0xff]
    %v3781 = vld [vmem:[#allocation2 + $0x19] sm:$0xff]
    %v3782 = vld [vmem:[#allocation2 + $0x21] sm:$0xff]
    %v3783 = vld [vmem:[#allocation2 + $0x29] sm:$0xff]
    %v3784 = vld [vmem:[#allocation2 + $0x31] sm:$0xff]
    %v3785 = vld [vmem:[#allocation2 + $0x39] sm:$0xff]
    %v3786 = vld [vmem:[#allocation2 + $0x41] sm:$0xff]
    %v3787 = vld [vmem:[#allocation2 + $0x49] sm:$0xff]
    %v3788 = vld [vmem:[#allocation2 + $0x51] sm:$0xff]
    %v3789 = vld [vmem:[#allocation2 + $0x59] sm:$0xff]
    %v3790 = vld [vmem:[#allocation2 + $0x61] sm:$0xff]
    %v3791 = vld [vmem:[#allocation2 + $0x69] sm:$0xff]
    %v3792 = vld [vmem:[#allocation2 + $0x71] sm:$0xff]
    %v3793 = vld [vmem:[#allocation2 + $0x79] sm:$0xff]
    %v3794 = vld [vmem:[#allocation2 + $0x81] sm:$0xff]
    %v3795 = vld [vmem:[#allocation2 + $0x89] sm:$0xff]
    %v3796 = vld [vmem:[#allocation2 + $0x91] sm:$0xff]
    %v3797 = vld [vmem:[#allocation2 + $0x99] sm:$0xff]
    %v3798 = vld [vmem:[#allocation2 + $0xa1] sm:$0xff]
    %v3799 = vld [vmem:[#allocation2 + $0xa9] sm:$0xff]
    %v3800 = vld [vmem:[#allocation2 + $0xb1] sm:$0xff]
    %v3801 = vld [vmem:[#allocation2 + $0xb9] sm:$0x7]
    %v3802 = vld [vmem:[#allocation2 + $0x2] sm:$0xff]
    %v3803 = vld [vmem:[#allocation2 + $0xa] sm:$0xff]
    %v3804 = vld [vmem:[#allocation2 + $0x12] sm:$0xff]
    %v3805 = vld [vmem:[#allocation2 + $0x1a] sm:$0xff]
    %v3806 = vld [vmem:[#allocation2 + $0x22] sm:$0xff]
    %v3807 = vld [vmem:[#allocation2 + $0x2a] sm:$0xff]
    %v3808 = vld [vmem:[#allocation2 + $0x32] sm:$0xff]
    %v3809 = vld [vmem:[#allocation2 + $0x3a] sm:$0xff]
    %v3810 = vld [vmem:[#allocation2 + $0x42] sm:$0xff]
    %v3811 = vld [vmem:[#allocation2 + $0x4a] sm:$0xff]
    %v3812 = vld [vmem:[#allocation2 + $0x52] sm:$0xff]
    %v3813 = vld [vmem:[#allocation2 + $0x5a] sm:$0xff]
    %v3814 = vld [vmem:[#allocation2 + $0x62] sm:$0xff]
    %v3815 = vld [vmem:[#allocation2 + $0x6a] sm:$0xff]
    %v3816 = vld [vmem:[#allocation2 + $0x72] sm:$0xff]
    %v3817 = vld [vmem:[#allocation2 + $0x7a] sm:$0xff]
    %v3818 = vld [vmem:[#allocation2 + $0x82] sm:$0xff]
    %v3819 = vld [vmem:[#allocation2 + $0x8a] sm:$0xff]
    %v3820 = vld [vmem:[#allocation2 + $0x92] sm:$0xff]
    %v3821 = vld [vmem:[#allocation2 + $0x9a] sm:$0xff]
    %v3822 = vld [vmem:[#allocation2 + $0xa2] sm:$0xff]
    %v3823 = vld [vmem:[#allocation2 + $0xaa] sm:$0xff]
    %v3824 = vld [vmem:[#allocation2 + $0xb2] sm:$0xff]
    %v3825 = vld [vmem:[#allocation2 + $0xba] sm:$0x7]
    %3850 = vrot.lane.b32.xlu0 %v3778, 16
    %v3851 = vpop.permute.xlu0 %3850
    %3852 = vrot.lane.b32.xlu0 %v3779, 16
    %v3853 = vpop.permute.xlu0 %3852
    %3854 = vrot.lane.b32.xlu0 %v3780, 16
    %v3855 = vpop.permute.xlu0 %3854
    %3856 = vrot.lane.b32.xlu0 %v3781, 16
    %v3857 = vpop.permute.xlu0 %3856
    %3858 = vrot.lane.b32.xlu0 %v3782, 16
    %v3859 = vpop.permute.xlu0 %3858
    %3860 = vrot.lane.b32.xlu0 %v3783, 16
    %v3861 = vpop.permute.xlu0 %3860
    %3862 = vrot.lane.b32.xlu0 %v3784, 16
    %v3863 = vpop.permute.xlu0 %3862
    %3864 = vrot.lane.b32.xlu0 %v3785, 16
    %v3865 = vpop.permute.xlu0 %3864
    %3866 = vrot.lane.b32.xlu0 %v3786, 16
    %v3867 = vpop.permute.xlu0 %3866
    %3868 = vrot.lane.b32.xlu0 %v3787, 16
    %v3869 = vpop.permute.xlu0 %3868
    %3870 = vrot.lane.b32.xlu0 %v3788, 16
    %v3871 = vpop.permute.xlu0 %3870
    %3872 = vrot.lane.b32.xlu0 %v3789, 16
    %v3873 = vpop.permute.xlu0 %3872
    %3874 = vrot.lane.b32.xlu0 %v3790, 16
    %v3875 = vpop.permute.xlu0 %3874
    %3876 = vrot.lane.b32.xlu0 %v3791, 16
    %v3877 = vpop.permute.xlu0 %3876
    %3878 = vrot.lane.b32.xlu0 %v3792, 16
    %v3879 = vpop.permute.xlu0 %3878
    %3880 = vrot.lane.b32.xlu0 %v3793, 16
    %v3881 = vpop.permute.xlu0 %3880
    %3882 = vrot.lane.b32.xlu0 %v3794, 16
    %v3883 = vpop.permute.xlu0 %3882
    %3884 = vrot.lane.b32.xlu0 %v3795, 16
    %v3885 = vpop.permute.xlu0 %3884
    %3886 = vrot.lane.b32.xlu0 %v3796, 16
    %v3887 = vpop.permute.xlu0 %3886
    %3888 = vrot.lane.b32.xlu0 %v3797, 16
    %v3889 = vpop.permute.xlu0 %3888
    %3890 = vrot.lane.b32.xlu0 %v3798, 16
    %v3891 = vpop.permute.xlu0 %3890
    %3892 = vrot.lane.b32.xlu0 %v3799, 16
    %v3893 = vpop.permute.xlu0 %3892
    %3894 = vrot.lane.b32.xlu0 %v3800, 16
    %v3895 = vpop.permute.xlu0 %3894
    %3896 = vrot.lane.b32.xlu0 %v3801, 16
    %v3897 = vpop.permute.xlu0 %3896
    %3946 = vrot.lane.b32.xlu0 %v3802, 32
    %v3947 = vpop.permute.xlu0 %3946
    %3948 = vrot.lane.b32.xlu0 %v3803, 32
    %v3949 = vpop.permute.xlu0 %3948
    %3950 = vrot.lane.b32.xlu0 %v3804, 32
    %v3951 = vpop.permute.xlu0 %3950
    %3952 = vrot.lane.b32.xlu0 %v3805, 32
    %v3953 = vpop.permute.xlu0 %3952
    %3954 = vrot.lane.b32.xlu0 %v3806, 32
    %v3955 = vpop.permute.xlu0 %3954
    %3956 = vrot.lane.b32.xlu0 %v3807, 32
    %v3957 = vpop.permute.xlu0 %3956
    %3958 = vrot.lane.b32.xlu0 %v3808, 32
    %v3959 = vpop.permute.xlu0 %3958
    %3960 = vrot.lane.b32.xlu0 %v3809, 32
    %v3961 = vpop.permute.xlu0 %3960
    %3962 = vrot.lane.b32.xlu0 %v3810, 32
    %v3963 = vpop.permute.xlu0 %3962
    %3964 = vrot.lane.b32.xlu0 %v3811, 32
    %v3965 = vpop.permute.xlu0 %3964
    %3966 = vrot.lane.b32.xlu0 %v3812, 32
    %v3967 = vpop.permute.xlu0 %3966
    %3968 = vrot.lane.b32.xlu0 %v3813, 32
    %v3969 = vpop.permute.xlu0 %3968
    %3970 = vrot.lane.b32.xlu0 %v3814, 32
    %v3971 = vpop.permute.xlu0 %3970
    %3972 = vrot.lane.b32.xlu0 %v3815, 32
    %v3973 = vpop.permute.xlu0 %3972
    %3974 = vrot.lane.b32.xlu0 %v3816, 32
    %v3975 = vpop.permute.xlu0 %3974
    %3976 = vrot.lane.b32.xlu0 %v3817, 32
    %v3977 = vpop.permute.xlu0 %3976
    %3978 = vrot.lane.b32.xlu0 %v3818, 32
    %v3979 = vpop.permute.xlu0 %3978
    %3980 = vrot.lane.b32.xlu0 %v3819, 32
    %v3981 = vpop.permute.xlu0 %3980
    %3982 = vrot.lane.b32.xlu0 %v3820, 32
    %v3983 = vpop.permute.xlu0 %3982
    %3984 = vrot.lane.b32.xlu0 %v3821, 32
    %v3985 = vpop.permute.xlu0 %3984
    %3986 = vrot.lane.b32.xlu0 %v3822, 32
    %v3987 = vpop.permute.xlu0 %3986
    %3988 = vrot.lane.b32.xlu0 %v3823, 32
    %v3989 = vpop.permute.xlu0 %3988
    %3990 = vrot.lane.b32.xlu0 %v3824, 32
    %v3991 = vpop.permute.xlu0 %3990
    %3992 = vrot.lane.b32.xlu0 %v3825, 32
    %v3993 = vpop.permute.xlu0 %3992
    %v4018 = vsel %vm245, %v3754, %v3851
    %v4019 = vsel %vm245, %v3755, %v3853
    %v4020 = vsel %vm245, %v3756, %v3855
    %v4021 = vsel %vm245, %v3757, %v3857
    %v4022 = vsel %vm245, %v3758, %v3859
    %v4023 = vsel %vm245, %v3759, %v3861
    %v4024 = vsel %vm245, %v3760, %v3863
    %v4025 = vsel %vm245, %v3761, %v3865
    %v4026 = vsel %vm245, %v3762, %v3867
    %v4027 = vsel %vm245, %v3763, %v3869
    %v4028 = vsel %vm245, %v3764, %v3871
    %v4029 = vsel %vm245, %v3765, %v3873
    %v4030 = vsel %vm245, %v3766, %v3875
    %v4031 = vsel %vm245, %v3767, %v3877
    %v4032 = vsel %vm245, %v3768, %v3879
    %v4033 = vsel %vm245, %v3769, %v3881
    %v4034 = vsel %vm245, %v3770, %v3883
    %v4035 = vsel %vm245, %v3771, %v3885
    %v4036 = vsel %vm245, %v3772, %v3887
    %v4037 = vsel %vm245, %v3773, %v3889
    %v4038 = vsel %vm245, %v3774, %v3891
    %v4039 = vsel %vm245, %v3775, %v3893
    %v4040 = vsel %vm245, %v3776, %v3895
    %v4041 = vsel %vm245, %v3777, %v3897
    %v4042 = vsel %vm954, %v4018, %v3947
    %v4043 = vsel %vm954, %v4019, %v3949
    %v4044 = vsel %vm954, %v4020, %v3951
    %v4045 = vsel %vm954, %v4021, %v3953
    %v4046 = vsel %vm954, %v4022, %v3955
    %v4047 = vsel %vm954, %v4023, %v3957
    %v4048 = vsel %vm954, %v4024, %v3959
    %v4049 = vsel %vm954, %v4025, %v3961
    %v4050 = vsel %vm954, %v4026, %v3963
    %v4051 = vsel %vm954, %v4027, %v3965
    %v4052 = vsel %vm954, %v4028, %v3967
    %v4053 = vsel %vm954, %v4029, %v3969
    %v4054 = vsel %vm954, %v4030, %v3971
    %v4055 = vsel %vm954, %v4031, %v3973
    %v4056 = vsel %vm954, %v4032, %v3975
    %v4057 = vsel %vm954, %v4033, %v3977
    %v4058 = vsel %vm954, %v4034, %v3979
    %v4059 = vsel %vm954, %v4035, %v3981
    %v4060 = vsel %vm954, %v4036, %v3983
    %v4061 = vsel %vm954, %v4037, %v3985
    %v4062 = vsel %vm954, %v4038, %v3987
    %v4063 = vsel %vm954, %v4039, %v3989
    %v4064 = vsel %vm954, %v4040, %v3991
    %v4065 = vsel %vm954, %v4041, %v3993
    %s4066 = scalar_lea.vmem %s5, 48
    %v4067 = vld [vmem:[%s4066] sm:$0xff]
    %v4068 = vld [vmem:[%s4066 + $0x8] sm:$0xff]
    %v4069 = vld [vmem:[%s4066 + $0x10] sm:$0xff]
    %v4070 = vld [vmem:[%s4066 + $0x18] sm:$0xff]
    %v4071 = vld [vmem:[%s4066 + $0x20] sm:$0xff]
    %v4072 = vld [vmem:[%s4066 + $0x28] sm:$0xff]
    %v4074 = vsel %vm1857, %v4042, 0
    %v4077 = vsel %vm1857, %v4043, 0
    %v4080 = vsel %vm1857, %v4044, 0
    %v4083 = vsel %vm1857, %v4045, 0
    %v4086 = vsel %vm1857, %v4046, 0
    %v4089 = vsel %vm1857, %v4047, 0
    %v4092 = vsel %vm1857, %v4048, 0
    %v4095 = vsel %vm1857, %v4049, 0
    %v4098 = vsel %vm1857, %v4050, 0
    %v4101 = vsel %vm1857, %v4051, 0
    %v4104 = vsel %vm1857, %v4052, 0
    %v4107 = vsel %vm1857, %v4053, 0
    %v4110 = vsel %vm1857, %v4054, 0
    %v4113 = vsel %vm1857, %v4055, 0
    %v4116 = vsel %vm1857, %v4056, 0
    %v4119 = vsel %vm1857, %v4057, 0
    %v4122 = vsel %vm1857, %v4058, 0
    %v4125 = vsel %vm1857, %v4059, 0
    %v4128 = vsel %vm1857, %v4060, 0
    %v4131 = vsel %vm1857, %v4061, 0
    %v4134 = vsel %vm1857, %v4062, 0
    %v4137 = vsel %vm1857, %v4063, 0
    %v4140 = vsel %vm1857, %v4064, 0
    %v4143 = vsel %vm1857, %v4065, 0
    %4145 = vmatprep.subr.mxu0 0.0
    %4146 = vmatpush1.msra.mxu0 %v4067
    %4147 = vmatprep.subr.mxu0 0.0
    %4148 = vmatpush1.msra.mxu0 %v4068
    %4149 = vmatprep.subr.mxu0 0.0
    %4150 = vmatpush1.msra.mxu0 %v4069
    %4151 = vmatprep.subr.mxu0 0.0
    %4152 = vmatpush1.msra.mxu0 %v4070
    %4153 = vmatprep.subr.mxu0 0.0
    %4154 = vmatpush1.msra.mxu0 %v4071
    %4155 = vmatprep.subr.mxu0 0.0
    %4156 = vmatpush1.msra.mxu0 %v4072
    %4157 = vmatprep.subr.mxu0 0.0
    %4158 = vmatpush1.msra.mxu0 0.0
    %4159 = vmatprep.subr.mxu0 0.0
    %4160 = vmatpush1.msra.mxu0 0.0
    %4161 = vmatprep.subr.mxu0 0.0
    %4162 = vmatpush1.msra.mxu0 0.0
    %4163 = vmatprep.subr.mxu0 0.0
    %4164 = vmatpush1.msra.mxu0 0.0
    %4165 = vmatprep.subr.mxu0 0.0
    %4166 = vmatpush1.msra.mxu0 0.0
    %4167 = vmatprep.subr.mxu0 0.0
    %4168 = vmatpush1.msra.mxu0 0.0
    %4169 = vmatprep.subr.mxu0 0.0
    %4170 = vmatpush1.msra.mxu0 0.0
    %4171 = vmatprep.subr.mxu0 0.0
    %4172 = vmatpush1.msra.mxu0 0.0
    %4173 = vmatprep.subr.mxu0 0.0
    %4174 = vmatpush1.msra.mxu0 0.0
    %4175 = vmatprep.subr.mxu0 0.0
    %4176 = vmatpush1.msra.mxu0 0.0
    %4177 = vmatprep.subr.mxu0 0.0
    %4178 = vmatpush1.msra.mxu0 0.0
    %4179 = vmatprep.subr.mxu0 0.0
    %4180 = vmatpush1.msra.mxu0 0.0
    %4181 = vmatprep.subr.mxu0 0.0
    %4182 = vmatpush1.msra.mxu0 0.0
    %4183 = vmatprep.subr.mxu0 0.0
    %4184 = vmatpush1.msra.mxu0 0.0
    %4185 = vmatprep.subr.mxu0 0.0
    %4186 = vmatpush1.msra.mxu0 0.0
    %4187 = vmatprep.subr.mxu0 0.0
    %4188 = vmatpush1.msra.mxu0 0.0
    %4189 = vmatprep.subr.mxu0 0.0
    %4190 = vmatpush1.msra.mxu0 0.0
    %4191 = vmatprep.subr.mxu0 0.0
    %4192 = vmatpush1.msra.mxu0 0.0
    %4193 = vmatprep.subr.mxu0 0.0
    %4194 = vmatpush1.msra.mxu0 0.0
    %4195 = vmatprep.subr.mxu0 0.0
    %4196 = vmatpush1.msra.mxu0 0.0
    %4197 = vmatprep.subr.mxu0 0.0
    %4198 = vmatpush1.msra.mxu0 0.0
    %4199 = vmatprep.subr.mxu0 0.0
    %4200 = vmatpush1.msra.mxu0 0.0
    %4201 = vmatprep.subr.mxu0 0.0
    %4202 = vmatpush1.msra.mxu0 0.0
    %4203 = vmatprep.subr.mxu0 0.0
    %4204 = vmatpush1.msra.mxu0 0.0
    %4205 = vmatprep.subr.mxu0 0.0
    %4206 = vmatpush1.msra.mxu0 0.0
    %4207 = vmatprep.subr.mxu0 0.0
    %4208 = vmatpush1.msra.mxu0 0.0
    %4209 = vmatprep.mubr.f32.mxu0 0.0
    %4210 = vmatmul.mubr.f32.gmra.mrb[0].mxu0 %v4074
    %v4211 = vpop.f32.mrb[0].mxu0
    %v4212 = vadd.f32 0.0, %v4211
    %v4213 = vpop.f32.mrb[0].mxu0
    %4214 = vmatprep.mubr.f32.mxu0 0.0
    %4215 = vmatmul.mubr.f32.gmra.mrb[0].mxu0 %v4077
    %v4216 = vpop.f32.mrb[0].mxu0
    %v4217 = vadd.f32 0.0, %v4216
    %v4218 = vpop.f32.mrb[0].mxu0
    %4219 = vmatprep.mubr.f32.mxu0 0.0
    %4220 = vmatmul.mubr.f32.gmra.mrb[0].mxu0 %v4080
    %v4221 = vpop.f32.mrb[0].mxu0
    %v4222 = vadd.f32 0.0, %v4221
    %v4223 = vpop.f32.mrb[0].mxu0
    %4224 = vmatprep.mubr.f32.mxu0 0.0
    %4225 = vmatmul.mubr.f32.gmra.mrb[0].mxu0 %v4083
    %v4226 = vpop.f32.mrb[0].mxu0
    %v4227 = vadd.f32 0.0, %v4226
    %v4228 = vpop.f32.mrb[0].mxu0
    %4229 = vmatprep.mubr.f32.mxu0 0.0
    %4230 = vmatmul.mubr.f32.gmra.mrb[0].mxu0 %v4086
    %v4231 = vpop.f32.mrb[0].mxu0
    %v4232 = vadd.f32 0.0, %v4231
    %v4233 = vpop.f32.mrb[0].mxu0
    %4234 = vmatprep.mubr.f32.mxu0 0.0
    %4235 = vmatmul.mubr.f32.gmra.mrb[0].mxu0 %v4089
    %v4236 = vpop.f32.mrb[0].mxu0
    %v4237 = vadd.f32 0.0, %v4236
    %v4238 = vpop.f32.mrb[0].mxu0
    %4239 = vmatprep.mubr.f32.mxu0 0.0
    %4240 = vmatmul.mubr.f32.gmra.mrb[0].mxu0 %v4092
    %v4241 = vpop.f32.mrb[0].mxu0
    %v4242 = vadd.f32 0.0, %v4241
    %v4243 = vpop.f32.mrb[0].mxu0
    %4244 = vmatprep.mubr.f32.mxu0 0.0
    %4245 = vmatmul.mubr.f32.gmra.mrb[0].mxu0 %v4095
    %v4246 = vpop.f32.mrb[0].mxu0
    %v4247 = vadd.f32 0.0, %v4246
    %v4248 = vpop.f32.mrb[0].mxu0
    %4249 = vmatprep.mubr.f32.mxu0 0.0
    %4250 = vmatmul.mubr.f32.gmra.mrb[0].mxu0 %v4098
    %v4251 = vpop.f32.mrb[0].mxu0
    %v4252 = vadd.f32 0.0, %v4251
    %v4253 = vpop.f32.mrb[0].mxu0
    %4254 = vmatprep.mubr.f32.mxu0 0.0
    %4255 = vmatmul.mubr.f32.gmra.mrb[0].mxu0 %v4101
    %v4256 = vpop.f32.mrb[0].mxu0
    %v4257 = vadd.f32 0.0, %v4256
    %v4258 = vpop.f32.mrb[0].mxu0
    %4259 = vmatprep.mubr.f32.mxu0 0.0
    %4260 = vmatmul.mubr.f32.gmra.mrb[0].mxu0 %v4104
    %v4261 = vpop.f32.mrb[0].mxu0
    %v4262 = vadd.f32 0.0, %v4261
    %v4263 = vpop.f32.mrb[0].mxu0
    %4264 = vmatprep.mubr.f32.mxu0 0.0
    %4265 = vmatmul.mubr.f32.gmra.mrb[0].mxu0 %v4107
    %v4266 = vpop.f32.mrb[0].mxu0
    %v4267 = vadd.f32 0.0, %v4266
    %v4268 = vpop.f32.mrb[0].mxu0
    %4269 = vmatprep.mubr.f32.mxu0 0.0
    %4270 = vmatmul.mubr.f32.gmra.mrb[0].mxu0 %v4110
    %v4271 = vpop.f32.mrb[0].mxu0
    %v4272 = vadd.f32 0.0, %v4271
    %v4273 = vpop.f32.mrb[0].mxu0
    %4274 = vmatprep.mubr.f32.mxu0 0.0
    %4275 = vmatmul.mubr.f32.gmra.mrb[0].mxu0 %v4113
    %v4276 = vpop.f32.mrb[0].mxu0
    %v4277 = vadd.f32 0.0, %v4276
    %v4278 = vpop.f32.mrb[0].mxu0
    %4279 = vmatprep.mubr.f32.mxu0 0.0
    %4280 = vmatmul.mubr.f32.gmra.mrb[0].mxu0 %v4116
    %v4281 = vpop.f32.mrb[0].mxu0
    %v4282 = vadd.f32 0.0, %v4281
    %v4283 = vpop.f32.mrb[0].mxu0
    %4284 = vmatprep.mubr.f32.mxu0 0.0
    %4285 = vmatmul.mubr.f32.gmra.mrb[0].mxu0 %v4119
    %v4286 = vpop.f32.mrb[0].mxu0
    %v4287 = vadd.f32 0.0, %v4286
    %v4288 = vpop.f32.mrb[0].mxu0
    %4289 = vmatprep.mubr.f32.mxu0 0.0
    %4290 = vmatmul.mubr.f32.gmra.mrb[0].mxu0 %v4122
    %v4291 = vpop.f32.mrb[0].mxu0
    %v4292 = vadd.f32 0.0, %v4291
    %v4293 = vpop.f32.mrb[0].mxu0
    %4294 = vmatprep.mubr.f32.mxu0 0.0
    %4295 = vmatmul.mubr.f32.gmra.mrb[0].mxu0 %v4125
    %v4296 = vpop.f32.mrb[0].mxu0
    %v4297 = vadd.f32 0.0, %v4296
    %v4298 = vpop.f32.mrb[0].mxu0
    %4299 = vmatprep.mubr.f32.mxu0 0.0
    %4300 = vmatmul.mubr.f32.gmra.mrb[0].mxu0 %v4128
    %v4301 = vpop.f32.mrb[0].mxu0
    %v4302 = vadd.f32 0.0, %v4301
    %v4303 = vpop.f32.mrb[0].mxu0
    %4304 = vmatprep.mubr.f32.mxu0 0.0
    %4305 = vmatmul.mubr.f32.gmra.mrb[0].mxu0 %v4131
    %v4306 = vpop.f32.mrb[0].mxu0
    %v4307 = vadd.f32 0.0, %v4306
    %v4308 = vpop.f32.mrb[0].mxu0
    %4309 = vmatprep.mubr.f32.mxu0 0.0
    %4310 = vmatmul.mubr.f32.gmra.mrb[0].mxu0 %v4134
    %v4311 = vpop.f32.mrb[0].mxu0
    %v4312 = vadd.f32 0.0, %v4311
    %v4313 = vpop.f32.mrb[0].mxu0
    %4314 = vmatprep.mubr.f32.mxu0 0.0
    %4315 = vmatmul.mubr.f32.gmra.mrb[0].mxu0 %v4137
    %v4316 = vpop.f32.mrb[0].mxu0
    %v4317 = vadd.f32 0.0, %v4316
    %v4318 = vpop.f32.mrb[0].mxu0
    %4319 = vmatprep.mubr.f32.mxu0 0.0
    %4320 = vmatmul.mubr.f32.gmra.mrb[0].mxu0 %v4140
    %v4321 = vpop.f32.mrb[0].mxu0
    %v4322 = vadd.f32 0.0, %v4321
    %v4323 = vpop.f32.mrb[0].mxu0
    %4324 = vmatprep.mubr.f32.mxu0 0.0
    %4325 = vmatmul.mubr.f32.gmra.mrb[0].mxu0 %v4143
    %v4326 = vpop.f32.mrb[0].mxu0
    %v4327 = vadd.f32 0.0, %v4326
    %v4328 = vpop.f32.mrb[0].mxu0
    %4329 = vdwg.mxu0
    %4330 = vst.msk [vmem:[#allocation4] sm:$0xff] %vm245, %v4212
    %4331 = vst.msk [vmem:[#allocation4 + $0x8] sm:$0xff] %vm245, %v4217
    %4332 = vst.msk [vmem:[#allocation4 + $0x10] sm:$0xff] %vm245, %v4222
    %4333 = vst.msk [vmem:[#allocation4 + $0x18] sm:$0xff] %vm245, %v4227
    %4334 = vst.msk [vmem:[#allocation4 + $0x20] sm:$0xff] %vm245, %v4232
    %4335 = vst.msk [vmem:[#allocation4 + $0x28] sm:$0xff] %vm245, %v4237
    %4336 = vst.msk [vmem:[#allocation4 + $0x30] sm:$0xff] %vm245, %v4242
    %4337 = vst.msk [vmem:[#allocation4 + $0x38] sm:$0xff] %vm245, %v4247
    %4338 = vst.msk [vmem:[#allocation4 + $0x40] sm:$0xff] %vm245, %v4252
    %4339 = vst.msk [vmem:[#allocation4 + $0x48] sm:$0xff] %vm245, %v4257
    %4340 = vst.msk [vmem:[#allocation4 + $0x50] sm:$0xff] %vm245, %v4262
    %4341 = vst.msk [vmem:[#allocation4 + $0x58] sm:$0xff] %vm245, %v4267
    %4342 = vst.msk [vmem:[#allocation4 + $0x60] sm:$0xff] %vm245, %v4272
    %4343 = vst.msk [vmem:[#allocation4 + $0x68] sm:$0xff] %vm245, %v4277
    %4344 = vst.msk [vmem:[#allocation4 + $0x70] sm:$0xff] %vm245, %v4282
    %4345 = vst.msk [vmem:[#allocation4 + $0x78] sm:$0xff] %vm245, %v4287
    %4346 = vst.msk [vmem:[#allocation4 + $0x80] sm:$0xff] %vm245, %v4292
    %4347 = vst.msk [vmem:[#allocation4 + $0x88] sm:$0xff] %vm245, %v4297
    %4348 = vst.msk [vmem:[#allocation4 + $0x90] sm:$0xff] %vm245, %v4302
    %4349 = vst.msk [vmem:[#allocation4 + $0x98] sm:$0xff] %vm245, %v4307
    %4350 = vst.msk [vmem:[#allocation4 + $0xa0] sm:$0xff] %vm245, %v4312
    %4351 = vst.msk [vmem:[#allocation4 + $0xa8] sm:$0xff] %vm245, %v4317
    %4352 = vst.msk [vmem:[#allocation4 + $0xb0] sm:$0xff] %vm245, %v4322
    %4353 = vst.msk [vmem:[#allocation4 + $0xb8] sm:$0x7] %vm2855, %v4327
    %v4354 = vld [vmem:[#allocation4] ss:$2 sm:$0xff]
    %s4355 = scalar_lea.vmem [#allocation4], 16
    %v4356 = vld [vmem:[%s4355] ss:$2 sm:$0xff]
    %s4357 = scalar_lea.vmem [#allocation4], 32
    %v4358 = vld [vmem:[%s4357] ss:$2 sm:$0xff]
    %s4359 = scalar_lea.vmem [#allocation4], 48
    %v4360 = vld [vmem:[%s4359] ss:$2 sm:$0xff]
    %s4361 = scalar_lea.vmem [#allocation4], 64
    %v4362 = vld [vmem:[%s4361] ss:$2 sm:$0xff]
    %s4363 = scalar_lea.vmem [#allocation4], 80
    %v4364 = vld [vmem:[%s4363] ss:$2 sm:$0xff]
    %s4365 = scalar_lea.vmem [#allocation4], 96
    %v4366 = vld [vmem:[%s4365] ss:$2 sm:$0xff]
    %s4367 = scalar_lea.vmem [#allocation4], 112
    %v4368 = vld [vmem:[%s4367] ss:$2 sm:$0xff]
    %s4369 = scalar_lea.vmem [#allocation4], 128
    %v4370 = vld [vmem:[%s4369] ss:$2 sm:$0xff]
    %s4371 = scalar_lea.vmem [#allocation4], 144
    %v4372 = vld [vmem:[%s4371] ss:$2 sm:$0xff]
    %s4373 = scalar_lea.vmem [#allocation4], 160
    %v4374 = vld [vmem:[%s4373] ss:$2 sm:$0xff]
    %s4375 = scalar_lea.vmem [#allocation4], 176
    %v4376 = vld [vmem:[%s4375] ss:$2 sm:$0x1f]
    %s4377 = scalar_lea.vmem [#allocation4], 1
    %v4378 = vld [vmem:[%s4377] ss:$2 sm:$0xff]
    %s4379 = scalar_lea.vmem [#allocation4], 17
    %v4380 = vld [vmem:[%s4379] ss:$2 sm:$0xff]
    %s4381 = scalar_lea.vmem [#allocation4], 33
    %v4382 = vld [vmem:[%s4381] ss:$2 sm:$0xff]
    %s4383 = scalar_lea.vmem [#allocation4], 49
    %v4384 = vld [vmem:[%s4383] ss:$2 sm:$0xff]
    %s4385 = scalar_lea.vmem [#allocation4], 65
    %v4386 = vld [vmem:[%s4385] ss:$2 sm:$0xff]
    %s4387 = scalar_lea.vmem [#allocation4], 81
    %v4388 = vld [vmem:[%s4387] ss:$2 sm:$0xff]
    %s4389 = scalar_lea.vmem [#allocation4], 97
    %v4390 = vld [vmem:[%s4389] ss:$2 sm:$0xff]
    %s4391 = scalar_lea.vmem [#allocation4], 113
    %v4392 = vld [vmem:[%s4391] ss:$2 sm:$0xff]
    %s4393 = scalar_lea.vmem [#allocation4], 129
    %v4394 = vld [vmem:[%s4393] ss:$2 sm:$0xff]
    %s4395 = scalar_lea.vmem [#allocation4], 145
    %v4396 = vld [vmem:[%s4395] ss:$2 sm:$0xff]
    %s4397 = scalar_lea.vmem [#allocation4], 161
    %v4398 = vld [vmem:[%s4397] ss:$2 sm:$0xff]
    %s4399 = scalar_lea.vmem [#allocation4], 177
    %v4400 = vld [vmem:[%s4399] ss:$2 sm:$0x1f]
    %v4401 = vmax.f32 %v4354, %v4378
    %v4402 = vmax.f32 %v4356, %v4380
    %v4403 = vmax.f32 %v4358, %v4382
    %v4404 = vmax.f32 %v4360, %v4384
    %v4405 = vmax.f32 %v4362, %v4386
    %v4406 = vmax.f32 %v4364, %v4388
    %v4407 = vmax.f32 %v4366, %v4390
    %v4408 = vmax.f32 %v4368, %v4392
    %v4409 = vmax.f32 %v4370, %v4394
    %v4410 = vmax.f32 %v4372, %v4396
    %v4411 = vmax.f32 %v4374, %v4398
    %v4412 = vmax.f32 %v4376, %v4400
    %v4413 = vld [vmem:[#allocation3] ss:$2 sm:$0xff]
    %s4414 = scalar_lea.vmem [#allocation3], 16
    %v4415 = vld [vmem:[%s4414] ss:$2 sm:$0xff]
    %s4416 = scalar_lea.vmem [#allocation3], 32
    %v4417 = vld [vmem:[%s4416] ss:$2 sm:$0xff]
    %s4418 = scalar_lea.vmem [#allocation3], 48
    %v4419 = vld [vmem:[%s4418] ss:$2 sm:$0xff]
    %s4420 = scalar_lea.vmem [#allocation3], 64
    %v4421 = vld [vmem:[%s4420] ss:$2 sm:$0xff]
    %s4422 = scalar_lea.vmem [#allocation3], 80
    %v4423 = vld [vmem:[%s4422] ss:$2 sm:$0xff]
    %s4424 = scalar_lea.vmem [#allocation3], 96
    %v4425 = vld [vmem:[%s4424] ss:$2 sm:$0xff]
    %s4426 = scalar_lea.vmem [#allocation3], 112
    %v4427 = vld [vmem:[%s4426] ss:$2 sm:$0xff]
    %s4428 = scalar_lea.vmem [#allocation3], 128
    %v4429 = vld [vmem:[%s4428] ss:$2 sm:$0xff]
    %s4430 = scalar_lea.vmem [#allocation3], 144
    %v4431 = vld [vmem:[%s4430] ss:$2 sm:$0xff]
    %s4432 = scalar_lea.vmem [#allocation3], 160
    %v4433 = vld [vmem:[%s4432] ss:$2 sm:$0xff]
    %s4434 = scalar_lea.vmem [#allocation3], 176
    %v4435 = vld [vmem:[%s4434] ss:$2 sm:$0x1f]
    %s4436 = scalar_lea.vmem [#allocation3], 1
    %v4437 = vld [vmem:[%s4436] ss:$2 sm:$0xff]
    %s4438 = scalar_lea.vmem [#allocation3], 17
    %v4439 = vld [vmem:[%s4438] ss:$2 sm:$0xff]
    %s4440 = scalar_lea.vmem [#allocation3], 33
    %v4441 = vld [vmem:[%s4440] ss:$2 sm:$0xff]
    %s4442 = scalar_lea.vmem [#allocation3], 49
    %v4443 = vld [vmem:[%s4442] ss:$2 sm:$0xff]
    %s4444 = scalar_lea.vmem [#allocation3], 65
    %v4445 = vld [vmem:[%s4444] ss:$2 sm:$0xff]
    %s4446 = scalar_lea.vmem [#allocation3], 81
    %v4447 = vld [vmem:[%s4446] ss:$2 sm:$0xff]
    %s4448 = scalar_lea.vmem [#allocation3], 97
    %v4449 = vld [vmem:[%s4448] ss:$2 sm:$0xff]
    %s4450 = scalar_lea.vmem [#allocation3], 113
    %v4451 = vld [vmem:[%s4450] ss:$2 sm:$0xff]
    %s4452 = scalar_lea.vmem [#allocation3], 129
    %v4453 = vld [vmem:[%s4452] ss:$2 sm:$0xff]
    %s4454 = scalar_lea.vmem [#allocation3], 145
    %v4455 = vld [vmem:[%s4454] ss:$2 sm:$0xff]
    %s4456 = scalar_lea.vmem [#allocation3], 161
    %v4457 = vld [vmem:[%s4456] ss:$2 sm:$0xff]
    %s4458 = scalar_lea.vmem [#allocation3], 177
    %v4459 = vld [vmem:[%s4458] ss:$2 sm:$0x1f]
    %v4460 = vmax.f32 %v4413, %v4437
    %v4461 = vmax.f32 %v4415, %v4439
    %v4462 = vmax.f32 %v4417, %v4441
    %v4463 = vmax.f32 %v4419, %v4443
    %v4464 = vmax.f32 %v4421, %v4445
    %v4465 = vmax.f32 %v4423, %v4447
    %v4466 = vmax.f32 %v4425, %v4449
    %v4467 = vmax.f32 %v4427, %v4451
    %v4468 = vmax.f32 %v4429, %v4453
    %v4469 = vmax.f32 %v4431, %v4455
    %v4470 = vmax.f32 %v4433, %v4457
    %v4471 = vmax.f32 %v4435, %v4459
    %v4472 = vadd.f32 %v4401, %v4460
    %v4473 = vadd.f32 %v4402, %v4461
    %v4474 = vadd.f32 %v4403, %v4462
    %v4475 = vadd.f32 %v4404, %v4463
    %v4476 = vadd.f32 %v4405, %v4464
    %v4477 = vadd.f32 %v4406, %v4465
    %v4478 = vadd.f32 %v4407, %v4466
    %v4479 = vadd.f32 %v4408, %v4467
    %v4480 = vadd.f32 %v4409, %v4468
    %v4481 = vadd.f32 %v4410, %v4469
    %v4482 = vadd.f32 %v4411, %v4470
    %v4483 = vadd.f32 %v4412, %v4471
    %4484 = vst.msk [vmem:[#allocation3] sm:$0xff] %vm245, %v4472
    %4485 = vst.msk [vmem:[#allocation3 + $0x8] sm:$0xff] %vm245, %v4473
    %4486 = vst.msk [vmem:[#allocation3 + $0x10] sm:$0xff] %vm245, %v4474
    %4487 = vst.msk [vmem:[#allocation3 + $0x18] sm:$0xff] %vm245, %v4475
    %4488 = vst.msk [vmem:[#allocation3 + $0x20] sm:$0xff] %vm245, %v4476
    %4489 = vst.msk [vmem:[#allocation3 + $0x28] sm:$0xff] %vm245, %v4477
    %4490 = vst.msk [vmem:[#allocation3 + $0x30] sm:$0xff] %vm245, %v4478
    %4491 = vst.msk [vmem:[#allocation3 + $0x38] sm:$0xff] %vm245, %v4479
    %4492 = vst.msk [vmem:[#allocation3 + $0x40] sm:$0xff] %vm245, %v4480
    %4493 = vst.msk [vmem:[#allocation3 + $0x48] sm:$0xff] %vm245, %v4481
    %4494 = vst.msk [vmem:[#allocation3 + $0x50] sm:$0xff] %vm245, %v4482
    %vm4495 = vcmask 126976
    %4496 = vst.msk [vmem:[#allocation3 + $0x58] sm:$0x1f] %vm4495, %v4483
    %s4497 = scalar_lea.vmem %s6, 3
    %v4498 = vld [vmem:[%s4497] sm:$0x1]
    %v4500 = vlaneseq
    %v4501 = vshrl.u32 %v4500, 7
    %v4502 = vsub.s32 0, %v4501
    %v4503 = vrot.slane %v4498, %v4502
    %v4505 = vmul.f32 %v4472, %v4503
    %v4506 = vmul.f32 %v4473, %v4503
    %v4507 = vmul.f32 %v4474, %v4503
    %v4508 = vmul.f32 %v4475, %v4503
    %v4509 = vmul.f32 %v4476, %v4503
    %v4510 = vmul.f32 %v4477, %v4503
    %v4511 = vmul.f32 %v4478, %v4503
    %v4512 = vmul.f32 %v4479, %v4503
    %v4513 = vmul.f32 %v4480, %v4503
    %v4514 = vmul.f32 %v4481, %v4503
    %v4515 = vmul.f32 %v4482, %v4503
    %v4516 = vmul.f32 %v4483, %v4503
    %s4517 = scalar_lea.vmem %s7, 3
    %v4518 = vld [vmem:[%s4517] sm:$0x1]
    %v4520 = vlaneseq
    %v4521 = vshrl.u32 %v4520, 7
    %v4522 = vsub.s32 0, %v4521
    %v4523 = vrot.slane %v4518, %v4522
    %v4525 = vadd.f32 %v4505, %v4523
    %v4526 = vadd.f32 %v4506, %v4523
    %v4527 = vadd.f32 %v4507, %v4523
    %v4528 = vadd.f32 %v4508, %v4523
    %v4529 = vadd.f32 %v4509, %v4523
    %v4530 = vadd.f32 %v4510, %v4523
    %v4531 = vadd.f32 %v4511, %v4523
    %v4532 = vadd.f32 %v4512, %v4523
    %v4533 = vadd.f32 %v4513, %v4523
    %v4534 = vadd.f32 %v4514, %v4523
    %v4535 = vadd.f32 %v4515, %v4523
    %v4536 = vadd.f32 %v4516, %v4523
    %vm4537 = vcmp.ge.f32.partialorder %v4525, 0.0
    %vm4538 = vcmp.ge.f32.partialorder %v4526, 0.0
    %vm4539 = vcmp.ge.f32.partialorder %v4527, 0.0
    %vm4540 = vcmp.ge.f32.partialorder %v4528, 0.0
    %vm4541 = vcmp.ge.f32.partialorder %v4529, 0.0
    %vm4542 = vcmp.ge.f32.partialorder %v4530, 0.0
    %vm4543 = vcmp.ge.f32.partialorder %v4531, 0.0
    %vm4544 = vcmp.ge.f32.partialorder %v4532, 0.0
    %vm4545 = vcmp.ge.f32.partialorder %v4533, 0.0
    %vm4546 = vcmp.ge.f32.partialorder %v4534, 0.0
    %vm4547 = vcmp.ge.f32.partialorder %v4535, 0.0
    %vm4548 = vcmp.ge.f32.partialorder %v4536, 0.0
    %v4549 = vmul.f32 %v4525, 0.01
    %v4550 = vmul.f32 %v4526, 0.01
    %v4551 = vmul.f32 %v4527, 0.01
    %v4552 = vmul.f32 %v4528, 0.01
    %v4553 = vmul.f32 %v4529, 0.01
    %v4554 = vmul.f32 %v4530, 0.01
    %v4555 = vmul.f32 %v4531, 0.01
    %v4556 = vmul.f32 %v4532, 0.01
    %v4557 = vmul.f32 %v4533, 0.01
    %v4558 = vmul.f32 %v4534, 0.01
    %v4559 = vmul.f32 %v4535, 0.01
    %v4560 = vmul.f32 %v4536, 0.01
    %v4561 = vsel %vm4537, %v4525, %v4549
    %v4562 = vsel %vm4538, %v4526, %v4550
    %v4563 = vsel %vm4539, %v4527, %v4551
    %v4564 = vsel %vm4540, %v4528, %v4552
    %v4565 = vsel %vm4541, %v4529, %v4553
    %v4566 = vsel %vm4542, %v4530, %v4554
    %v4567 = vsel %vm4543, %v4531, %v4555
    %v4568 = vsel %vm4544, %v4532, %v4556
    %v4569 = vsel %vm4545, %v4533, %v4557
    %v4570 = vsel %vm4546, %v4534, %v4558
    %v4571 = vsel %vm4547, %v4535, %v4559
    %v4572 = vsel %vm4548, %v4536, %v4560
    %4573 = vst.msk [vmem:[#allocation2 + $0x1] sm:$0xff] %vm245, %v4561
    %4574 = vst.msk [vmem:[#allocation2 + $0x9] sm:$0xff] %vm245, %v4562
    %4575 = vst.msk [vmem:[#allocation2 + $0x11] sm:$0xff] %vm245, %v4563
    %4576 = vst.msk [vmem:[#allocation2 + $0x19] sm:$0xff] %vm245, %v4564
    %4577 = vst.msk [vmem:[#allocation2 + $0x21] sm:$0xff] %vm245, %v4565
    %4578 = vst.msk [vmem:[#allocation2 + $0x29] sm:$0xff] %vm245, %v4566
    %4579 = vst.msk [vmem:[#allocation2 + $0x31] sm:$0xff] %vm245, %v4567
    %4580 = vst.msk [vmem:[#allocation2 + $0x39] sm:$0xff] %vm245, %v4568
    %4581 = vst.msk [vmem:[#allocation2 + $0x41] sm:$0xff] %vm245, %v4569
    %4582 = vst.msk [vmem:[#allocation2 + $0x49] sm:$0xff] %vm245, %v4570
    %4583 = vst.msk [vmem:[#allocation2 + $0x51] sm:$0xff] %vm245, %v4571
    %4584 = vst.msk [vmem:[#allocation2 + $0x59] sm:$0x1f] %vm4495, %v4572
    %4585 = vst.msk [vmem:[#allocation2 + $0x5e] sm:$0x1] %vm3017, 0.0
    %v4586 = vld [vmem:[#allocation2] sm:$0xff]
    %v4587 = vld [vmem:[#allocation2 + $0x8] sm:$0xff]
    %v4588 = vld [vmem:[#allocation2 + $0x10] sm:$0xff]
    %v4589 = vld [vmem:[#allocation2 + $0x18] sm:$0xff]
    %v4590 = vld [vmem:[#allocation2 + $0x20] sm:$0xff]
    %v4591 = vld [vmem:[#allocation2 + $0x28] sm:$0xff]
    %v4592 = vld [vmem:[#allocation2 + $0x30] sm:$0xff]
    %v4593 = vld [vmem:[#allocation2 + $0x38] sm:$0xff]
    %v4594 = vld [vmem:[#allocation2 + $0x40] sm:$0xff]
    %v4595 = vld [vmem:[#allocation2 + $0x48] sm:$0xff]
    %v4596 = vld [vmem:[#allocation2 + $0x50] sm:$0xff]
    %v4597 = vld [vmem:[#allocation2 + $0x58] sm:$0x1f]
    %v4598 = vld [vmem:[#allocation2 + $0x1] sm:$0xff]
    %v4599 = vld [vmem:[#allocation2 + $0x9] sm:$0xff]
    %v4600 = vld [vmem:[#allocation2 + $0x11] sm:$0xff]
    %v4601 = vld [vmem:[#allocation2 + $0x19] sm:$0xff]
    %v4602 = vld [vmem:[#allocation2 + $0x21] sm:$0xff]
    %v4603 = vld [vmem:[#allocation2 + $0x29] sm:$0xff]
    %v4604 = vld [vmem:[#allocation2 + $0x31] sm:$0xff]
    %v4605 = vld [vmem:[#allocation2 + $0x39] sm:$0xff]
    %v4606 = vld [vmem:[#allocation2 + $0x41] sm:$0xff]
    %v4607 = vld [vmem:[#allocation2 + $0x49] sm:$0xff]
    %v4608 = vld [vmem:[#allocation2 + $0x51] sm:$0xff]
    %v4609 = vld [vmem:[#allocation2 + $0x59] sm:$0x1f]
    %v4610 = vld [vmem:[#allocation2 + $0x2] sm:$0xff]
    %v4611 = vld [vmem:[#allocation2 + $0xa] sm:$0xff]
    %v4612 = vld [vmem:[#allocation2 + $0x12] sm:$0xff]
    %v4613 = vld [vmem:[#allocation2 + $0x1a] sm:$0xff]
    %v4614 = vld [vmem:[#allocation2 + $0x22] sm:$0xff]
    %v4615 = vld [vmem:[#allocation2 + $0x2a] sm:$0xff]
    %v4616 = vld [vmem:[#allocation2 + $0x32] sm:$0xff]
    %v4617 = vld [vmem:[#allocation2 + $0x3a] sm:$0xff]
    %v4618 = vld [vmem:[#allocation2 + $0x42] sm:$0xff]
    %v4619 = vld [vmem:[#allocation2 + $0x4a] sm:$0xff]
    %v4620 = vld [vmem:[#allocation2 + $0x52] sm:$0xff]
    %v4621 = vld [vmem:[#allocation2 + $0x5a] sm:$0x1f]
    %4634 = vrot.lane.b32.xlu0 %v4598, 16
    %v4635 = vpop.permute.xlu0 %4634
    %4636 = vrot.lane.b32.xlu0 %v4599, 16
    %v4637 = vpop.permute.xlu0 %4636
    %4638 = vrot.lane.b32.xlu0 %v4600, 16
    %v4639 = vpop.permute.xlu0 %4638
    %4640 = vrot.lane.b32.xlu0 %v4601, 16
    %v4641 = vpop.permute.xlu0 %4640
    %4642 = vrot.lane.b32.xlu0 %v4602, 16
    %v4643 = vpop.permute.xlu0 %4642
    %4644 = vrot.lane.b32.xlu0 %v4603, 16
    %v4645 = vpop.permute.xlu0 %4644
    %4646 = vrot.lane.b32.xlu0 %v4604, 16
    %v4647 = vpop.permute.xlu0 %4646
    %4648 = vrot.lane.b32.xlu0 %v4605, 16
    %v4649 = vpop.permute.xlu0 %4648
    %4650 = vrot.lane.b32.xlu0 %v4606, 16
    %v4651 = vpop.permute.xlu0 %4650
    %4652 = vrot.lane.b32.xlu0 %v4607, 16
    %v4653 = vpop.permute.xlu0 %4652
    %4654 = vrot.lane.b32.xlu0 %v4608, 16
    %v4655 = vpop.permute.xlu0 %4654
    %4656 = vrot.lane.b32.xlu0 %v4609, 16
    %v4657 = vpop.permute.xlu0 %4656
    %4682 = vrot.lane.b32.xlu0 %v4610, 32
    %v4683 = vpop.permute.xlu0 %4682
    %4684 = vrot.lane.b32.xlu0 %v4611, 32
    %v4685 = vpop.permute.xlu0 %4684
    %4686 = vrot.lane.b32.xlu0 %v4612, 32
    %v4687 = vpop.permute.xlu0 %4686
    %4688 = vrot.lane.b32.xlu0 %v4613, 32
    %v4689 = vpop.permute.xlu0 %4688
    %4690 = vrot.lane.b32.xlu0 %v4614, 32
    %v4691 = vpop.permute.xlu0 %4690
    %4692 = vrot.lane.b32.xlu0 %v4615, 32
    %v4693 = vpop.permute.xlu0 %4692
    %4694 = vrot.lane.b32.xlu0 %v4616, 32
    %v4695 = vpop.permute.xlu0 %4694
    %4696 = vrot.lane.b32.xlu0 %v4617, 32
    %v4697 = vpop.permute.xlu0 %4696
    %4698 = vrot.lane.b32.xlu0 %v4618, 32
    %v4699 = vpop.permute.xlu0 %4698
    %4700 = vrot.lane.b32.xlu0 %v4619, 32
    %v4701 = vpop.permute.xlu0 %4700
    %4702 = vrot.lane.b32.xlu0 %v4620, 32
    %v4703 = vpop.permute.xlu0 %4702
    %4704 = vrot.lane.b32.xlu0 %v4621, 32
    %v4705 = vpop.permute.xlu0 %4704
    %v4718 = vsel %vm245, %v4586, %v4635
    %v4719 = vsel %vm245, %v4587, %v4637
    %v4720 = vsel %vm245, %v4588, %v4639
    %v4721 = vsel %vm245, %v4589, %v4641
    %v4722 = vsel %vm245, %v4590, %v4643
    %v4723 = vsel %vm245, %v4591, %v4645
    %v4724 = vsel %vm245, %v4592, %v4647
    %v4725 = vsel %vm245, %v4593, %v4649
    %v4726 = vsel %vm245, %v4594, %v4651
    %v4727 = vsel %vm245, %v4595, %v4653
    %v4728 = vsel %vm245, %v4596, %v4655
    %v4729 = vsel %vm245, %v4597, %v4657
    %v4730 = vsel %vm954, %v4718, %v4683
    %v4731 = vsel %vm954, %v4719, %v4685
    %v4732 = vsel %vm954, %v4720, %v4687
    %v4733 = vsel %vm954, %v4721, %v4689
    %v4734 = vsel %vm954, %v4722, %v4691
    %v4735 = vsel %vm954, %v4723, %v4693
    %v4736 = vsel %vm954, %v4724, %v4695
    %v4737 = vsel %vm954, %v4725, %v4697
    %v4738 = vsel %vm954, %v4726, %v4699
    %v4739 = vsel %vm954, %v4727, %v4701
    %v4740 = vsel %vm954, %v4728, %v4703
    %v4741 = vsel %vm954, %v4729, %v4705
    %s4742 = scalar_lea.vmem %s5, 96
    %v4743 = vld [vmem:[%s4742] sm:$0xff]
    %v4744 = vld [vmem:[%s4742 + $0x8] sm:$0xff]
    %v4745 = vld [vmem:[%s4742 + $0x10] sm:$0xff]
    %v4746 = vld [vmem:[%s4742 + $0x18] sm:$0xff]
    %v4747 = vld [vmem:[%s4742 + $0x20] sm:$0xff]
    %v4748 = vld [vmem:[%s4742 + $0x28] sm:$0xff]
    %v4750 = vsel %vm1857, %v4730, 0
    %v4753 = vsel %vm1857, %v4731, 0
    %v4756 = vsel %vm1857, %v4732, 0
    %v4759 = vsel %vm1857, %v4733, 0
    %v4762 = vsel %vm1857, %v4734, 0
    %v4765 = vsel %vm1857, %v4735, 0
    %v4768 = vsel %vm1857, %v4736, 0
    %v4771 = vsel %vm1857, %v4737, 0
    %v4774 = vsel %vm1857, %v4738, 0
    %v4777 = vsel %vm1857, %v4739, 0
    %v4780 = vsel %vm1857, %v4740, 0
    %v4783 = vsel %vm1857, %v4741, 0
    %4785 = vmatprep.subr.mxu0 0.0
    %4786 = vmatpush1.msra.mxu0 %v4743
    %4787 = vmatprep.subr.mxu0 0.0
    %4788 = vmatpush1.msra.mxu0 %v4744
    %4789 = vmatprep.subr.mxu0 0.0
    %4790 = vmatpush1.msra.mxu0 %v4745
    %4791 = vmatprep.subr.mxu0 0.0
    %4792 = vmatpush1.msra.mxu0 %v4746
    %4793 = vmatprep.subr.mxu0 0.0
    %4794 = vmatpush1.msra.mxu0 %v4747
    %4795 = vmatprep.subr.mxu0 0.0
    %4796 = vmatpush1.msra.mxu0 %v4748
    %4797 = vmatprep.subr.mxu0 0.0
    %4798 = vmatpush1.msra.mxu0 0.0
    %4799 = vmatprep.subr.mxu0 0.0
    %4800 = vmatpush1.msra.mxu0 0.0
    %4801 = vmatprep.subr.mxu0 0.0
    %4802 = vmatpush1.msra.mxu0 0.0
    %4803 = vmatprep.subr.mxu0 0.0
    %4804 = vmatpush1.msra.mxu0 0.0
    %4805 = vmatprep.subr.mxu0 0.0
    %4806 = vmatpush1.msra.mxu0 0.0
    %4807 = vmatprep.subr.mxu0 0.0
    %4808 = vmatpush1.msra.mxu0 0.0
    %4809 = vmatprep.subr.mxu0 0.0
    %4810 = vmatpush1.msra.mxu0 0.0
    %4811 = vmatprep.subr.mxu0 0.0
    %4812 = vmatpush1.msra.mxu0 0.0
    %4813 = vmatprep.subr.mxu0 0.0
    %4814 = vmatpush1.msra.mxu0 0.0
    %4815 = vmatprep.subr.mxu0 0.0
    %4816 = vmatpush1.msra.mxu0 0.0
    %4817 = vmatprep.subr.mxu0 0.0
    %4818 = vmatpush1.msra.mxu0 0.0
    %4819 = vmatprep.subr.mxu0 0.0
    %4820 = vmatpush1.msra.mxu0 0.0
    %4821 = vmatprep.subr.mxu0 0.0
    %4822 = vmatpush1.msra.mxu0 0.0
    %4823 = vmatprep.subr.mxu0 0.0
    %4824 = vmatpush1.msra.mxu0 0.0
    %4825 = vmatprep.subr.mxu0 0.0
    %4826 = vmatpush1.msra.mxu0 0.0
    %4827 = vmatprep.subr.mxu0 0.0
    %4828 = vmatpush1.msra.mxu0 0.0
    %4829 = vmatprep.subr.mxu0 0.0
    %4830 = vmatpush1.msra.mxu0 0.0
    %4831 = vmatprep.subr.mxu0 0.0
    %4832 = vmatpush1.msra.mxu0 0.0
    %4833 = vmatprep.subr.mxu0 0.0
    %4834 = vmatpush1.msra.mxu0 0.0
    %4835 = vmatprep.subr.mxu0 0.0
    %4836 = vmatpush1.msra.mxu0 0.0
    %4837 = vmatprep.subr.mxu0 0.0
    %4838 = vmatpush1.msra.mxu0 0.0
    %4839 = vmatprep.subr.mxu0 0.0
    %4840 = vmatpush1.msra.mxu0 0.0
    %4841 = vmatprep.subr.mxu0 0.0
    %4842 = vmatpush1.msra.mxu0 0.0
    %4843 = vmatprep.subr.mxu0 0.0
    %4844 = vmatpush1.msra.mxu0 0.0
    %4845 = vmatprep.subr.mxu0 0.0
    %4846 = vmatpush1.msra.mxu0 0.0
    %4847 = vmatprep.subr.mxu0 0.0
    %4848 = vmatpush1.msra.mxu0 0.0
    %4849 = vmatprep.mubr.f32.mxu0 0.0
    %4850 = vmatmul.mubr.f32.gmra.mrb[0].mxu0 %v4750
    %v4851 = vpop.f32.mrb[0].mxu0
    %v4852 = vadd.f32 0.0, %v4851
    %v4853 = vpop.f32.mrb[0].mxu0
    %4854 = vmatprep.mubr.f32.mxu0 0.0
    %4855 = vmatmul.mubr.f32.gmra.mrb[0].mxu0 %v4753
    %v4856 = vpop.f32.mrb[0].mxu0
    %v4857 = vadd.f32 0.0, %v4856
    %v4858 = vpop.f32.mrb[0].mxu0
    %4859 = vmatprep.mubr.f32.mxu0 0.0
    %4860 = vmatmul.mubr.f32.gmra.mrb[0].mxu0 %v4756
    %v4861 = vpop.f32.mrb[0].mxu0
    %v4862 = vadd.f32 0.0, %v4861
    %v4863 = vpop.f32.mrb[0].mxu0
    %4864 = vmatprep.mubr.f32.mxu0 0.0
    %4865 = vmatmul.mubr.f32.gmra.mrb[0].mxu0 %v4759
    %v4866 = vpop.f32.mrb[0].mxu0
    %v4867 = vadd.f32 0.0, %v4866
    %v4868 = vpop.f32.mrb[0].mxu0
    %4869 = vmatprep.mubr.f32.mxu0 0.0
    %4870 = vmatmul.mubr.f32.gmra.mrb[0].mxu0 %v4762
    %v4871 = vpop.f32.mrb[0].mxu0
    %v4872 = vadd.f32 0.0, %v4871
    %v4873 = vpop.f32.mrb[0].mxu0
    %4874 = vmatprep.mubr.f32.mxu0 0.0
    %4875 = vmatmul.mubr.f32.gmra.mrb[0].mxu0 %v4765
    %v4876 = vpop.f32.mrb[0].mxu0
    %v4877 = vadd.f32 0.0, %v4876
    %v4878 = vpop.f32.mrb[0].mxu0
    %4879 = vmatprep.mubr.f32.mxu0 0.0
    %4880 = vmatmul.mubr.f32.gmra.mrb[0].mxu0 %v4768
    %v4881 = vpop.f32.mrb[0].mxu0
    %v4882 = vadd.f32 0.0, %v4881
    %v4883 = vpop.f32.mrb[0].mxu0
    %4884 = vmatprep.mubr.f32.mxu0 0.0
    %4885 = vmatmul.mubr.f32.gmra.mrb[0].mxu0 %v4771
    %v4886 = vpop.f32.mrb[0].mxu0
    %v4887 = vadd.f32 0.0, %v4886
    %v4888 = vpop.f32.mrb[0].mxu0
    %4889 = vmatprep.mubr.f32.mxu0 0.0
    %4890 = vmatmul.mubr.f32.gmra.mrb[0].mxu0 %v4774
    %v4891 = vpop.f32.mrb[0].mxu0
    %v4892 = vadd.f32 0.0, %v4891
    %v4893 = vpop.f32.mrb[0].mxu0
    %4894 = vmatprep.mubr.f32.mxu0 0.0
    %4895 = vmatmul.mubr.f32.gmra.mrb[0].mxu0 %v4777
    %v4896 = vpop.f32.mrb[0].mxu0
    %v4897 = vadd.f32 0.0, %v4896
    %v4898 = vpop.f32.mrb[0].mxu0
    %4899 = vmatprep.mubr.f32.mxu0 0.0
    %4900 = vmatmul.mubr.f32.gmra.mrb[0].mxu0 %v4780
    %v4901 = vpop.f32.mrb[0].mxu0
    %v4902 = vadd.f32 0.0, %v4901
    %v4903 = vpop.f32.mrb[0].mxu0
    %4904 = vmatprep.mubr.f32.mxu0 0.0
    %4905 = vmatmul.mubr.f32.gmra.mrb[0].mxu0 %v4783
    %v4906 = vpop.f32.mrb[0].mxu0
    %v4907 = vadd.f32 0.0, %v4906
    %v4908 = vpop.f32.mrb[0].mxu0
    %4909 = vdwg.mxu0
    %s4910 = scalar_lea.vmem %s6, 4
    %v4911 = vld [vmem:[%s4910] sm:$0x1]
    %v4913 = vlaneseq
    %v4914 = vshrl.u32 %v4913, 7
    %v4915 = vsub.s32 0, %v4914
    %v4916 = vrot.slane %v4911, %v4915
    %v4918 = vmul.f32 %v4852, %v4916
    %v4919 = vmul.f32 %v4857, %v4916
    %v4920 = vmul.f32 %v4862, %v4916
    %v4921 = vmul.f32 %v4867, %v4916
    %v4922 = vmul.f32 %v4872, %v4916
    %v4923 = vmul.f32 %v4877, %v4916
    %v4924 = vmul.f32 %v4882, %v4916
    %v4925 = vmul.f32 %v4887, %v4916
    %v4926 = vmul.f32 %v4892, %v4916
    %v4927 = vmul.f32 %v4897, %v4916
    %v4928 = vmul.f32 %v4902, %v4916
    %v4929 = vmul.f32 %v4907, %v4916
    %s4930 = scalar_lea.vmem %s7, 4
    %v4931 = vld [vmem:[%s4930] sm:$0x1]
    %v4933 = vlaneseq
    %v4934 = vshrl.u32 %v4933, 7
    %v4935 = vsub.s32 0, %v4934
    %v4936 = vrot.slane %v4931, %v4935
    %v4938 = vadd.f32 %v4918, %v4936
    %v4939 = vadd.f32 %v4919, %v4936
    %v4940 = vadd.f32 %v4920, %v4936
    %v4941 = vadd.f32 %v4921, %v4936
    %v4942 = vadd.f32 %v4922, %v4936
    %v4943 = vadd.f32 %v4923, %v4936
    %v4944 = vadd.f32 %v4924, %v4936
    %v4945 = vadd.f32 %v4925, %v4936
    %v4946 = vadd.f32 %v4926, %v4936
    %v4947 = vadd.f32 %v4927, %v4936
    %v4948 = vadd.f32 %v4928, %v4936
    %v4949 = vadd.f32 %v4929, %v4936
    %vm4950 = vcmp.ge.f32.partialorder %v4938, 0.0
    %vm4951 = vcmp.ge.f32.partialorder %v4939, 0.0
    %vm4952 = vcmp.ge.f32.partialorder %v4940, 0.0
    %vm4953 = vcmp.ge.f32.partialorder %v4941, 0.0
    %vm4954 = vcmp.ge.f32.partialorder %v4942, 0.0
    %vm4955 = vcmp.ge.f32.partialorder %v4943, 0.0
    %vm4956 = vcmp.ge.f32.partialorder %v4944, 0.0
    %vm4957 = vcmp.ge.f32.partialorder %v4945, 0.0
    %vm4958 = vcmp.ge.f32.partialorder %v4946, 0.0
    %vm4959 = vcmp.ge.f32.partialorder %v4947, 0.0
    %vm4960 = vcmp.ge.f32.partialorder %v4948, 0.0
    %vm4961 = vcmp.ge.f32.partialorder %v4949, 0.0
    %v4962 = vmul.f32 %v4938, 0.01
    %v4963 = vmul.f32 %v4939, 0.01
    %v4964 = vmul.f32 %v4940, 0.01
    %v4965 = vmul.f32 %v4941, 0.01
    %v4966 = vmul.f32 %v4942, 0.01
    %v4967 = vmul.f32 %v4943, 0.01
    %v4968 = vmul.f32 %v4944, 0.01
    %v4969 = vmul.f32 %v4945, 0.01
    %v4970 = vmul.f32 %v4946, 0.01
    %v4971 = vmul.f32 %v4947, 0.01
    %v4972 = vmul.f32 %v4948, 0.01
    %v4973 = vmul.f32 %v4949, 0.01
    %v4974 = vsel %vm4950, %v4938, %v4962
    %v4975 = vsel %vm4951, %v4939, %v4963
    %v4976 = vsel %vm4952, %v4940, %v4964
    %v4977 = vsel %vm4953, %v4941, %v4965
    %v4978 = vsel %vm4954, %v4942, %v4966
    %v4979 = vsel %vm4955, %v4943, %v4967
    %v4980 = vsel %vm4956, %v4944, %v4968
    %v4981 = vsel %vm4957, %v4945, %v4969
    %v4982 = vsel %vm4958, %v4946, %v4970
    %v4983 = vsel %vm4959, %v4947, %v4971
    %v4984 = vsel %vm4960, %v4948, %v4972
    %v4985 = vsel %vm4961, %v4949, %v4973
    %4986 = vst.msk [vmem:[#allocation2 + $0x1] sm:$0xff] %vm245, %v4974
    %4987 = vst.msk [vmem:[#allocation2 + $0x9] sm:$0xff] %vm245, %v4975
    %4988 = vst.msk [vmem:[#allocation2 + $0x11] sm:$0xff] %vm245, %v4976
    %4989 = vst.msk [vmem:[#allocation2 + $0x19] sm:$0xff] %vm245, %v4977
    %4990 = vst.msk [vmem:[#allocation2 + $0x21] sm:$0xff] %vm245, %v4978
    %4991 = vst.msk [vmem:[#allocation2 + $0x29] sm:$0xff] %vm245, %v4979
    %4992 = vst.msk [vmem:[#allocation2 + $0x31] sm:$0xff] %vm245, %v4980
    %4993 = vst.msk [vmem:[#allocation2 + $0x39] sm:$0xff] %vm245, %v4981
    %4994 = vst.msk [vmem:[#allocation2 + $0x41] sm:$0xff] %vm245, %v4982
    %4995 = vst.msk [vmem:[#allocation2 + $0x49] sm:$0xff] %vm245, %v4983
    %4996 = vst.msk [vmem:[#allocation2 + $0x51] sm:$0xff] %vm245, %v4984
    %4997 = vst.msk [vmem:[#allocation2 + $0x59] sm:$0x1f] %vm4495, %v4985
    %v4998 = vld [vmem:[#allocation2] sm:$0xff]
    %v4999 = vld [vmem:[#allocation2 + $0x8] sm:$0xff]
    %v5000 = vld [vmem:[#allocation2 + $0x10] sm:$0xff]
    %v5001 = vld [vmem:[#allocation2 + $0x18] sm:$0xff]
    %v5002 = vld [vmem:[#allocation2 + $0x20] sm:$0xff]
    %v5003 = vld [vmem:[#allocation2 + $0x28] sm:$0xff]
    %v5004 = vld [vmem:[#allocation2 + $0x30] sm:$0xff]
    %v5005 = vld [vmem:[#allocation2 + $0x38] sm:$0xff]
    %v5006 = vld [vmem:[#allocation2 + $0x40] sm:$0xff]
    %v5007 = vld [vmem:[#allocation2 + $0x48] sm:$0xff]
    %v5008 = vld [vmem:[#allocation2 + $0x50] sm:$0xff]
    %v5009 = vld [vmem:[#allocation2 + $0x58] sm:$0x1f]
    %v5010 = vld [vmem:[#allocation2 + $0x1] sm:$0xff]
    %v5011 = vld [vmem:[#allocation2 + $0x9] sm:$0xff]
    %v5012 = vld [vmem:[#allocation2 + $0x11] sm:$0xff]
    %v5013 = vld [vmem:[#allocation2 + $0x19] sm:$0xff]
    %v5014 = vld [vmem:[#allocation2 + $0x21] sm:$0xff]
    %v5015 = vld [vmem:[#allocation2 + $0x29] sm:$0xff]
    %v5016 = vld [vmem:[#allocation2 + $0x31] sm:$0xff]
    %v5017 = vld [vmem:[#allocation2 + $0x39] sm:$0xff]
    %v5018 = vld [vmem:[#allocation2 + $0x41] sm:$0xff]
    %v5019 = vld [vmem:[#allocation2 + $0x49] sm:$0xff]
    %v5020 = vld [vmem:[#allocation2 + $0x51] sm:$0xff]
    %v5021 = vld [vmem:[#allocation2 + $0x59] sm:$0x1f]
    %v5022 = vld [vmem:[#allocation2 + $0x2] sm:$0xff]
    %v5023 = vld [vmem:[#allocation2 + $0xa] sm:$0xff]
    %v5024 = vld [vmem:[#allocation2 + $0x12] sm:$0xff]
    %v5025 = vld [vmem:[#allocation2 + $0x1a] sm:$0xff]
    %v5026 = vld [vmem:[#allocation2 + $0x22] sm:$0xff]
    %v5027 = vld [vmem:[#allocation2 + $0x2a] sm:$0xff]
    %v5028 = vld [vmem:[#allocation2 + $0x32] sm:$0xff]
    %v5029 = vld [vmem:[#allocation2 + $0x3a] sm:$0xff]
    %v5030 = vld [vmem:[#allocation2 + $0x42] sm:$0xff]
    %v5031 = vld [vmem:[#allocation2 + $0x4a] sm:$0xff]
    %v5032 = vld [vmem:[#allocation2 + $0x52] sm:$0xff]
    %v5033 = vld [vmem:[#allocation2 + $0x5a] sm:$0x1f]
    %5046 = vrot.lane.b32.xlu0 %v5010, 16
    %v5047 = vpop.permute.xlu0 %5046
    %5048 = vrot.lane.b32.xlu0 %v5011, 16
    %v5049 = vpop.permute.xlu0 %5048
    %5050 = vrot.lane.b32.xlu0 %v5012, 16
    %v5051 = vpop.permute.xlu0 %5050
    %5052 = vrot.lane.b32.xlu0 %v5013, 16
    %v5053 = vpop.permute.xlu0 %5052
    %5054 = vrot.lane.b32.xlu0 %v5014, 16
    %v5055 = vpop.permute.xlu0 %5054
    %5056 = vrot.lane.b32.xlu0 %v5015, 16
    %v5057 = vpop.permute.xlu0 %5056
    %5058 = vrot.lane.b32.xlu0 %v5016, 16
    %v5059 = vpop.permute.xlu0 %5058
    %5060 = vrot.lane.b32.xlu0 %v5017, 16
    %v5061 = vpop.permute.xlu0 %5060
    %5062 = vrot.lane.b32.xlu0 %v5018, 16
    %v5063 = vpop.permute.xlu0 %5062
    %5064 = vrot.lane.b32.xlu0 %v5019, 16
    %v5065 = vpop.permute.xlu0 %5064
    %5066 = vrot.lane.b32.xlu0 %v5020, 16
    %v5067 = vpop.permute.xlu0 %5066
    %5068 = vrot.lane.b32.xlu0 %v5021, 16
    %v5069 = vpop.permute.xlu0 %5068
    %5094 = vrot.lane.b32.xlu0 %v5022, 32
    %v5095 = vpop.permute.xlu0 %5094
    %5096 = vrot.lane.b32.xlu0 %v5023, 32
    %v5097 = vpop.permute.xlu0 %5096
    %5098 = vrot.lane.b32.xlu0 %v5024, 32
    %v5099 = vpop.permute.xlu0 %5098
    %5100 = vrot.lane.b32.xlu0 %v5025, 32
    %v5101 = vpop.permute.xlu0 %5100
    %5102 = vrot.lane.b32.xlu0 %v5026, 32
    %v5103 = vpop.permute.xlu0 %5102
    %5104 = vrot.lane.b32.xlu0 %v5027, 32
    %v5105 = vpop.permute.xlu0 %5104
    %5106 = vrot.lane.b32.xlu0 %v5028, 32
    %v5107 = vpop.permute.xlu0 %5106
    %5108 = vrot.lane.b32.xlu0 %v5029, 32
    %v5109 = vpop.permute.xlu0 %5108
    %5110 = vrot.lane.b32.xlu0 %v5030, 32
    %v5111 = vpop.permute.xlu0 %5110
    %5112 = vrot.lane.b32.xlu0 %v5031, 32
    %v5113 = vpop.permute.xlu0 %5112
    %5114 = vrot.lane.b32.xlu0 %v5032, 32
    %v5115 = vpop.permute.xlu0 %5114
    %5116 = vrot.lane.b32.xlu0 %v5033, 32
    %v5117 = vpop.permute.xlu0 %5116
    %v5130 = vsel %vm245, %v4998, %v5047
    %v5131 = vsel %vm245, %v4999, %v5049
    %v5132 = vsel %vm245, %v5000, %v5051
    %v5133 = vsel %vm245, %v5001, %v5053
    %v5134 = vsel %vm245, %v5002, %v5055
    %v5135 = vsel %vm245, %v5003, %v5057
    %v5136 = vsel %vm245, %v5004, %v5059
    %v5137 = vsel %vm245, %v5005, %v5061
    %v5138 = vsel %vm245, %v5006, %v5063
    %v5139 = vsel %vm245, %v5007, %v5065
    %v5140 = vsel %vm245, %v5008, %v5067
    %v5141 = vsel %vm245, %v5009, %v5069
    %v5142 = vsel %vm954, %v5130, %v5095
    %v5143 = vsel %vm954, %v5131, %v5097
    %v5144 = vsel %vm954, %v5132, %v5099
    %v5145 = vsel %vm954, %v5133, %v5101
    %v5146 = vsel %vm954, %v5134, %v5103
    %v5147 = vsel %vm954, %v5135, %v5105
    %v5148 = vsel %vm954, %v5136, %v5107
    %v5149 = vsel %vm954, %v5137, %v5109
    %v5150 = vsel %vm954, %v5138, %v5111
    %v5151 = vsel %vm954, %v5139, %v5113
    %v5152 = vsel %vm954, %v5140, %v5115
    %v5153 = vsel %vm954, %v5141, %v5117
    %s5154 = scalar_lea.vmem %s5, 144
    %v5155 = vld [vmem:[%s5154] sm:$0xff]
    %v5156 = vld [vmem:[%s5154 + $0x8] sm:$0xff]
    %v5157 = vld [vmem:[%s5154 + $0x10] sm:$0xff]
    %v5158 = vld [vmem:[%s5154 + $0x18] sm:$0xff]
    %v5159 = vld [vmem:[%s5154 + $0x20] sm:$0xff]
    %v5160 = vld [vmem:[%s5154 + $0x28] sm:$0xff]
    %v5162 = vsel %vm1857, %v5142, 0
    %v5165 = vsel %vm1857, %v5143, 0
    %v5168 = vsel %vm1857, %v5144, 0
    %v5171 = vsel %vm1857, %v5145, 0
    %v5174 = vsel %vm1857, %v5146, 0
    %v5177 = vsel %vm1857, %v5147, 0
    %v5180 = vsel %vm1857, %v5148, 0
    %v5183 = vsel %vm1857, %v5149, 0
    %v5186 = vsel %vm1857, %v5150, 0
    %v5189 = vsel %vm1857, %v5151, 0
    %v5192 = vsel %vm1857, %v5152, 0
    %v5195 = vsel %vm1857, %v5153, 0
    %5197 = vmatprep.subr.mxu0 0.0
    %5198 = vmatpush1.msra.mxu0 %v5155
    %5199 = vmatprep.subr.mxu0 0.0
    %5200 = vmatpush1.msra.mxu0 %v5156
    %5201 = vmatprep.subr.mxu0 0.0
    %5202 = vmatpush1.msra.mxu0 %v5157
    %5203 = vmatprep.subr.mxu0 0.0
    %5204 = vmatpush1.msra.mxu0 %v5158
    %5205 = vmatprep.subr.mxu0 0.0
    %5206 = vmatpush1.msra.mxu0 %v5159
    %5207 = vmatprep.subr.mxu0 0.0
    %5208 = vmatpush1.msra.mxu0 %v5160
    %5209 = vmatprep.subr.mxu0 0.0
    %5210 = vmatpush1.msra.mxu0 0.0
    %5211 = vmatprep.subr.mxu0 0.0
    %5212 = vmatpush1.msra.mxu0 0.0
    %5213 = vmatprep.subr.mxu0 0.0
    %5214 = vmatpush1.msra.mxu0 0.0
    %5215 = vmatprep.subr.mxu0 0.0
    %5216 = vmatpush1.msra.mxu0 0.0
    %5217 = vmatprep.subr.mxu0 0.0
    %5218 = vmatpush1.msra.mxu0 0.0
    %5219 = vmatprep.subr.mxu0 0.0
    %5220 = vmatpush1.msra.mxu0 0.0
    %5221 = vmatprep.subr.mxu0 0.0
    %5222 = vmatpush1.msra.mxu0 0.0
    %5223 = vmatprep.subr.mxu0 0.0
    %5224 = vmatpush1.msra.mxu0 0.0
    %5225 = vmatprep.subr.mxu0 0.0
    %5226 = vmatpush1.msra.mxu0 0.0
    %5227 = vmatprep.subr.mxu0 0.0
    %5228 = vmatpush1.msra.mxu0 0.0
    %5229 = vmatprep.subr.mxu0 0.0
    %5230 = vmatpush1.msra.mxu0 0.0
    %5231 = vmatprep.subr.mxu0 0.0
    %5232 = vmatpush1.msra.mxu0 0.0
    %5233 = vmatprep.subr.mxu0 0.0
    %5234 = vmatpush1.msra.mxu0 0.0
    %5235 = vmatprep.subr.mxu0 0.0
    %5236 = vmatpush1.msra.mxu0 0.0
    %5237 = vmatprep.subr.mxu0 0.0
    %5238 = vmatpush1.msra.mxu0 0.0
    %5239 = vmatprep.subr.mxu0 0.0
    %5240 = vmatpush1.msra.mxu0 0.0
    %5241 = vmatprep.subr.mxu0 0.0
    %5242 = vmatpush1.msra.mxu0 0.0
    %5243 = vmatprep.subr.mxu0 0.0
    %5244 = vmatpush1.msra.mxu0 0.0
    %5245 = vmatprep.subr.mxu0 0.0
    %5246 = vmatpush1.msra.mxu0 0.0
    %5247 = vmatprep.subr.mxu0 0.0
    %5248 = vmatpush1.msra.mxu0 0.0
    %5249 = vmatprep.subr.mxu0 0.0
    %5250 = vmatpush1.msra.mxu0 0.0
    %5251 = vmatprep.subr.mxu0 0.0
    %5252 = vmatpush1.msra.mxu0 0.0
    %5253 = vmatprep.subr.mxu0 0.0
    %5254 = vmatpush1.msra.mxu0 0.0
    %5255 = vmatprep.subr.mxu0 0.0
    %5256 = vmatpush1.msra.mxu0 0.0
    %5257 = vmatprep.subr.mxu0 0.0
    %5258 = vmatpush1.msra.mxu0 0.0
    %5259 = vmatprep.subr.mxu0 0.0
    %5260 = vmatpush1.msra.mxu0 0.0
    %5261 = vmatprep.mubr.f32.mxu0 0.0
    %5262 = vmatmul.mubr.f32.gmra.mrb[0].mxu0 %v5162
    %v5263 = vpop.f32.mrb[0].mxu0
    %v5264 = vadd.f32 0.0, %v5263
    %v5265 = vpop.f32.mrb[0].mxu0
    %5266 = vmatprep.mubr.f32.mxu0 0.0
    %5267 = vmatmul.mubr.f32.gmra.mrb[0].mxu0 %v5165
    %v5268 = vpop.f32.mrb[0].mxu0
    %v5269 = vadd.f32 0.0, %v5268
    %v5270 = vpop.f32.mrb[0].mxu0
    %5271 = vmatprep.mubr.f32.mxu0 0.0
    %5272 = vmatmul.mubr.f32.gmra.mrb[0].mxu0 %v5168
    %v5273 = vpop.f32.mrb[0].mxu0
    %v5274 = vadd.f32 0.0, %v5273
    %v5275 = vpop.f32.mrb[0].mxu0
    %5276 = vmatprep.mubr.f32.mxu0 0.0
    %5277 = vmatmul.mubr.f32.gmra.mrb[0].mxu0 %v5171
    %v5278 = vpop.f32.mrb[0].mxu0
    %v5279 = vadd.f32 0.0, %v5278
    %v5280 = vpop.f32.mrb[0].mxu0
    %5281 = vmatprep.mubr.f32.mxu0 0.0
    %5282 = vmatmul.mubr.f32.gmra.mrb[0].mxu0 %v5174
    %v5283 = vpop.f32.mrb[0].mxu0
    %v5284 = vadd.f32 0.0, %v5283
    %v5285 = vpop.f32.mrb[0].mxu0
    %5286 = vmatprep.mubr.f32.mxu0 0.0
    %5287 = vmatmul.mubr.f32.gmra.mrb[0].mxu0 %v5177
    %v5288 = vpop.f32.mrb[0].mxu0
    %v5289 = vadd.f32 0.0, %v5288
    %v5290 = vpop.f32.mrb[0].mxu0
    %5291 = vmatprep.mubr.f32.mxu0 0.0
    %5292 = vmatmul.mubr.f32.gmra.mrb[0].mxu0 %v5180
    %v5293 = vpop.f32.mrb[0].mxu0
    %v5294 = vadd.f32 0.0, %v5293
    %v5295 = vpop.f32.mrb[0].mxu0
    %5296 = vmatprep.mubr.f32.mxu0 0.0
    %5297 = vmatmul.mubr.f32.gmra.mrb[0].mxu0 %v5183
    %v5298 = vpop.f32.mrb[0].mxu0
    %v5299 = vadd.f32 0.0, %v5298
    %v5300 = vpop.f32.mrb[0].mxu0
    %5301 = vmatprep.mubr.f32.mxu0 0.0
    %5302 = vmatmul.mubr.f32.gmra.mrb[0].mxu0 %v5186
    %v5303 = vpop.f32.mrb[0].mxu0
    %v5304 = vadd.f32 0.0, %v5303
    %v5305 = vpop.f32.mrb[0].mxu0
    %5306 = vmatprep.mubr.f32.mxu0 0.0
    %5307 = vmatmul.mubr.f32.gmra.mrb[0].mxu0 %v5189
    %v5308 = vpop.f32.mrb[0].mxu0
    %v5309 = vadd.f32 0.0, %v5308
    %v5310 = vpop.f32.mrb[0].mxu0
    %5311 = vmatprep.mubr.f32.mxu0 0.0
    %5312 = vmatmul.mubr.f32.gmra.mrb[0].mxu0 %v5192
    %v5313 = vpop.f32.mrb[0].mxu0
    %v5314 = vadd.f32 0.0, %v5313
    %v5315 = vpop.f32.mrb[0].mxu0
    %5316 = vmatprep.mubr.f32.mxu0 0.0
    %5317 = vmatmul.mubr.f32.gmra.mrb[0].mxu0 %v5195
    %v5318 = vpop.f32.mrb[0].mxu0
    %v5319 = vadd.f32 0.0, %v5318
    %v5320 = vpop.f32.mrb[0].mxu0
    %5321 = vdwg.mxu0
    %5322 = vst.msk [vmem:[#allocation4] sm:$0xff] %vm245, %v5264
    %5323 = vst.msk [vmem:[#allocation4 + $0x8] sm:$0xff] %vm245, %v5269
    %5324 = vst.msk [vmem:[#allocation4 + $0x10] sm:$0xff] %vm245, %v5274
    %5325 = vst.msk [vmem:[#allocation4 + $0x18] sm:$0xff] %vm245, %v5279
    %5326 = vst.msk [vmem:[#allocation4 + $0x20] sm:$0xff] %vm245, %v5284
    %5327 = vst.msk [vmem:[#allocation4 + $0x28] sm:$0xff] %vm245, %v5289
    %5328 = vst.msk [vmem:[#allocation4 + $0x30] sm:$0xff] %vm245, %v5294
    %5329 = vst.msk [vmem:[#allocation4 + $0x38] sm:$0xff] %vm245, %v5299
    %5330 = vst.msk [vmem:[#allocation4 + $0x40] sm:$0xff] %vm245, %v5304
    %5331 = vst.msk [vmem:[#allocation4 + $0x48] sm:$0xff] %vm245, %v5309
    %5332 = vst.msk [vmem:[#allocation4 + $0x50] sm:$0xff] %vm245, %v5314
    %5333 = vst.msk [vmem:[#allocation4 + $0x58] sm:$0x1f] %vm4495, %v5319
    %v5334 = vld [vmem:[#allocation4] ss:$2 sm:$0xff]
    %v5335 = vld [vmem:[%s4355] ss:$2 sm:$0xff]
    %v5336 = vld [vmem:[%s4357] ss:$2 sm:$0xff]
    %v5337 = vld [vmem:[%s4359] ss:$2 sm:$0xff]
    %v5338 = vld [vmem:[%s4361] ss:$2 sm:$0xff]
    %v5339 = vld [vmem:[%s4363] ss:$2 sm:$0x3f]
    %v5340 = vld [vmem:[%s4377] ss:$2 sm:$0xff]
    %v5341 = vld [vmem:[%s4379] ss:$2 sm:$0xff]
    %v5342 = vld [vmem:[%s4381] ss:$2 sm:$0xff]
    %v5343 = vld [vmem:[%s4383] ss:$2 sm:$0xff]
    %v5344 = vld [vmem:[%s4385] ss:$2 sm:$0xff]
    %v5345 = vld [vmem:[%s4387] ss:$2 sm:$0x3f]
    %v5346 = vmax.f32 %v5334, %v5340
    %v5347 = vmax.f32 %v5335, %v5341
    %v5348 = vmax.f32 %v5336, %v5342
    %v5349 = vmax.f32 %v5337, %v5343
    %v5350 = vmax.f32 %v5338, %v5344
    %v5351 = vmax.f32 %v5339, %v5345
    %v5352 = vld [vmem:[#allocation3] ss:$2 sm:$0xff]
    %v5353 = vld [vmem:[%s4414] ss:$2 sm:$0xff]
    %v5354 = vld [vmem:[%s4416] ss:$2 sm:$0xff]
    %v5355 = vld [vmem:[%s4418] ss:$2 sm:$0xff]
    %v5356 = vld [vmem:[%s4420] ss:$2 sm:$0xff]
    %v5357 = vld [vmem:[%s4422] ss:$2 sm:$0x3f]
    %v5358 = vld [vmem:[%s4436] ss:$2 sm:$0xff]
    %v5359 = vld [vmem:[%s4438] ss:$2 sm:$0xff]
    %v5360 = vld [vmem:[%s4440] ss:$2 sm:$0xff]
    %v5361 = vld [vmem:[%s4442] ss:$2 sm:$0xff]
    %v5362 = vld [vmem:[%s4444] ss:$2 sm:$0xff]
    %v5363 = vld [vmem:[%s4446] ss:$2 sm:$0x3f]
    %v5364 = vmax.f32 %v5352, %v5358
    %v5365 = vmax.f32 %v5353, %v5359
    %v5366 = vmax.f32 %v5354, %v5360
    %v5367 = vmax.f32 %v5355, %v5361
    %v5368 = vmax.f32 %v5356, %v5362
    %v5369 = vmax.f32 %v5357, %v5363
    %v5370 = vadd.f32 %v5346, %v5364
    %v5371 = vadd.f32 %v5347, %v5365
    %v5372 = vadd.f32 %v5348, %v5366
    %v5373 = vadd.f32 %v5349, %v5367
    %v5374 = vadd.f32 %v5350, %v5368
    %v5375 = vadd.f32 %v5351, %v5369
    %5376 = vst.msk [vmem:[#allocation3] sm:$0xff] %vm245, %v5370
    %5377 = vst.msk [vmem:[#allocation3 + $0x8] sm:$0xff] %vm245, %v5371
    %5378 = vst.msk [vmem:[#allocation3 + $0x10] sm:$0xff] %vm245, %v5372
    %5379 = vst.msk [vmem:[#allocation3 + $0x18] sm:$0xff] %vm245, %v5373
    %5380 = vst.msk [vmem:[#allocation3 + $0x20] sm:$0xff] %vm245, %v5374
    %5381 = vst.msk [vmem:[#allocation3 + $0x28] sm:$0x3f] %vm568, %v5375
    %s5382 = scalar_lea.vmem %s6, 5
    %v5383 = vld [vmem:[%s5382] sm:$0x1]
    %v5385 = vlaneseq
    %v5386 = vshrl.u32 %v5385, 7
    %v5387 = vsub.s32 0, %v5386
    %v5388 = vrot.slane %v5383, %v5387
    %v5390 = vmul.f32 %v5370, %v5388
    %v5391 = vmul.f32 %v5371, %v5388
    %v5392 = vmul.f32 %v5372, %v5388
    %v5393 = vmul.f32 %v5373, %v5388
    %v5394 = vmul.f32 %v5374, %v5388
    %v5395 = vmul.f32 %v5375, %v5388
    %s5396 = scalar_lea.vmem %s7, 5
    %v5397 = vld [vmem:[%s5396] sm:$0x1]
    %v5399 = vlaneseq
    %v5400 = vshrl.u32 %v5399, 7
    %v5401 = vsub.s32 0, %v5400
    %v5402 = vrot.slane %v5397, %v5401
    %v5404 = vadd.f32 %v5390, %v5402
    %v5405 = vadd.f32 %v5391, %v5402
    %v5406 = vadd.f32 %v5392, %v5402
    %v5407 = vadd.f32 %v5393, %v5402
    %v5408 = vadd.f32 %v5394, %v5402
    %v5409 = vadd.f32 %v5395, %v5402
    %vm5410 = vcmp.ge.f32.partialorder %v5404, 0.0
    %vm5411 = vcmp.ge.f32.partialorder %v5405, 0.0
    %vm5412 = vcmp.ge.f32.partialorder %v5406, 0.0
    %vm5413 = vcmp.ge.f32.partialorder %v5407, 0.0
    %vm5414 = vcmp.ge.f32.partialorder %v5408, 0.0
    %vm5415 = vcmp.ge.f32.partialorder %v5409, 0.0
    %v5416 = vmul.f32 %v5404, 0.01
    %v5417 = vmul.f32 %v5405, 0.01
    %v5418 = vmul.f32 %v5406, 0.01
    %v5419 = vmul.f32 %v5407, 0.01
    %v5420 = vmul.f32 %v5408, 0.01
    %v5421 = vmul.f32 %v5409, 0.01
    %v5422 = vsel %vm5410, %v5404, %v5416
    %v5423 = vsel %vm5411, %v5405, %v5417
    %v5424 = vsel %vm5412, %v5406, %v5418
    %v5425 = vsel %vm5413, %v5407, %v5419
    %v5426 = vsel %vm5414, %v5408, %v5420
    %v5427 = vsel %vm5415, %v5409, %v5421
    %5428 = vst.msk [vmem:[#allocation2 + $0x1] sm:$0xff] %vm245, %v5422
    %5429 = vst.msk [vmem:[#allocation2 + $0x9] sm:$0xff] %vm245, %v5423
    %5430 = vst.msk [vmem:[#allocation2 + $0x11] sm:$0xff] %vm245, %v5424
    %5431 = vst.msk [vmem:[#allocation2 + $0x19] sm:$0xff] %vm245, %v5425
    %5432 = vst.msk [vmem:[#allocation2 + $0x21] sm:$0xff] %vm245, %v5426
    %5433 = vst.msk [vmem:[#allocation2 + $0x29] sm:$0x3f] %vm568, %v5427
    %5434 = vst.msk [vmem:[#allocation2 + $0x2f] sm:$0x1] %vm3017, 0.0
    %v5435 = vld [vmem:[#allocation2] sm:$0xff]
    %v5436 = vld [vmem:[#allocation2 + $0x8] sm:$0xff]
    %v5437 = vld [vmem:[#allocation2 + $0x10] sm:$0xff]
    %v5438 = vld [vmem:[#allocation2 + $0x18] sm:$0xff]
    %v5439 = vld [vmem:[#allocation2 + $0x20] sm:$0xff]
    %v5440 = vld [vmem:[#allocation2 + $0x28] sm:$0x3f]
    %v5441 = vld [vmem:[#allocation2 + $0x1] sm:$0xff]
    %v5442 = vld [vmem:[#allocation2 + $0x9] sm:$0xff]
    %v5443 = vld [vmem:[#allocation2 + $0x11] sm:$0xff]
    %v5444 = vld [vmem:[#allocation2 + $0x19] sm:$0xff]
    %v5445 = vld [vmem:[#allocation2 + $0x21] sm:$0xff]
    %v5446 = vld [vmem:[#allocation2 + $0x29] sm:$0x3f]
    %v5447 = vld [vmem:[#allocation2 + $0x2] sm:$0xff]
    %v5448 = vld [vmem:[#allocation2 + $0xa] sm:$0xff]
    %v5449 = vld [vmem:[#allocation2 + $0x12] sm:$0xff]
    %v5450 = vld [vmem:[#allocation2 + $0x1a] sm:$0xff]
    %v5451 = vld [vmem:[#allocation2 + $0x22] sm:$0xff]
    %v5452 = vld [vmem:[#allocation2 + $0x2a] sm:$0x3f]
    %5459 = vrot.lane.b32.xlu0 %v5441, 16
    %v5460 = vpop.permute.xlu0 %5459
    %5461 = vrot.lane.b32.xlu0 %v5442, 16
    %v5462 = vpop.permute.xlu0 %5461
    %5463 = vrot.lane.b32.xlu0 %v5443, 16
    %v5464 = vpop.permute.xlu0 %5463
    %5465 = vrot.lane.b32.xlu0 %v5444, 16
    %v5466 = vpop.permute.xlu0 %5465
    %5467 = vrot.lane.b32.xlu0 %v5445, 16
    %v5468 = vpop.permute.xlu0 %5467
    %5469 = vrot.lane.b32.xlu0 %v5446, 16
    %v5470 = vpop.permute.xlu0 %5469
    %5483 = vrot.lane.b32.xlu0 %v5447, 32
    %v5484 = vpop.permute.xlu0 %5483
    %5485 = vrot.lane.b32.xlu0 %v5448, 32
    %v5486 = vpop.permute.xlu0 %5485
    %5487 = vrot.lane.b32.xlu0 %v5449, 32
    %v5488 = vpop.permute.xlu0 %5487
    %5489 = vrot.lane.b32.xlu0 %v5450, 32
    %v5490 = vpop.permute.xlu0 %5489
    %5491 = vrot.lane.b32.xlu0 %v5451, 32
    %v5492 = vpop.permute.xlu0 %5491
    %5493 = vrot.lane.b32.xlu0 %v5452, 32
    %v5494 = vpop.permute.xlu0 %5493
    %v5501 = vsel %vm245, %v5435, %v5460
    %v5502 = vsel %vm245, %v5436, %v5462
    %v5503 = vsel %vm245, %v5437, %v5464
    %v5504 = vsel %vm245, %v5438, %v5466
    %v5505 = vsel %vm245, %v5439, %v5468
    %v5506 = vsel %vm245, %v5440, %v5470
    %v5507 = vsel %vm954, %v5501, %v5484
    %v5508 = vsel %vm954, %v5502, %v5486
    %v5509 = vsel %vm954, %v5503, %v5488
    %v5510 = vsel %vm954, %v5504, %v5490
    %v5511 = vsel %vm954, %v5505, %v5492
    %v5512 = vsel %vm954, %v5506, %v5494
    %s5513 = scalar_lea.vmem %s5, 192
    %v5514 = vld [vmem:[%s5513] sm:$0xff]
    %v5515 = vld [vmem:[%s5513 + $0x8] sm:$0xff]
    %v5516 = vld [vmem:[%s5513 + $0x10] sm:$0xff]
    %v5517 = vld [vmem:[%s5513 + $0x18] sm:$0xff]
    %v5518 = vld [vmem:[%s5513 + $0x20] sm:$0xff]
    %v5519 = vld [vmem:[%s5513 + $0x28] sm:$0xff]
    %v5521 = vsel %vm1857, %v5507, 0
    %v5524 = vsel %vm1857, %v5508, 0
    %v5527 = vsel %vm1857, %v5509, 0
    %v5530 = vsel %vm1857, %v5510, 0
    %v5533 = vsel %vm1857, %v5511, 0
    %v5536 = vsel %vm1857, %v5512, 0
    %5538 = vmatprep.subr.mxu0 0.0
    %5539 = vmatpush1.msra.mxu0 %v5514
    %5540 = vmatprep.subr.mxu0 0.0
    %5541 = vmatpush1.msra.mxu0 %v5515
    %5542 = vmatprep.subr.mxu0 0.0
    %5543 = vmatpush1.msra.mxu0 %v5516
    %5544 = vmatprep.subr.mxu0 0.0
    %5545 = vmatpush1.msra.mxu0 %v5517
    %5546 = vmatprep.subr.mxu0 0.0
    %5547 = vmatpush1.msra.mxu0 %v5518
    %5548 = vmatprep.subr.mxu0 0.0
    %5549 = vmatpush1.msra.mxu0 %v5519
    %5550 = vmatprep.subr.mxu0 0.0
    %5551 = vmatpush1.msra.mxu0 0.0
    %5552 = vmatprep.subr.mxu0 0.0
    %5553 = vmatpush1.msra.mxu0 0.0
    %5554 = vmatprep.subr.mxu0 0.0
    %5555 = vmatpush1.msra.mxu0 0.0
    %5556 = vmatprep.subr.mxu0 0.0
    %5557 = vmatpush1.msra.mxu0 0.0
    %5558 = vmatprep.subr.mxu0 0.0
    %5559 = vmatpush1.msra.mxu0 0.0
    %5560 = vmatprep.subr.mxu0 0.0
    %5561 = vmatpush1.msra.mxu0 0.0
    %5562 = vmatprep.subr.mxu0 0.0
    %5563 = vmatpush1.msra.mxu0 0.0
    %5564 = vmatprep.subr.mxu0 0.0
    %5565 = vmatpush1.msra.mxu0 0.0
    %5566 = vmatprep.subr.mxu0 0.0
    %5567 = vmatpush1.msra.mxu0 0.0
    %5568 = vmatprep.subr.mxu0 0.0
    %5569 = vmatpush1.msra.mxu0 0.0
    %5570 = vmatprep.subr.mxu0 0.0
    %5571 = vmatpush1.msra.mxu0 0.0
    %5572 = vmatprep.subr.mxu0 0.0
    %5573 = vmatpush1.msra.mxu0 0.0
    %5574 = vmatprep.subr.mxu0 0.0
    %5575 = vmatpush1.msra.mxu0 0.0
    %5576 = vmatprep.subr.mxu0 0.0
    %5577 = vmatpush1.msra.mxu0 0.0
    %5578 = vmatprep.subr.mxu0 0.0
    %5579 = vmatpush1.msra.mxu0 0.0
    %5580 = vmatprep.subr.mxu0 0.0
    %5581 = vmatpush1.msra.mxu0 0.0
    %5582 = vmatprep.subr.mxu0 0.0
    %5583 = vmatpush1.msra.mxu0 0.0
    %5584 = vmatprep.subr.mxu0 0.0
    %5585 = vmatpush1.msra.mxu0 0.0
    %5586 = vmatprep.subr.mxu0 0.0
    %5587 = vmatpush1.msra.mxu0 0.0
    %5588 = vmatprep.subr.mxu0 0.0
    %5589 = vmatpush1.msra.mxu0 0.0
    %5590 = vmatprep.subr.mxu0 0.0
    %5591 = vmatpush1.msra.mxu0 0.0
    %5592 = vmatprep.subr.mxu0 0.0
    %5593 = vmatpush1.msra.mxu0 0.0
    %5594 = vmatprep.subr.mxu0 0.0
    %5595 = vmatpush1.msra.mxu0 0.0
    %5596 = vmatprep.subr.mxu0 0.0
    %5597 = vmatpush1.msra.mxu0 0.0
    %5598 = vmatprep.subr.mxu0 0.0
    %5599 = vmatpush1.msra.mxu0 0.0
    %5600 = vmatprep.subr.mxu0 0.0
    %5601 = vmatpush1.msra.mxu0 0.0
    %5602 = vmatprep.mubr.f32.mxu0 0.0
    %5603 = vmatmul.mubr.f32.gmra.mrb[0].mxu0 %v5521
    %v5604 = vpop.f32.mrb[0].mxu0
    %v5605 = vadd.f32 0.0, %v5604
    %v5606 = vpop.f32.mrb[0].mxu0
    %5607 = vmatprep.mubr.f32.mxu0 0.0
    %5608 = vmatmul.mubr.f32.gmra.mrb[0].mxu0 %v5524
    %v5609 = vpop.f32.mrb[0].mxu0
    %v5610 = vadd.f32 0.0, %v5609
    %v5611 = vpop.f32.mrb[0].mxu0
    %5612 = vmatprep.mubr.f32.mxu0 0.0
    %5613 = vmatmul.mubr.f32.gmra.mrb[0].mxu0 %v5527
    %v5614 = vpop.f32.mrb[0].mxu0
    %v5615 = vadd.f32 0.0, %v5614
    %v5616 = vpop.f32.mrb[0].mxu0
    %5617 = vmatprep.mubr.f32.mxu0 0.0
    %5618 = vmatmul.mubr.f32.gmra.mrb[0].mxu0 %v5530
    %v5619 = vpop.f32.mrb[0].mxu0
    %v5620 = vadd.f32 0.0, %v5619
    %v5621 = vpop.f32.mrb[0].mxu0
    %5622 = vmatprep.mubr.f32.mxu0 0.0
    %5623 = vmatmul.mubr.f32.gmra.mrb[0].mxu0 %v5533
    %v5624 = vpop.f32.mrb[0].mxu0
    %v5625 = vadd.f32 0.0, %v5624
    %v5626 = vpop.f32.mrb[0].mxu0
    %5627 = vmatprep.mubr.f32.mxu0 0.0
    %5628 = vmatmul.mubr.f32.gmra.mrb[0].mxu0 %v5536
    %v5629 = vpop.f32.mrb[0].mxu0
    %v5630 = vadd.f32 0.0, %v5629
    %v5631 = vpop.f32.mrb[0].mxu0
    %5632 = vdwg.mxu0
    %s5633 = scalar_lea.vmem %s6, 6
    %v5634 = vld [vmem:[%s5633] sm:$0x1]
    %v5636 = vlaneseq
    %v5637 = vshrl.u32 %v5636, 7
    %v5638 = vsub.s32 0, %v5637
    %v5639 = vrot.slane %v5634, %v5638
    %v5641 = vmul.f32 %v5605, %v5639
    %v5642 = vmul.f32 %v5610, %v5639
    %v5643 = vmul.f32 %v5615, %v5639
    %v5644 = vmul.f32 %v5620, %v5639
    %v5645 = vmul.f32 %v5625, %v5639
    %v5646 = vmul.f32 %v5630, %v5639
    %s5647 = scalar_lea.vmem %s7, 6
    %v5648 = vld [vmem:[%s5647] sm:$0x1]
    %v5650 = vlaneseq
    %v5651 = vshrl.u32 %v5650, 7
    %v5652 = vsub.s32 0, %v5651
    %v5653 = vrot.slane %v5648, %v5652
    %v5655 = vadd.f32 %v5641, %v5653
    %v5656 = vadd.f32 %v5642, %v5653
    %v5657 = vadd.f32 %v5643, %v5653
    %v5658 = vadd.f32 %v5644, %v5653
    %v5659 = vadd.f32 %v5645, %v5653
    %v5660 = vadd.f32 %v5646, %v5653
    %vm5661 = vcmp.ge.f32.partialorder %v5655, 0.0
    %vm5662 = vcmp.ge.f32.partialorder %v5656, 0.0
    %vm5663 = vcmp.ge.f32.partialorder %v5657, 0.0
    %vm5664 = vcmp.ge.f32.partialorder %v5658, 0.0
    %vm5665 = vcmp.ge.f32.partialorder %v5659, 0.0
    %vm5666 = vcmp.ge.f32.partialorder %v5660, 0.0
    %v5667 = vmul.f32 %v5655, 0.01
    %v5668 = vmul.f32 %v5656, 0.01
    %v5669 = vmul.f32 %v5657, 0.01
    %v5670 = vmul.f32 %v5658, 0.01
    %v5671 = vmul.f32 %v5659, 0.01
    %v5672 = vmul.f32 %v5660, 0.01
    %v5673 = vsel %vm5661, %v5655, %v5667
    %v5674 = vsel %vm5662, %v5656, %v5668
    %v5675 = vsel %vm5663, %v5657, %v5669
    %v5676 = vsel %vm5664, %v5658, %v5670
    %v5677 = vsel %vm5665, %v5659, %v5671
    %v5678 = vsel %vm5666, %v5660, %v5672
    %5679 = vst.msk [vmem:[#allocation2 + $0x1] sm:$0xff] %vm245, %v5673
    %5680 = vst.msk [vmem:[#allocation2 + $0x9] sm:$0xff] %vm245, %v5674
    %5681 = vst.msk [vmem:[#allocation2 + $0x11] sm:$0xff] %vm245, %v5675
    %5682 = vst.msk [vmem:[#allocation2 + $0x19] sm:$0xff] %vm245, %v5676
    %5683 = vst.msk [vmem:[#allocation2 + $0x21] sm:$0xff] %vm245, %v5677
    %5684 = vst.msk [vmem:[#allocation2 + $0x29] sm:$0x3f] %vm568, %v5678
    %v5685 = vld [vmem:[#allocation2] sm:$0xff]
    %v5686 = vld [vmem:[#allocation2 + $0x8] sm:$0xff]
    %v5687 = vld [vmem:[#allocation2 + $0x10] sm:$0xff]
    %v5688 = vld [vmem:[#allocation2 + $0x18] sm:$0xff]
    %v5689 = vld [vmem:[#allocation2 + $0x20] sm:$0xff]
    %v5690 = vld [vmem:[#allocation2 + $0x28] sm:$0x3f]
    %v5691 = vld [vmem:[#allocation2 + $0x1] sm:$0xff]
    %v5692 = vld [vmem:[#allocation2 + $0x9] sm:$0xff]
    %v5693 = vld [vmem:[#allocation2 + $0x11] sm:$0xff]
    %v5694 = vld [vmem:[#allocation2 + $0x19] sm:$0xff]
    %v5695 = vld [vmem:[#allocation2 + $0x21] sm:$0xff]
    %v5696 = vld [vmem:[#allocation2 + $0x29] sm:$0x3f]
    %v5697 = vld [vmem:[#allocation2 + $0x2] sm:$0xff]
    %v5698 = vld [vmem:[#allocation2 + $0xa] sm:$0xff]
    %v5699 = vld [vmem:[#allocation2 + $0x12] sm:$0xff]
    %v5700 = vld [vmem:[#allocation2 + $0x1a] sm:$0xff]
    %v5701 = vld [vmem:[#allocation2 + $0x22] sm:$0xff]
    %v5702 = vld [vmem:[#allocation2 + $0x2a] sm:$0x3f]
    %5709 = vrot.lane.b32.xlu0 %v5691, 16
    %v5710 = vpop.permute.xlu0 %5709
    %5711 = vrot.lane.b32.xlu0 %v5692, 16
    %v5712 = vpop.permute.xlu0 %5711
    %5713 = vrot.lane.b32.xlu0 %v5693, 16
    %v5714 = vpop.permute.xlu0 %5713
    %5715 = vrot.lane.b32.xlu0 %v5694, 16
    %v5716 = vpop.permute.xlu0 %5715
    %5717 = vrot.lane.b32.xlu0 %v5695, 16
    %v5718 = vpop.permute.xlu0 %5717
    %5719 = vrot.lane.b32.xlu0 %v5696, 16
    %v5720 = vpop.permute.xlu0 %5719
    %5733 = vrot.lane.b32.xlu0 %v5697, 32
    %v5734 = vpop.permute.xlu0 %5733
    %5735 = vrot.lane.b32.xlu0 %v5698, 32
    %v5736 = vpop.permute.xlu0 %5735
    %5737 = vrot.lane.b32.xlu0 %v5699, 32
    %v5738 = vpop.permute.xlu0 %5737
    %5739 = vrot.lane.b32.xlu0 %v5700, 32
    %v5740 = vpop.permute.xlu0 %5739
    %5741 = vrot.lane.b32.xlu0 %v5701, 32
    %v5742 = vpop.permute.xlu0 %5741
    %5743 = vrot.lane.b32.xlu0 %v5702, 32
    %v5744 = vpop.permute.xlu0 %5743
    %v5751 = vsel %vm245, %v5685, %v5710
    %v5752 = vsel %vm245, %v5686, %v5712
    %v5753 = vsel %vm245, %v5687, %v5714
    %v5754 = vsel %vm245, %v5688, %v5716
    %v5755 = vsel %vm245, %v5689, %v5718
    %v5756 = vsel %vm245, %v5690, %v5720
    %v5757 = vsel %vm954, %v5751, %v5734
    %v5758 = vsel %vm954, %v5752, %v5736
    %v5759 = vsel %vm954, %v5753, %v5738
    %v5760 = vsel %vm954, %v5754, %v5740
    %v5761 = vsel %vm954, %v5755, %v5742
    %v5762 = vsel %vm954, %v5756, %v5744
    %s5763 = scalar_lea.vmem %s5, 240
    %v5764 = vld [vmem:[%s5763] sm:$0xff]
    %v5765 = vld [vmem:[%s5763 + $0x8] sm:$0xff]
    %v5766 = vld [vmem:[%s5763 + $0x10] sm:$0xff]
    %v5767 = vld [vmem:[%s5763 + $0x18] sm:$0xff]
    %v5768 = vld [vmem:[%s5763 + $0x20] sm:$0xff]
    %v5769 = vld [vmem:[%s5763 + $0x28] sm:$0xff]
    %v5771 = vsel %vm1857, %v5757, 0
    %v5774 = vsel %vm1857, %v5758, 0
    %v5777 = vsel %vm1857, %v5759, 0
    %v5780 = vsel %vm1857, %v5760, 0
    %v5783 = vsel %vm1857, %v5761, 0
    %v5786 = vsel %vm1857, %v5762, 0
    %5788 = vmatprep.subr.mxu0 0.0
    %5789 = vmatpush1.msra.mxu0 %v5764
    %5790 = vmatprep.subr.mxu0 0.0
    %5791 = vmatpush1.msra.mxu0 %v5765
    %5792 = vmatprep.subr.mxu0 0.0
    %5793 = vmatpush1.msra.mxu0 %v5766
    %5794 = vmatprep.subr.mxu0 0.0
    %5795 = vmatpush1.msra.mxu0 %v5767
    %5796 = vmatprep.subr.mxu0 0.0
    %5797 = vmatpush1.msra.mxu0 %v5768
    %5798 = vmatprep.subr.mxu0 0.0
    %5799 = vmatpush1.msra.mxu0 %v5769
    %5800 = vmatprep.subr.mxu0 0.0
    %5801 = vmatpush1.msra.mxu0 0.0
    %5802 = vmatprep.subr.mxu0 0.0
    %5803 = vmatpush1.msra.mxu0 0.0
    %5804 = vmatprep.subr.mxu0 0.0
    %5805 = vmatpush1.msra.mxu0 0.0
    %5806 = vmatprep.subr.mxu0 0.0
    %5807 = vmatpush1.msra.mxu0 0.0
    %5808 = vmatprep.subr.mxu0 0.0
    %5809 = vmatpush1.msra.mxu0 0.0
    %5810 = vmatprep.subr.mxu0 0.0
    %5811 = vmatpush1.msra.mxu0 0.0
    %5812 = vmatprep.subr.mxu0 0.0
    %5813 = vmatpush1.msra.mxu0 0.0
    %5814 = vmatprep.subr.mxu0 0.0
    %5815 = vmatpush1.msra.mxu0 0.0
    %5816 = vmatprep.subr.mxu0 0.0
    %5817 = vmatpush1.msra.mxu0 0.0
    %5818 = vmatprep.subr.mxu0 0.0
    %5819 = vmatpush1.msra.mxu0 0.0
    %5820 = vmatprep.subr.mxu0 0.0
    %5821 = vmatpush1.msra.mxu0 0.0
    %5822 = vmatprep.subr.mxu0 0.0
    %5823 = vmatpush1.msra.mxu0 0.0
    %5824 = vmatprep.subr.mxu0 0.0
    %5825 = vmatpush1.msra.mxu0 0.0
    %5826 = vmatprep.subr.mxu0 0.0
    %5827 = vmatpush1.msra.mxu0 0.0
    %5828 = vmatprep.subr.mxu0 0.0
    %5829 = vmatpush1.msra.mxu0 0.0
    %5830 = vmatprep.subr.mxu0 0.0
    %5831 = vmatpush1.msra.mxu0 0.0
    %5832 = vmatprep.subr.mxu0 0.0
    %5833 = vmatpush1.msra.mxu0 0.0
    %5834 = vmatprep.subr.mxu0 0.0
    %5835 = vmatpush1.msra.mxu0 0.0
    %5836 = vmatprep.subr.mxu0 0.0
    %5837 = vmatpush1.msra.mxu0 0.0
    %5838 = vmatprep.subr.mxu0 0.0
    %5839 = vmatpush1.msra.mxu0 0.0
    %5840 = vmatprep.subr.mxu0 0.0
    %5841 = vmatpush1.msra.mxu0 0.0
    %5842 = vmatprep.subr.mxu0 0.0
    %5843 = vmatpush1.msra.mxu0 0.0
    %5844 = vmatprep.subr.mxu0 0.0
    %5845 = vmatpush1.msra.mxu0 0.0
    %5846 = vmatprep.subr.mxu0 0.0
    %5847 = vmatpush1.msra.mxu0 0.0
    %5848 = vmatprep.subr.mxu0 0.0
    %5849 = vmatpush1.msra.mxu0 0.0
    %5850 = vmatprep.subr.mxu0 0.0
    %5851 = vmatpush1.msra.mxu0 0.0
    %5852 = vmatprep.mubr.f32.mxu0 0.0
    %5853 = vmatmul.mubr.f32.gmra.mrb[0].mxu0 %v5771
    %v5854 = vpop.f32.mrb[0].mxu0
    %v5855 = vadd.f32 0.0, %v5854
    %v5856 = vpop.f32.mrb[0].mxu0
    %5857 = vmatprep.mubr.f32.mxu0 0.0
    %5858 = vmatmul.mubr.f32.gmra.mrb[0].mxu0 %v5774
    %v5859 = vpop.f32.mrb[0].mxu0
    %v5860 = vadd.f32 0.0, %v5859
    %v5861 = vpop.f32.mrb[0].mxu0
    %5862 = vmatprep.mubr.f32.mxu0 0.0
    %5863 = vmatmul.mubr.f32.gmra.mrb[0].mxu0 %v5777
    %v5864 = vpop.f32.mrb[0].mxu0
    %v5865 = vadd.f32 0.0, %v5864
    %v5866 = vpop.f32.mrb[0].mxu0
    %5867 = vmatprep.mubr.f32.mxu0 0.0
    %5868 = vmatmul.mubr.f32.gmra.mrb[0].mxu0 %v5780
    %v5869 = vpop.f32.mrb[0].mxu0
    %v5870 = vadd.f32 0.0, %v5869
    %v5871 = vpop.f32.mrb[0].mxu0
    %5872 = vmatprep.mubr.f32.mxu0 0.0
    %5873 = vmatmul.mubr.f32.gmra.mrb[0].mxu0 %v5783
    %v5874 = vpop.f32.mrb[0].mxu0
    %v5875 = vadd.f32 0.0, %v5874
    %v5876 = vpop.f32.mrb[0].mxu0
    %5877 = vmatprep.mubr.f32.mxu0 0.0
    %5878 = vmatmul.mubr.f32.gmra.mrb[0].mxu0 %v5786
    %v5879 = vpop.f32.mrb[0].mxu0
    %v5880 = vadd.f32 0.0, %v5879
    %v5881 = vpop.f32.mrb[0].mxu0
    %5882 = vdwg.mxu0
    %5883 = vst.msk [vmem:[#allocation4] sm:$0xff] %vm245, %v5855
    %5884 = vst.msk [vmem:[#allocation4 + $0x8] sm:$0xff] %vm245, %v5860
    %5885 = vst.msk [vmem:[#allocation4 + $0x10] sm:$0xff] %vm245, %v5865
    %5886 = vst.msk [vmem:[#allocation4 + $0x18] sm:$0xff] %vm245, %v5870
    %5887 = vst.msk [vmem:[#allocation4 + $0x20] sm:$0xff] %vm245, %v5875
    %5888 = vst.msk [vmem:[#allocation4 + $0x28] sm:$0x3f] %vm568, %v5880
    %v5889 = vld [vmem:[#allocation4] ss:$2 sm:$0xff]
    %v5890 = vld [vmem:[%s4355] ss:$2 sm:$0xff]
    %v5891 = vld [vmem:[%s4357] ss:$2 sm:$0x7f]
    %v5892 = vld [vmem:[%s4377] ss:$2 sm:$0xff]
    %v5893 = vld [vmem:[%s4379] ss:$2 sm:$0xff]
    %v5894 = vld [vmem:[%s4381] ss:$2 sm:$0x7f]
    %v5895 = vmax.f32 %v5889, %v5892
    %v5896 = vmax.f32 %v5890, %v5893
    %v5897 = vmax.f32 %v5891, %v5894
    %v5898 = vld [vmem:[#allocation3] ss:$2 sm:$0xff]
    %v5899 = vld [vmem:[%s4414] ss:$2 sm:$0xff]
    %v5900 = vld [vmem:[%s4416] ss:$2 sm:$0x7f]
    %v5901 = vld [vmem:[%s4436] ss:$2 sm:$0xff]
    %v5902 = vld [vmem:[%s4438] ss:$2 sm:$0xff]
    %v5903 = vld [vmem:[%s4440] ss:$2 sm:$0x7f]
    %v5904 = vmax.f32 %v5898, %v5901
    %v5905 = vmax.f32 %v5899, %v5902
    %v5906 = vmax.f32 %v5900, %v5903
    %v5907 = vadd.f32 %v5895, %v5904
    %v5908 = vadd.f32 %v5896, %v5905
    %v5909 = vadd.f32 %v5897, %v5906
    %5910 = vst.msk [vmem:[#allocation3] sm:$0xff] %vm245, %v5907
    %5911 = vst.msk [vmem:[#allocation3 + $0x8] sm:$0xff] %vm245, %v5908
    %vm5912 = vcmask 129024
    %5913 = vst.msk [vmem:[#allocation3 + $0x10] sm:$0x7f] %vm5912, %v5909
    %s5914 = scalar_lea.vmem %s6, 7
    %v5915 = vld [vmem:[%s5914] sm:$0x1]
    %v5917 = vlaneseq
    %v5918 = vshrl.u32 %v5917, 7
    %v5919 = vsub.s32 0, %v5918
    %v5920 = vrot.slane %v5915, %v5919
    %v5922 = vmul.f32 %v5907, %v5920
    %v5923 = vmul.f32 %v5908, %v5920
    %v5924 = vmul.f32 %v5909, %v5920
    %s5925 = scalar_lea.vmem %s7, 7
    %v5926 = vld [vmem:[%s5925] sm:$0x1]
    %v5928 = vlaneseq
    %v5929 = vshrl.u32 %v5928, 7
    %v5930 = vsub.s32 0, %v5929
    %v5931 = vrot.slane %v5926, %v5930
    %v5933 = vadd.f32 %v5922, %v5931
    %v5934 = vadd.f32 %v5923, %v5931
    %v5935 = vadd.f32 %v5924, %v5931
    %vm5936 = vcmp.ge.f32.partialorder %v5933, 0.0
    %vm5937 = vcmp.ge.f32.partialorder %v5934, 0.0
    %vm5938 = vcmp.ge.f32.partialorder %v5935, 0.0
    %v5939 = vmul.f32 %v5933, 0.01
    %v5940 = vmul.f32 %v5934, 0.01
    %v5941 = vmul.f32 %v5935, 0.01
    %v5942 = vsel %vm5936, %v5933, %v5939
    %v5943 = vsel %vm5937, %v5934, %v5940
    %v5944 = vsel %vm5938, %v5935, %v5941
    %5945 = vst.msk [vmem:[#allocation2 + $0x1] sm:$0xff] %vm245, %v5942
    %5946 = vst.msk [vmem:[#allocation2 + $0x9] sm:$0xff] %vm245, %v5943
    %5947 = vst.msk [vmem:[#allocation2 + $0x11] sm:$0x7f] %vm5912, %v5944
    %5948 = vst.msk [vmem:[#allocation2 + $0x18] sm:$0x1] %vm3017, 0.0
    %v5949 = vld [vmem:[#allocation2] sm:$0xff]
    %v5950 = vld [vmem:[#allocation2 + $0x8] sm:$0xff]
    %v5951 = vld [vmem:[#allocation2 + $0x10] sm:$0x7f]
    %v5952 = vld [vmem:[#allocation2 + $0x1] sm:$0xff]
    %v5953 = vld [vmem:[#allocation2 + $0x9] sm:$0xff]
    %v5954 = vld [vmem:[#allocation2 + $0x11] sm:$0x7f]
    %v5955 = vld [vmem:[#allocation2 + $0x2] sm:$0xff]
    %v5956 = vld [vmem:[#allocation2 + $0xa] sm:$0xff]
    %v5957 = vld [vmem:[#allocation2 + $0x12] sm:$0x7f]
    %5961 = vrot.lane.b32.xlu0 %v5952, 16
    %v5962 = vpop.permute.xlu0 %5961
    %5963 = vrot.lane.b32.xlu0 %v5953, 16
    %v5964 = vpop.permute.xlu0 %5963
    %5965 = vrot.lane.b32.xlu0 %v5954, 16
    %v5966 = vpop.permute.xlu0 %5965
    %5973 = vrot.lane.b32.xlu0 %v5955, 32
    %v5974 = vpop.permute.xlu0 %5973
    %5975 = vrot.lane.b32.xlu0 %v5956, 32
    %v5976 = vpop.permute.xlu0 %5975
    %5977 = vrot.lane.b32.xlu0 %v5957, 32
    %v5978 = vpop.permute.xlu0 %5977
    %v5982 = vsel %vm245, %v5949, %v5962
    %v5983 = vsel %vm245, %v5950, %v5964
    %v5984 = vsel %vm245, %v5951, %v5966
    %v5985 = vsel %vm954, %v5982, %v5974
    %v5986 = vsel %vm954, %v5983, %v5976
    %v5987 = vsel %vm954, %v5984, %v5978
    %s5988 = scalar_lea.vmem %s5, 288
    %v5989 = vld [vmem:[%s5988] sm:$0xff]
    %v5990 = vld [vmem:[%s5988 + $0x8] sm:$0xff]
    %v5991 = vld [vmem:[%s5988 + $0x10] sm:$0xff]
    %v5992 = vld [vmem:[%s5988 + $0x18] sm:$0xff]
    %v5993 = vld [vmem:[%s5988 + $0x20] sm:$0xff]
    %v5994 = vld [vmem:[%s5988 + $0x28] sm:$0xff]
    %v5996 = vsel %vm1857, %v5985, 0
    %v5999 = vsel %vm1857, %v5986, 0
    %v6002 = vsel %vm1857, %v5987, 0
    %6004 = vmatprep.subr.mxu0 0.0
    %6005 = vmatpush1.msra.mxu0 %v5989
    %6006 = vmatprep.subr.mxu0 0.0
    %6007 = vmatpush1.msra.mxu0 %v5990
    %6008 = vmatprep.subr.mxu0 0.0
    %6009 = vmatpush1.msra.mxu0 %v5991
    %6010 = vmatprep.subr.mxu0 0.0
    %6011 = vmatpush1.msra.mxu0 %v5992
    %6012 = vmatprep.subr.mxu0 0.0
    %6013 = vmatpush1.msra.mxu0 %v5993
    %6014 = vmatprep.subr.mxu0 0.0
    %6015 = vmatpush1.msra.mxu0 %v5994
    %6016 = vmatprep.subr.mxu0 0.0
    %6017 = vmatpush1.msra.mxu0 0.0
    %6018 = vmatprep.subr.mxu0 0.0
    %6019 = vmatpush1.msra.mxu0 0.0
    %6020 = vmatprep.subr.mxu0 0.0
    %6021 = vmatpush1.msra.mxu0 0.0
    %6022 = vmatprep.subr.mxu0 0.0
    %6023 = vmatpush1.msra.mxu0 0.0
    %6024 = vmatprep.subr.mxu0 0.0
    %6025 = vmatpush1.msra.mxu0 0.0
    %6026 = vmatprep.subr.mxu0 0.0
    %6027 = vmatpush1.msra.mxu0 0.0
    %6028 = vmatprep.subr.mxu0 0.0
    %6029 = vmatpush1.msra.mxu0 0.0
    %6030 = vmatprep.subr.mxu0 0.0
    %6031 = vmatpush1.msra.mxu0 0.0
    %6032 = vmatprep.subr.mxu0 0.0
    %6033 = vmatpush1.msra.mxu0 0.0
    %6034 = vmatprep.subr.mxu0 0.0
    %6035 = vmatpush1.msra.mxu0 0.0
    %6036 = vmatprep.subr.mxu0 0.0
    %6037 = vmatpush1.msra.mxu0 0.0
    %6038 = vmatprep.subr.mxu0 0.0
    %6039 = vmatpush1.msra.mxu0 0.0
    %6040 = vmatprep.subr.mxu0 0.0
    %6041 = vmatpush1.msra.mxu0 0.0
    %6042 = vmatprep.subr.mxu0 0.0
    %6043 = vmatpush1.msra.mxu0 0.0
    %6044 = vmatprep.subr.mxu0 0.0
    %6045 = vmatpush1.msra.mxu0 0.0
    %6046 = vmatprep.subr.mxu0 0.0
    %6047 = vmatpush1.msra.mxu0 0.0
    %6048 = vmatprep.subr.mxu0 0.0
    %6049 = vmatpush1.msra.mxu0 0.0
    %6050 = vmatprep.subr.mxu0 0.0
    %6051 = vmatpush1.msra.mxu0 0.0
    %6052 = vmatprep.subr.mxu0 0.0
    %6053 = vmatpush1.msra.mxu0 0.0
    %6054 = vmatprep.subr.mxu0 0.0
    %6055 = vmatpush1.msra.mxu0 0.0
    %6056 = vmatprep.subr.mxu0 0.0
    %6057 = vmatpush1.msra.mxu0 0.0
    %6058 = vmatprep.subr.mxu0 0.0
    %6059 = vmatpush1.msra.mxu0 0.0
    %6060 = vmatprep.subr.mxu0 0.0
    %6061 = vmatpush1.msra.mxu0 0.0
    %6062 = vmatprep.subr.mxu0 0.0
    %6063 = vmatpush1.msra.mxu0 0.0
    %6064 = vmatprep.subr.mxu0 0.0
    %6065 = vmatpush1.msra.mxu0 0.0
    %6066 = vmatprep.subr.mxu0 0.0
    %6067 = vmatpush1.msra.mxu0 0.0
    %6068 = vmatprep.mubr.f32.mxu0 0.0
    %6069 = vmatmul.mubr.f32.gmra.mrb[0].mxu0 %v5996
    %v6070 = vpop.f32.mrb[0].mxu0
    %v6071 = vadd.f32 0.0, %v6070
    %v6072 = vpop.f32.mrb[0].mxu0
    %6073 = vmatprep.mubr.f32.mxu0 0.0
    %6074 = vmatmul.mubr.f32.gmra.mrb[0].mxu0 %v5999
    %v6075 = vpop.f32.mrb[0].mxu0
    %v6076 = vadd.f32 0.0, %v6075
    %v6077 = vpop.f32.mrb[0].mxu0
    %6078 = vmatprep.mubr.f32.mxu0 0.0
    %6079 = vmatmul.mubr.f32.gmra.mrb[0].mxu0 %v6002
    %v6080 = vpop.f32.mrb[0].mxu0
    %v6081 = vadd.f32 0.0, %v6080
    %v6082 = vpop.f32.mrb[0].mxu0
    %6083 = vdwg.mxu0
    %s6084 = scalar_lea.vmem %s6, 8
    %v6085 = vld [vmem:[%s6084] sm:$0x1]
    %v6087 = vlaneseq
    %v6088 = vshrl.u32 %v6087, 7
    %v6089 = vsub.s32 0, %v6088
    %v6090 = vrot.slane %v6085, %v6089
    %v6092 = vmul.f32 %v6071, %v6090
    %v6093 = vmul.f32 %v6076, %v6090
    %v6094 = vmul.f32 %v6081, %v6090
    %s6095 = scalar_lea.vmem %s7, 8
    %v6096 = vld [vmem:[%s6095] sm:$0x1]
    %v6098 = vlaneseq
    %v6099 = vshrl.u32 %v6098, 7
    %v6100 = vsub.s32 0, %v6099
    %v6101 = vrot.slane %v6096, %v6100
    %v6103 = vadd.f32 %v6092, %v6101
    %v6104 = vadd.f32 %v6093, %v6101
    %v6105 = vadd.f32 %v6094, %v6101
    %vm6106 = vcmp.ge.f32.partialorder %v6103, 0.0
    %vm6107 = vcmp.ge.f32.partialorder %v6104, 0.0
    %vm6108 = vcmp.ge.f32.partialorder %v6105, 0.0
    %v6109 = vmul.f32 %v6103, 0.01
    %v6110 = vmul.f32 %v6104, 0.01
    %v6111 = vmul.f32 %v6105, 0.01
    %v6112 = vsel %vm6106, %v6103, %v6109
    %v6113 = vsel %vm6107, %v6104, %v6110
    %v6114 = vsel %vm6108, %v6105, %v6111
    %6115 = vst.msk [vmem:[#allocation2 + $0x1] sm:$0xff] %vm245, %v6112
    %6116 = vst.msk [vmem:[#allocation2 + $0x9] sm:$0xff] %vm245, %v6113
    %6117 = vst.msk [vmem:[#allocation2 + $0x11] sm:$0x7f] %vm5912, %v6114
    %v6118 = vld [vmem:[#allocation2] sm:$0xff]
    %v6119 = vld [vmem:[#allocation2 + $0x8] sm:$0xff]
    %v6120 = vld [vmem:[#allocation2 + $0x10] sm:$0x7f]
    %v6121 = vld [vmem:[#allocation2 + $0x1] sm:$0xff]
    %v6122 = vld [vmem:[#allocation2 + $0x9] sm:$0xff]
    %v6123 = vld [vmem:[#allocation2 + $0x11] sm:$0x7f]
    %v6124 = vld [vmem:[#allocation2 + $0x2] sm:$0xff]
    %v6125 = vld [vmem:[#allocation2 + $0xa] sm:$0xff]
    %v6126 = vld [vmem:[#allocation2 + $0x12] sm:$0x7f]
    %6130 = vrot.lane.b32.xlu0 %v6121, 16
    %v6131 = vpop.permute.xlu0 %6130
    %6132 = vrot.lane.b32.xlu0 %v6122, 16
    %v6133 = vpop.permute.xlu0 %6132
    %6134 = vrot.lane.b32.xlu0 %v6123, 16
    %v6135 = vpop.permute.xlu0 %6134
    %6142 = vrot.lane.b32.xlu0 %v6124, 32
    %v6143 = vpop.permute.xlu0 %6142
    %6144 = vrot.lane.b32.xlu0 %v6125, 32
    %v6145 = vpop.permute.xlu0 %6144
    %6146 = vrot.lane.b32.xlu0 %v6126, 32
    %v6147 = vpop.permute.xlu0 %6146
    %v6151 = vsel %vm245, %v6118, %v6131
    %v6152 = vsel %vm245, %v6119, %v6133
    %v6153 = vsel %vm245, %v6120, %v6135
    %v6154 = vsel %vm954, %v6151, %v6143
    %v6155 = vsel %vm954, %v6152, %v6145
    %v6156 = vsel %vm954, %v6153, %v6147
    %s6157 = scalar_lea.vmem %s5, 336
    %v6158 = vld [vmem:[%s6157] sm:$0xff]
    %v6159 = vld [vmem:[%s6157 + $0x8] sm:$0xff]
    %v6160 = vld [vmem:[%s6157 + $0x10] sm:$0xff]
    %v6161 = vld [vmem:[%s6157 + $0x18] sm:$0xff]
    %v6162 = vld [vmem:[%s6157 + $0x20] sm:$0xff]
    %v6163 = vld [vmem:[%s6157 + $0x28] sm:$0xff]
    %v6165 = vsel %vm1857, %v6154, 0
    %v6168 = vsel %vm1857, %v6155, 0
    %v6171 = vsel %vm1857, %v6156, 0
    %6173 = vmatprep.subr.mxu0 0.0
    %6174 = vmatpush1.msra.mxu0 %v6158
    %6175 = vmatprep.subr.mxu0 0.0
    %6176 = vmatpush1.msra.mxu0 %v6159
    %6177 = vmatprep.subr.mxu0 0.0
    %6178 = vmatpush1.msra.mxu0 %v6160
    %6179 = vmatprep.subr.mxu0 0.0
    %6180 = vmatpush1.msra.mxu0 %v6161
    %6181 = vmatprep.subr.mxu0 0.0
    %6182 = vmatpush1.msra.mxu0 %v6162
    %6183 = vmatprep.subr.mxu0 0.0
    %6184 = vmatpush1.msra.mxu0 %v6163
    %6185 = vmatprep.subr.mxu0 0.0
    %6186 = vmatpush1.msra.mxu0 0.0
    %6187 = vmatprep.subr.mxu0 0.0
    %6188 = vmatpush1.msra.mxu0 0.0
    %6189 = vmatprep.subr.mxu0 0.0
    %6190 = vmatpush1.msra.mxu0 0.0
    %6191 = vmatprep.subr.mxu0 0.0
    %6192 = vmatpush1.msra.mxu0 0.0
    %6193 = vmatprep.subr.mxu0 0.0
    %6194 = vmatpush1.msra.mxu0 0.0
    %6195 = vmatprep.subr.mxu0 0.0
    %6196 = vmatpush1.msra.mxu0 0.0
    %6197 = vmatprep.subr.mxu0 0.0
    %6198 = vmatpush1.msra.mxu0 0.0
    %6199 = vmatprep.subr.mxu0 0.0
    %6200 = vmatpush1.msra.mxu0 0.0
    %6201 = vmatprep.subr.mxu0 0.0
    %6202 = vmatpush1.msra.mxu0 0.0
    %6203 = vmatprep.subr.mxu0 0.0
    %6204 = vmatpush1.msra.mxu0 0.0
    %6205 = vmatprep.subr.mxu0 0.0
    %6206 = vmatpush1.msra.mxu0 0.0
    %6207 = vmatprep.subr.mxu0 0.0
    %6208 = vmatpush1.msra.mxu0 0.0
    %6209 = vmatprep.subr.mxu0 0.0
    %6210 = vmatpush1.msra.mxu0 0.0
    %6211 = vmatprep.subr.mxu0 0.0
    %6212 = vmatpush1.msra.mxu0 0.0
    %6213 = vmatprep.subr.mxu0 0.0
    %6214 = vmatpush1.msra.mxu0 0.0
    %6215 = vmatprep.subr.mxu0 0.0
    %6216 = vmatpush1.msra.mxu0 0.0
    %6217 = vmatprep.subr.mxu0 0.0
    %6218 = vmatpush1.msra.mxu0 0.0
    %6219 = vmatprep.subr.mxu0 0.0
    %6220 = vmatpush1.msra.mxu0 0.0
    %6221 = vmatprep.subr.mxu0 0.0
    %6222 = vmatpush1.msra.mxu0 0.0
    %6223 = vmatprep.subr.mxu0 0.0
    %6224 = vmatpush1.msra.mxu0 0.0
    %6225 = vmatprep.subr.mxu0 0.0
    %6226 = vmatpush1.msra.mxu0 0.0
    %6227 = vmatprep.subr.mxu0 0.0
    %6228 = vmatpush1.msra.mxu0 0.0
    %6229 = vmatprep.subr.mxu0 0.0
    %6230 = vmatpush1.msra.mxu0 0.0
    %6231 = vmatprep.subr.mxu0 0.0
    %6232 = vmatpush1.msra.mxu0 0.0
    %6233 = vmatprep.subr.mxu0 0.0
    %6234 = vmatpush1.msra.mxu0 0.0
    %6235 = vmatprep.subr.mxu0 0.0
    %6236 = vmatpush1.msra.mxu0 0.0
    %6237 = vmatprep.mubr.f32.mxu0 0.0
    %6238 = vmatmul.mubr.f32.gmra.mrb[0].mxu0 %v6165
    %v6239 = vpop.f32.mrb[0].mxu0
    %v6240 = vadd.f32 0.0, %v6239
    %v6241 = vpop.f32.mrb[0].mxu0
    %6242 = vmatprep.mubr.f32.mxu0 0.0
    %6243 = vmatmul.mubr.f32.gmra.mrb[0].mxu0 %v6168
    %v6244 = vpop.f32.mrb[0].mxu0
    %v6245 = vadd.f32 0.0, %v6244
    %v6246 = vpop.f32.mrb[0].mxu0
    %6247 = vmatprep.mubr.f32.mxu0 0.0
    %6248 = vmatmul.mubr.f32.gmra.mrb[0].mxu0 %v6171
    %v6249 = vpop.f32.mrb[0].mxu0
    %v6250 = vadd.f32 0.0, %v6249
    %v6251 = vpop.f32.mrb[0].mxu0
    %6252 = vdwg.mxu0
    %6253 = vst.msk [vmem:[#allocation4] sm:$0xff] %vm245, %v6240
    %6254 = vst.msk [vmem:[#allocation4 + $0x8] sm:$0xff] %vm245, %v6245
    %6255 = vst.msk [vmem:[#allocation4 + $0x10] sm:$0x7f] %vm5912, %v6250
    %v6256 = vld [vmem:[#allocation4] ss:$2 sm:$0xff]
    %v6257 = vld [vmem:[%s4355] ss:$2 sm:$0x7]
    %v6258 = vld [vmem:[%s4377] ss:$2 sm:$0xff]
    %v6259 = vld [vmem:[%s4379] ss:$2 sm:$0x7]
    %v6260 = vmax.f32 %v6256, %v6258
    %v6261 = vmax.f32 %v6257, %v6259
    %v6262 = vld [vmem:[#allocation3] ss:$2 sm:$0xff]
    %v6263 = vld [vmem:[%s4414] ss:$2 sm:$0x7]
    %v6264 = vld [vmem:[%s4436] ss:$2 sm:$0xff]
    %v6265 = vld [vmem:[%s4438] ss:$2 sm:$0x7]
    %v6266 = vmax.f32 %v6262, %v6264
    %v6267 = vmax.f32 %v6263, %v6265
    %v6268 = vadd.f32 %v6260, %v6266
    %v6269 = vadd.f32 %v6261, %v6267
    %6270 = vst.msk [vmem:[#allocation3] sm:$0xff] %vm245, %v6268
    %6271 = vst.msk [vmem:[#allocation3 + $0x8] sm:$0x7] %vm2855, %v6269
    %s6272 = scalar_lea.vmem %s6, 9
    %v6273 = vld [vmem:[%s6272] sm:$0x1]
    %v6275 = vlaneseq
    %v6276 = vshrl.u32 %v6275, 7
    %v6277 = vsub.s32 0, %v6276
    %v6278 = vrot.slane %v6273, %v6277
    %v6280 = vmul.f32 %v6268, %v6278
    %v6281 = vmul.f32 %v6269, %v6278
    %s6282 = scalar_lea.vmem %s7, 9
    %v6283 = vld [vmem:[%s6282] sm:$0x1]
    %v6285 = vlaneseq
    %v6286 = vshrl.u32 %v6285, 7
    %v6287 = vsub.s32 0, %v6286
    %v6288 = vrot.slane %v6283, %v6287
    %v6290 = vadd.f32 %v6280, %v6288
    %v6291 = vadd.f32 %v6281, %v6288
    %vm6292 = vcmp.ge.f32.partialorder %v6290, 0.0
    %vm6293 = vcmp.ge.f32.partialorder %v6291, 0.0
    %v6294 = vmul.f32 %v6290, 0.01
    %v6295 = vmul.f32 %v6291, 0.01
    %v6296 = vsel %vm6292, %v6290, %v6294
    %v6297 = vsel %vm6293, %v6291, %v6295
    %6298 = vst.msk [vmem:[#allocation2 + $0x1] sm:$0xff] %vm245, %v6296
    %6299 = vst.msk [vmem:[#allocation2 + $0x9] sm:$0x7] %vm2855, %v6297
    %6300 = vst.msk [vmem:[#allocation2 + $0xc] sm:$0x1] %vm3017, 0.0
    %v6301 = vld [vmem:[#allocation2] sm:$0xff]
    %v6302 = vld [vmem:[#allocation2 + $0x8] sm:$0x7]
    %v6303 = vld [vmem:[#allocation2 + $0x1] sm:$0xff]
    %v6304 = vld [vmem:[#allocation2 + $0x9] sm:$0x7]
    %v6305 = vld [vmem:[#allocation2 + $0x2] sm:$0xff]
    %v6306 = vld [vmem:[#allocation2 + $0xa] sm:$0x7]
    %6309 = vrot.lane.b32.xlu0 %v6303, 16
    %v6310 = vpop.permute.xlu0 %6309
    %6311 = vrot.lane.b32.xlu0 %v6304, 16
    %v6312 = vpop.permute.xlu0 %6311
    %6317 = vrot.lane.b32.xlu0 %v6305, 32
    %v6318 = vpop.permute.xlu0 %6317
    %6319 = vrot.lane.b32.xlu0 %v6306, 32
    %v6320 = vpop.permute.xlu0 %6319
    %v6323 = vsel %vm245, %v6301, %v6310
    %v6324 = vsel %vm245, %v6302, %v6312
    %v6325 = vsel %vm954, %v6323, %v6318
    %v6326 = vsel %vm954, %v6324, %v6320
    %s6327 = scalar_lea.vmem %s5, 384
    %v6328 = vld [vmem:[%s6327] sm:$0xff]
    %v6329 = vld [vmem:[%s6327 + $0x8] sm:$0xff]
    %v6330 = vld [vmem:[%s6327 + $0x10] sm:$0xff]
    %v6331 = vld [vmem:[%s6327 + $0x18] sm:$0xff]
    %v6332 = vld [vmem:[%s6327 + $0x20] sm:$0xff]
    %v6333 = vld [vmem:[%s6327 + $0x28] sm:$0xff]
    %v6335 = vsel %vm1857, %v6325, 0
    %v6338 = vsel %vm1857, %v6326, 0
    %6340 = vmatprep.subr.mxu0 0.0
    %6341 = vmatpush1.msra.mxu0 %v6328
    %6342 = vmatprep.subr.mxu0 0.0
    %6343 = vmatpush1.msra.mxu0 %v6329
    %6344 = vmatprep.subr.mxu0 0.0
    %6345 = vmatpush1.msra.mxu0 %v6330
    %6346 = vmatprep.subr.mxu0 0.0
    %6347 = vmatpush1.msra.mxu0 %v6331
    %6348 = vmatprep.subr.mxu0 0.0
    %6349 = vmatpush1.msra.mxu0 %v6332
    %6350 = vmatprep.subr.mxu0 0.0
    %6351 = vmatpush1.msra.mxu0 %v6333
    %6352 = vmatprep.subr.mxu0 0.0
    %6353 = vmatpush1.msra.mxu0 0.0
    %6354 = vmatprep.subr.mxu0 0.0
    %6355 = vmatpush1.msra.mxu0 0.0
    %6356 = vmatprep.subr.mxu0 0.0
    %6357 = vmatpush1.msra.mxu0 0.0
    %6358 = vmatprep.subr.mxu0 0.0
    %6359 = vmatpush1.msra.mxu0 0.0
    %6360 = vmatprep.subr.mxu0 0.0
    %6361 = vmatpush1.msra.mxu0 0.0
    %6362 = vmatprep.subr.mxu0 0.0
    %6363 = vmatpush1.msra.mxu0 0.0
    %6364 = vmatprep.subr.mxu0 0.0
    %6365 = vmatpush1.msra.mxu0 0.0
    %6366 = vmatprep.subr.mxu0 0.0
    %6367 = vmatpush1.msra.mxu0 0.0
    %6368 = vmatprep.subr.mxu0 0.0
    %6369 = vmatpush1.msra.mxu0 0.0
    %6370 = vmatprep.subr.mxu0 0.0
    %6371 = vmatpush1.msra.mxu0 0.0
    %6372 = vmatprep.subr.mxu0 0.0
    %6373 = vmatpush1.msra.mxu0 0.0
    %6374 = vmatprep.subr.mxu0 0.0
    %6375 = vmatpush1.msra.mxu0 0.0
    %6376 = vmatprep.subr.mxu0 0.0
    %6377 = vmatpush1.msra.mxu0 0.0
    %6378 = vmatprep.subr.mxu0 0.0
    %6379 = vmatpush1.msra.mxu0 0.0
    %6380 = vmatprep.subr.mxu0 0.0
    %6381 = vmatpush1.msra.mxu0 0.0
    %6382 = vmatprep.subr.mxu0 0.0
    %6383 = vmatpush1.msra.mxu0 0.0
    %6384 = vmatprep.subr.mxu0 0.0
    %6385 = vmatpush1.msra.mxu0 0.0
    %6386 = vmatprep.subr.mxu0 0.0
    %6387 = vmatpush1.msra.mxu0 0.0
    %6388 = vmatprep.subr.mxu0 0.0
    %6389 = vmatpush1.msra.mxu0 0.0
    %6390 = vmatprep.subr.mxu0 0.0
    %6391 = vmatpush1.msra.mxu0 0.0
    %6392 = vmatprep.subr.mxu0 0.0
    %6393 = vmatpush1.msra.mxu0 0.0
    %6394 = vmatprep.subr.mxu0 0.0
    %6395 = vmatpush1.msra.mxu0 0.0
    %6396 = vmatprep.subr.mxu0 0.0
    %6397 = vmatpush1.msra.mxu0 0.0
    %6398 = vmatprep.subr.mxu0 0.0
    %6399 = vmatpush1.msra.mxu0 0.0
    %6400 = vmatprep.subr.mxu0 0.0
    %6401 = vmatpush1.msra.mxu0 0.0
    %6402 = vmatprep.subr.mxu0 0.0
    %6403 = vmatpush1.msra.mxu0 0.0
    %6404 = vmatprep.mubr.f32.mxu0 0.0
    %6405 = vmatmul.mubr.f32.gmra.mrb[0].mxu0 %v6335
    %v6406 = vpop.f32.mrb[0].mxu0
    %v6407 = vadd.f32 0.0, %v6406
    %v6408 = vpop.f32.mrb[0].mxu0
    %6409 = vmatprep.mubr.f32.mxu0 0.0
    %6410 = vmatmul.mubr.f32.gmra.mrb[0].mxu0 %v6338
    %v6411 = vpop.f32.mrb[0].mxu0
    %v6412 = vadd.f32 0.0, %v6411
    %v6413 = vpop.f32.mrb[0].mxu0
    %6414 = vdwg.mxu0
    %s6415 = scalar_lea.vmem %s6, 10
    %v6416 = vld [vmem:[%s6415] sm:$0x1]
    %v6418 = vlaneseq
    %v6419 = vshrl.u32 %v6418, 7
    %v6420 = vsub.s32 0, %v6419
    %v6421 = vrot.slane %v6416, %v6420
    %v6423 = vmul.f32 %v6407, %v6421
    %v6424 = vmul.f32 %v6412, %v6421
    %s6425 = scalar_lea.vmem %s7, 10
    %v6426 = vld [vmem:[%s6425] sm:$0x1]
    %v6428 = vlaneseq
    %v6429 = vshrl.u32 %v6428, 7
    %v6430 = vsub.s32 0, %v6429
    %v6431 = vrot.slane %v6426, %v6430
    %v6433 = vadd.f32 %v6423, %v6431
    %v6434 = vadd.f32 %v6424, %v6431
    %vm6435 = vcmp.ge.f32.partialorder %v6433, 0.0
    %vm6436 = vcmp.ge.f32.partialorder %v6434, 0.0
    %v6437 = vmul.f32 %v6433, 0.01
    %v6438 = vmul.f32 %v6434, 0.01
    %v6439 = vsel %vm6435, %v6433, %v6437
    %v6440 = vsel %vm6436, %v6434, %v6438
    %6441 = vst.msk [vmem:[#allocation2 + $0x1] sm:$0xff] %vm245, %v6439
    %6442 = vst.msk [vmem:[#allocation2 + $0x9] sm:$0x7] %vm2855, %v6440
    %v6443 = vld [vmem:[#allocation2] sm:$0xff]
    %v6444 = vld [vmem:[#allocation2 + $0x8] sm:$0x7]
    %v6445 = vld [vmem:[#allocation2 + $0x1] sm:$0xff]
    %v6446 = vld [vmem:[#allocation2 + $0x9] sm:$0x7]
    %v6447 = vld [vmem:[#allocation2 + $0x2] sm:$0xff]
    %v6448 = vld [vmem:[#allocation2 + $0xa] sm:$0x7]
    %6451 = vrot.lane.b32.xlu0 %v6445, 16
    %v6452 = vpop.permute.xlu0 %6451
    %6453 = vrot.lane.b32.xlu0 %v6446, 16
    %v6454 = vpop.permute.xlu0 %6453
    %6459 = vrot.lane.b32.xlu0 %v6447, 32
    %v6460 = vpop.permute.xlu0 %6459
    %6461 = vrot.lane.b32.xlu0 %v6448, 32
    %v6462 = vpop.permute.xlu0 %6461
    %v6465 = vsel %vm245, %v6443, %v6452
    %v6466 = vsel %vm245, %v6444, %v6454
    %v6467 = vsel %vm954, %v6465, %v6460
    %v6468 = vsel %vm954, %v6466, %v6462
    %s6469 = scalar_lea.vmem %s5, 432
    %v6470 = vld [vmem:[%s6469] sm:$0xff]
    %v6471 = vld [vmem:[%s6469 + $0x8] sm:$0xff]
    %v6472 = vld [vmem:[%s6469 + $0x10] sm:$0xff]
    %v6473 = vld [vmem:[%s6469 + $0x18] sm:$0xff]
    %v6474 = vld [vmem:[%s6469 + $0x20] sm:$0xff]
    %v6475 = vld [vmem:[%s6469 + $0x28] sm:$0xff]
    %v6477 = vsel %vm1857, %v6467, 0
    %v6480 = vsel %vm1857, %v6468, 0
    %6482 = vmatprep.subr.mxu0 0.0
    %6483 = vmatpush1.msra.mxu0 %v6470
    %6484 = vmatprep.subr.mxu0 0.0
    %6485 = vmatpush1.msra.mxu0 %v6471
    %6486 = vmatprep.subr.mxu0 0.0
    %6487 = vmatpush1.msra.mxu0 %v6472
    %6488 = vmatprep.subr.mxu0 0.0
    %6489 = vmatpush1.msra.mxu0 %v6473
    %6490 = vmatprep.subr.mxu0 0.0
    %6491 = vmatpush1.msra.mxu0 %v6474
    %6492 = vmatprep.subr.mxu0 0.0
    %6493 = vmatpush1.msra.mxu0 %v6475
    %6494 = vmatprep.subr.mxu0 0.0
    %6495 = vmatpush1.msra.mxu0 0.0
    %6496 = vmatprep.subr.mxu0 0.0
    %6497 = vmatpush1.msra.mxu0 0.0
    %6498 = vmatprep.subr.mxu0 0.0
    %6499 = vmatpush1.msra.mxu0 0.0
    %6500 = vmatprep.subr.mxu0 0.0
    %6501 = vmatpush1.msra.mxu0 0.0
    %6502 = vmatprep.subr.mxu0 0.0
    %6503 = vmatpush1.msra.mxu0 0.0
    %6504 = vmatprep.subr.mxu0 0.0
    %6505 = vmatpush1.msra.mxu0 0.0
    %6506 = vmatprep.subr.mxu0 0.0
    %6507 = vmatpush1.msra.mxu0 0.0
    %6508 = vmatprep.subr.mxu0 0.0
    %6509 = vmatpush1.msra.mxu0 0.0
    %6510 = vmatprep.subr.mxu0 0.0
    %6511 = vmatpush1.msra.mxu0 0.0
    %6512 = vmatprep.subr.mxu0 0.0
    %6513 = vmatpush1.msra.mxu0 0.0
    %6514 = vmatprep.subr.mxu0 0.0
    %6515 = vmatpush1.msra.mxu0 0.0
    %6516 = vmatprep.subr.mxu0 0.0
    %6517 = vmatpush1.msra.mxu0 0.0
    %6518 = vmatprep.subr.mxu0 0.0
    %6519 = vmatpush1.msra.mxu0 0.0
    %6520 = vmatprep.subr.mxu0 0.0
    %6521 = vmatpush1.msra.mxu0 0.0
    %6522 = vmatprep.subr.mxu0 0.0
    %6523 = vmatpush1.msra.mxu0 0.0
    %6524 = vmatprep.subr.mxu0 0.0
    %6525 = vmatpush1.msra.mxu0 0.0
    %6526 = vmatprep.subr.mxu0 0.0
    %6527 = vmatpush1.msra.mxu0 0.0
    %6528 = vmatprep.subr.mxu0 0.0
    %6529 = vmatpush1.msra.mxu0 0.0
    %6530 = vmatprep.subr.mxu0 0.0
    %6531 = vmatpush1.msra.mxu0 0.0
    %6532 = vmatprep.subr.mxu0 0.0
    %6533 = vmatpush1.msra.mxu0 0.0
    %6534 = vmatprep.subr.mxu0 0.0
    %6535 = vmatpush1.msra.mxu0 0.0
    %6536 = vmatprep.subr.mxu0 0.0
    %6537 = vmatpush1.msra.mxu0 0.0
    %6538 = vmatprep.subr.mxu0 0.0
    %6539 = vmatpush1.msra.mxu0 0.0
    %6540 = vmatprep.subr.mxu0 0.0
    %6541 = vmatpush1.msra.mxu0 0.0
    %6542 = vmatprep.subr.mxu0 0.0
    %6543 = vmatpush1.msra.mxu0 0.0
    %6544 = vmatprep.subr.mxu0 0.0
    %6545 = vmatpush1.msra.mxu0 0.0
    %6546 = vmatprep.mubr.f32.mxu0 0.0
    %6547 = vmatmul.mubr.f32.gmra.mrb[0].mxu0 %v6477
    %v6548 = vpop.f32.mrb[0].mxu0
    %v6549 = vadd.f32 0.0, %v6548
    %v6550 = vpop.f32.mrb[0].mxu0
    %6551 = vmatprep.mubr.f32.mxu0 0.0
    %6552 = vmatmul.mubr.f32.gmra.mrb[0].mxu0 %v6480
    %v6553 = vpop.f32.mrb[0].mxu0
    %v6554 = vadd.f32 0.0, %v6553
    %v6555 = vpop.f32.mrb[0].mxu0
    %6556 = vdwg.mxu0
    %6557 = vst.msk [vmem:[#allocation4] sm:$0xff] %vm245, %v6549
    %6558 = vst.msk [vmem:[#allocation4 + $0x8] sm:$0x7] %vm2855, %v6554
    %v6559 = vld [vmem:[#allocation4] ss:$2 sm:$0x1f]
    %v6560 = vld [vmem:[%s4377] ss:$2 sm:$0x1f]
    %v6561 = vmax.f32 %v6559, %v6560
    %v6562 = vld [vmem:[#allocation3] ss:$2 sm:$0x1f]
    %v6563 = vld [vmem:[%s4436] ss:$2 sm:$0x1f]
    %v6564 = vmax.f32 %v6562, %v6563
    %v6565 = vadd.f32 %v6561, %v6564
    %6566 = vst.msk [vmem:[#allocation3] sm:$0x1f] %vm4495, %v6565
    %s6567 = scalar_lea.vmem %s6, 11
    %v6568 = vld [vmem:[%s6567] sm:$0x1]
    %v6570 = vlaneseq
    %v6571 = vshrl.u32 %v6570, 7
    %v6572 = vsub.s32 0, %v6571
    %v6573 = vrot.slane %v6568, %v6572
    %v6575 = vmul.f32 %v6565, %v6573
    %s6576 = scalar_lea.vmem %s7, 11
    %v6577 = vld [vmem:[%s6576] sm:$0x1]
    %v6579 = vlaneseq
    %v6580 = vshrl.u32 %v6579, 7
    %v6581 = vsub.s32 0, %v6580
    %v6582 = vrot.slane %v6577, %v6581
    %v6584 = vadd.f32 %v6575, %v6582
    %vm6585 = vcmp.ge.f32.partialorder %v6584, 0.0
    %v6586 = vmul.f32 %v6584, 0.01
    %v6587 = vsel %vm6585, %v6584, %v6586
    %6588 = vst.msk [vmem:[#allocation2 + $0x1] sm:$0x1f] %vm4495, %v6587
    %6589 = vst.msk [vmem:[#allocation2 + $0x6] sm:$0x1] %vm3017, 0.0
    %v6590 = vld [vmem:[#allocation2] sm:$0x1f]
    %v6591 = vld [vmem:[#allocation2 + $0x1] sm:$0x1f]
    %v6592 = vld [vmem:[#allocation2 + $0x2] sm:$0x1f]
    %6594 = vrot.lane.b32.xlu0 %v6591, 16
    %v6595 = vpop.permute.xlu0 %6594
    %6598 = vrot.lane.b32.xlu0 %v6592, 32
    %v6599 = vpop.permute.xlu0 %6598
    %v6601 = vsel %vm245, %v6590, %v6595
    %v6602 = vsel %vm954, %v6601, %v6599
    %s6603 = scalar_lea.vmem %s5, 480
    %v6604 = vld [vmem:[%s6603] sm:$0xff]
    %v6605 = vld [vmem:[%s6603 + $0x8] sm:$0xff]
    %v6606 = vld [vmem:[%s6603 + $0x10] sm:$0xff]
    %v6607 = vld [vmem:[%s6603 + $0x18] sm:$0xff]
    %v6608 = vld [vmem:[%s6603 + $0x20] sm:$0xff]
    %v6609 = vld [vmem:[%s6603 + $0x28] sm:$0xff]
    %v6611 = vsel %vm1857, %v6602, 0
    %6613 = vmatprep.subr.mxu0 0.0
    %6614 = vmatpush1.msra.mxu0 %v6604
    %6615 = vmatprep.subr.mxu0 0.0
    %6616 = vmatpush1.msra.mxu0 %v6605
    %6617 = vmatprep.subr.mxu0 0.0
    %6618 = vmatpush1.msra.mxu0 %v6606
    %6619 = vmatprep.subr.mxu0 0.0
    %6620 = vmatpush1.msra.mxu0 %v6607
    %6621 = vmatprep.subr.mxu0 0.0
    %6622 = vmatpush1.msra.mxu0 %v6608
    %6623 = vmatprep.subr.mxu0 0.0
    %6624 = vmatpush1.msra.mxu0 %v6609
    %6625 = vmatprep.subr.mxu0 0.0
    %6626 = vmatpush1.msra.mxu0 0.0
    %6627 = vmatprep.subr.mxu0 0.0
    %6628 = vmatpush1.msra.mxu0 0.0
    %6629 = vmatprep.subr.mxu0 0.0
    %6630 = vmatpush1.msra.mxu0 0.0
    %6631 = vmatprep.subr.mxu0 0.0
    %6632 = vmatpush1.msra.mxu0 0.0
    %6633 = vmatprep.subr.mxu0 0.0
    %6634 = vmatpush1.msra.mxu0 0.0
    %6635 = vmatprep.subr.mxu0 0.0
    %6636 = vmatpush1.msra.mxu0 0.0
    %6637 = vmatprep.subr.mxu0 0.0
    %6638 = vmatpush1.msra.mxu0 0.0
    %6639 = vmatprep.subr.mxu0 0.0
    %6640 = vmatpush1.msra.mxu0 0.0
    %6641 = vmatprep.subr.mxu0 0.0
    %6642 = vmatpush1.msra.mxu0 0.0
    %6643 = vmatprep.subr.mxu0 0.0
    %6644 = vmatpush1.msra.mxu0 0.0
    %6645 = vmatprep.subr.mxu0 0.0
    %6646 = vmatpush1.msra.mxu0 0.0
    %6647 = vmatprep.subr.mxu0 0.0
    %6648 = vmatpush1.msra.mxu0 0.0
    %6649 = vmatprep.subr.mxu0 0.0
    %6650 = vmatpush1.msra.mxu0 0.0
    %6651 = vmatprep.subr.mxu0 0.0
    %6652 = vmatpush1.msra.mxu0 0.0
    %6653 = vmatprep.subr.mxu0 0.0
    %6654 = vmatpush1.msra.mxu0 0.0
    %6655 = vmatprep.subr.mxu0 0.0
    %6656 = vmatpush1.msra.mxu0 0.0
    %6657 = vmatprep.subr.mxu0 0.0
    %6658 = vmatpush1.msra.mxu0 0.0
    %6659 = vmatprep.subr.mxu0 0.0
    %6660 = vmatpush1.msra.mxu0 0.0
    %6661 = vmatprep.subr.mxu0 0.0
    %6662 = vmatpush1.msra.mxu0 0.0
    %6663 = vmatprep.subr.mxu0 0.0
    %6664 = vmatpush1.msra.mxu0 0.0
    %6665 = vmatprep.subr.mxu0 0.0
    %6666 = vmatpush1.msra.mxu0 0.0
    %6667 = vmatprep.subr.mxu0 0.0
    %6668 = vmatpush1.msra.mxu0 0.0
    %6669 = vmatprep.subr.mxu0 0.0
    %6670 = vmatpush1.msra.mxu0 0.0
    %6671 = vmatprep.subr.mxu0 0.0
    %6672 = vmatpush1.msra.mxu0 0.0
    %6673 = vmatprep.subr.mxu0 0.0
    %6674 = vmatpush1.msra.mxu0 0.0
    %6675 = vmatprep.subr.mxu0 0.0
    %6676 = vmatpush1.msra.mxu0 0.0
    %6677 = vmatprep.mubr.f32.mxu0 0.0
    %6678 = vmatmul.mubr.f32.gmra.mrb[0].mxu0 %v6611
    %v6679 = vpop.f32.mrb[0].mxu0
    %v6680 = vadd.f32 0.0, %v6679
    %v6681 = vpop.f32.mrb[0].mxu0
    %6682 = vdwg.mxu0
    %s6683 = scalar_lea.vmem %s6, 12
    %v6684 = vld [vmem:[%s6683] sm:$0x1]
    %v6686 = vlaneseq
    %v6687 = vshrl.u32 %v6686, 7
    %v6688 = vsub.s32 0, %v6687
    %v6689 = vrot.slane %v6684, %v6688
    %v6691 = vmul.f32 %v6680, %v6689
    %s6692 = scalar_lea.vmem %s7, 12
    %v6693 = vld [vmem:[%s6692] sm:$0x1]
    %v6695 = vlaneseq
    %v6696 = vshrl.u32 %v6695, 7
    %v6697 = vsub.s32 0, %v6696
    %v6698 = vrot.slane %v6693, %v6697
    %v6700 = vadd.f32 %v6691, %v6698
    %vm6701 = vcmp.ge.f32.partialorder %v6700, 0.0
    %v6702 = vmul.f32 %v6700, 0.01
    %v6703 = vsel %vm6701, %v6700, %v6702
    %6704 = vst.msk [vmem:[#allocation2 + $0x1] sm:$0x1f] %vm4495, %v6703
    %v6705 = vld [vmem:[#allocation2] sm:$0x1f]
    %v6706 = vld [vmem:[#allocation2 + $0x1] sm:$0x1f]
    %v6707 = vld [vmem:[#allocation2 + $0x2] sm:$0x1f]
    %6709 = vrot.lane.b32.xlu0 %v6706, 16
    %v6710 = vpop.permute.xlu0 %6709
    %6713 = vrot.lane.b32.xlu0 %v6707, 32
    %v6714 = vpop.permute.xlu0 %6713
    %v6716 = vsel %vm245, %v6705, %v6710
    %v6717 = vsel %vm954, %v6716, %v6714
    %s6718 = scalar_lea.vmem %s5, 528
    %v6719 = vld [vmem:[%s6718] sm:$0xff]
    %v6720 = vld [vmem:[%s6718 + $0x8] sm:$0xff]
    %v6721 = vld [vmem:[%s6718 + $0x10] sm:$0xff]
    %v6722 = vld [vmem:[%s6718 + $0x18] sm:$0xff]
    %v6723 = vld [vmem:[%s6718 + $0x20] sm:$0xff]
    %v6724 = vld [vmem:[%s6718 + $0x28] sm:$0xff]
    %v6726 = vsel %vm1857, %v6717, 0
    %6728 = vmatprep.subr.mxu0 0.0
    %6729 = vmatpush1.msra.mxu0 %v6719
    %6730 = vmatprep.subr.mxu0 0.0
    %6731 = vmatpush1.msra.mxu0 %v6720
    %6732 = vmatprep.subr.mxu0 0.0
    %6733 = vmatpush1.msra.mxu0 %v6721
    %6734 = vmatprep.subr.mxu0 0.0
    %6735 = vmatpush1.msra.mxu0 %v6722
    %6736 = vmatprep.subr.mxu0 0.0
    %6737 = vmatpush1.msra.mxu0 %v6723
    %6738 = vmatprep.subr.mxu0 0.0
    %6739 = vmatpush1.msra.mxu0 %v6724
    %6740 = vmatprep.subr.mxu0 0.0
    %6741 = vmatpush1.msra.mxu0 0.0
    %6742 = vmatprep.subr.mxu0 0.0
    %6743 = vmatpush1.msra.mxu0 0.0
    %6744 = vmatprep.subr.mxu0 0.0
    %6745 = vmatpush1.msra.mxu0 0.0
    %6746 = vmatprep.subr.mxu0 0.0
    %6747 = vmatpush1.msra.mxu0 0.0
    %6748 = vmatprep.subr.mxu0 0.0
    %6749 = vmatpush1.msra.mxu0 0.0
    %6750 = vmatprep.subr.mxu0 0.0
    %6751 = vmatpush1.msra.mxu0 0.0
    %6752 = vmatprep.subr.mxu0 0.0
    %6753 = vmatpush1.msra.mxu0 0.0
    %6754 = vmatprep.subr.mxu0 0.0
    %6755 = vmatpush1.msra.mxu0 0.0
    %6756 = vmatprep.subr.mxu0 0.0
    %6757 = vmatpush1.msra.mxu0 0.0
    %6758 = vmatprep.subr.mxu0 0.0
    %6759 = vmatpush1.msra.mxu0 0.0
    %6760 = vmatprep.subr.mxu0 0.0
    %6761 = vmatpush1.msra.mxu0 0.0
    %6762 = vmatprep.subr.mxu0 0.0
    %6763 = vmatpush1.msra.mxu0 0.0
    %6764 = vmatprep.subr.mxu0 0.0
    %6765 = vmatpush1.msra.mxu0 0.0
    %6766 = vmatprep.subr.mxu0 0.0
    %6767 = vmatpush1.msra.mxu0 0.0
    %6768 = vmatprep.subr.mxu0 0.0
    %6769 = vmatpush1.msra.mxu0 0.0
    %6770 = vmatprep.subr.mxu0 0.0
    %6771 = vmatpush1.msra.mxu0 0.0
    %6772 = vmatprep.subr.mxu0 0.0
    %6773 = vmatpush1.msra.mxu0 0.0
    %6774 = vmatprep.subr.mxu0 0.0
    %6775 = vmatpush1.msra.mxu0 0.0
    %6776 = vmatprep.subr.mxu0 0.0
    %6777 = vmatpush1.msra.mxu0 0.0
    %6778 = vmatprep.subr.mxu0 0.0
    %6779 = vmatpush1.msra.mxu0 0.0
    %6780 = vmatprep.subr.mxu0 0.0
    %6781 = vmatpush1.msra.mxu0 0.0
    %6782 = vmatprep.subr.mxu0 0.0
    %6783 = vmatpush1.msra.mxu0 0.0
    %6784 = vmatprep.subr.mxu0 0.0
    %6785 = vmatpush1.msra.mxu0 0.0
    %6786 = vmatprep.subr.mxu0 0.0
    %6787 = vmatpush1.msra.mxu0 0.0
    %6788 = vmatprep.subr.mxu0 0.0
    %6789 = vmatpush1.msra.mxu0 0.0
    %6790 = vmatprep.subr.mxu0 0.0
    %6791 = vmatpush1.msra.mxu0 0.0
    %6792 = vmatprep.mubr.f32.mxu0 0.0
    %6793 = vmatmul.mubr.f32.gmra.mrb[0].mxu0 %v6726
    %v6794 = vpop.f32.mrb[0].mxu0
    %v6795 = vadd.f32 0.0, %v6794
    %v6796 = vpop.f32.mrb[0].mxu0
    %6797 = vdwg.mxu0
    %6798 = vst.msk [vmem:[#allocation4] sm:$0x1f] %vm4495, %v6795
    %v6799 = vld [vmem:[#allocation4] ss:$2 sm:$0x3]
    %v6800 = vld [vmem:[%s4377] ss:$2 sm:$0x3]
    %v6801 = vmax.f32 %v6799, %v6800
    %v6802 = vld [vmem:[#allocation3] ss:$2 sm:$0x3]
    %v6803 = vld [vmem:[%s4436] ss:$2 sm:$0x3]
    %v6804 = vmax.f32 %v6802, %v6803
    %v6805 = vadd.f32 %v6801, %v6804
    %6806 = vst.msk [vmem:[#allocation3] sm:$0x3] %vm50, %v6805
    %s6807 = scalar_lea.vmem %s6, 13
    %v6808 = vld [vmem:[%s6807] sm:$0x1]
    %v6810 = vlaneseq
    %v6811 = vshrl.u32 %v6810, 7
    %v6812 = vsub.s32 0, %v6811
    %v6813 = vrot.slane %v6808, %v6812
    %v6815 = vmul.f32 %v6805, %v6813
    %s6816 = scalar_lea.vmem %s7, 13
    %v6817 = vld [vmem:[%s6816] sm:$0x1]
    %v6819 = vlaneseq
    %v6820 = vshrl.u32 %v6819, 7
    %v6821 = vsub.s32 0, %v6820
    %v6822 = vrot.slane %v6817, %v6821
    %v6824 = vadd.f32 %v6815, %v6822
    %vm6825 = vcmp.ge.f32.partialorder %v6824, 0.0
    %v6826 = vmul.f32 %v6824, 0.01
    %v6827 = vsel %vm6825, %v6824, %v6826
    %v6828 = vsel %vm50, %v6827, 0.0
    %v6829 = vrot.slane %v6828, 4
    %v6830 = vadd.f32 %v6828, %v6829
    %v6831 = vrot.slane %v6830, 2
    %v6832 = vadd.f32 %v6830, %v6831
    %v6833 = vrot.slane %v6832, 1
    %v6834 = vadd.f32 %v6832, %v6833
    %v6835 = vmul.f32 %v6834, 0.16666667
    %v6836 = vld [vmem:[%s8] sm:$0xff]
    %v6837 = vld [vmem:[%s8 + $0x8] sm:$0xff]
    %v6838 = vld [vmem:[%s9] sm:$0x1]
    %v6840 = vsel %vm245, %v6835, 0
    %6842 = vmatprep.subr.mxu0 0.0
    %6843 = vmatpush1.msra.mxu0 %v6836
    %6844 = vmatprep.subr.mxu0 0.0
    %6845 = vmatpush1.msra.mxu0 %v6837
    %6846 = vmatprep.subr.mxu0 0.0
    %6847 = vmatpush1.msra.mxu0 0.0
    %6848 = vmatprep.subr.mxu0 0.0
    %6849 = vmatpush1.msra.mxu0 0.0
    %6850 = vmatprep.subr.mxu0 0.0
    %6851 = vmatpush1.msra.mxu0 0.0
    %6852 = vmatprep.subr.mxu0 0.0
    %6853 = vmatpush1.msra.mxu0 0.0
    %6854 = vmatprep.subr.mxu0 0.0
    %6855 = vmatpush1.msra.mxu0 0.0
    %6856 = vmatprep.subr.mxu0 0.0
    %6857 = vmatpush1.msra.mxu0 0.0
    %6858 = vmatprep.subr.mxu0 0.0
    %6859 = vmatpush1.msra.mxu0 0.0
    %6860 = vmatprep.subr.mxu0 0.0
    %6861 = vmatpush1.msra.mxu0 0.0
    %6862 = vmatprep.subr.mxu0 0.0
    %6863 = vmatpush1.msra.mxu0 0.0
    %6864 = vmatprep.subr.mxu0 0.0
    %6865 = vmatpush1.msra.mxu0 0.0
    %6866 = vmatprep.subr.mxu0 0.0
    %6867 = vmatpush1.msra.mxu0 0.0
    %6868 = vmatprep.subr.mxu0 0.0
    %6869 = vmatpush1.msra.mxu0 0.0
    %6870 = vmatprep.subr.mxu0 0.0
    %6871 = vmatpush1.msra.mxu0 0.0
    %6872 = vmatprep.subr.mxu0 0.0
    %6873 = vmatpush1.msra.mxu0 0.0
    %6874 = vmatprep.subr.mxu0 0.0
    %6875 = vmatpush1.msra.mxu0 0.0
    %6876 = vmatprep.subr.mxu0 0.0
    %6877 = vmatpush1.msra.mxu0 0.0
    %6878 = vmatprep.subr.mxu0 0.0
    %6879 = vmatpush1.msra.mxu0 0.0
    %6880 = vmatprep.subr.mxu0 0.0
    %6881 = vmatpush1.msra.mxu0 0.0
    %6882 = vmatprep.subr.mxu0 0.0
    %6883 = vmatpush1.msra.mxu0 0.0
    %6884 = vmatprep.subr.mxu0 0.0
    %6885 = vmatpush1.msra.mxu0 0.0
    %6886 = vmatprep.subr.mxu0 0.0
    %6887 = vmatpush1.msra.mxu0 0.0
    %6888 = vmatprep.subr.mxu0 0.0
    %6889 = vmatpush1.msra.mxu0 0.0
    %6890 = vmatprep.subr.mxu0 0.0
    %6891 = vmatpush1.msra.mxu0 0.0
    %6892 = vmatprep.subr.mxu0 0.0
    %6893 = vmatpush1.msra.mxu0 0.0
    %6894 = vmatprep.subr.mxu0 0.0
    %6895 = vmatpush1.msra.mxu0 0.0
    %6896 = vmatprep.subr.mxu0 0.0
    %6897 = vmatpush1.msra.mxu0 0.0
    %6898 = vmatprep.subr.mxu0 0.0
    %6899 = vmatpush1.msra.mxu0 0.0
    %6900 = vmatprep.subr.mxu0 0.0
    %6901 = vmatpush1.msra.mxu0 0.0
    %6902 = vmatprep.subr.mxu0 0.0
    %6903 = vmatpush1.msra.mxu0 0.0
    %6904 = vmatprep.subr.mxu0 0.0
    %6905 = vmatpush1.msra.mxu0 0.0
    %6906 = vmatprep.mubr.f32.mxu0 0.0
    %6907 = vmatmul.mubr.f32.gmra.mrb[0].mxu0 %v6840
    %v6908 = vpop.f32.mrb[0].mxu0
    %v6909 = vadd.f32 %v6838, %v6908
    %v6910 = vpop.f32.mrb[0].mxu0
    %6911 = vdwg.mxu0
    %v6912 = vld [vmem:[%s10] sm:$0xff]
    %v6913 = vld [vmem:[%s10 + $0x8] sm:$0xff]
    %v6914 = vld [vmem:[%s11] sm:$0x1]
    %6915 = vmatprep.subr.mxu0 0.0
    %6916 = vmatpush1.msra.mxu0 %v6912
    %6917 = vmatprep.subr.mxu0 0.0
    %6918 = vmatpush1.msra.mxu0 %v6913
    %6919 = vmatprep.subr.mxu0 0.0
    %6920 = vmatpush1.msra.mxu0 0.0
    %6921 = vmatprep.subr.mxu0 0.0
    %6922 = vmatpush1.msra.mxu0 0.0
    %6923 = vmatprep.subr.mxu0 0.0
    %6924 = vmatpush1.msra.mxu0 0.0
    %6925 = vmatprep.subr.mxu0 0.0
    %6926 = vmatpush1.msra.mxu0 0.0
    %6927 = vmatprep.subr.mxu0 0.0
    %6928 = vmatpush1.msra.mxu0 0.0
    %6929 = vmatprep.subr.mxu0 0.0
    %6930 = vmatpush1.msra.mxu0 0.0
    %6931 = vmatprep.subr.mxu0 0.0
    %6932 = vmatpush1.msra.mxu0 0.0
    %6933 = vmatprep.subr.mxu0 0.0
    %6934 = vmatpush1.msra.mxu0 0.0
    %6935 = vmatprep.subr.mxu0 0.0
    %6936 = vmatpush1.msra.mxu0 0.0
    %6937 = vmatprep.subr.mxu0 0.0
    %6938 = vmatpush1.msra.mxu0 0.0
    %6939 = vmatprep.subr.mxu0 0.0
    %6940 = vmatpush1.msra.mxu0 0.0
    %6941 = vmatprep.subr.mxu0 0.0
    %6942 = vmatpush1.msra.mxu0 0.0
    %6943 = vmatprep.subr.mxu0 0.0
    %6944 = vmatpush1.msra.mxu0 0.0
    %6945 = vmatprep.subr.mxu0 0.0
    %6946 = vmatpush1.msra.mxu0 0.0
    %6947 = vmatprep.subr.mxu0 0.0
    %6948 = vmatpush1.msra.mxu0 0.0
    %6949 = vmatprep.subr.mxu0 0.0
    %6950 = vmatpush1.msra.mxu0 0.0
    %6951 = vmatprep.subr.mxu0 0.0
    %6952 = vmatpush1.msra.mxu0 0.0
    %6953 = vmatprep.subr.mxu0 0.0
    %6954 = vmatpush1.msra.mxu0 0.0
    %6955 = vmatprep.subr.mxu0 0.0
    %6956 = vmatpush1.msra.mxu0 0.0
    %6957 = vmatprep.subr.mxu0 0.0
    %6958 = vmatpush1.msra.mxu0 0.0
    %6959 = vmatprep.subr.mxu0 0.0
    %6960 = vmatpush1.msra.mxu0 0.0
    %6961 = vmatprep.subr.mxu0 0.0
    %6962 = vmatpush1.msra.mxu0 0.0
    %6963 = vmatprep.subr.mxu0 0.0
    %6964 = vmatpush1.msra.mxu0 0.0
    %6965 = vmatprep.subr.mxu0 0.0
    %6966 = vmatpush1.msra.mxu0 0.0
    %6967 = vmatprep.subr.mxu0 0.0
    %6968 = vmatpush1.msra.mxu0 0.0
    %6969 = vmatprep.subr.mxu0 0.0
    %6970 = vmatpush1.msra.mxu0 0.0
    %6971 = vmatprep.subr.mxu0 0.0
    %6972 = vmatpush1.msra.mxu0 0.0
    %6973 = vmatprep.subr.mxu0 0.0
    %6974 = vmatpush1.msra.mxu0 0.0
    %6975 = vmatprep.subr.mxu0 0.0
    %6976 = vmatpush1.msra.mxu0 0.0
    %6977 = vmatprep.subr.mxu0 0.0
    %6978 = vmatpush1.msra.mxu0 0.0
    %6979 = vmatprep.mubr.f32.mxu0 0.0
    %6980 = vmatmul.mubr.f32.gmra.mrb[0].mxu0 %v6840
    %v6981 = vpop.f32.mrb[0].mxu0
    %v6982 = vadd.f32 %v6914, %v6981
    %v6983 = vpop.f32.mrb[0].mxu0
    %6984 = vdwg.mxu0
    %vm6985 = vcmask 90112
    %6986 = vst.msk [vmem:[%s14] sm:$0x1] %vm6985, %v6909
    %v6987 = vld [vmem:[%s12] sm:$0x1]
    %v6988 = vmul.f32 %v6987, %v6909
    %v6989 = vsel %vm6985, %v6988, 0.0
    %6990 = vadd.xlane.f32.xlu0 %v6989
    %v6991 = vpop.xlane.xlu0 %6990
    %v6992 = vlaneseq
    %v6993 = vand.u32 %v6992, 127
    %v6994 = vsub.f32 0.0, %v6991
    %vm6995 = vcmp.ge.s32.totalorder %v6993, 0
    %vm6996 = vcmp.lt.s32.totalorder %v6993, 6
    %vm6997 = vmand %vm6995, %vm6996
    %v6998 = vsel %vm6997, %v6909, -1e+30
    %v6999 = vsel %vm6985, %v6998, -inf
    %7000 = vmax.xlane.f32.xlu0 %v6999
    %v7001 = vpop.xlane.xlu0 %7000
    %v7002 = vsub.f32 %v6909, %v7001
    %v7003 = vmul.f32 %v7002, 1.442695
    %v7004 = vpow.pop %v7003
    %v7005 = vsel %vm6997, %v7004, 0.0
    %v7006 = vsel %vm6985, %v7005, 0.0
    %7007 = vadd.xlane.f32.xlu0 %v7006
    %v7008 = vpop.xlane.xlu0 %7007
    %v7009 = vadd.f32 %v6994, %v7001
    %v7010 = vlog2.pop %v7008
    %v7011 = vmul.f32 %v7010, 0.6931472
    %v7012 = vadd.f32 %v7009, %v7011
    %vm7013 = vcmp.ge.s32.totalorder %v6993, 6
    %vm7014 = vcmp.lt.s32.totalorder %v6993, 12
    %vm7015 = vmand %vm7013, %vm7014
    %v7016 = vsel %vm7015, %v6909, -1e+30
    %v7017 = vsel %vm6985, %v7016, -inf
    %7018 = vmax.xlane.f32.xlu0 %v7017
    %v7019 = vpop.xlane.xlu0 %7018
    %v7020 = vsub.f32 %v6909, %v7019
    %v7021 = vmul.f32 %v7020, 1.442695
    %v7022 = vpow.pop %v7021
    %v7023 = vsel %vm7015, %v7022, 0.0
    %v7024 = vsel %vm6985, %v7023, 0.0
    %7025 = vadd.xlane.f32.xlu0 %v7024
    %v7026 = vpop.xlane.xlu0 %7025
    %v7027 = vadd.f32 %v7012, %v7019
    %v7028 = vlog2.pop %v7026
    %v7029 = vmul.f32 %v7028, 0.6931472
    %v7030 = vadd.f32 %v7027, %v7029
    %v7031 = vld [vmem:[%s13] sm:$0x1]
    %v7032 = vmax.f32 %v6982, 0.0
    %v7033 = vmul.f32 %v6982, %v7031
    %v7034 = vsub.f32 %v7032, %v7033
    %v7035 = vand.u32 2147483647, %v6982
    %v7036 = vsub.f32 0.0, %v7035
    %v7037 = vmul.f32 %v7036, 1.442695
    %v7038 = vpow.pop %v7037
    %v7039 = vadd.f32 %v7038, 1.0
    %v7040 = vlog2.pop %v7039
    %v7041 = vmul.f32 %v7040, 0.6931472
    %v7042 = vadd.f32 %v7034, %v7041
    %vm7043 = vcmask 8192
    %v7044 = vsel %vm7043, %v7042, 0.0
    %7045 = vadd.xlane.f32.xlu0 %v7044
    %v7046 = vpop.xlane.xlu0 %7045
    %v7047 = vmul.f32 %v7030, 0.9
    %v7048 = vmul.f32 %v7047, 0.5
    %v7049 = vmul.f32 %v7046, 0.1
    %v7050 = vmul.f32 %v7049, 0.5
    %v7051 = vadd.f32 %v7048, %v7050
    %vm7052 = vcmask 0
    %7053 = vst.msk [vmem:[#allocation5] sm:$0x1] %vm7052, %v7051
    // Predicated region
    $region58: #{net_forward.1} parent=1 // pred_check
      _
    $region59: #{net_forward.1} parent=1 // pred_check_branch
      %7055 = sbr.rel (0) target = $region61
    $region60: #{net_forward.1} parent=1 // pred_region
      _
    $region61: #{net_forward.1} parent=1 // pred_fallthru
      _
    // Predicated region
    $region62: #{net_forward.1} parent=1 // pred_check
      _
    $region63: #{net_forward.1} parent=1 // pred_check_branch
      %7057 = sbr.rel (0) target = $region65
    $region64: #{net_forward.1} parent=1 // pred_region
      %s7059 = ssub.s32 16, 16
      %7060 = vsyncadd [#allocation6], %s7059
      %s7062 = sshll.u32 [#allocation5], 4
      %s7063 = int_to_ptr.vmem [resolvable:$true] %s7062
      %7065 = dma.vmem_to_hbm [thread:$0]  %s7063, 16, %s15, [#allocation6]
    $region65: #{net_forward.1} parent=1 // pred_fallthru
      _
    // Predicated region
    $region66: #{net_forward.1} parent=1 // pred_check
      _
    $region67: #{net_forward.1} parent=1 // pred_check_branch
      %7067 = sbr.rel (0) target = $region69
    $region68: #{net_forward.1} parent=1 // pred_region
      _
    $region69: #{net_forward.1} parent=1 // pred_fallthru
      _
    // Predicated region
    $region70: #{net_forward.1} parent=1 // pred_check
      _
    $region71: #{net_forward.1} parent=1 // pred_check_branch
      %7069 = sbr.rel (0) target = $region73
    $region72: #{net_forward.1} parent=1 // pred_region
      %7070 = dma.done [#allocation6], 16
    $region73: #{net_forward.1} parent=1 // pred_fallthru
      _
    %7071 = vsyncpa [#allocation6], 1

</llo_original>
